<compile_context>
chip_gen: v7x
topology: tpu7x:2x2x1
jax: 0.10.0
libtpu: 0.0.40
codegen_flags: <defaults>
</compile_context>

<pallas_src>
import functools

import numpy as np
import jax
import jax.numpy as jnp
from jax.experimental import pallas as pl
from jax.experimental.pallas import tpu as pltpu

CPAD = 128       # lane-dense channel padding used for every layer
EPS = 1e-5       # PyTorch BatchNorm2d default
SLOPE = 0.2      # LeakyReLU negative slope


# ----------------------------- fused Pallas kernel -----------------------------

def _disc_kernel(p1_ref, w1_ref, g2_ref, w2_ref, gam2_ref, bet2_ref,
                 g3_ref, w3_ref, gam3_ref, bet3_ref, w4_ref, out_ref, *, n):
    """Entire Discriminator forward for a batch of n images, fully VMEM-resident."""

    def lrelu(v):
        return jnp.where(v > 0.0, v, SLOPE * v)

    # ---- conv1 (k4 s2 p1, no bias) + LeakyReLU :  (n*196, 16) @ (16, 128)
    a1 = jnp.dot(p1_ref[...], w1_ref[...], preferred_element_type=jnp.float32)
    a1 = lrelu(a1).astype(jnp.bfloat16)                                 # (n*196, 128)

    # ---- conv2 (k4 s2 p1) as 16 in-kernel taps + BatchNorm (batch stats) + LeakyReLU
    acc2 = jnp.zeros((n * 49, CPAD), jnp.float32)
    for t in range(16):
        # 0/1 gather of the tap's input pixels (rows), exact in bf16.
        gat = jnp.dot(g2_ref[t], a1, preferred_element_type=jnp.float32)
        gat = gat.astype(jnp.bfloat16)                                  # (n*49, 128)
        acc2 = acc2 + jnp.dot(gat, w2_ref[t], preferred_element_type=jnp.float32)
    m2 = jnp.mean(acc2, axis=0, keepdims=True)
    v2 = jnp.mean(jnp.square(acc2 - m2), axis=0, keepdims=True)         # biased (PyTorch)
    a2 = (acc2 - m2) * jax.lax.rsqrt(v2 + EPS) * gam2_ref[...] + bet2_ref[...]
    a2 = lrelu(a2).astype(jnp.bfloat16)                                 # (n*49, 128)

    # ---- conv3 (k3 s2 p1) as 9 in-kernel taps + BatchNorm + LeakyReLU
    acc3 = jnp.zeros((n * 16, CPAD), jnp.float32)
    for t in range(9):
        gat = jnp.dot(g3_ref[t], a2, preferred_element_type=jnp.float32)
        gat = gat.astype(jnp.bfloat16)                                  # (n*16, 128)
        acc3 = acc3 + jnp.dot(gat, w3_ref[t], preferred_element_type=jnp.float32)
    m3 = jnp.mean(acc3, axis=0, keepdims=True)
    v3 = jnp.mean(jnp.square(acc3 - m3), axis=0, keepdims=True)
    a3 = (acc3 - m3) * jax.lax.rsqrt(v3 + EPS) * gam3_ref[...] + bet3_ref[...]
    a3 = lrelu(a3)                                                      # (n*16, 128) f32

    # ---- conv4 (k4 s1 p0 == full 4x4xC contraction) + Sigmoid
    y3 = a3.reshape(n, 16, CPAD)                   # split leading dim only (tile-aligned)
    w4 = w4_ref[...].reshape(1, 16, CPAD)          # broadcast over batch
    s = jnp.sum(y3 * w4, axis=2)                   # lane reduce -> (n, 16)
    s = jnp.sum(s, axis=1, keepdims=True)          # -> (n, 1)
    out = jax.nn.sigmoid(s)
    out_ref[...] = jnp.broadcast_to(out, out_ref.shape).astype(out_ref.dtype)


def discriminator_pallas(prep, p1, n):
    """Single pallas_call: no grid, whole-array VMEM operands (one DMA wave)."""
    operands = (p1, prep["w1"], prep["g2"], prep["w2"], prep["gamma2"], prep["beta2"],
                prep["g3"], prep["w3"], prep["gamma3"], prep["beta3"], prep["w4"])
    return pl.pallas_call(
        functools.partial(_disc_kernel, n=n),
        out_shape=jax.ShapeDtypeStruct((n, CPAD), jnp.float32),
        in_specs=[pl.BlockSpec(memory_space=pltpu.MemorySpace.VMEM) for _ in operands],
        out_specs=pl.BlockSpec(memory_space=pltpu.MemorySpace.VMEM),
    )(*operands)


# ----------------------------- host-side glue (tiny) ----------------------------

def im2col_nhwc(x, kh, kw, stride, pad):
    """x: (N,H,W,C) -> (N*Ho*Wo, kh*kw*C); columns ordered (kh, kw, c), c fastest."""
    N, H, W, C = x.shape
    Ho = (H + 2 * pad - kh) // stride + 1
    Wo = (W + 2 * pad - kw) // stride + 1
    xp = jnp.pad(x, ((0, 0), (pad, pad), (pad, pad), (0, 0)))
    cols = []
    for i in range(kh):
        for j in range(kw):
            cols.append(xp[:, i:i + stride * Ho:stride, j:j + stride * Wo:stride, :])
    p = jnp.concatenate(cols, axis=-1)
    return p.reshape(N * Ho * Wo, kh * kw * C), Ho, Wo


def _pad_vec(v, cpad, fill):
    return jnp.pad(v, (0, cpad - v.shape[0]),
                   constant_values=fill).reshape(1, cpad).astype(jnp.float32)


def _gather_matrices(n):
    """0/1 row-gather matrices implementing the in-kernel im2col for conv2/conv3."""
    # conv2: input 14x14 (conv1 output), k=4, s=2, p=1 -> 7x7
    g2 = np.zeros((16, n * 49, n * 196), np.float32)
    for i in range(4):
        for j in range(4):
            t = i * 4 + j
            for b in range(n):
                for oh in range(7):
                    for ow in range(7):
                        r, c = 2 * oh + i - 1, 2 * ow + j - 1
                        if 0 <= r < 14 and 0 <= c < 14:
                            g2[t, (b * 7 + oh) * 7 + ow, (b * 14 + r) * 14 + c] = 1.0
    # conv3: input 7x7 (conv2 output), k=3, s=2, p=1 -> 4x4
    g3 = np.zeros((9, n * 16, n * 49), np.float32)
    for i in range(3):
        for j in range(3):
            t = i * 3 + j
            for b in range(n):
                for oh in range(4):
                    for ow in range(4):
                        r, c = 2 * oh + i - 1, 2 * ow + j - 1
                        if 0 <= r < 7 and 0 <= c < 7:
                            g3[t, (b * 4 + oh) * 4 + ow, (b * 7 + r) * 7 + c] = 1.0
    return jnp.asarray(g2, jnp.bfloat16), jnp.asarray(g3, jnp.bfloat16)


def prepare_params(params, batch):
    """One-time weight reordering / padding + gather-matrix construction."""
    # conv1: OIHW (28,1,4,4) -> (16, 128)
    w1 = jnp.transpose(params["w1"], (2, 3, 1, 0)).reshape(16, 28)
    w1 = jnp.pad(w1, ((0, 0), (0, CPAD - 28))).astype(jnp.bfloat16)
    # conv2: per-tap (128, 128) matrices, tap index t = i*4 + j
    w2 = jnp.transpose(params["w2"], (2, 3, 1, 0))                    # (4,4,28,56)
    w2 = jnp.pad(w2, ((0, 0), (0, 0), (0, CPAD - 28), (0, CPAD - 56)))
    w2 = w2.reshape(16, CPAD, CPAD).astype(jnp.bfloat16)
    # conv3: per-tap (128, 128), tap index t = i*3 + j
    w3 = jnp.transpose(params["w3"], (2, 3, 1, 0))                    # (3,3,56,112)
    w3 = jnp.pad(w3, ((0, 0), (0, 0), (0, CPAD - 56), (0, CPAD - 112)))
    w3 = w3.reshape(9, CPAD, CPAD).astype(jnp.bfloat16)
    # conv4: (1,112,4,4) -> (16, 128) f32, row index = h*4 + w
    w4 = jnp.pad(params["w4"], ((0, 0), (0, CPAD - 112), (0, 0), (0, 0)))
    w4 = jnp.transpose(w4, (0, 2, 3, 1)).reshape(16, CPAD).astype(jnp.float32)

    g2, g3 = _gather_matrices(batch)
    return dict(
        w1=w1, w2=w2, w3=w3, w4=w4, g2=g2, g3=g3,
        gamma2=_pad_vec(params["g2"], CPAD, 1.0), beta2=_pad_vec(params["b2"], CPAD, 0.0),
        gamma3=_pad_vec(params["g3"], CPAD, 1.0), beta3=_pad_vec(params["b3"], CPAD, 0.0),
    )


# ----------------------------- model ---------------------------------------

def init_params(key, nc=1, ndf=28):
    ks = jax.random.split(key, 4)
    w1 = 0.02 * jax.random.normal(ks[0], (ndf, nc, 4, 4), jnp.float32)
    w2 = 0.02 * jax.random.normal(ks[1], (ndf * 2, ndf, 4, 4), jnp.float32)
    w3 = 0.02 * jax.random.normal(ks[2], (ndf * 4, ndf * 2, 3, 3), jnp.float32)
    w4 = 0.02 * jax.random.normal(ks[3], (1, ndf * 4, 4, 4), jnp.float32)
    g2 = jnp.ones((ndf * 2,), jnp.float32); b2 = jnp.zeros((ndf * 2,), jnp.float32)
    g3 = jnp.ones((ndf * 4,), jnp.float32); b3 = jnp.zeros((ndf * 4,), jnp.float32)
    return dict(w1=w1, w2=w2, w3=w3, w4=w4, g2=g2, b2=b2, g3=g3, b3=b3)


def discriminator_forward(prep, x_nchw):
    n = x_nchw.shape[0]
    x = jnp.transpose(x_nchw, (0, 2, 3, 1)).astype(jnp.bfloat16)   # NHWC bf16
    p1, _, _ = im2col_nhwc(x, 4, 4, 2, 1)                          # (n*196, 16)  (tiny)
    out = discriminator_pallas(prep, p1, n)                        # (n, 128) f32
    # output.view(-1, 1).squeeze(1) -> (n,); result was broadcast across lanes.
    return out[:, 0]


# ----------------------------- pure-JAX reference ---------------------------

def reference_forward(params, x_nchw):
    def conv(x, w, stride, pad):
        return jax.lax.conv_general_dilated(
            x, w, window_strides=(stride, stride),
            padding=[(pad, pad), (pad, pad)],
            dimension_numbers=("NCHW", "OIHW", "NCHW"),
            precision=jax.lax.Precision.HIGHEST)

    def bn(x, g, b):
        mean = jnp.mean(x, axis=(0, 2, 3), keepdims=True)
        var = jnp.mean(jnp.square(x - mean), axis=(0, 2, 3), keepdims=True)
        return (x - mean) * jax.lax.rsqrt(var + EPS) * g.reshape(1, -1, 1, 1) \
            + b.reshape(1, -1, 1, 1)

    lrelu = lambda v: jnp.where(v > 0, v, SLOPE * v)
    y = lrelu(conv(x_nchw, params["w1"], 2, 1))
    y = lrelu(bn(conv(y, params["w2"], 2, 1), params["g2"], params["b2"]))
    y = lrelu(bn(conv(y, params["w3"], 2, 1), params["g3"], params["b3"]))
    y = jax.nn.sigmoid(conv(y, params["w4"], 1, 0))
    return y.reshape(-1)


# ----------------------------- main ----------------------------------------

if __name__ == "__main__":
    key = jax.random.PRNGKey(0)
    kx, kp = jax.random.split(key)

    nc, ndf, batch = 1, 28, 2
    # MNIST-shaped input (N, C, H, W) = (2, 1, 28, 28) -- required by the final
    # 4x4 valid conv of the architecture.
    x = jax.random.normal(kx, (batch, nc, 28, 28), jnp.float32)
    params = init_params(kp, nc=nc, ndf=ndf)
    prep = prepare_params(params, batch)

    fwd = jax.jit(discriminator_forward)
    out = jax.block_until_ready(fwd(prep, x))

    assert out.shape == (batch,), out.shape
    assert bool(jnp.all((out >= 0.0) & (out <= 1.0)))          # sigmoid range sanity

    # Loose tolerance: inter-layer activations / MXU operands are bf16 in the Pallas path.
    ref = jax.block_until_ready(reference_forward(params, x))
    max_err = float(jnp.max(jnp.abs(out - ref)))
    assert max_err < 5e-2, f"max |pallas - reference| = {max_err}"

    print("KERNEL_OK")
</pallas_src>

<mosaic_0001>
module attributes {stable_mosaic.version = 11 : i64} {
  func.func @_disc_kernel(%arg0: memref<392x16xbf16, #tpu.memory_space<vmem>>, %arg1: memref<16x128xbf16, #tpu.memory_space<vmem>>, %arg2: memref<16x98x392xbf16, #tpu.memory_space<vmem>>, %arg3: memref<16x128x128xbf16, #tpu.memory_space<vmem>>, %arg4: memref<1x128xf32, #tpu.memory_space<vmem>>, %arg5: memref<1x128xf32, #tpu.memory_space<vmem>>, %arg6: memref<9x32x98xbf16, #tpu.memory_space<vmem>>, %arg7: memref<9x128x128xbf16, #tpu.memory_space<vmem>>, %arg8: memref<1x128xf32, #tpu.memory_space<vmem>>, %arg9: memref<1x128xf32, #tpu.memory_space<vmem>>, %arg10: memref<16x128xf32, #tpu.memory_space<vmem>>, %arg11: memref<2x128xf32, #tpu.memory_space<vmem>>) attributes {dimension_semantics = [], scalar_prefetch = 0 : i64, scratch_operands = 0 : i64, tpu.core_type = #tpu.core_type<tc>} {
    %c0 = arith.constant 0 : index
    %c0_0 = arith.constant 0 : index
    %0 = vector.load %arg0[%c0, %c0_0] : memref<392x16xbf16, #tpu.memory_space<vmem>>, vector<392x16xbf16>
    %c0_1 = arith.constant 0 : index
    %c0_2 = arith.constant 0 : index
    %1 = vector.load %arg1[%c0_1, %c0_2] : memref<16x128xbf16, #tpu.memory_space<vmem>>, vector<16x128xbf16>
    %cst = arith.constant dense<0.000000e+00> : vector<392x128xf32>
    %2 = tpu.matmul %0, %1, %cst {dimension_numbers = #tpu.dot_dimension_numbers<[1], [0], [0], [1], [0, 0, 1, 1], [], []>} : vector<392x16xbf16>, vector<16x128xbf16>, vector<392x128xf32> -> vector<392x128xf32>
    %cst_3 = arith.constant 0.000000e+00 : f32
    %3 = vector.broadcast %cst_3 : f32 to vector<392x128xf32>
    %4 = arith.cmpf ogt, %2, %3 : vector<392x128xf32>
    %cst_4 = arith.constant 2.000000e-01 : f32
    %5 = vector.broadcast %cst_4 : f32 to vector<392x128xf32>
    %6 = arith.mulf %5, %2 : vector<392x128xf32>
    %7 = arith.select %4, %2, %6 : vector<392x128xi1>, vector<392x128xf32>
    %8 = arith.truncf %7 : vector<392x128xf32> to vector<392x128xbf16>
    %cst_5 = arith.constant 0.000000e+00 : f32
    %9 = vector.broadcast %cst_5 : f32 to vector<98x128xf32>
    %c0_6 = arith.constant 0 : index
    %c0_7 = arith.constant 0 : index
    %c0_8 = arith.constant 0 : index
    %10 = vector.load %arg2[%c0_6, %c0_7, %c0_8] : memref<16x98x392xbf16, #tpu.memory_space<vmem>>, vector<1x98x392xbf16>
    %11 = vector.shape_cast %10 : vector<1x98x392xbf16> to vector<98x392xbf16>
    %cst_9 = arith.constant dense<0.000000e+00> : vector<98x128xf32>
    %12 = tpu.matmul %11, %8, %cst_9 {dimension_numbers = #tpu.dot_dimension_numbers<[1], [0], [0], [1], [0, 0, 1, 1], [], []>} : vector<98x392xbf16>, vector<392x128xbf16>, vector<98x128xf32> -> vector<98x128xf32>
    %13 = arith.truncf %12 : vector<98x128xf32> to vector<98x128xbf16>
    %c0_10 = arith.constant 0 : index
    %c0_11 = arith.constant 0 : index
    %c0_12 = arith.constant 0 : index
    %14 = vector.load %arg3[%c0_10, %c0_11, %c0_12] : memref<16x128x128xbf16, #tpu.memory_space<vmem>>, vector<1x128x128xbf16>
    %15 = vector.shape_cast %14 : vector<1x128x128xbf16> to vector<128x128xbf16>
    %cst_13 = arith.constant dense<0.000000e+00> : vector<98x128xf32>
    %16 = tpu.matmul %13, %15, %cst_13 {dimension_numbers = #tpu.dot_dimension_numbers<[1], [0], [0], [1], [0, 0, 1, 1], [], []>} : vector<98x128xbf16>, vector<128x128xbf16>, vector<98x128xf32> -> vector<98x128xf32>
    %17 = arith.addf %9, %16 : vector<98x128xf32>
    %c1 = arith.constant 1 : index
    %c0_14 = arith.constant 0 : index
    %c0_15 = arith.constant 0 : index
    %18 = vector.load %arg2[%c1, %c0_14, %c0_15] : memref<16x98x392xbf16, #tpu.memory_space<vmem>>, vector<1x98x392xbf16>
    %19 = vector.shape_cast %18 : vector<1x98x392xbf16> to vector<98x392xbf16>
    %cst_16 = arith.constant dense<0.000000e+00> : vector<98x128xf32>
    %20 = tpu.matmul %19, %8, %cst_16 {dimension_numbers = #tpu.dot_dimension_numbers<[1], [0], [0], [1], [0, 0, 1, 1], [], []>} : vector<98x392xbf16>, vector<392x128xbf16>, vector<98x128xf32> -> vector<98x128xf32>
    %21 = arith.truncf %20 : vector<98x128xf32> to vector<98x128xbf16>
    %c1_17 = arith.constant 1 : index
    %c0_18 = arith.constant 0 : index
    %c0_19 = arith.constant 0 : index
    %22 = vector.load %arg3[%c1_17, %c0_18, %c0_19] : memref<16x128x128xbf16, #tpu.memory_space<vmem>>, vector<1x128x128xbf16>
    %23 = vector.shape_cast %22 : vector<1x128x128xbf16> to vector<128x128xbf16>
    %cst_20 = arith.constant dense<0.000000e+00> : vector<98x128xf32>
    %24 = tpu.matmul %21, %23, %cst_20 {dimension_numbers = #tpu.dot_dimension_numbers<[1], [0], [0], [1], [0, 0, 1, 1], [], []>} : vector<98x128xbf16>, vector<128x128xbf16>, vector<98x128xf32> -> vector<98x128xf32>
    %25 = arith.addf %17, %24 : vector<98x128xf32>
    %c2 = arith.constant 2 : index
    %c0_21 = arith.constant 0 : index
    %c0_22 = arith.constant 0 : index
    %26 = vector.load %arg2[%c2, %c0_21, %c0_22] : memref<16x98x392xbf16, #tpu.memory_space<vmem>>, vector<1x98x392xbf16>
    %27 = vector.shape_cast %26 : vector<1x98x392xbf16> to vector<98x392xbf16>
    %cst_23 = arith.constant dense<0.000000e+00> : vector<98x128xf32>
    %28 = tpu.matmul %27, %8, %cst_23 {dimension_numbers = #tpu.dot_dimension_numbers<[1], [0], [0], [1], [0, 0, 1, 1], [], []>} : vector<98x392xbf16>, vector<392x128xbf16>, vector<98x128xf32> -> vector<98x128xf32>
    %29 = arith.truncf %28 : vector<98x128xf32> to vector<98x128xbf16>
    %c2_24 = arith.constant 2 : index
    %c0_25 = arith.constant 0 : index
    %c0_26 = arith.constant 0 : index
    %30 = vector.load %arg3[%c2_24, %c0_25, %c0_26] : memref<16x128x128xbf16, #tpu.memory_space<vmem>>, vector<1x128x128xbf16>
    %31 = vector.shape_cast %30 : vector<1x128x128xbf16> to vector<128x128xbf16>
    %cst_27 = arith.constant dense<0.000000e+00> : vector<98x128xf32>
    %32 = tpu.matmul %29, %31, %cst_27 {dimension_numbers = #tpu.dot_dimension_numbers<[1], [0], [0], [1], [0, 0, 1, 1], [], []>} : vector<98x128xbf16>, vector<128x128xbf16>, vector<98x128xf32> -> vector<98x128xf32>
    %33 = arith.addf %25, %32 : vector<98x128xf32>
    %c3 = arith.constant 3 : index
    %c0_28 = arith.constant 0 : index
    %c0_29 = arith.constant 0 : index
    %34 = vector.load %arg2[%c3, %c0_28, %c0_29] : memref<16x98x392xbf16, #tpu.memory_space<vmem>>, vector<1x98x392xbf16>
    %35 = vector.shape_cast %34 : vector<1x98x392xbf16> to vector<98x392xbf16>
    %cst_30 = arith.constant dense<0.000000e+00> : vector<98x128xf32>
    %36 = tpu.matmul %35, %8, %cst_30 {dimension_numbers = #tpu.dot_dimension_numbers<[1], [0], [0], [1], [0, 0, 1, 1], [], []>} : vector<98x392xbf16>, vector<392x128xbf16>, vector<98x128xf32> -> vector<98x128xf32>
    %37 = arith.truncf %36 : vector<98x128xf32> to vector<98x128xbf16>
    %c3_31 = arith.constant 3 : index
    %c0_32 = arith.constant 0 : index
    %c0_33 = arith.constant 0 : index
    %38 = vector.load %arg3[%c3_31, %c0_32, %c0_33] : memref<16x128x128xbf16, #tpu.memory_space<vmem>>, vector<1x128x128xbf16>
    %39 = vector.shape_cast %38 : vector<1x128x128xbf16> to vector<128x128xbf16>
    %cst_34 = arith.constant dense<0.000000e+00> : vector<98x128xf32>
    %40 = tpu.matmul %37, %39, %cst_34 {dimension_numbers = #tpu.dot_dimension_numbers<[1], [0], [0], [1], [0, 0, 1, 1], [], []>} : vector<98x128xbf16>, vector<128x128xbf16>, vector<98x128xf32> -> vector<98x128xf32>
    %41 = arith.addf %33, %40 : vector<98x128xf32>
    %c4 = arith.constant 4 : index
    %c0_35 = arith.constant 0 : index
    %c0_36 = arith.constant 0 : index
    %42 = vector.load %arg2[%c4, %c0_35, %c0_36] : memref<16x98x392xbf16, #tpu.memory_space<vmem>>, vector<1x98x392xbf16>
    %43 = vector.shape_cast %42 : vector<1x98x392xbf16> to vector<98x392xbf16>
    %cst_37 = arith.constant dense<0.000000e+00> : vector<98x128xf32>
    %44 = tpu.matmul %43, %8, %cst_37 {dimension_numbers = #tpu.dot_dimension_numbers<[1], [0], [0], [1], [0, 0, 1, 1], [], []>} : vector<98x392xbf16>, vector<392x128xbf16>, vector<98x128xf32> -> vector<98x128xf32>
    %45 = arith.truncf %44 : vector<98x128xf32> to vector<98x128xbf16>
    %c4_38 = arith.constant 4 : index
    %c0_39 = arith.constant 0 : index
    %c0_40 = arith.constant 0 : index
    %46 = vector.load %arg3[%c4_38, %c0_39, %c0_40] : memref<16x128x128xbf16, #tpu.memory_space<vmem>>, vector<1x128x128xbf16>
    %47 = vector.shape_cast %46 : vector<1x128x128xbf16> to vector<128x128xbf16>
    %cst_41 = arith.constant dense<0.000000e+00> : vector<98x128xf32>
    %48 = tpu.matmul %45, %47, %cst_41 {dimension_numbers = #tpu.dot_dimension_numbers<[1], [0], [0], [1], [0, 0, 1, 1], [], []>} : vector<98x128xbf16>, vector<128x128xbf16>, vector<98x128xf32> -> vector<98x128xf32>
    %49 = arith.addf %41, %48 : vector<98x128xf32>
    %c5 = arith.constant 5 : index
    %c0_42 = arith.constant 0 : index
    %c0_43 = arith.constant 0 : index
    %50 = vector.load %arg2[%c5, %c0_42, %c0_43] : memref<16x98x392xbf16, #tpu.memory_space<vmem>>, vector<1x98x392xbf16>
    %51 = vector.shape_cast %50 : vector<1x98x392xbf16> to vector<98x392xbf16>
    %cst_44 = arith.constant dense<0.000000e+00> : vector<98x128xf32>
    %52 = tpu.matmul %51, %8, %cst_44 {dimension_numbers = #tpu.dot_dimension_numbers<[1], [0], [0], [1], [0, 0, 1, 1], [], []>} : vector<98x392xbf16>, vector<392x128xbf16>, vector<98x128xf32> -> vector<98x128xf32>
    %53 = arith.truncf %52 : vector<98x128xf32> to vector<98x128xbf16>
    %c5_45 = arith.constant 5 : index
    %c0_46 = arith.constant 0 : index
    %c0_47 = arith.constant 0 : index
    %54 = vector.load %arg3[%c5_45, %c0_46, %c0_47] : memref<16x128x128xbf16, #tpu.memory_space<vmem>>, vector<1x128x128xbf16>
    %55 = vector.shape_cast %54 : vector<1x128x128xbf16> to vector<128x128xbf16>
    %cst_48 = arith.constant dense<0.000000e+00> : vector<98x128xf32>
    %56 = tpu.matmul %53, %55, %cst_48 {dimension_numbers = #tpu.dot_dimension_numbers<[1], [0], [0], [1], [0, 0, 1, 1], [], []>} : vector<98x128xbf16>, vector<128x128xbf16>, vector<98x128xf32> -> vector<98x128xf32>
    %57 = arith.addf %49, %56 : vector<98x128xf32>
    %c6 = arith.constant 6 : index
    %c0_49 = arith.constant 0 : index
    %c0_50 = arith.constant 0 : index
    %58 = vector.load %arg2[%c6, %c0_49, %c0_50] : memref<16x98x392xbf16, #tpu.memory_space<vmem>>, vector<1x98x392xbf16>
    %59 = vector.shape_cast %58 : vector<1x98x392xbf16> to vector<98x392xbf16>
    %cst_51 = arith.constant dense<0.000000e+00> : vector<98x128xf32>
    %60 = tpu.matmul %59, %8, %cst_51 {dimension_numbers = #tpu.dot_dimension_numbers<[1], [0], [0], [1], [0, 0, 1, 1], [], []>} : vector<98x392xbf16>, vector<392x128xbf16>, vector<98x128xf32> -> vector<98x128xf32>
    %61 = arith.truncf %60 : vector<98x128xf32> to vector<98x128xbf16>
    %c6_52 = arith.constant 6 : index
    %c0_53 = arith.constant 0 : index
    %c0_54 = arith.constant 0 : index
    %62 = vector.load %arg3[%c6_52, %c0_53, %c0_54] : memref<16x128x128xbf16, #tpu.memory_space<vmem>>, vector<1x128x128xbf16>
    %63 = vector.shape_cast %62 : vector<1x128x128xbf16> to vector<128x128xbf16>
    %cst_55 = arith.constant dense<0.000000e+00> : vector<98x128xf32>
    %64 = tpu.matmul %61, %63, %cst_55 {dimension_numbers = #tpu.dot_dimension_numbers<[1], [0], [0], [1], [0, 0, 1, 1], [], []>} : vector<98x128xbf16>, vector<128x128xbf16>, vector<98x128xf32> -> vector<98x128xf32>
    %65 = arith.addf %57, %64 : vector<98x128xf32>
    %c7 = arith.constant 7 : index
    %c0_56 = arith.constant 0 : index
    %c0_57 = arith.constant 0 : index
    %66 = vector.load %arg2[%c7, %c0_56, %c0_57] : memref<16x98x392xbf16, #tpu.memory_space<vmem>>, vector<1x98x392xbf16>
    %67 = vector.shape_cast %66 : vector<1x98x392xbf16> to vector<98x392xbf16>
    %cst_58 = arith.constant dense<0.000000e+00> : vector<98x128xf32>
    %68 = tpu.matmul %67, %8, %cst_58 {dimension_numbers = #tpu.dot_dimension_numbers<[1], [0], [0], [1], [0, 0, 1, 1], [], []>} : vector<98x392xbf16>, vector<392x128xbf16>, vector<98x128xf32> -> vector<98x128xf32>
    %69 = arith.truncf %68 : vector<98x128xf32> to vector<98x128xbf16>
    %c7_59 = arith.constant 7 : index
    %c0_60 = arith.constant 0 : index
    %c0_61 = arith.constant 0 : index
    %70 = vector.load %arg3[%c7_59, %c0_60, %c0_61] : memref<16x128x128xbf16, #tpu.memory_space<vmem>>, vector<1x128x128xbf16>
    %71 = vector.shape_cast %70 : vector<1x128x128xbf16> to vector<128x128xbf16>
    %cst_62 = arith.constant dense<0.000000e+00> : vector<98x128xf32>
    %72 = tpu.matmul %69, %71, %cst_62 {dimension_numbers = #tpu.dot_dimension_numbers<[1], [0], [0], [1], [0, 0, 1, 1], [], []>} : vector<98x128xbf16>, vector<128x128xbf16>, vector<98x128xf32> -> vector<98x128xf32>
    %73 = arith.addf %65, %72 : vector<98x128xf32>
    %c8 = arith.constant 8 : index
    %c0_63 = arith.constant 0 : index
    %c0_64 = arith.constant 0 : index
    %74 = vector.load %arg2[%c8, %c0_63, %c0_64] : memref<16x98x392xbf16, #tpu.memory_space<vmem>>, vector<1x98x392xbf16>
    %75 = vector.shape_cast %74 : vector<1x98x392xbf16> to vector<98x392xbf16>
    %cst_65 = arith.constant dense<0.000000e+00> : vector<98x128xf32>
    %76 = tpu.matmul %75, %8, %cst_65 {dimension_numbers = #tpu.dot_dimension_numbers<[1], [0], [0], [1], [0, 0, 1, 1], [], []>} : vector<98x392xbf16>, vector<392x128xbf16>, vector<98x128xf32> -> vector<98x128xf32>
    %77 = arith.truncf %76 : vector<98x128xf32> to vector<98x128xbf16>
    %c8_66 = arith.constant 8 : index
    %c0_67 = arith.constant 0 : index
    %c0_68 = arith.constant 0 : index
    %78 = vector.load %arg3[%c8_66, %c0_67, %c0_68] : memref<16x128x128xbf16, #tpu.memory_space<vmem>>, vector<1x128x128xbf16>
    %79 = vector.shape_cast %78 : vector<1x128x128xbf16> to vector<128x128xbf16>
    %cst_69 = arith.constant dense<0.000000e+00> : vector<98x128xf32>
    %80 = tpu.matmul %77, %79, %cst_69 {dimension_numbers = #tpu.dot_dimension_numbers<[1], [0], [0], [1], [0, 0, 1, 1], [], []>} : vector<98x128xbf16>, vector<128x128xbf16>, vector<98x128xf32> -> vector<98x128xf32>
    %81 = arith.addf %73, %80 : vector<98x128xf32>
    %c9 = arith.constant 9 : index
    %c0_70 = arith.constant 0 : index
    %c0_71 = arith.constant 0 : index
    %82 = vector.load %arg2[%c9, %c0_70, %c0_71] : memref<16x98x392xbf16, #tpu.memory_space<vmem>>, vector<1x98x392xbf16>
    %83 = vector.shape_cast %82 : vector<1x98x392xbf16> to vector<98x392xbf16>
    %cst_72 = arith.constant dense<0.000000e+00> : vector<98x128xf32>
    %84 = tpu.matmul %83, %8, %cst_72 {dimension_numbers = #tpu.dot_dimension_numbers<[1], [0], [0], [1], [0, 0, 1, 1], [], []>} : vector<98x392xbf16>, vector<392x128xbf16>, vector<98x128xf32> -> vector<98x128xf32>
    %85 = arith.truncf %84 : vector<98x128xf32> to vector<98x128xbf16>
    %c9_73 = arith.constant 9 : index
    %c0_74 = arith.constant 0 : index
    %c0_75 = arith.constant 0 : index
    %86 = vector.load %arg3[%c9_73, %c0_74, %c0_75] : memref<16x128x128xbf16, #tpu.memory_space<vmem>>, vector<1x128x128xbf16>
    %87 = vector.shape_cast %86 : vector<1x128x128xbf16> to vector<128x128xbf16>
    %cst_76 = arith.constant dense<0.000000e+00> : vector<98x128xf32>
    %88 = tpu.matmul %85, %87, %cst_76 {dimension_numbers = #tpu.dot_dimension_numbers<[1], [0], [0], [1], [0, 0, 1, 1], [], []>} : vector<98x128xbf16>, vector<128x128xbf16>, vector<98x128xf32> -> vector<98x128xf32>
    %89 = arith.addf %81, %88 : vector<98x128xf32>
    %c10 = arith.constant 10 : index
    %c0_77 = arith.constant 0 : index
    %c0_78 = arith.constant 0 : index
    %90 = vector.load %arg2[%c10, %c0_77, %c0_78] : memref<16x98x392xbf16, #tpu.memory_space<vmem>>, vector<1x98x392xbf16>
    %91 = vector.shape_cast %90 : vector<1x98x392xbf16> to vector<98x392xbf16>
    %cst_79 = arith.constant dense<0.000000e+00> : vector<98x128xf32>
    %92 = tpu.matmul %91, %8, %cst_79 {dimension_numbers = #tpu.dot_dimension_numbers<[1], [0], [0], [1], [0, 0, 1, 1], [], []>} : vector<98x392xbf16>, vector<392x128xbf16>, vector<98x128xf32> -> vector<98x128xf32>
    %93 = arith.truncf %92 : vector<98x128xf32> to vector<98x128xbf16>
    %c10_80 = arith.constant 10 : index
    %c0_81 = arith.constant 0 : index
    %c0_82 = arith.constant 0 : index
    %94 = vector.load %arg3[%c10_80, %c0_81, %c0_82] : memref<16x128x128xbf16, #tpu.memory_space<vmem>>, vector<1x128x128xbf16>
    %95 = vector.shape_cast %94 : vector<1x128x128xbf16> to vector<128x128xbf16>
    %cst_83 = arith.constant dense<0.000000e+00> : vector<98x128xf32>
    %96 = tpu.matmul %93, %95, %cst_83 {dimension_numbers = #tpu.dot_dimension_numbers<[1], [0], [0], [1], [0, 0, 1, 1], [], []>} : vector<98x128xbf16>, vector<128x128xbf16>, vector<98x128xf32> -> vector<98x128xf32>
    %97 = arith.addf %89, %96 : vector<98x128xf32>
    %c11 = arith.constant 11 : index
    %c0_84 = arith.constant 0 : index
    %c0_85 = arith.constant 0 : index
    %98 = vector.load %arg2[%c11, %c0_84, %c0_85] : memref<16x98x392xbf16, #tpu.memory_space<vmem>>, vector<1x98x392xbf16>
    %99 = vector.shape_cast %98 : vector<1x98x392xbf16> to vector<98x392xbf16>
    %cst_86 = arith.constant dense<0.000000e+00> : vector<98x128xf32>
    %100 = tpu.matmul %99, %8, %cst_86 {dimension_numbers = #tpu.dot_dimension_numbers<[1], [0], [0], [1], [0, 0, 1, 1], [], []>} : vector<98x392xbf16>, vector<392x128xbf16>, vector<98x128xf32> -> vector<98x128xf32>
    %101 = arith.truncf %100 : vector<98x128xf32> to vector<98x128xbf16>
    %c11_87 = arith.constant 11 : index
    %c0_88 = arith.constant 0 : index
    %c0_89 = arith.constant 0 : index
    %102 = vector.load %arg3[%c11_87, %c0_88, %c0_89] : memref<16x128x128xbf16, #tpu.memory_space<vmem>>, vector<1x128x128xbf16>
    %103 = vector.shape_cast %102 : vector<1x128x128xbf16> to vector<128x128xbf16>
    %cst_90 = arith.constant dense<0.000000e+00> : vector<98x128xf32>
    %104 = tpu.matmul %101, %103, %cst_90 {dimension_numbers = #tpu.dot_dimension_numbers<[1], [0], [0], [1], [0, 0, 1, 1], [], []>} : vector<98x128xbf16>, vector<128x128xbf16>, vector<98x128xf32> -> vector<98x128xf32>
    %105 = arith.addf %97, %104 : vector<98x128xf32>
    %c12 = arith.constant 12 : index
    %c0_91 = arith.constant 0 : index
    %c0_92 = arith.constant 0 : index
    %106 = vector.load %arg2[%c12, %c0_91, %c0_92] : memref<16x98x392xbf16, #tpu.memory_space<vmem>>, vector<1x98x392xbf16>
    %107 = vector.shape_cast %106 : vector<1x98x392xbf16> to vector<98x392xbf16>
    %cst_93 = arith.constant dense<0.000000e+00> : vector<98x128xf32>
    %108 = tpu.matmul %107, %8, %cst_93 {dimension_numbers = #tpu.dot_dimension_numbers<[1], [0], [0], [1], [0, 0, 1, 1], [], []>} : vector<98x392xbf16>, vector<392x128xbf16>, vector<98x128xf32> -> vector<98x128xf32>
    %109 = arith.truncf %108 : vector<98x128xf32> to vector<98x128xbf16>
    %c12_94 = arith.constant 12 : index
    %c0_95 = arith.constant 0 : index
    %c0_96 = arith.constant 0 : index
    %110 = vector.load %arg3[%c12_94, %c0_95, %c0_96] : memref<16x128x128xbf16, #tpu.memory_space<vmem>>, vector<1x128x128xbf16>
    %111 = vector.shape_cast %110 : vector<1x128x128xbf16> to vector<128x128xbf16>
    %cst_97 = arith.constant dense<0.000000e+00> : vector<98x128xf32>
    %112 = tpu.matmul %109, %111, %cst_97 {dimension_numbers = #tpu.dot_dimension_numbers<[1], [0], [0], [1], [0, 0, 1, 1], [], []>} : vector<98x128xbf16>, vector<128x128xbf16>, vector<98x128xf32> -> vector<98x128xf32>
    %113 = arith.addf %105, %112 : vector<98x128xf32>
    %c13 = arith.constant 13 : index
    %c0_98 = arith.constant 0 : index
    %c0_99 = arith.constant 0 : index
    %114 = vector.load %arg2[%c13, %c0_98, %c0_99] : memref<16x98x392xbf16, #tpu.memory_space<vmem>>, vector<1x98x392xbf16>
    %115 = vector.shape_cast %114 : vector<1x98x392xbf16> to vector<98x392xbf16>
    %cst_100 = arith.constant dense<0.000000e+00> : vector<98x128xf32>
    %116 = tpu.matmul %115, %8, %cst_100 {dimension_numbers = #tpu.dot_dimension_numbers<[1], [0], [0], [1], [0, 0, 1, 1], [], []>} : vector<98x392xbf16>, vector<392x128xbf16>, vector<98x128xf32> -> vector<98x128xf32>
    %117 = arith.truncf %116 : vector<98x128xf32> to vector<98x128xbf16>
    %c13_101 = arith.constant 13 : index
    %c0_102 = arith.constant 0 : index
    %c0_103 = arith.constant 0 : index
    %118 = vector.load %arg3[%c13_101, %c0_102, %c0_103] : memref<16x128x128xbf16, #tpu.memory_space<vmem>>, vector<1x128x128xbf16>
    %119 = vector.shape_cast %118 : vector<1x128x128xbf16> to vector<128x128xbf16>
    %cst_104 = arith.constant dense<0.000000e+00> : vector<98x128xf32>
    %120 = tpu.matmul %117, %119, %cst_104 {dimension_numbers = #tpu.dot_dimension_numbers<[1], [0], [0], [1], [0, 0, 1, 1], [], []>} : vector<98x128xbf16>, vector<128x128xbf16>, vector<98x128xf32> -> vector<98x128xf32>
    %121 = arith.addf %113, %120 : vector<98x128xf32>
    %c14 = arith.constant 14 : index
    %c0_105 = arith.constant 0 : index
    %c0_106 = arith.constant 0 : index
    %122 = vector.load %arg2[%c14, %c0_105, %c0_106] : memref<16x98x392xbf16, #tpu.memory_space<vmem>>, vector<1x98x392xbf16>
    %123 = vector.shape_cast %122 : vector<1x98x392xbf16> to vector<98x392xbf16>
    %cst_107 = arith.constant dense<0.000000e+00> : vector<98x128xf32>
    %124 = tpu.matmul %123, %8, %cst_107 {dimension_numbers = #tpu.dot_dimension_numbers<[1], [0], [0], [1], [0, 0, 1, 1], [], []>} : vector<98x392xbf16>, vector<392x128xbf16>, vector<98x128xf32> -> vector<98x128xf32>
    %125 = arith.truncf %124 : vector<98x128xf32> to vector<98x128xbf16>
    %c14_108 = arith.constant 14 : index
    %c0_109 = arith.constant 0 : index
    %c0_110 = arith.constant 0 : index
    %126 = vector.load %arg3[%c14_108, %c0_109, %c0_110] : memref<16x128x128xbf16, #tpu.memory_space<vmem>>, vector<1x128x128xbf16>
    %127 = vector.shape_cast %126 : vector<1x128x128xbf16> to vector<128x128xbf16>
    %cst_111 = arith.constant dense<0.000000e+00> : vector<98x128xf32>
    %128 = tpu.matmul %125, %127, %cst_111 {dimension_numbers = #tpu.dot_dimension_numbers<[1], [0], [0], [1], [0, 0, 1, 1], [], []>} : vector<98x128xbf16>, vector<128x128xbf16>, vector<98x128xf32> -> vector<98x128xf32>
    %129 = arith.addf %121, %128 : vector<98x128xf32>
    %c15 = arith.constant 15 : index
    %c0_112 = arith.constant 0 : index
    %c0_113 = arith.constant 0 : index
    %130 = vector.load %arg2[%c15, %c0_112, %c0_113] : memref<16x98x392xbf16, #tpu.memory_space<vmem>>, vector<1x98x392xbf16>
    %131 = vector.shape_cast %130 : vector<1x98x392xbf16> to vector<98x392xbf16>
    %cst_114 = arith.constant dense<0.000000e+00> : vector<98x128xf32>
    %132 = tpu.matmul %131, %8, %cst_114 {dimension_numbers = #tpu.dot_dimension_numbers<[1], [0], [0], [1], [0, 0, 1, 1], [], []>} : vector<98x392xbf16>, vector<392x128xbf16>, vector<98x128xf32> -> vector<98x128xf32>
    %133 = arith.truncf %132 : vector<98x128xf32> to vector<98x128xbf16>
    %c15_115 = arith.constant 15 : index
    %c0_116 = arith.constant 0 : index
    %c0_117 = arith.constant 0 : index
    %134 = vector.load %arg3[%c15_115, %c0_116, %c0_117] : memref<16x128x128xbf16, #tpu.memory_space<vmem>>, vector<1x128x128xbf16>
    %135 = vector.shape_cast %134 : vector<1x128x128xbf16> to vector<128x128xbf16>
    %cst_118 = arith.constant dense<0.000000e+00> : vector<98x128xf32>
    %136 = tpu.matmul %133, %135, %cst_118 {dimension_numbers = #tpu.dot_dimension_numbers<[1], [0], [0], [1], [0, 0, 1, 1], [], []>} : vector<98x128xbf16>, vector<128x128xbf16>, vector<98x128xf32> -> vector<98x128xf32>
    %137 = arith.addf %129, %136 : vector<98x128xf32>
    %cst_119 = arith.constant dense<0.000000e+00> : vector<128xf32>
    %138 = vector.multi_reduction <add>, %137, %cst_119 [0] : vector<98x128xf32> to vector<128xf32>
    %139 = vector.shape_cast %138 : vector<128xf32> to vector<1x128xf32>
    %cst_120 = arith.constant 9.800000e+01 : f32
    %140 = vector.broadcast %cst_120 : f32 to vector<1x128xf32>
    %141 = arith.divf %139, %140 : vector<1x128xf32>
    %142 = vector.broadcast %141 : vector<1x128xf32> to vector<98x128xf32>
    %143 = arith.subf %137, %142 : vector<98x128xf32>
    %144 = arith.mulf %143, %143 : vector<98x128xf32>
    %cst_121 = arith.constant dense<0.000000e+00> : vector<128xf32>
    %145 = vector.multi_reduction <add>, %144, %cst_121 [0] : vector<98x128xf32> to vector<128xf32>
    %146 = vector.shape_cast %145 : vector<128xf32> to vector<1x128xf32>
    %cst_122 = arith.constant 9.800000e+01 : f32
    %147 = vector.broadcast %cst_122 : f32 to vector<1x128xf32>
    %148 = arith.divf %146, %147 : vector<1x128xf32>
    %149 = vector.broadcast %141 : vector<1x128xf32> to vector<98x128xf32>
    %150 = arith.subf %137, %149 : vector<98x128xf32>
    %cst_123 = arith.constant 9.99999974E-6 : f32
    %151 = vector.broadcast %cst_123 : f32 to vector<1x128xf32>
    %152 = arith.addf %148, %151 : vector<1x128xf32>
    %153 = math.rsqrt %152 : vector<1x128xf32>
    %154 = vector.broadcast %153 : vector<1x128xf32> to vector<98x128xf32>
    %155 = arith.mulf %150, %154 : vector<98x128xf32>
    %c0_124 = arith.constant 0 : index
    %c0_125 = arith.constant 0 : index
    %156 = vector.load %arg4[%c0_124, %c0_125] : memref<1x128xf32, #tpu.memory_space<vmem>>, vector<1x128xf32>
    %157 = vector.broadcast %156 : vector<1x128xf32> to vector<98x128xf32>
    %158 = arith.mulf %155, %157 : vector<98x128xf32>
    %c0_126 = arith.constant 0 : index
    %c0_127 = arith.constant 0 : index
    %159 = vector.load %arg5[%c0_126, %c0_127] : memref<1x128xf32, #tpu.memory_space<vmem>>, vector<1x128xf32>
    %160 = vector.broadcast %159 : vector<1x128xf32> to vector<98x128xf32>
    %161 = arith.addf %158, %160 : vector<98x128xf32>
    %cst_128 = arith.constant 0.000000e+00 : f32
    %162 = vector.broadcast %cst_128 : f32 to vector<98x128xf32>
    %163 = arith.cmpf ogt, %161, %162 : vector<98x128xf32>
    %cst_129 = arith.constant 2.000000e-01 : f32
    %164 = vector.broadcast %cst_129 : f32 to vector<98x128xf32>
    %165 = arith.mulf %164, %161 : vector<98x128xf32>
    %166 = arith.select %163, %161, %165 : vector<98x128xi1>, vector<98x128xf32>
    %167 = arith.truncf %166 : vector<98x128xf32> to vector<98x128xbf16>
    %cst_130 = arith.constant 0.000000e+00 : f32
    %168 = vector.broadcast %cst_130 : f32 to vector<32x128xf32>
    %c0_131 = arith.constant 0 : index
    %c0_132 = arith.constant 0 : index
    %c0_133 = arith.constant 0 : index
    %169 = vector.load %arg6[%c0_131, %c0_132, %c0_133] : memref<9x32x98xbf16, #tpu.memory_space<vmem>>, vector<1x32x98xbf16>
    %170 = vector.shape_cast %169 : vector<1x32x98xbf16> to vector<32x98xbf16>
    %cst_134 = arith.constant dense<0.000000e+00> : vector<32x128xf32>
    %171 = tpu.matmul %170, %167, %cst_134 {dimension_numbers = #tpu.dot_dimension_numbers<[1], [0], [0], [1], [0, 0, 1, 1], [], []>} : vector<32x98xbf16>, vector<98x128xbf16>, vector<32x128xf32> -> vector<32x128xf32>
    %172 = arith.truncf %171 : vector<32x128xf32> to vector<32x128xbf16>
    %c0_135 = arith.constant 0 : index
    %c0_136 = arith.constant 0 : index
    %c0_137 = arith.constant 0 : index
    %173 = vector.load %arg7[%c0_135, %c0_136, %c0_137] : memref<9x128x128xbf16, #tpu.memory_space<vmem>>, vector<1x128x128xbf16>
    %174 = vector.shape_cast %173 : vector<1x128x128xbf16> to vector<128x128xbf16>
    %cst_138 = arith.constant dense<0.000000e+00> : vector<32x128xf32>
    %175 = tpu.matmul %172, %174, %cst_138 {dimension_numbers = #tpu.dot_dimension_numbers<[1], [0], [0], [1], [0, 0, 1, 1], [], []>} : vector<32x128xbf16>, vector<128x128xbf16>, vector<32x128xf32> -> vector<32x128xf32>
    %176 = arith.addf %168, %175 : vector<32x128xf32>
    %c1_139 = arith.constant 1 : index
    %c0_140 = arith.constant 0 : index
    %c0_141 = arith.constant 0 : index
    %177 = vector.load %arg6[%c1_139, %c0_140, %c0_141] : memref<9x32x98xbf16, #tpu.memory_space<vmem>>, vector<1x32x98xbf16>
    %178 = vector.shape_cast %177 : vector<1x32x98xbf16> to vector<32x98xbf16>
    %cst_142 = arith.constant dense<0.000000e+00> : vector<32x128xf32>
    %179 = tpu.matmul %178, %167, %cst_142 {dimension_numbers = #tpu.dot_dimension_numbers<[1], [0], [0], [1], [0, 0, 1, 1], [], []>} : vector<32x98xbf16>, vector<98x128xbf16>, vector<32x128xf32> -> vector<32x128xf32>
    %180 = arith.truncf %179 : vector<32x128xf32> to vector<32x128xbf16>
    %c1_143 = arith.constant 1 : index
    %c0_144 = arith.constant 0 : index
    %c0_145 = arith.constant 0 : index
    %181 = vector.load %arg7[%c1_143, %c0_144, %c0_145] : memref<9x128x128xbf16, #tpu.memory_space<vmem>>, vector<1x128x128xbf16>
    %182 = vector.shape_cast %181 : vector<1x128x128xbf16> to vector<128x128xbf16>
    %cst_146 = arith.constant dense<0.000000e+00> : vector<32x128xf32>
    %183 = tpu.matmul %180, %182, %cst_146 {dimension_numbers = #tpu.dot_dimension_numbers<[1], [0], [0], [1], [0, 0, 1, 1], [], []>} : vector<32x128xbf16>, vector<128x128xbf16>, vector<32x128xf32> -> vector<32x128xf32>
    %184 = arith.addf %176, %183 : vector<32x128xf32>
    %c2_147 = arith.constant 2 : index
    %c0_148 = arith.constant 0 : index
    %c0_149 = arith.constant 0 : index
    %185 = vector.load %arg6[%c2_147, %c0_148, %c0_149] : memref<9x32x98xbf16, #tpu.memory_space<vmem>>, vector<1x32x98xbf16>
    %186 = vector.shape_cast %185 : vector<1x32x98xbf16> to vector<32x98xbf16>
    %cst_150 = arith.constant dense<0.000000e+00> : vector<32x128xf32>
    %187 = tpu.matmul %186, %167, %cst_150 {dimension_numbers = #tpu.dot_dimension_numbers<[1], [0], [0], [1], [0, 0, 1, 1], [], []>} : vector<32x98xbf16>, vector<98x128xbf16>, vector<32x128xf32> -> vector<32x128xf32>
    %188 = arith.truncf %187 : vector<32x128xf32> to vector<32x128xbf16>
    %c2_151 = arith.constant 2 : index
    %c0_152 = arith.constant 0 : index
    %c0_153 = arith.constant 0 : index
    %189 = vector.load %arg7[%c2_151, %c0_152, %c0_153] : memref<9x128x128xbf16, #tpu.memory_space<vmem>>, vector<1x128x128xbf16>
    %190 = vector.shape_cast %189 : vector<1x128x128xbf16> to vector<128x128xbf16>
    %cst_154 = arith.constant dense<0.000000e+00> : vector<32x128xf32>
    %191 = tpu.matmul %188, %190, %cst_154 {dimension_numbers = #tpu.dot_dimension_numbers<[1], [0], [0], [1], [0, 0, 1, 1], [], []>} : vector<32x128xbf16>, vector<128x128xbf16>, vector<32x128xf32> -> vector<32x128xf32>
    %192 = arith.addf %184, %191 : vector<32x128xf32>
    %c3_155 = arith.constant 3 : index
    %c0_156 = arith.constant 0 : index
    %c0_157 = arith.constant 0 : index
    %193 = vector.load %arg6[%c3_155, %c0_156, %c0_157] : memref<9x32x98xbf16, #tpu.memory_space<vmem>>, vector<1x32x98xbf16>
    %194 = vector.shape_cast %193 : vector<1x32x98xbf16> to vector<32x98xbf16>
    %cst_158 = arith.constant dense<0.000000e+00> : vector<32x128xf32>
    %195 = tpu.matmul %194, %167, %cst_158 {dimension_numbers = #tpu.dot_dimension_numbers<[1], [0], [0], [1], [0, 0, 1, 1], [], []>} : vector<32x98xbf16>, vector<98x128xbf16>, vector<32x128xf32> -> vector<32x128xf32>
    %196 = arith.truncf %195 : vector<32x128xf32> to vector<32x128xbf16>
    %c3_159 = arith.constant 3 : index
    %c0_160 = arith.constant 0 : index
    %c0_161 = arith.constant 0 : index
    %197 = vector.load %arg7[%c3_159, %c0_160, %c0_161] : memref<9x128x128xbf16, #tpu.memory_space<vmem>>, vector<1x128x128xbf16>
    %198 = vector.shape_cast %197 : vector<1x128x128xbf16> to vector<128x128xbf16>
    %cst_162 = arith.constant dense<0.000000e+00> : vector<32x128xf32>
    %199 = tpu.matmul %196, %198, %cst_162 {dimension_numbers = #tpu.dot_dimension_numbers<[1], [0], [0], [1], [0, 0, 1, 1], [], []>} : vector<32x128xbf16>, vector<128x128xbf16>, vector<32x128xf32> -> vector<32x128xf32>
    %200 = arith.addf %192, %199 : vector<32x128xf32>
    %c4_163 = arith.constant 4 : index
    %c0_164 = arith.constant 0 : index
    %c0_165 = arith.constant 0 : index
    %201 = vector.load %arg6[%c4_163, %c0_164, %c0_165] : memref<9x32x98xbf16, #tpu.memory_space<vmem>>, vector<1x32x98xbf16>
    %202 = vector.shape_cast %201 : vector<1x32x98xbf16> to vector<32x98xbf16>
    %cst_166 = arith.constant dense<0.000000e+00> : vector<32x128xf32>
    %203 = tpu.matmul %202, %167, %cst_166 {dimension_numbers = #tpu.dot_dimension_numbers<[1], [0], [0], [1], [0, 0, 1, 1], [], []>} : vector<32x98xbf16>, vector<98x128xbf16>, vector<32x128xf32> -> vector<32x128xf32>
    %204 = arith.truncf %203 : vector<32x128xf32> to vector<32x128xbf16>
    %c4_167 = arith.constant 4 : index
    %c0_168 = arith.constant 0 : index
    %c0_169 = arith.constant 0 : index
    %205 = vector.load %arg7[%c4_167, %c0_168, %c0_169] : memref<9x128x128xbf16, #tpu.memory_space<vmem>>, vector<1x128x128xbf16>
    %206 = vector.shape_cast %205 : vector<1x128x128xbf16> to vector<128x128xbf16>
    %cst_170 = arith.constant dense<0.000000e+00> : vector<32x128xf32>
    %207 = tpu.matmul %204, %206, %cst_170 {dimension_numbers = #tpu.dot_dimension_numbers<[1], [0], [0], [1], [0, 0, 1, 1], [], []>} : vector<32x128xbf16>, vector<128x128xbf16>, vector<32x128xf32> -> vector<32x128xf32>
    %208 = arith.addf %200, %207 : vector<32x128xf32>
    %c5_171 = arith.constant 5 : index
    %c0_172 = arith.constant 0 : index
    %c0_173 = arith.constant 0 : index
    %209 = vector.load %arg6[%c5_171, %c0_172, %c0_173] : memref<9x32x98xbf16, #tpu.memory_space<vmem>>, vector<1x32x98xbf16>
    %210 = vector.shape_cast %209 : vector<1x32x98xbf16> to vector<32x98xbf16>
    %cst_174 = arith.constant dense<0.000000e+00> : vector<32x128xf32>
    %211 = tpu.matmul %210, %167, %cst_174 {dimension_numbers = #tpu.dot_dimension_numbers<[1], [0], [0], [1], [0, 0, 1, 1], [], []>} : vector<32x98xbf16>, vector<98x128xbf16>, vector<32x128xf32> -> vector<32x128xf32>
    %212 = arith.truncf %211 : vector<32x128xf32> to vector<32x128xbf16>
    %c5_175 = arith.constant 5 : index
    %c0_176 = arith.constant 0 : index
    %c0_177 = arith.constant 0 : index
    %213 = vector.load %arg7[%c5_175, %c0_176, %c0_177] : memref<9x128x128xbf16, #tpu.memory_space<vmem>>, vector<1x128x128xbf16>
    %214 = vector.shape_cast %213 : vector<1x128x128xbf16> to vector<128x128xbf16>
    %cst_178 = arith.constant dense<0.000000e+00> : vector<32x128xf32>
    %215 = tpu.matmul %212, %214, %cst_178 {dimension_numbers = #tpu.dot_dimension_numbers<[1], [0], [0], [1], [0, 0, 1, 1], [], []>} : vector<32x128xbf16>, vector<128x128xbf16>, vector<32x128xf32> -> vector<32x128xf32>
    %216 = arith.addf %208, %215 : vector<32x128xf32>
    %c6_179 = arith.constant 6 : index
    %c0_180 = arith.constant 0 : index
    %c0_181 = arith.constant 0 : index
    %217 = vector.load %arg6[%c6_179, %c0_180, %c0_181] : memref<9x32x98xbf16, #tpu.memory_space<vmem>>, vector<1x32x98xbf16>
    %218 = vector.shape_cast %217 : vector<1x32x98xbf16> to vector<32x98xbf16>
    %cst_182 = arith.constant dense<0.000000e+00> : vector<32x128xf32>
    %219 = tpu.matmul %218, %167, %cst_182 {dimension_numbers = #tpu.dot_dimension_numbers<[1], [0], [0], [1], [0, 0, 1, 1], [], []>} : vector<32x98xbf16>, vector<98x128xbf16>, vector<32x128xf32> -> vector<32x128xf32>
    %220 = arith.truncf %219 : vector<32x128xf32> to vector<32x128xbf16>
    %c6_183 = arith.constant 6 : index
    %c0_184 = arith.constant 0 : index
    %c0_185 = arith.constant 0 : index
    %221 = vector.load %arg7[%c6_183, %c0_184, %c0_185] : memref<9x128x128xbf16, #tpu.memory_space<vmem>>, vector<1x128x128xbf16>
    %222 = vector.shape_cast %221 : vector<1x128x128xbf16> to vector<128x128xbf16>
    %cst_186 = arith.constant dense<0.000000e+00> : vector<32x128xf32>
    %223 = tpu.matmul %220, %222, %cst_186 {dimension_numbers = #tpu.dot_dimension_numbers<[1], [0], [0], [1], [0, 0, 1, 1], [], []>} : vector<32x128xbf16>, vector<128x128xbf16>, vector<32x128xf32> -> vector<32x128xf32>
    %224 = arith.addf %216, %223 : vector<32x128xf32>
    %c7_187 = arith.constant 7 : index
    %c0_188 = arith.constant 0 : index
    %c0_189 = arith.constant 0 : index
    %225 = vector.load %arg6[%c7_187, %c0_188, %c0_189] : memref<9x32x98xbf16, #tpu.memory_space<vmem>>, vector<1x32x98xbf16>
    %226 = vector.shape_cast %225 : vector<1x32x98xbf16> to vector<32x98xbf16>
    %cst_190 = arith.constant dense<0.000000e+00> : vector<32x128xf32>
    %227 = tpu.matmul %226, %167, %cst_190 {dimension_numbers = #tpu.dot_dimension_numbers<[1], [0], [0], [1], [0, 0, 1, 1], [], []>} : vector<32x98xbf16>, vector<98x128xbf16>, vector<32x128xf32> -> vector<32x128xf32>
    %228 = arith.truncf %227 : vector<32x128xf32> to vector<32x128xbf16>
    %c7_191 = arith.constant 7 : index
    %c0_192 = arith.constant 0 : index
    %c0_193 = arith.constant 0 : index
    %229 = vector.load %arg7[%c7_191, %c0_192, %c0_193] : memref<9x128x128xbf16, #tpu.memory_space<vmem>>, vector<1x128x128xbf16>
    %230 = vector.shape_cast %229 : vector<1x128x128xbf16> to vector<128x128xbf16>
    %cst_194 = arith.constant dense<0.000000e+00> : vector<32x128xf32>
    %231 = tpu.matmul %228, %230, %cst_194 {dimension_numbers = #tpu.dot_dimension_numbers<[1], [0], [0], [1], [0, 0, 1, 1], [], []>} : vector<32x128xbf16>, vector<128x128xbf16>, vector<32x128xf32> -> vector<32x128xf32>
    %232 = arith.addf %224, %231 : vector<32x128xf32>
    %c8_195 = arith.constant 8 : index
    %c0_196 = arith.constant 0 : index
    %c0_197 = arith.constant 0 : index
    %233 = vector.load %arg6[%c8_195, %c0_196, %c0_197] : memref<9x32x98xbf16, #tpu.memory_space<vmem>>, vector<1x32x98xbf16>
    %234 = vector.shape_cast %233 : vector<1x32x98xbf16> to vector<32x98xbf16>
    %cst_198 = arith.constant dense<0.000000e+00> : vector<32x128xf32>
    %235 = tpu.matmul %234, %167, %cst_198 {dimension_numbers = #tpu.dot_dimension_numbers<[1], [0], [0], [1], [0, 0, 1, 1], [], []>} : vector<32x98xbf16>, vector<98x128xbf16>, vector<32x128xf32> -> vector<32x128xf32>
    %236 = arith.truncf %235 : vector<32x128xf32> to vector<32x128xbf16>
    %c8_199 = arith.constant 8 : index
    %c0_200 = arith.constant 0 : index
    %c0_201 = arith.constant 0 : index
    %237 = vector.load %arg7[%c8_199, %c0_200, %c0_201] : memref<9x128x128xbf16, #tpu.memory_space<vmem>>, vector<1x128x128xbf16>
    %238 = vector.shape_cast %237 : vector<1x128x128xbf16> to vector<128x128xbf16>
    %cst_202 = arith.constant dense<0.000000e+00> : vector<32x128xf32>
    %239 = tpu.matmul %236, %238, %cst_202 {dimension_numbers = #tpu.dot_dimension_numbers<[1], [0], [0], [1], [0, 0, 1, 1], [], []>} : vector<32x128xbf16>, vector<128x128xbf16>, vector<32x128xf32> -> vector<32x128xf32>
    %240 = arith.addf %232, %239 : vector<32x128xf32>
    %cst_203 = arith.constant dense<0.000000e+00> : vector<128xf32>
    %241 = vector.multi_reduction <add>, %240, %cst_203 [0] : vector<32x128xf32> to vector<128xf32>
    %242 = vector.shape_cast %241 : vector<128xf32> to vector<1x128xf32>
    %cst_204 = arith.constant 3.200000e+01 : f32
    %243 = vector.broadcast %cst_204 : f32 to vector<1x128xf32>
    %244 = arith.divf %242, %243 : vector<1x128xf32>
    %245 = vector.broadcast %244 : vector<1x128xf32> to vector<32x128xf32>
    %246 = arith.subf %240, %245 : vector<32x128xf32>
    %247 = arith.mulf %246, %246 : vector<32x128xf32>
    %cst_205 = arith.constant dense<0.000000e+00> : vector<128xf32>
    %248 = vector.multi_reduction <add>, %247, %cst_205 [0] : vector<32x128xf32> to vector<128xf32>
    %249 = vector.shape_cast %248 : vector<128xf32> to vector<1x128xf32>
    %cst_206 = arith.constant 3.200000e+01 : f32
    %250 = vector.broadcast %cst_206 : f32 to vector<1x128xf32>
    %251 = arith.divf %249, %250 : vector<1x128xf32>
    %252 = vector.broadcast %244 : vector<1x128xf32> to vector<32x128xf32>
    %253 = arith.subf %240, %252 : vector<32x128xf32>
    %cst_207 = arith.constant 9.99999974E-6 : f32
    %254 = vector.broadcast %cst_207 : f32 to vector<1x128xf32>
    %255 = arith.addf %251, %254 : vector<1x128xf32>
    %256 = math.rsqrt %255 : vector<1x128xf32>
    %257 = vector.broadcast %256 : vector<1x128xf32> to vector<32x128xf32>
    %258 = arith.mulf %253, %257 : vector<32x128xf32>
    %c0_208 = arith.constant 0 : index
    %c0_209 = arith.constant 0 : index
    %259 = vector.load %arg8[%c0_208, %c0_209] : memref<1x128xf32, #tpu.memory_space<vmem>>, vector<1x128xf32>
    %260 = vector.broadcast %259 : vector<1x128xf32> to vector<32x128xf32>
    %261 = arith.mulf %258, %260 : vector<32x128xf32>
    %c0_210 = arith.constant 0 : index
    %c0_211 = arith.constant 0 : index
    %262 = vector.load %arg9[%c0_210, %c0_211] : memref<1x128xf32, #tpu.memory_space<vmem>>, vector<1x128xf32>
    %263 = vector.broadcast %262 : vector<1x128xf32> to vector<32x128xf32>
    %264 = arith.addf %261, %263 : vector<32x128xf32>
    %cst_212 = arith.constant 0.000000e+00 : f32
    %265 = vector.broadcast %cst_212 : f32 to vector<32x128xf32>
    %266 = arith.cmpf ogt, %264, %265 : vector<32x128xf32>
    %cst_213 = arith.constant 2.000000e-01 : f32
    %267 = vector.broadcast %cst_213 : f32 to vector<32x128xf32>
    %268 = arith.mulf %267, %264 : vector<32x128xf32>
    %269 = arith.select %266, %264, %268 : vector<32x128xi1>, vector<32x128xf32>
    %270 = vector.shape_cast %269 : vector<32x128xf32> to vector<2x16x128xf32>
    %c0_214 = arith.constant 0 : index
    %c0_215 = arith.constant 0 : index
    %271 = vector.load %arg10[%c0_214, %c0_215] : memref<16x128xf32, #tpu.memory_space<vmem>>, vector<16x128xf32>
    %272 = vector.shape_cast %271 : vector<16x128xf32> to vector<1x16x128xf32>
    %273 = vector.broadcast %272 : vector<1x16x128xf32> to vector<2x16x128xf32>
    %274 = arith.mulf %270, %273 : vector<2x16x128xf32>
    %cst_216 = arith.constant dense<0.000000e+00> : vector<2x16xf32>
    %275 = vector.multi_reduction <add>, %274, %cst_216 [2] : vector<2x16x128xf32> to vector<2x16xf32>
    %cst_217 = arith.constant dense<0.000000e+00> : vector<2xf32>
    %276 = vector.multi_reduction <add>, %275, %cst_217 [1] : vector<2x16xf32> to vector<2xf32>
    %277 = vector.shape_cast %276 : vector<2xf32> to vector<2x1xf32>
    %278 = arith.negf %277 : vector<2x1xf32>
    %279 = math.exp %278 : vector<2x1xf32>
    %cst_218 = arith.constant 1.000000e+00 : f32
    %280 = vector.broadcast %cst_218 : f32 to vector<2x1xf32>
    %281 = arith.addf %280, %279 : vector<2x1xf32>
    %282 = arith.divf %280, %281 : vector<2x1xf32>
    %283 = vector.shape_cast %282 : vector<2x1xf32> to vector<2x1xf32>
    %284 = vector.broadcast %283 : vector<2x1xf32> to vector<2x128xf32>
    %c0_219 = arith.constant 0 : index
    %c0_220 = arith.constant 0 : index
    %285 = vector.load %arg11[%c0_219, %c0_220] : memref<2x128xf32, #tpu.memory_space<vmem>>, vector<2x128xf32>
    tpu.vector_store %arg11[%c0_219, %c0_220], %284 {strides = array<i32>} : memref<2x128xf32, #tpu.memory_space<vmem>>, vector<2x128xf32>,
    return
  }
}

</mosaic_0001>

<llo_original>
// kernel: discriminator_forward.1
$region0: #{discriminator_forward.1}
  #allocation0 [shape = 'u32[]', space=smem, size = 0x4, offset = 0x4, fixed_abs, tag = 'smem constant byte address 0x4 - core index']
  #allocation1 [shape = 'u32[144,128]{1,0:T(1,128)}', space=vmem, size = 0x12000, scoped, tag = 'internal scratch']
  %s0 = inlined_call_operand.vmem [shape: bf16[392,16], index: 0, kind: input, shape index: {}]
  %s1 = inlined_call_operand.vmem [shape: bf16[16,128], index: 1, kind: input, shape index: {}]
  %s2 = inlined_call_operand.vmem [shape: bf16[16,98,392], index: 2, kind: input, shape index: {}]
  %s3 = inlined_call_operand.vmem [shape: bf16[16,128,128], index: 3, kind: input, shape index: {}]
  %s4 = inlined_call_operand.vmem [shape: f32[1,128], index: 4, kind: input, shape index: {}]
  %s5 = inlined_call_operand.vmem [shape: f32[1,128], index: 5, kind: input, shape index: {}]
  %s6 = inlined_call_operand.vmem [shape: bf16[9,32,98], index: 6, kind: input, shape index: {}]
  %s7 = inlined_call_operand.vmem [shape: bf16[9,128,128], index: 7, kind: input, shape index: {}]
  %s8 = inlined_call_operand.vmem [shape: f32[1,128], index: 8, kind: input, shape index: {}]
  %s9 = inlined_call_operand.vmem [shape: f32[1,128], index: 9, kind: input, shape index: {}]
  %s10 = inlined_call_operand.vmem [shape: f32[16,128], index: 10, kind: input, shape index: {}]
  %s11 = inlined_call_operand.vmem [shape: f32[2,128], index: 11, kind: output, shape index: {}]
  %s12 = sld [smem:[#allocation0]]
  $region54: #{discriminator_forward.1} parent=0
    _
  %s14 = ssub.s32 1, %s12
  %s15 = scalar_select 0, %s14, %s12
  // Predicated region
  $region2: #{discriminator_forward.1} parent=0 // pred_check
    _
  $region3: #{discriminator_forward.1} parent=0 // pred_check_branch
    %17 = sbr.rel (0) target = $region5
  $region4: #{discriminator_forward.1} parent=0 // pred_region
    _
  $region5: #{discriminator_forward.1} parent=0 // pred_fallthru
    _
  // Predicated region
  $region6: #{discriminator_forward.1} parent=0 // pred_check
    _
  $region7: #{discriminator_forward.1} parent=0 // pred_check_branch
    %19 = sbr.rel (0) target = $region9
  $region8: #{discriminator_forward.1} parent=0 // pred_region
    _
  $region9: #{discriminator_forward.1} parent=0 // pred_fallthru
    _
  // Predicated region
  $region10: #{discriminator_forward.1} parent=0 // pred_check
    _
  $region11: #{discriminator_forward.1} parent=0 // pred_check_branch
    %21 = sbr.rel (0) target = $region13
  $region12: #{discriminator_forward.1} parent=0 // pred_region
    _
  $region13: #{discriminator_forward.1} parent=0 // pred_fallthru
    _
  // Predicated region
  $region14: #{discriminator_forward.1} parent=0 // pred_check
    _
  $region15: #{discriminator_forward.1} parent=0 // pred_check_branch
    %23 = sbr.rel (0) target = $region17
  $region16: #{discriminator_forward.1} parent=0 // pred_region
    _
  $region17: #{discriminator_forward.1} parent=0 // pred_fallthru
    _
  // Predicated region
  $region18: #{discriminator_forward.1} parent=0 // pred_check
    _
  $region19: #{discriminator_forward.1} parent=0 // pred_check_branch
    %25 = sbr.rel (0) target = $region21
  $region20: #{discriminator_forward.1} parent=0 // pred_region
    _
  $region21: #{discriminator_forward.1} parent=0 // pred_fallthru
    _
  // Predicated region
  $region22: #{discriminator_forward.1} parent=0 // pred_check
    _
  $region23: #{discriminator_forward.1} parent=0 // pred_check_branch
    %27 = sbr.rel (0) target = $region25
  $region24: #{discriminator_forward.1} parent=0 // pred_region
    _
  $region25: #{discriminator_forward.1} parent=0 // pred_fallthru
    _
  // Predicated region
  $region26: #{discriminator_forward.1} parent=0 // pred_check
    _
  $region27: #{discriminator_forward.1} parent=0 // pred_check_branch
    %29 = sbr.rel (0) target = $region29
  $region28: #{discriminator_forward.1} parent=0 // pred_region
    _
  $region29: #{discriminator_forward.1} parent=0 // pred_fallthru
    _
  // Predicated region
  $region30: #{discriminator_forward.1} parent=0 // pred_check
    _
  $region31: #{discriminator_forward.1} parent=0 // pred_check_branch
    %31 = sbr.rel (0) target = $region33
  $region32: #{discriminator_forward.1} parent=0 // pred_region
    _
  $region33: #{discriminator_forward.1} parent=0 // pred_fallthru
    _
  // Predicated region
  $region34: #{discriminator_forward.1} parent=0 // pred_check
    _
  $region35: #{discriminator_forward.1} parent=0 // pred_check_branch
    %33 = sbr.rel (0) target = $region37
  $region36: #{discriminator_forward.1} parent=0 // pred_region
    _
  $region37: #{discriminator_forward.1} parent=0 // pred_fallthru
    _
  // Predicated region
  $region38: #{discriminator_forward.1} parent=0 // pred_check
    _
  $region39: #{discriminator_forward.1} parent=0 // pred_check_branch
    %35 = sbr.rel (0) target = $region41
  $region40: #{discriminator_forward.1} parent=0 // pred_region
    _
  $region41: #{discriminator_forward.1} parent=0 // pred_fallthru
    _
  // Predicated region
  $region42: #{discriminator_forward.1} parent=0 // pred_check
    _
  $region43: #{discriminator_forward.1} parent=0 // pred_check_branch
    %37 = sbr.rel (0) target = $region45
  $region44: #{discriminator_forward.1} parent=0 // pred_region
    _
  $region45: #{discriminator_forward.1} parent=0 // pred_fallthru
    _
  %v39 = vld [vmem:[%s0] sm:$0xf]
  %v40 = vld [vmem:[%s0 + $0x4] sm:$0xf]
  %v41 = vld [vmem:[%s0 + $0x8] sm:$0xf]
  %v42 = vld [vmem:[%s0 + $0xc] sm:$0xf]
  %v43 = vld [vmem:[%s0 + $0x10] sm:$0xf]
  %v44 = vld [vmem:[%s0 + $0x14] sm:$0xf]
  %v45 = vld [vmem:[%s0 + $0x18] sm:$0xf]
  %v46 = vld [vmem:[%s0 + $0x1c] sm:$0xf]
  %v47 = vld [vmem:[%s0 + $0x20] sm:$0xf]
  %v48 = vld [vmem:[%s0 + $0x24] sm:$0xf]
  %v49 = vld [vmem:[%s0 + $0x28] sm:$0xf]
  %v50 = vld [vmem:[%s0 + $0x2c] sm:$0xf]
  %v51 = vld [vmem:[%s0 + $0x30] sm:$0xf]
  %v52 = vld [vmem:[%s0 + $0x34] sm:$0xf]
  %v53 = vld [vmem:[%s0 + $0x38] sm:$0xf]
  %v54 = vld [vmem:[%s0 + $0x3c] sm:$0xf]
  %v55 = vld [vmem:[%s0 + $0x40] sm:$0xf]
  %v56 = vld [vmem:[%s0 + $0x44] sm:$0xf]
  %v57 = vld [vmem:[%s0 + $0x48] sm:$0xf]
  %v58 = vld [vmem:[%s0 + $0x4c] sm:$0xf]
  %v59 = vld [vmem:[%s0 + $0x50] sm:$0xf]
  %v60 = vld [vmem:[%s0 + $0x54] sm:$0xf]
  %v61 = vld [vmem:[%s0 + $0x58] sm:$0xf]
  %v62 = vld [vmem:[%s0 + $0x5c] sm:$0xf]
  %v63 = vld [vmem:[%s0 + $0x60] sm:$0xf]
  %v64 = vld [vmem:[%s0 + $0x64] sm:$0xf]
  %v65 = vld [vmem:[%s0 + $0x68] sm:$0xf]
  %v66 = vld [vmem:[%s0 + $0x6c] sm:$0xf]
  %v67 = vld [vmem:[%s0 + $0x70] sm:$0xf]
  %v68 = vld [vmem:[%s0 + $0x74] sm:$0xf]
  %v69 = vld [vmem:[%s0 + $0x78] sm:$0xf]
  %v70 = vld [vmem:[%s0 + $0x7c] sm:$0xf]
  %v71 = vld [vmem:[%s0 + $0x80] sm:$0xf]
  %v72 = vld [vmem:[%s0 + $0x84] sm:$0xf]
  %v73 = vld [vmem:[%s0 + $0x88] sm:$0xf]
  %v74 = vld [vmem:[%s0 + $0x8c] sm:$0xf]
  %v75 = vld [vmem:[%s0 + $0x90] sm:$0xf]
  %v76 = vld [vmem:[%s0 + $0x94] sm:$0xf]
  %v77 = vld [vmem:[%s0 + $0x98] sm:$0xf]
  %v78 = vld [vmem:[%s0 + $0x9c] sm:$0xf]
  %v79 = vld [vmem:[%s0 + $0xa0] sm:$0xf]
  %v80 = vld [vmem:[%s0 + $0xa4] sm:$0xf]
  %v81 = vld [vmem:[%s0 + $0xa8] sm:$0xf]
  %v82 = vld [vmem:[%s0 + $0xac] sm:$0xf]
  %v83 = vld [vmem:[%s0 + $0xb0] sm:$0xf]
  %v84 = vld [vmem:[%s0 + $0xb4] sm:$0xf]
  %v85 = vld [vmem:[%s0 + $0xb8] sm:$0xf]
  %v86 = vld [vmem:[%s0 + $0xbc] sm:$0xf]
  %v87 = vld [vmem:[%s0 + $0xc0] sm:$0xf]
  %v88 = vld [vmem:[%s1] sm:$0xf]
  %v89 = vld [vmem:[%s1 + $0x4] sm:$0xf]
  %v139 = vunpack.c.l.b16 %v39
  %v140 = vunpack.c.l.b16 %v40
  %v141 = vunpack.c.l.b16 %v41
  %v142 = vunpack.c.l.b16 %v42
  %v143 = vunpack.c.l.b16 %v43
  %v144 = vunpack.c.l.b16 %v44
  %v145 = vunpack.c.l.b16 %v45
  %v146 = vunpack.c.l.b16 %v46
  %v147 = vunpack.c.l.b16 %v47
  %v148 = vunpack.c.l.b16 %v48
  %v149 = vunpack.c.l.b16 %v49
  %v150 = vunpack.c.l.b16 %v50
  %v151 = vunpack.c.l.b16 %v51
  %v152 = vunpack.c.l.b16 %v52
  %v153 = vunpack.c.l.b16 %v53
  %v154 = vunpack.c.l.b16 %v54
  %v155 = vunpack.c.l.b16 %v55
  %v156 = vunpack.c.l.b16 %v56
  %v157 = vunpack.c.l.b16 %v57
  %v158 = vunpack.c.l.b16 %v58
  %v159 = vunpack.c.l.b16 %v59
  %v160 = vunpack.c.l.b16 %v60
  %v161 = vunpack.c.l.b16 %v61
  %v162 = vunpack.c.l.b16 %v62
  %v163 = vunpack.c.l.b16 %v63
  %v164 = vunpack.c.l.b16 %v64
  %v165 = vunpack.c.l.b16 %v65
  %v166 = vunpack.c.l.b16 %v66
  %v167 = vunpack.c.l.b16 %v67
  %v168 = vunpack.c.l.b16 %v68
  %v169 = vunpack.c.l.b16 %v69
  %v170 = vunpack.c.l.b16 %v70
  %v171 = vunpack.c.l.b16 %v71
  %v172 = vunpack.c.l.b16 %v72
  %v173 = vunpack.c.l.b16 %v73
  %v174 = vunpack.c.l.b16 %v74
  %v175 = vunpack.c.l.b16 %v75
  %v176 = vunpack.c.l.b16 %v76
  %v177 = vunpack.c.l.b16 %v77
  %v178 = vunpack.c.l.b16 %v78
  %v179 = vunpack.c.l.b16 %v79
  %v180 = vunpack.c.l.b16 %v80
  %v181 = vunpack.c.l.b16 %v81
  %v182 = vunpack.c.l.b16 %v82
  %v183 = vunpack.c.l.b16 %v83
  %v184 = vunpack.c.l.b16 %v84
  %v185 = vunpack.c.l.b16 %v85
  %v186 = vunpack.c.l.b16 %v86
  %v187 = vunpack.c.l.b16 %v87
  %v188 = vpack.c.b16 %v140, %v139
  %v189 = vpack.c.b16 %v142, %v141
  %v190 = vpack.c.b16 %v144, %v143
  %v191 = vpack.c.b16 %v146, %v145
  %v192 = vpack.c.b16 %v148, %v147
  %v193 = vpack.c.b16 %v150, %v149
  %v194 = vpack.c.b16 %v152, %v151
  %v195 = vpack.c.b16 %v154, %v153
  %v196 = vpack.c.b16 %v156, %v155
  %v197 = vpack.c.b16 %v158, %v157
  %v198 = vpack.c.b16 %v160, %v159
  %v199 = vpack.c.b16 %v162, %v161
  %v200 = vpack.c.b16 %v164, %v163
  %v201 = vpack.c.b16 %v166, %v165
  %v202 = vpack.c.b16 %v168, %v167
  %v203 = vpack.c.b16 %v170, %v169
  %v204 = vpack.c.b16 %v172, %v171
  %v205 = vpack.c.b16 %v174, %v173
  %v206 = vpack.c.b16 %v176, %v175
  %v207 = vpack.c.b16 %v178, %v177
  %v208 = vpack.c.b16 %v180, %v179
  %v209 = vpack.c.b16 %v182, %v181
  %v210 = vpack.c.b16 %v184, %v183
  %v211 = vpack.c.b16 %v186, %v185
  %v212 = vpack.c.b16 %v187, %v187
  %v215 = vunpack.c.l.b16 %v88
  %v216 = vunpack.c.l.b16 %v89
  %v217 = vpack.c.b16 %v216, %v215
  %vm219 = vcmask 130048
  %v221 = vsel %vm219, %v188, 0
  %v224 = vsel %vm219, %v189, 0
  %v227 = vsel %vm219, %v190, 0
  %v230 = vsel %vm219, %v191, 0
  %v233 = vsel %vm219, %v192, 0
  %v236 = vsel %vm219, %v193, 0
  %v239 = vsel %vm219, %v194, 0
  %v242 = vsel %vm219, %v195, 0
  %v245 = vsel %vm219, %v196, 0
  %v248 = vsel %vm219, %v197, 0
  %v251 = vsel %vm219, %v198, 0
  %v254 = vsel %vm219, %v199, 0
  %v257 = vsel %vm219, %v200, 0
  %v260 = vsel %vm219, %v201, 0
  %v263 = vsel %vm219, %v202, 0
  %v266 = vsel %vm219, %v203, 0
  %v269 = vsel %vm219, %v204, 0
  %v272 = vsel %vm219, %v205, 0
  %v275 = vsel %vm219, %v206, 0
  %v278 = vsel %vm219, %v207, 0
  %v281 = vsel %vm219, %v208, 0
  %v284 = vsel %vm219, %v209, 0
  %v287 = vsel %vm219, %v210, 0
  %v290 = vsel %vm219, %v211, 0
  %v293 = vsel %vm219, %v212, 0
  %295 = vmatprep.subr.bf16.mxu0 0
  %296 = vmatpush1.bf16.msra.mxu0 %v217
  %297 = vmatprep.subr.bf16.mxu0 0
  %298 = vmatpush1.bf16.msra.mxu0 0
  %299 = vmatprep.subr.bf16.mxu0 0
  %300 = vmatpush1.bf16.msra.mxu0 0
  %301 = vmatprep.subr.bf16.mxu0 0
  %302 = vmatpush1.bf16.msra.mxu0 0
  %303 = vmatprep.subr.bf16.mxu0 0
  %304 = vmatpush1.bf16.msra.mxu0 0
  %305 = vmatprep.subr.bf16.mxu0 0
  %306 = vmatpush1.bf16.msra.mxu0 0
  %307 = vmatprep.subr.bf16.mxu0 0
  %308 = vmatpush1.bf16.msra.mxu0 0
  %309 = vmatprep.subr.bf16.mxu0 0
  %310 = vmatpush1.bf16.msra.mxu0 0
  %311 = vmatprep.subr.bf16.mxu0 0
  %312 = vmatpush1.bf16.msra.mxu0 0
  %313 = vmatprep.subr.bf16.mxu0 0
  %314 = vmatpush1.bf16.msra.mxu0 0
  %315 = vmatprep.subr.bf16.mxu0 0
  %316 = vmatpush1.bf16.msra.mxu0 0
  %317 = vmatprep.subr.bf16.mxu0 0
  %318 = vmatpush1.bf16.msra.mxu0 0
  %319 = vmatprep.subr.bf16.mxu0 0
  %320 = vmatpush1.bf16.msra.mxu0 0
  %321 = vmatprep.subr.bf16.mxu0 0
  %322 = vmatpush1.bf16.msra.mxu0 0
  %323 = vmatprep.subr.bf16.mxu0 0
  %324 = vmatpush1.bf16.msra.mxu0 0
  %325 = vmatprep.subr.bf16.mxu0 0
  %326 = vmatpush1.bf16.msra.mxu0 0
  %327 = vmatprep.mubr.bf16.mxu0 0
  %328 = vmatmul.mubr.bf16.gmra.mrb[0].mxu0 %v221
  %v329 = vpop.f32.mrb[0].mxu0
  %v330 = vadd.f32 0.0, %v329
  %v331 = vpop.f32.mrb[0].mxu0
  %v332 = vpop.f32.mrb[0].mxu0
  %v333 = vadd.f32 0.0, %v332
  %v334 = vpop.f32.mrb[0].mxu0
  %335 = vmatprep.mubr.bf16.mxu0 0
  %336 = vmatmul.mubr.bf16.gmra.mrb[0].mxu0 %v224
  %v337 = vpop.f32.mrb[0].mxu0
  %v338 = vadd.f32 0.0, %v337
  %v339 = vpop.f32.mrb[0].mxu0
  %v340 = vpop.f32.mrb[0].mxu0
  %v341 = vadd.f32 0.0, %v340
  %v342 = vpop.f32.mrb[0].mxu0
  %343 = vmatprep.mubr.bf16.mxu0 0
  %344 = vmatmul.mubr.bf16.gmra.mrb[0].mxu0 %v227
  %v345 = vpop.f32.mrb[0].mxu0
  %v346 = vadd.f32 0.0, %v345
  %v347 = vpop.f32.mrb[0].mxu0
  %v348 = vpop.f32.mrb[0].mxu0
  %v349 = vadd.f32 0.0, %v348
  %v350 = vpop.f32.mrb[0].mxu0
  %351 = vmatprep.mubr.bf16.mxu0 0
  %352 = vmatmul.mubr.bf16.gmra.mrb[0].mxu0 %v230
  %v353 = vpop.f32.mrb[0].mxu0
  %v354 = vadd.f32 0.0, %v353
  %v355 = vpop.f32.mrb[0].mxu0
  %v356 = vpop.f32.mrb[0].mxu0
  %v357 = vadd.f32 0.0, %v356
  %v358 = vpop.f32.mrb[0].mxu0
  %359 = vmatprep.mubr.bf16.mxu0 0
  %360 = vmatmul.mubr.bf16.gmra.mrb[0].mxu0 %v233
  %v361 = vpop.f32.mrb[0].mxu0
  %v362 = vadd.f32 0.0, %v361
  %v363 = vpop.f32.mrb[0].mxu0
  %v364 = vpop.f32.mrb[0].mxu0
  %v365 = vadd.f32 0.0, %v364
  %v366 = vpop.f32.mrb[0].mxu0
  %367 = vmatprep.mubr.bf16.mxu0 0
  %368 = vmatmul.mubr.bf16.gmra.mrb[0].mxu0 %v236
  %v369 = vpop.f32.mrb[0].mxu0
  %v370 = vadd.f32 0.0, %v369
  %v371 = vpop.f32.mrb[0].mxu0
  %v372 = vpop.f32.mrb[0].mxu0
  %v373 = vadd.f32 0.0, %v372
  %v374 = vpop.f32.mrb[0].mxu0
  %375 = vmatprep.mubr.bf16.mxu0 0
  %376 = vmatmul.mubr.bf16.gmra.mrb[0].mxu0 %v239
  %v377 = vpop.f32.mrb[0].mxu0
  %v378 = vadd.f32 0.0, %v377
  %v379 = vpop.f32.mrb[0].mxu0
  %v380 = vpop.f32.mrb[0].mxu0
  %v381 = vadd.f32 0.0, %v380
  %v382 = vpop.f32.mrb[0].mxu0
  %383 = vmatprep.mubr.bf16.mxu0 0
  %384 = vmatmul.mubr.bf16.gmra.mrb[0].mxu0 %v242
  %v385 = vpop.f32.mrb[0].mxu0
  %v386 = vadd.f32 0.0, %v385
  %v387 = vpop.f32.mrb[0].mxu0
  %v388 = vpop.f32.mrb[0].mxu0
  %v389 = vadd.f32 0.0, %v388
  %v390 = vpop.f32.mrb[0].mxu0
  %391 = vmatprep.mubr.bf16.mxu0 0
  %392 = vmatmul.mubr.bf16.gmra.mrb[0].mxu0 %v245
  %v393 = vpop.f32.mrb[0].mxu0
  %v394 = vadd.f32 0.0, %v393
  %v395 = vpop.f32.mrb[0].mxu0
  %v396 = vpop.f32.mrb[0].mxu0
  %v397 = vadd.f32 0.0, %v396
  %v398 = vpop.f32.mrb[0].mxu0
  %399 = vmatprep.mubr.bf16.mxu0 0
  %400 = vmatmul.mubr.bf16.gmra.mrb[0].mxu0 %v248
  %v401 = vpop.f32.mrb[0].mxu0
  %v402 = vadd.f32 0.0, %v401
  %v403 = vpop.f32.mrb[0].mxu0
  %v404 = vpop.f32.mrb[0].mxu0
  %v405 = vadd.f32 0.0, %v404
  %v406 = vpop.f32.mrb[0].mxu0
  %407 = vmatprep.mubr.bf16.mxu0 0
  %408 = vmatmul.mubr.bf16.gmra.mrb[0].mxu0 %v251
  %v409 = vpop.f32.mrb[0].mxu0
  %v410 = vadd.f32 0.0, %v409
  %v411 = vpop.f32.mrb[0].mxu0
  %v412 = vpop.f32.mrb[0].mxu0
  %v413 = vadd.f32 0.0, %v412
  %v414 = vpop.f32.mrb[0].mxu0
  %415 = vmatprep.mubr.bf16.mxu0 0
  %416 = vmatmul.mubr.bf16.gmra.mrb[0].mxu0 %v254
  %v417 = vpop.f32.mrb[0].mxu0
  %v418 = vadd.f32 0.0, %v417
  %v419 = vpop.f32.mrb[0].mxu0
  %v420 = vpop.f32.mrb[0].mxu0
  %v421 = vadd.f32 0.0, %v420
  %v422 = vpop.f32.mrb[0].mxu0
  %423 = vmatprep.mubr.bf16.mxu0 0
  %424 = vmatmul.mubr.bf16.gmra.mrb[0].mxu0 %v257
  %v425 = vpop.f32.mrb[0].mxu0
  %v426 = vadd.f32 0.0, %v425
  %v427 = vpop.f32.mrb[0].mxu0
  %v428 = vpop.f32.mrb[0].mxu0
  %v429 = vadd.f32 0.0, %v428
  %v430 = vpop.f32.mrb[0].mxu0
  %431 = vmatprep.mubr.bf16.mxu0 0
  %432 = vmatmul.mubr.bf16.gmra.mrb[0].mxu0 %v260
  %v433 = vpop.f32.mrb[0].mxu0
  %v434 = vadd.f32 0.0, %v433
  %v435 = vpop.f32.mrb[0].mxu0
  %v436 = vpop.f32.mrb[0].mxu0
  %v437 = vadd.f32 0.0, %v436
  %v438 = vpop.f32.mrb[0].mxu0
  %439 = vmatprep.mubr.bf16.mxu0 0
  %440 = vmatmul.mubr.bf16.gmra.mrb[0].mxu0 %v263
  %v441 = vpop.f32.mrb[0].mxu0
  %v442 = vadd.f32 0.0, %v441
  %v443 = vpop.f32.mrb[0].mxu0
  %v444 = vpop.f32.mrb[0].mxu0
  %v445 = vadd.f32 0.0, %v444
  %v446 = vpop.f32.mrb[0].mxu0
  %447 = vmatprep.mubr.bf16.mxu0 0
  %448 = vmatmul.mubr.bf16.gmra.mrb[0].mxu0 %v266
  %v449 = vpop.f32.mrb[0].mxu0
  %v450 = vadd.f32 0.0, %v449
  %v451 = vpop.f32.mrb[0].mxu0
  %v452 = vpop.f32.mrb[0].mxu0
  %v453 = vadd.f32 0.0, %v452
  %v454 = vpop.f32.mrb[0].mxu0
  %455 = vmatprep.mubr.bf16.mxu0 0
  %456 = vmatmul.mubr.bf16.gmra.mrb[0].mxu0 %v269
  %v457 = vpop.f32.mrb[0].mxu0
  %v458 = vadd.f32 0.0, %v457
  %v459 = vpop.f32.mrb[0].mxu0
  %v460 = vpop.f32.mrb[0].mxu0
  %v461 = vadd.f32 0.0, %v460
  %v462 = vpop.f32.mrb[0].mxu0
  %463 = vmatprep.mubr.bf16.mxu0 0
  %464 = vmatmul.mubr.bf16.gmra.mrb[0].mxu0 %v272
  %v465 = vpop.f32.mrb[0].mxu0
  %v466 = vadd.f32 0.0, %v465
  %v467 = vpop.f32.mrb[0].mxu0
  %v468 = vpop.f32.mrb[0].mxu0
  %v469 = vadd.f32 0.0, %v468
  %v470 = vpop.f32.mrb[0].mxu0
  %471 = vmatprep.mubr.bf16.mxu0 0
  %472 = vmatmul.mubr.bf16.gmra.mrb[0].mxu0 %v275
  %v473 = vpop.f32.mrb[0].mxu0
  %v474 = vadd.f32 0.0, %v473
  %v475 = vpop.f32.mrb[0].mxu0
  %v476 = vpop.f32.mrb[0].mxu0
  %v477 = vadd.f32 0.0, %v476
  %v478 = vpop.f32.mrb[0].mxu0
  %479 = vmatprep.mubr.bf16.mxu0 0
  %480 = vmatmul.mubr.bf16.gmra.mrb[0].mxu0 %v278
  %v481 = vpop.f32.mrb[0].mxu0
  %v482 = vadd.f32 0.0, %v481
  %v483 = vpop.f32.mrb[0].mxu0
  %v484 = vpop.f32.mrb[0].mxu0
  %v485 = vadd.f32 0.0, %v484
  %v486 = vpop.f32.mrb[0].mxu0
  %487 = vmatprep.mubr.bf16.mxu0 0
  %488 = vmatmul.mubr.bf16.gmra.mrb[0].mxu0 %v281
  %v489 = vpop.f32.mrb[0].mxu0
  %v490 = vadd.f32 0.0, %v489
  %v491 = vpop.f32.mrb[0].mxu0
  %v492 = vpop.f32.mrb[0].mxu0
  %v493 = vadd.f32 0.0, %v492
  %v494 = vpop.f32.mrb[0].mxu0
  %495 = vmatprep.mubr.bf16.mxu0 0
  %496 = vmatmul.mubr.bf16.gmra.mrb[0].mxu0 %v284
  %v497 = vpop.f32.mrb[0].mxu0
  %v498 = vadd.f32 0.0, %v497
  %v499 = vpop.f32.mrb[0].mxu0
  %v500 = vpop.f32.mrb[0].mxu0
  %v501 = vadd.f32 0.0, %v500
  %v502 = vpop.f32.mrb[0].mxu0
  %503 = vmatprep.mubr.bf16.mxu0 0
  %504 = vmatmul.mubr.bf16.gmra.mrb[0].mxu0 %v287
  %v505 = vpop.f32.mrb[0].mxu0
  %v506 = vadd.f32 0.0, %v505
  %v507 = vpop.f32.mrb[0].mxu0
  %v508 = vpop.f32.mrb[0].mxu0
  %v509 = vadd.f32 0.0, %v508
  %v510 = vpop.f32.mrb[0].mxu0
  %511 = vmatprep.mubr.bf16.mxu0 0
  %512 = vmatmul.mubr.bf16.gmra.mrb[0].mxu0 %v290
  %v513 = vpop.f32.mrb[0].mxu0
  %v514 = vadd.f32 0.0, %v513
  %v515 = vpop.f32.mrb[0].mxu0
  %v516 = vpop.f32.mrb[0].mxu0
  %v517 = vadd.f32 0.0, %v516
  %v518 = vpop.f32.mrb[0].mxu0
  %519 = vmatprep.mubr.bf16.mxu0 0
  %520 = vmatmul.mubr.bf16.gmra.mrb[0].mxu0 %v293
  %v521 = vpop.f32.mrb[0].mxu0
  %v522 = vadd.f32 0.0, %v521
  %v523 = vpop.f32.mrb[0].mxu0
  %v524 = vpop.f32.mrb[0].mxu0
  %v525 = vpop.f32.mrb[0].mxu0
  %526 = vdwg.mxu0
  %vm527 = vcmp.gt.f32.partialorder %v330, 0.0
  %vm528 = vcmp.gt.f32.partialorder %v333, 0.0
  %vm529 = vcmp.gt.f32.partialorder %v338, 0.0
  %vm530 = vcmp.gt.f32.partialorder %v341, 0.0
  %vm531 = vcmp.gt.f32.partialorder %v346, 0.0
  %vm532 = vcmp.gt.f32.partialorder %v349, 0.0
  %vm533 = vcmp.gt.f32.partialorder %v354, 0.0
  %vm534 = vcmp.gt.f32.partialorder %v357, 0.0
  %vm535 = vcmp.gt.f32.partialorder %v362, 0.0
  %vm536 = vcmp.gt.f32.partialorder %v365, 0.0
  %vm537 = vcmp.gt.f32.partialorder %v370, 0.0
  %vm538 = vcmp.gt.f32.partialorder %v373, 0.0
  %vm539 = vcmp.gt.f32.partialorder %v378, 0.0
  %vm540 = vcmp.gt.f32.partialorder %v381, 0.0
  %vm541 = vcmp.gt.f32.partialorder %v386, 0.0
  %vm542 = vcmp.gt.f32.partialorder %v389, 0.0
  %vm543 = vcmp.gt.f32.partialorder %v394, 0.0
  %vm544 = vcmp.gt.f32.partialorder %v397, 0.0
  %vm545 = vcmp.gt.f32.partialorder %v402, 0.0
  %vm546 = vcmp.gt.f32.partialorder %v405, 0.0
  %vm547 = vcmp.gt.f32.partialorder %v410, 0.0
  %vm548 = vcmp.gt.f32.partialorder %v413, 0.0
  %vm549 = vcmp.gt.f32.partialorder %v418, 0.0
  %vm550 = vcmp.gt.f32.partialorder %v421, 0.0
  %vm551 = vcmp.gt.f32.partialorder %v426, 0.0
  %vm552 = vcmp.gt.f32.partialorder %v429, 0.0
  %vm553 = vcmp.gt.f32.partialorder %v434, 0.0
  %vm554 = vcmp.gt.f32.partialorder %v437, 0.0
  %vm555 = vcmp.gt.f32.partialorder %v442, 0.0
  %vm556 = vcmp.gt.f32.partialorder %v445, 0.0
  %vm557 = vcmp.gt.f32.partialorder %v450, 0.0
  %vm558 = vcmp.gt.f32.partialorder %v453, 0.0
  %vm559 = vcmp.gt.f32.partialorder %v458, 0.0
  %vm560 = vcmp.gt.f32.partialorder %v461, 0.0
  %vm561 = vcmp.gt.f32.partialorder %v466, 0.0
  %vm562 = vcmp.gt.f32.partialorder %v469, 0.0
  %vm563 = vcmp.gt.f32.partialorder %v474, 0.0
  %vm564 = vcmp.gt.f32.partialorder %v477, 0.0
  %vm565 = vcmp.gt.f32.partialorder %v482, 0.0
  %vm566 = vcmp.gt.f32.partialorder %v485, 0.0
  %vm567 = vcmp.gt.f32.partialorder %v490, 0.0
  %vm568 = vcmp.gt.f32.partialorder %v493, 0.0
  %vm569 = vcmp.gt.f32.partialorder %v498, 0.0
  %vm570 = vcmp.gt.f32.partialorder %v501, 0.0
  %vm571 = vcmp.gt.f32.partialorder %v506, 0.0
  %vm572 = vcmp.gt.f32.partialorder %v509, 0.0
  %vm573 = vcmp.gt.f32.partialorder %v514, 0.0
  %vm574 = vcmp.gt.f32.partialorder %v517, 0.0
  %vm575 = vcmp.gt.f32.partialorder %v522, 0.0
  %v576 = vmul.f32 %v330, 0.2
  %v577 = vmul.f32 %v333, 0.2
  %v578 = vmul.f32 %v338, 0.2
  %v579 = vmul.f32 %v341, 0.2
  %v580 = vmul.f32 %v346, 0.2
  %v581 = vmul.f32 %v349, 0.2
  %v582 = vmul.f32 %v354, 0.2
  %v583 = vmul.f32 %v357, 0.2
  %v584 = vmul.f32 %v362, 0.2
  %v585 = vmul.f32 %v365, 0.2
  %v586 = vmul.f32 %v370, 0.2
  %v587 = vmul.f32 %v373, 0.2
  %v588 = vmul.f32 %v378, 0.2
  %v589 = vmul.f32 %v381, 0.2
  %v590 = vmul.f32 %v386, 0.2
  %v591 = vmul.f32 %v389, 0.2
  %v592 = vmul.f32 %v394, 0.2
  %v593 = vmul.f32 %v397, 0.2
  %v594 = vmul.f32 %v402, 0.2
  %v595 = vmul.f32 %v405, 0.2
  %v596 = vmul.f32 %v410, 0.2
  %v597 = vmul.f32 %v413, 0.2
  %v598 = vmul.f32 %v418, 0.2
  %v599 = vmul.f32 %v421, 0.2
  %v600 = vmul.f32 %v426, 0.2
  %v601 = vmul.f32 %v429, 0.2
  %v602 = vmul.f32 %v434, 0.2
  %v603 = vmul.f32 %v437, 0.2
  %v604 = vmul.f32 %v442, 0.2
  %v605 = vmul.f32 %v445, 0.2
  %v606 = vmul.f32 %v450, 0.2
  %v607 = vmul.f32 %v453, 0.2
  %v608 = vmul.f32 %v458, 0.2
  %v609 = vmul.f32 %v461, 0.2
  %v610 = vmul.f32 %v466, 0.2
  %v611 = vmul.f32 %v469, 0.2
  %v612 = vmul.f32 %v474, 0.2
  %v613 = vmul.f32 %v477, 0.2
  %v614 = vmul.f32 %v482, 0.2
  %v615 = vmul.f32 %v485, 0.2
  %v616 = vmul.f32 %v490, 0.2
  %v617 = vmul.f32 %v493, 0.2
  %v618 = vmul.f32 %v498, 0.2
  %v619 = vmul.f32 %v501, 0.2
  %v620 = vmul.f32 %v506, 0.2
  %v621 = vmul.f32 %v509, 0.2
  %v622 = vmul.f32 %v514, 0.2
  %v623 = vmul.f32 %v517, 0.2
  %v624 = vmul.f32 %v522, 0.2
  %v625 = vsel %vm527, %v330, %v576
  %v626 = vsel %vm528, %v333, %v577
  %v627 = vsel %vm529, %v338, %v578
  %v628 = vsel %vm530, %v341, %v579
  %v629 = vsel %vm531, %v346, %v580
  %v630 = vsel %vm532, %v349, %v581
  %v631 = vsel %vm533, %v354, %v582
  %v632 = vsel %vm534, %v357, %v583
  %v633 = vsel %vm535, %v362, %v584
  %v634 = vsel %vm536, %v365, %v585
  %v635 = vsel %vm537, %v370, %v586
  %v636 = vsel %vm538, %v373, %v587
  %v637 = vsel %vm539, %v378, %v588
  %v638 = vsel %vm540, %v381, %v589
  %v639 = vsel %vm541, %v386, %v590
  %v640 = vsel %vm542, %v389, %v591
  %v641 = vsel %vm543, %v394, %v592
  %v642 = vsel %vm544, %v397, %v593
  %v643 = vsel %vm545, %v402, %v594
  %v644 = vsel %vm546, %v405, %v595
  %v645 = vsel %vm547, %v410, %v596
  %v646 = vsel %vm548, %v413, %v597
  %v647 = vsel %vm549, %v418, %v598
  %v648 = vsel %vm550, %v421, %v599
  %v649 = vsel %vm551, %v426, %v600
  %v650 = vsel %vm552, %v429, %v601
  %v651 = vsel %vm553, %v434, %v602
  %v652 = vsel %vm554, %v437, %v603
  %v653 = vsel %vm555, %v442, %v604
  %v654 = vsel %vm556, %v445, %v605
  %v655 = vsel %vm557, %v450, %v606
  %v656 = vsel %vm558, %v453, %v607
  %v657 = vsel %vm559, %v458, %v608
  %v658 = vsel %vm560, %v461, %v609
  %v659 = vsel %vm561, %v466, %v610
  %v660 = vsel %vm562, %v469, %v611
  %v661 = vsel %vm563, %v474, %v612
  %v662 = vsel %vm564, %v477, %v613
  %v663 = vsel %vm565, %v482, %v614
  %v664 = vsel %vm566, %v485, %v615
  %v665 = vsel %vm567, %v490, %v616
  %v666 = vsel %vm568, %v493, %v617
  %v667 = vsel %vm569, %v498, %v618
  %v668 = vsel %vm570, %v501, %v619
  %v669 = vsel %vm571, %v506, %v620
  %v670 = vsel %vm572, %v509, %v621
  %v671 = vsel %vm573, %v514, %v622
  %v672 = vsel %vm574, %v517, %v623
  %v673 = vsel %vm575, %v522, %v624
  %v674 = vpack.c.bf16 %v626, %v625
  %v675 = vpack.c.bf16 %v628, %v627
  %v676 = vpack.c.bf16 %v630, %v629
  %v677 = vpack.c.bf16 %v632, %v631
  %v678 = vpack.c.bf16 %v634, %v633
  %v679 = vpack.c.bf16 %v636, %v635
  %v680 = vpack.c.bf16 %v638, %v637
  %v681 = vpack.c.bf16 %v640, %v639
  %v682 = vpack.c.bf16 %v642, %v641
  %v683 = vpack.c.bf16 %v644, %v643
  %v684 = vpack.c.bf16 %v646, %v645
  %v685 = vpack.c.bf16 %v648, %v647
  %v686 = vpack.c.bf16 %v650, %v649
  %v687 = vpack.c.bf16 %v652, %v651
  %v688 = vpack.c.bf16 %v654, %v653
  %v689 = vpack.c.bf16 %v656, %v655
  %v690 = vpack.c.bf16 %v658, %v657
  %v691 = vpack.c.bf16 %v660, %v659
  %v692 = vpack.c.bf16 %v662, %v661
  %v693 = vpack.c.bf16 %v664, %v663
  %v694 = vpack.c.bf16 %v666, %v665
  %v695 = vpack.c.bf16 %v668, %v667
  %v696 = vpack.c.bf16 %v670, %v669
  %v697 = vpack.c.bf16 %v672, %v671
  %v698 = vpack.c.bf16 %v673, %v673
  %v699 = vld [vmem:[%s2] sm:$0xff]
  %v700 = vld [vmem:[%s2 + $0x8] sm:$0xff]
  %v701 = vld [vmem:[%s2 + $0x10] sm:$0xff]
  %v702 = vld [vmem:[%s2 + $0x18] sm:$0xff]
  %v703 = vld [vmem:[%s2 + $0x20] sm:$0xff]
  %v704 = vld [vmem:[%s2 + $0x28] sm:$0xff]
  %v705 = vld [vmem:[%s2 + $0x30] sm:$0xff]
  %v706 = vld [vmem:[%s2 + $0x38] sm:$0xff]
  %v707 = vld [vmem:[%s2 + $0x40] sm:$0xff]
  %v708 = vld [vmem:[%s2 + $0x48] sm:$0xff]
  %v709 = vld [vmem:[%s2 + $0x50] sm:$0xff]
  %v710 = vld [vmem:[%s2 + $0x58] sm:$0xff]
  %v711 = vld [vmem:[%s2 + $0x60] sm:$0xff]
  %v712 = vld [vmem:[%s2 + $0x68] sm:$0xff]
  %v713 = vld [vmem:[%s2 + $0x70] sm:$0xff]
  %v714 = vld [vmem:[%s2 + $0x78] sm:$0xff]
  %v715 = vld [vmem:[%s2 + $0x80] sm:$0xff]
  %v716 = vld [vmem:[%s2 + $0x88] sm:$0xff]
  %v717 = vld [vmem:[%s2 + $0x90] sm:$0xff]
  %v718 = vld [vmem:[%s2 + $0x98] sm:$0xff]
  %v719 = vld [vmem:[%s2 + $0xa0] sm:$0xff]
  %v720 = vld [vmem:[%s2 + $0xa8] sm:$0xff]
  %v721 = vld [vmem:[%s2 + $0xb0] sm:$0xff]
  %v722 = vld [vmem:[%s2 + $0xb8] sm:$0xff]
  %v723 = vld [vmem:[%s2 + $0xc0] sm:$0x11]
  %v724 = vld [vmem:[%s2 + $0xc8] sm:$0x11]
  %v751 = vunpack.c.l.b16 %v699
  %v752 = vunpack.c.h.b16 %v699
  %v753 = vunpack.c.l.b16 %v700
  %v754 = vunpack.c.h.b16 %v700
  %v755 = vunpack.c.l.b16 %v701
  %v756 = vunpack.c.h.b16 %v701
  %v757 = vunpack.c.l.b16 %v702
  %v758 = vunpack.c.h.b16 %v702
  %v759 = vunpack.c.l.b16 %v703
  %v760 = vunpack.c.h.b16 %v703
  %v761 = vunpack.c.l.b16 %v704
  %v762 = vunpack.c.h.b16 %v704
  %v763 = vunpack.c.l.b16 %v705
  %v764 = vunpack.c.h.b16 %v705
  %v765 = vunpack.c.l.b16 %v706
  %v766 = vunpack.c.h.b16 %v706
  %v767 = vunpack.c.l.b16 %v707
  %v768 = vunpack.c.h.b16 %v707
  %v769 = vunpack.c.l.b16 %v708
  %v770 = vunpack.c.h.b16 %v708
  %v771 = vunpack.c.l.b16 %v709
  %v772 = vunpack.c.h.b16 %v709
  %v773 = vunpack.c.l.b16 %v710
  %v774 = vunpack.c.h.b16 %v710
  %v775 = vunpack.c.l.b16 %v711
  %v776 = vunpack.c.h.b16 %v711
  %v777 = vunpack.c.l.b16 %v712
  %v778 = vunpack.c.h.b16 %v712
  %v779 = vunpack.c.l.b16 %v713
  %v780 = vunpack.c.h.b16 %v713
  %v781 = vunpack.c.l.b16 %v714
  %v782 = vunpack.c.h.b16 %v714
  %v783 = vunpack.c.l.b16 %v715
  %v784 = vunpack.c.h.b16 %v715
  %v785 = vunpack.c.l.b16 %v716
  %v786 = vunpack.c.h.b16 %v716
  %v787 = vunpack.c.l.b16 %v717
  %v788 = vunpack.c.h.b16 %v717
  %v789 = vunpack.c.l.b16 %v718
  %v790 = vunpack.c.h.b16 %v718
  %v791 = vunpack.c.l.b16 %v719
  %v792 = vunpack.c.h.b16 %v719
  %v793 = vunpack.c.l.b16 %v720
  %v794 = vunpack.c.h.b16 %v720
  %v795 = vunpack.c.l.b16 %v721
  %v796 = vunpack.c.h.b16 %v721
  %v797 = vunpack.c.l.b16 %v722
  %v798 = vunpack.c.h.b16 %v722
  %v799 = vunpack.c.l.b16 %v723
  %v800 = vunpack.c.h.b16 %v723
  %v801 = vunpack.c.l.b16 %v724
  %v802 = vunpack.c.h.b16 %v724
  %v803 = vpack.c.b16 %v755, %v751
  %v804 = vpack.c.b16 %v756, %v752
  %v805 = vpack.c.b16 %v757, %v753
  %v806 = vpack.c.b16 %v758, %v754
  %v807 = vpack.c.b16 %v763, %v759
  %v808 = vpack.c.b16 %v764, %v760
  %v809 = vpack.c.b16 %v765, %v761
  %v810 = vpack.c.b16 %v766, %v762
  %v811 = vpack.c.b16 %v771, %v767
  %v812 = vpack.c.b16 %v772, %v768
  %v813 = vpack.c.b16 %v773, %v769
  %v814 = vpack.c.b16 %v774, %v770
  %v815 = vpack.c.b16 %v779, %v775
  %v816 = vpack.c.b16 %v780, %v776
  %v817 = vpack.c.b16 %v781, %v777
  %v818 = vpack.c.b16 %v782, %v778
  %v819 = vpack.c.b16 %v787, %v783
  %v820 = vpack.c.b16 %v788, %v784
  %v821 = vpack.c.b16 %v789, %v785
  %v822 = vpack.c.b16 %v790, %v786
  %v823 = vpack.c.b16 %v795, %v791
  %v824 = vpack.c.b16 %v796, %v792
  %v825 = vpack.c.b16 %v797, %v793
  %v826 = vpack.c.b16 %v798, %v794
  %v827 = vpack.c.b16 %v799, %v799
  %v828 = vpack.c.b16 %v800, %v800
  %v829 = vpack.c.b16 %v801, %v801
  %v830 = vpack.c.b16 %v802, %v802
  %vm852 = vcmask 64512
  %v854 = vsel %vm852, %v806, 0
  %v857 = vsel %vm852, %v810, 0
  %v860 = vsel %vm852, %v814, 0
  %v863 = vsel %vm852, %v818, 0
  %v866 = vsel %vm852, %v822, 0
  %v869 = vsel %vm852, %v826, 0
  %v872 = vsel %vm852, %v830, 0
  %vm874 = vcmask 1043456
  %v876 = vsel %vm874, %v698, 0
  %878 = vmatprep.subr.bf16.mxu0 0
  %879 = vmatpush1.bf16.msra.mxu0 %v674
  %880 = vmatprep.subr.bf16.mxu0 0
  %881 = vmatpush1.bf16.msra.mxu0 %v675
  %882 = vmatprep.subr.bf16.mxu0 0
  %883 = vmatpush1.bf16.msra.mxu0 %v676
  %884 = vmatprep.subr.bf16.mxu0 0
  %885 = vmatpush1.bf16.msra.mxu0 %v677
  %886 = vmatprep.subr.bf16.mxu0 0
  %887 = vmatpush1.bf16.msra.mxu0 %v678
  %888 = vmatprep.subr.bf16.mxu0 0
  %889 = vmatpush1.bf16.msra.mxu0 %v679
  %890 = vmatprep.subr.bf16.mxu0 0
  %891 = vmatpush1.bf16.msra.mxu0 %v680
  %892 = vmatprep.subr.bf16.mxu0 0
  %893 = vmatpush1.bf16.msra.mxu0 %v681
  %894 = vmatprep.subr.bf16.mxu0 0
  %895 = vmatpush1.bf16.msra.mxu0 %v682
  %896 = vmatprep.subr.bf16.mxu0 0
  %897 = vmatpush1.bf16.msra.mxu0 %v683
  %898 = vmatprep.subr.bf16.mxu0 0
  %899 = vmatpush1.bf16.msra.mxu0 %v684
  %900 = vmatprep.subr.bf16.mxu0 0
  %901 = vmatpush1.bf16.msra.mxu0 %v685
  %902 = vmatprep.subr.bf16.mxu0 0
  %903 = vmatpush1.bf16.msra.mxu0 %v686
  %904 = vmatprep.subr.bf16.mxu0 0
  %905 = vmatpush1.bf16.msra.mxu0 %v687
  %906 = vmatprep.subr.bf16.mxu0 0
  %907 = vmatpush1.bf16.msra.mxu0 %v688
  %908 = vmatprep.subr.bf16.mxu0 0
  %909 = vmatpush1.bf16.msra.mxu0 %v689
  %910 = vmatprep.mubr.bf16.mxu0 %v804
  %911 = vmatmul.mubr.bf16.gmra.mrb[0].mxu0 %v803
  %v912 = vpop.f32.mrb[0].mxu0
  %v913 = vadd.f32 0.0, %v912
  %v914 = vpop.f32.mrb[0].mxu0
  %v915 = vpop.f32.mrb[0].mxu0
  %v916 = vadd.f32 0.0, %v915
  %v917 = vpop.f32.mrb[0].mxu0
  %918 = vmatprep.mubr.bf16.mxu0 %v808
  %919 = vmatmul.mubr.bf16.gmra.mrb[0].mxu0 %v807
  %v920 = vpop.f32.mrb[0].mxu0
  %v921 = vadd.f32 0.0, %v920
  %v922 = vpop.f32.mrb[0].mxu0
  %v923 = vpop.f32.mrb[0].mxu0
  %v924 = vadd.f32 0.0, %v923
  %v925 = vpop.f32.mrb[0].mxu0
  %926 = vmatprep.mubr.bf16.mxu0 %v812
  %927 = vmatmul.mubr.bf16.gmra.mrb[0].mxu0 %v811
  %v928 = vpop.f32.mrb[0].mxu0
  %v929 = vadd.f32 0.0, %v928
  %v930 = vpop.f32.mrb[0].mxu0
  %v931 = vpop.f32.mrb[0].mxu0
  %v932 = vadd.f32 0.0, %v931
  %v933 = vpop.f32.mrb[0].mxu0
  %934 = vmatprep.mubr.bf16.mxu0 %v816
  %935 = vmatmul.mubr.bf16.gmra.mrb[0].mxu0 %v815
  %v936 = vpop.f32.mrb[0].mxu0
  %v937 = vadd.f32 0.0, %v936
  %v938 = vpop.f32.mrb[0].mxu0
  %v939 = vpop.f32.mrb[0].mxu0
  %v940 = vadd.f32 0.0, %v939
  %v941 = vpop.f32.mrb[0].mxu0
  %942 = vmatprep.mubr.bf16.mxu0 %v820
  %943 = vmatmul.mubr.bf16.gmra.mrb[0].mxu0 %v819
  %v944 = vpop.f32.mrb[0].mxu0
  %v945 = vadd.f32 0.0, %v944
  %v946 = vpop.f32.mrb[0].mxu0
  %v947 = vpop.f32.mrb[0].mxu0
  %v948 = vadd.f32 0.0, %v947
  %v949 = vpop.f32.mrb[0].mxu0
  %950 = vmatprep.mubr.bf16.mxu0 %v824
  %951 = vmatmul.mubr.bf16.gmra.mrb[0].mxu0 %v823
  %v952 = vpop.f32.mrb[0].mxu0
  %v953 = vadd.f32 0.0, %v952
  %v954 = vpop.f32.mrb[0].mxu0
  %v955 = vpop.f32.mrb[0].mxu0
  %v956 = vadd.f32 0.0, %v955
  %v957 = vpop.f32.mrb[0].mxu0
  %958 = vmatprep.mubr.bf16.mxu0 %v828
  %959 = vmatmul.mubr.bf16.gmra.mrb[0].mxu0 %v827
  %v960 = vpop.f32.mrb[0].mxu0
  %v961 = vadd.f32 0.0, %v960
  %v962 = vpop.f32.mrb[0].mxu0
  %v963 = vpop.f32.mrb[0].mxu0
  %v964 = vpop.f32.mrb[0].mxu0
  %965 = vdwg.mxu0
  %966 = vmatprep.subr.bf16.mxu0 0
  %967 = vmatpush1.bf16.msra.mxu0 %v690
  %968 = vmatprep.subr.bf16.mxu0 0
  %969 = vmatpush1.bf16.msra.mxu0 %v691
  %970 = vmatprep.subr.bf16.mxu0 0
  %971 = vmatpush1.bf16.msra.mxu0 %v692
  %972 = vmatprep.subr.bf16.mxu0 0
  %973 = vmatpush1.bf16.msra.mxu0 %v693
  %974 = vmatprep.subr.bf16.mxu0 0
  %975 = vmatpush1.bf16.msra.mxu0 %v694
  %976 = vmatprep.subr.bf16.mxu0 0
  %977 = vmatpush1.bf16.msra.mxu0 %v695
  %978 = vmatprep.subr.bf16.mxu0 0
  %979 = vmatpush1.bf16.msra.mxu0 %v696
  %980 = vmatprep.subr.bf16.mxu0 0
  %981 = vmatpush1.bf16.msra.mxu0 %v697
  %982 = vmatprep.subr.bf16.mxu0 0
  %983 = vmatpush1.bf16.msra.mxu0 %v876
  %984 = vmatprep.subr.bf16.mxu0 0
  %985 = vmatpush1.bf16.msra.mxu0 0
  %986 = vmatprep.subr.bf16.mxu0 0
  %987 = vmatpush1.bf16.msra.mxu0 0
  %988 = vmatprep.subr.bf16.mxu0 0
  %989 = vmatpush1.bf16.msra.mxu0 0
  %990 = vmatprep.subr.bf16.mxu0 0
  %991 = vmatpush1.bf16.msra.mxu0 0
  %992 = vmatprep.subr.bf16.mxu0 0
  %993 = vmatpush1.bf16.msra.mxu0 0
  %994 = vmatprep.subr.bf16.mxu0 0
  %995 = vmatpush1.bf16.msra.mxu0 0
  %996 = vmatprep.subr.bf16.mxu0 0
  %997 = vmatpush1.bf16.msra.mxu0 0
  %998 = vmatprep.mubr.bf16.mxu0 %v854
  %999 = vmatmul.mubr.bf16.gmra.mrb[0].mxu0 %v805
  %v1000 = vpop.f32.mrb[0].mxu0
  %v1001 = vadd.f32 %v913, %v1000
  %v1002 = vpop.f32.mrb[0].mxu0
  %v1003 = vpop.f32.mrb[0].mxu0
  %v1004 = vadd.f32 %v916, %v1003
  %v1005 = vpop.f32.mrb[0].mxu0
  %1006 = vmatprep.mubr.bf16.mxu0 %v857
  %1007 = vmatmul.mubr.bf16.gmra.mrb[0].mxu0 %v809
  %v1008 = vpop.f32.mrb[0].mxu0
  %v1009 = vadd.f32 %v921, %v1008
  %v1010 = vpop.f32.mrb[0].mxu0
  %v1011 = vpop.f32.mrb[0].mxu0
  %v1012 = vadd.f32 %v924, %v1011
  %v1013 = vpop.f32.mrb[0].mxu0
  %1014 = vmatprep.mubr.bf16.mxu0 %v860
  %1015 = vmatmul.mubr.bf16.gmra.mrb[0].mxu0 %v813
  %v1016 = vpop.f32.mrb[0].mxu0
  %v1017 = vadd.f32 %v929, %v1016
  %v1018 = vpop.f32.mrb[0].mxu0
  %v1019 = vpop.f32.mrb[0].mxu0
  %v1020 = vadd.f32 %v932, %v1019
  %v1021 = vpop.f32.mrb[0].mxu0
  %1022 = vmatprep.mubr.bf16.mxu0 %v863
  %1023 = vmatmul.mubr.bf16.gmra.mrb[0].mxu0 %v817
  %v1024 = vpop.f32.mrb[0].mxu0
  %v1025 = vadd.f32 %v937, %v1024
  %v1026 = vpop.f32.mrb[0].mxu0
  %v1027 = vpop.f32.mrb[0].mxu0
  %v1028 = vadd.f32 %v940, %v1027
  %v1029 = vpop.f32.mrb[0].mxu0
  %1030 = vmatprep.mubr.bf16.mxu0 %v866
  %1031 = vmatmul.mubr.bf16.gmra.mrb[0].mxu0 %v821
  %v1032 = vpop.f32.mrb[0].mxu0
  %v1033 = vadd.f32 %v945, %v1032
  %v1034 = vpop.f32.mrb[0].mxu0
  %v1035 = vpop.f32.mrb[0].mxu0
  %v1036 = vadd.f32 %v948, %v1035
  %v1037 = vpop.f32.mrb[0].mxu0
  %1038 = vmatprep.mubr.bf16.mxu0 %v869
  %1039 = vmatmul.mubr.bf16.gmra.mrb[0].mxu0 %v825
  %v1040 = vpop.f32.mrb[0].mxu0
  %v1041 = vadd.f32 %v953, %v1040
  %v1042 = vpop.f32.mrb[0].mxu0
  %v1043 = vpop.f32.mrb[0].mxu0
  %v1044 = vadd.f32 %v956, %v1043
  %v1045 = vpop.f32.mrb[0].mxu0
  %1046 = vmatprep.mubr.bf16.mxu0 %v872
  %1047 = vmatmul.mubr.bf16.gmra.mrb[0].mxu0 %v829
  %v1048 = vpop.f32.mrb[0].mxu0
  %v1049 = vadd.f32 %v961, %v1048
  %v1050 = vpop.f32.mrb[0].mxu0
  %v1051 = vpop.f32.mrb[0].mxu0
  %v1052 = vpop.f32.mrb[0].mxu0
  %1053 = vdwg.mxu0
  %v1054 = vpack.c.bf16 %v1004, %v1001
  %v1055 = vpack.c.bf16 %v1012, %v1009
  %v1056 = vpack.c.bf16 %v1020, %v1017
  %v1057 = vpack.c.bf16 %v1028, %v1025
  %v1058 = vpack.c.bf16 %v1036, %v1033
  %v1059 = vpack.c.bf16 %v1044, %v1041
  %v1060 = vpack.c.bf16 %v1049, %v1049
  %v1061 = vld [vmem:[%s3] sm:$0xf]
  %v1062 = vld [vmem:[%s3 + $0x4] sm:$0xf]
  %v1063 = vld [vmem:[%s3 + $0x8] sm:$0xf]
  %v1064 = vld [vmem:[%s3 + $0xc] sm:$0xf]
  %v1065 = vld [vmem:[%s3 + $0x10] sm:$0xf]
  %v1066 = vld [vmem:[%s3 + $0x14] sm:$0xf]
  %v1067 = vld [vmem:[%s3 + $0x18] sm:$0xf]
  %v1068 = vld [vmem:[%s3 + $0x1c] sm:$0xf]
  %v1069 = vld [vmem:[%s3 + $0x20] sm:$0xf]
  %v1070 = vld [vmem:[%s3 + $0x24] sm:$0xf]
  %v1071 = vld [vmem:[%s3 + $0x28] sm:$0xf]
  %v1072 = vld [vmem:[%s3 + $0x2c] sm:$0xf]
  %v1073 = vld [vmem:[%s3 + $0x30] sm:$0xf]
  %v1074 = vld [vmem:[%s3 + $0x34] sm:$0xf]
  %v1075 = vld [vmem:[%s3 + $0x38] sm:$0xf]
  %v1076 = vld [vmem:[%s3 + $0x3c] sm:$0xf]
  %s1077 = scalar_lea.vmem %s2, 208
  %v1078 = vld [vmem:[%s1077] sm:$0xff]
  %v1079 = vld [vmem:[%s1077 + $0x8] sm:$0xff]
  %v1080 = vld [vmem:[%s1077 + $0x10] sm:$0xff]
  %v1081 = vld [vmem:[%s1077 + $0x18] sm:$0xff]
  %v1082 = vld [vmem:[%s1077 + $0x20] sm:$0xff]
  %v1083 = vld [vmem:[%s1077 + $0x28] sm:$0xff]
  %v1084 = vld [vmem:[%s1077 + $0x30] sm:$0xff]
  %v1085 = vld [vmem:[%s1077 + $0x38] sm:$0xff]
  %v1086 = vld [vmem:[%s1077 + $0x40] sm:$0xff]
  %v1087 = vld [vmem:[%s1077 + $0x48] sm:$0xff]
  %v1088 = vld [vmem:[%s1077 + $0x50] sm:$0xff]
  %v1089 = vld [vmem:[%s1077 + $0x58] sm:$0xff]
  %v1090 = vld [vmem:[%s1077 + $0x60] sm:$0xff]
  %v1091 = vld [vmem:[%s1077 + $0x68] sm:$0xff]
  %v1092 = vld [vmem:[%s1077 + $0x70] sm:$0xff]
  %v1093 = vld [vmem:[%s1077 + $0x78] sm:$0xff]
  %v1094 = vld [vmem:[%s1077 + $0x80] sm:$0xff]
  %v1095 = vld [vmem:[%s1077 + $0x88] sm:$0xff]
  %v1096 = vld [vmem:[%s1077 + $0x90] sm:$0xff]
  %v1097 = vld [vmem:[%s1077 + $0x98] sm:$0xff]
  %v1098 = vld [vmem:[%s1077 + $0xa0] sm:$0xff]
  %v1099 = vld [vmem:[%s1077 + $0xa8] sm:$0xff]
  %v1100 = vld [vmem:[%s1077 + $0xb0] sm:$0xff]
  %v1101 = vld [vmem:[%s1077 + $0xb8] sm:$0xff]
  %v1102 = vld [vmem:[%s1077 + $0xc0] sm:$0x11]
  %v1103 = vld [vmem:[%s1077 + $0xc8] sm:$0x11]
  %v1130 = vunpack.c.l.b16 %v1078
  %v1131 = vunpack.c.h.b16 %v1078
  %v1132 = vunpack.c.l.b16 %v1079
  %v1133 = vunpack.c.h.b16 %v1079
  %v1134 = vunpack.c.l.b16 %v1080
  %v1135 = vunpack.c.h.b16 %v1080
  %v1136 = vunpack.c.l.b16 %v1081
  %v1137 = vunpack.c.h.b16 %v1081
  %v1138 = vunpack.c.l.b16 %v1082
  %v1139 = vunpack.c.h.b16 %v1082
  %v1140 = vunpack.c.l.b16 %v1083
  %v1141 = vunpack.c.h.b16 %v1083
  %v1142 = vunpack.c.l.b16 %v1084
  %v1143 = vunpack.c.h.b16 %v1084
  %v1144 = vunpack.c.l.b16 %v1085
  %v1145 = vunpack.c.h.b16 %v1085
  %v1146 = vunpack.c.l.b16 %v1086
  %v1147 = vunpack.c.h.b16 %v1086
  %v1148 = vunpack.c.l.b16 %v1087
  %v1149 = vunpack.c.h.b16 %v1087
  %v1150 = vunpack.c.l.b16 %v1088
  %v1151 = vunpack.c.h.b16 %v1088
  %v1152 = vunpack.c.l.b16 %v1089
  %v1153 = vunpack.c.h.b16 %v1089
  %v1154 = vunpack.c.l.b16 %v1090
  %v1155 = vunpack.c.h.b16 %v1090
  %v1156 = vunpack.c.l.b16 %v1091
  %v1157 = vunpack.c.h.b16 %v1091
  %v1158 = vunpack.c.l.b16 %v1092
  %v1159 = vunpack.c.h.b16 %v1092
  %v1160 = vunpack.c.l.b16 %v1093
  %v1161 = vunpack.c.h.b16 %v1093
  %v1162 = vunpack.c.l.b16 %v1094
  %v1163 = vunpack.c.h.b16 %v1094
  %v1164 = vunpack.c.l.b16 %v1095
  %v1165 = vunpack.c.h.b16 %v1095
  %v1166 = vunpack.c.l.b16 %v1096
  %v1167 = vunpack.c.h.b16 %v1096
  %v1168 = vunpack.c.l.b16 %v1097
  %v1169 = vunpack.c.h.b16 %v1097
  %v1170 = vunpack.c.l.b16 %v1098
  %v1171 = vunpack.c.h.b16 %v1098
  %v1172 = vunpack.c.l.b16 %v1099
  %v1173 = vunpack.c.h.b16 %v1099
  %v1174 = vunpack.c.l.b16 %v1100
  %v1175 = vunpack.c.h.b16 %v1100
  %v1176 = vunpack.c.l.b16 %v1101
  %v1177 = vunpack.c.h.b16 %v1101
  %v1178 = vunpack.c.l.b16 %v1102
  %v1179 = vunpack.c.h.b16 %v1102
  %v1180 = vunpack.c.l.b16 %v1103
  %v1181 = vunpack.c.h.b16 %v1103
  %v1182 = vpack.c.b16 %v1134, %v1130
  %v1183 = vpack.c.b16 %v1135, %v1131
  %v1184 = vpack.c.b16 %v1136, %v1132
  %v1185 = vpack.c.b16 %v1137, %v1133
  %v1186 = vpack.c.b16 %v1142, %v1138
  %v1187 = vpack.c.b16 %v1143, %v1139
  %v1188 = vpack.c.b16 %v1144, %v1140
  %v1189 = vpack.c.b16 %v1145, %v1141
  %v1190 = vpack.c.b16 %v1150, %v1146
  %v1191 = vpack.c.b16 %v1151, %v1147
  %v1192 = vpack.c.b16 %v1152, %v1148
  %v1193 = vpack.c.b16 %v1153, %v1149
  %v1194 = vpack.c.b16 %v1158, %v1154
  %v1195 = vpack.c.b16 %v1159, %v1155
  %v1196 = vpack.c.b16 %v1160, %v1156
  %v1197 = vpack.c.b16 %v1161, %v1157
  %v1198 = vpack.c.b16 %v1166, %v1162
  %v1199 = vpack.c.b16 %v1167, %v1163
  %v1200 = vpack.c.b16 %v1168, %v1164
  %v1201 = vpack.c.b16 %v1169, %v1165
  %v1202 = vpack.c.b16 %v1174, %v1170
  %v1203 = vpack.c.b16 %v1175, %v1171
  %v1204 = vpack.c.b16 %v1176, %v1172
  %v1205 = vpack.c.b16 %v1177, %v1173
  %v1206 = vpack.c.b16 %v1178, %v1178
  %v1207 = vpack.c.b16 %v1179, %v1179
  %v1208 = vpack.c.b16 %v1180, %v1180
  %v1209 = vpack.c.b16 %v1181, %v1181
  %v1232 = vsel %vm852, %v1185, 0
  %v1235 = vsel %vm852, %v1189, 0
  %v1238 = vsel %vm852, %v1193, 0
  %v1241 = vsel %vm852, %v1197, 0
  %v1244 = vsel %vm852, %v1201, 0
  %v1247 = vsel %vm852, %v1205, 0
  %v1250 = vsel %vm852, %v1209, 0
  %1252 = vmatprep.subr.bf16.mxu0 0
  %1253 = vmatpush1.bf16.msra.mxu0 %v674
  %1254 = vmatprep.subr.bf16.mxu0 0
  %1255 = vmatpush1.bf16.msra.mxu0 %v675
  %1256 = vmatprep.subr.bf16.mxu0 0
  %1257 = vmatpush1.bf16.msra.mxu0 %v676
  %1258 = vmatprep.subr.bf16.mxu0 0
  %1259 = vmatpush1.bf16.msra.mxu0 %v677
  %1260 = vmatprep.subr.bf16.mxu0 0
  %1261 = vmatpush1.bf16.msra.mxu0 %v678
  %1262 = vmatprep.subr.bf16.mxu0 0
  %1263 = vmatpush1.bf16.msra.mxu0 %v679
  %1264 = vmatprep.subr.bf16.mxu0 0
  %1265 = vmatpush1.bf16.msra.mxu0 %v680
  %1266 = vmatprep.subr.bf16.mxu0 0
  %1267 = vmatpush1.bf16.msra.mxu0 %v681
  %1268 = vmatprep.subr.bf16.mxu0 0
  %1269 = vmatpush1.bf16.msra.mxu0 %v682
  %1270 = vmatprep.subr.bf16.mxu0 0
  %1271 = vmatpush1.bf16.msra.mxu0 %v683
  %1272 = vmatprep.subr.bf16.mxu0 0
  %1273 = vmatpush1.bf16.msra.mxu0 %v684
  %1274 = vmatprep.subr.bf16.mxu0 0
  %1275 = vmatpush1.bf16.msra.mxu0 %v685
  %1276 = vmatprep.subr.bf16.mxu0 0
  %1277 = vmatpush1.bf16.msra.mxu0 %v686
  %1278 = vmatprep.subr.bf16.mxu0 0
  %1279 = vmatpush1.bf16.msra.mxu0 %v687
  %1280 = vmatprep.subr.bf16.mxu0 0
  %1281 = vmatpush1.bf16.msra.mxu0 %v688
  %1282 = vmatprep.subr.bf16.mxu0 0
  %1283 = vmatpush1.bf16.msra.mxu0 %v689
  %1284 = vmatprep.mubr.bf16.mxu0 %v1183
  %1285 = vmatmul.mubr.bf16.gmra.mrb[0].mxu0 %v1182
  %v1286 = vpop.f32.mrb[0].mxu0
  %v1287 = vadd.f32 0.0, %v1286
  %v1288 = vpop.f32.mrb[0].mxu0
  %v1289 = vpop.f32.mrb[0].mxu0
  %v1290 = vadd.f32 0.0, %v1289
  %v1291 = vpop.f32.mrb[0].mxu0
  %1292 = vmatprep.mubr.bf16.mxu0 %v1187
  %1293 = vmatmul.mubr.bf16.gmra.mrb[0].mxu0 %v1186
  %v1294 = vpop.f32.mrb[0].mxu0
  %v1295 = vadd.f32 0.0, %v1294
  %v1296 = vpop.f32.mrb[0].mxu0
  %v1297 = vpop.f32.mrb[0].mxu0
  %v1298 = vadd.f32 0.0, %v1297
  %v1299 = vpop.f32.mrb[0].mxu0
  %1300 = vmatprep.mubr.bf16.mxu0 %v1191
  %1301 = vmatmul.mubr.bf16.gmra.mrb[0].mxu0 %v1190
  %v1302 = vpop.f32.mrb[0].mxu0
  %v1303 = vadd.f32 0.0, %v1302
  %v1304 = vpop.f32.mrb[0].mxu0
  %v1305 = vpop.f32.mrb[0].mxu0
  %v1306 = vadd.f32 0.0, %v1305
  %v1307 = vpop.f32.mrb[0].mxu0
  %1308 = vmatprep.mubr.bf16.mxu0 %v1195
  %1309 = vmatmul.mubr.bf16.gmra.mrb[0].mxu0 %v1194
  %v1310 = vpop.f32.mrb[0].mxu0
  %v1311 = vadd.f32 0.0, %v1310
  %v1312 = vpop.f32.mrb[0].mxu0
  %v1313 = vpop.f32.mrb[0].mxu0
  %v1314 = vadd.f32 0.0, %v1313
  %v1315 = vpop.f32.mrb[0].mxu0
  %1316 = vmatprep.mubr.bf16.mxu0 %v1199
  %1317 = vmatmul.mubr.bf16.gmra.mrb[0].mxu0 %v1198
  %v1318 = vpop.f32.mrb[0].mxu0
  %v1319 = vadd.f32 0.0, %v1318
  %v1320 = vpop.f32.mrb[0].mxu0
  %v1321 = vpop.f32.mrb[0].mxu0
  %v1322 = vadd.f32 0.0, %v1321
  %v1323 = vpop.f32.mrb[0].mxu0
  %1324 = vmatprep.mubr.bf16.mxu0 %v1203
  %1325 = vmatmul.mubr.bf16.gmra.mrb[0].mxu0 %v1202
  %v1326 = vpop.f32.mrb[0].mxu0
  %v1327 = vadd.f32 0.0, %v1326
  %v1328 = vpop.f32.mrb[0].mxu0
  %v1329 = vpop.f32.mrb[0].mxu0
  %v1330 = vadd.f32 0.0, %v1329
  %v1331 = vpop.f32.mrb[0].mxu0
  %1332 = vmatprep.mubr.bf16.mxu0 %v1207
  %1333 = vmatmul.mubr.bf16.gmra.mrb[0].mxu0 %v1206
  %v1334 = vpop.f32.mrb[0].mxu0
  %v1335 = vadd.f32 0.0, %v1334
  %v1336 = vpop.f32.mrb[0].mxu0
  %v1337 = vpop.f32.mrb[0].mxu0
  %v1338 = vpop.f32.mrb[0].mxu0
  %1339 = vdwg.mxu0
  %1340 = vmatprep.subr.bf16.mxu0 0
  %1341 = vmatpush1.bf16.msra.mxu0 %v690
  %1342 = vmatprep.subr.bf16.mxu0 0
  %1343 = vmatpush1.bf16.msra.mxu0 %v691
  %1344 = vmatprep.subr.bf16.mxu0 0
  %1345 = vmatpush1.bf16.msra.mxu0 %v692
  %1346 = vmatprep.subr.bf16.mxu0 0
  %1347 = vmatpush1.bf16.msra.mxu0 %v693
  %1348 = vmatprep.subr.bf16.mxu0 0
  %1349 = vmatpush1.bf16.msra.mxu0 %v694
  %1350 = vmatprep.subr.bf16.mxu0 0
  %1351 = vmatpush1.bf16.msra.mxu0 %v695
  %1352 = vmatprep.subr.bf16.mxu0 0
  %1353 = vmatpush1.bf16.msra.mxu0 %v696
  %1354 = vmatprep.subr.bf16.mxu0 0
  %1355 = vmatpush1.bf16.msra.mxu0 %v697
  %1356 = vmatprep.subr.bf16.mxu0 0
  %1357 = vmatpush1.bf16.msra.mxu0 %v876
  %1358 = vmatprep.subr.bf16.mxu0 0
  %1359 = vmatpush1.bf16.msra.mxu0 0
  %1360 = vmatprep.subr.bf16.mxu0 0
  %1361 = vmatpush1.bf16.msra.mxu0 0
  %1362 = vmatprep.subr.bf16.mxu0 0
  %1363 = vmatpush1.bf16.msra.mxu0 0
  %1364 = vmatprep.subr.bf16.mxu0 0
  %1365 = vmatpush1.bf16.msra.mxu0 0
  %1366 = vmatprep.subr.bf16.mxu0 0
  %1367 = vmatpush1.bf16.msra.mxu0 0
  %1368 = vmatprep.subr.bf16.mxu0 0
  %1369 = vmatpush1.bf16.msra.mxu0 0
  %1370 = vmatprep.subr.bf16.mxu0 0
  %1371 = vmatpush1.bf16.msra.mxu0 0
  %1372 = vmatprep.mubr.bf16.mxu0 %v1232
  %1373 = vmatmul.mubr.bf16.gmra.mrb[0].mxu0 %v1184
  %v1374 = vpop.f32.mrb[0].mxu0
  %v1375 = vadd.f32 %v1287, %v1374
  %v1376 = vpop.f32.mrb[0].mxu0
  %v1377 = vpop.f32.mrb[0].mxu0
  %v1378 = vadd.f32 %v1290, %v1377
  %v1379 = vpop.f32.mrb[0].mxu0
  %1380 = vmatprep.mubr.bf16.mxu0 %v1235
  %1381 = vmatmul.mubr.bf16.gmra.mrb[0].mxu0 %v1188
  %v1382 = vpop.f32.mrb[0].mxu0
  %v1383 = vadd.f32 %v1295, %v1382
  %v1384 = vpop.f32.mrb[0].mxu0
  %v1385 = vpop.f32.mrb[0].mxu0
  %v1386 = vadd.f32 %v1298, %v1385
  %v1387 = vpop.f32.mrb[0].mxu0
  %1388 = vmatprep.mubr.bf16.mxu0 %v1238
  %1389 = vmatmul.mubr.bf16.gmra.mrb[0].mxu0 %v1192
  %v1390 = vpop.f32.mrb[0].mxu0
  %v1391 = vadd.f32 %v1303, %v1390
  %v1392 = vpop.f32.mrb[0].mxu0
  %v1393 = vpop.f32.mrb[0].mxu0
  %v1394 = vadd.f32 %v1306, %v1393
  %v1395 = vpop.f32.mrb[0].mxu0
  %1396 = vmatprep.mubr.bf16.mxu0 %v1241
  %1397 = vmatmul.mubr.bf16.gmra.mrb[0].mxu0 %v1196
  %v1398 = vpop.f32.mrb[0].mxu0
  %v1399 = vadd.f32 %v1311, %v1398
  %v1400 = vpop.f32.mrb[0].mxu0
  %v1401 = vpop.f32.mrb[0].mxu0
  %v1402 = vadd.f32 %v1314, %v1401
  %v1403 = vpop.f32.mrb[0].mxu0
  %1404 = vmatprep.mubr.bf16.mxu0 %v1244
  %1405 = vmatmul.mubr.bf16.gmra.mrb[0].mxu0 %v1200
  %v1406 = vpop.f32.mrb[0].mxu0
  %v1407 = vadd.f32 %v1319, %v1406
  %v1408 = vpop.f32.mrb[0].mxu0
  %v1409 = vpop.f32.mrb[0].mxu0
  %v1410 = vadd.f32 %v1322, %v1409
  %v1411 = vpop.f32.mrb[0].mxu0
  %1412 = vmatprep.mubr.bf16.mxu0 %v1247
  %1413 = vmatmul.mubr.bf16.gmra.mrb[0].mxu0 %v1204
  %v1414 = vpop.f32.mrb[0].mxu0
  %v1415 = vadd.f32 %v1327, %v1414
  %v1416 = vpop.f32.mrb[0].mxu0
  %v1417 = vpop.f32.mrb[0].mxu0
  %v1418 = vadd.f32 %v1330, %v1417
  %v1419 = vpop.f32.mrb[0].mxu0
  %1420 = vmatprep.mubr.bf16.mxu0 %v1250
  %1421 = vmatmul.mubr.bf16.gmra.mrb[0].mxu0 %v1208
  %v1422 = vpop.f32.mrb[0].mxu0
  %v1423 = vadd.f32 %v1335, %v1422
  %v1424 = vpop.f32.mrb[0].mxu0
  %v1425 = vpop.f32.mrb[0].mxu0
  %v1426 = vpop.f32.mrb[0].mxu0
  %1427 = vdwg.mxu0
  %v1428 = vpack.c.bf16 %v1378, %v1375
  %v1429 = vpack.c.bf16 %v1386, %v1383
  %v1430 = vpack.c.bf16 %v1394, %v1391
  %v1431 = vpack.c.bf16 %v1402, %v1399
  %v1432 = vpack.c.bf16 %v1410, %v1407
  %v1433 = vpack.c.bf16 %v1418, %v1415
  %v1434 = vpack.c.bf16 %v1423, %v1423
  %s1435 = scalar_lea.vmem %s3, 64
  %v1436 = vld [vmem:[%s1435] sm:$0xf]
  %v1437 = vld [vmem:[%s1435 + $0x4] sm:$0xf]
  %v1438 = vld [vmem:[%s1435 + $0x8] sm:$0xf]
  %v1439 = vld [vmem:[%s1435 + $0xc] sm:$0xf]
  %v1440 = vld [vmem:[%s1435 + $0x10] sm:$0xf]
  %v1441 = vld [vmem:[%s1435 + $0x14] sm:$0xf]
  %v1442 = vld [vmem:[%s1435 + $0x18] sm:$0xf]
  %v1443 = vld [vmem:[%s1435 + $0x1c] sm:$0xf]
  %v1444 = vld [vmem:[%s1435 + $0x20] sm:$0xf]
  %v1445 = vld [vmem:[%s1435 + $0x24] sm:$0xf]
  %v1446 = vld [vmem:[%s1435 + $0x28] sm:$0xf]
  %v1447 = vld [vmem:[%s1435 + $0x2c] sm:$0xf]
  %v1448 = vld [vmem:[%s1435 + $0x30] sm:$0xf]
  %v1449 = vld [vmem:[%s1435 + $0x34] sm:$0xf]
  %v1450 = vld [vmem:[%s1435 + $0x38] sm:$0xf]
  %v1451 = vld [vmem:[%s1435 + $0x3c] sm:$0xf]
  %v1468 = vunpack.c.l.b16 %v1436
  %v1469 = vunpack.c.l.b16 %v1437
  %v1470 = vunpack.c.l.b16 %v1438
  %v1471 = vunpack.c.l.b16 %v1439
  %v1472 = vunpack.c.l.b16 %v1440
  %v1473 = vunpack.c.l.b16 %v1441
  %v1474 = vunpack.c.l.b16 %v1442
  %v1475 = vunpack.c.l.b16 %v1443
  %v1476 = vunpack.c.l.b16 %v1444
  %v1477 = vunpack.c.l.b16 %v1445
  %v1478 = vunpack.c.l.b16 %v1446
  %v1479 = vunpack.c.l.b16 %v1447
  %v1480 = vunpack.c.l.b16 %v1448
  %v1481 = vunpack.c.l.b16 %v1449
  %v1482 = vunpack.c.l.b16 %v1450
  %v1483 = vunpack.c.l.b16 %v1451
  %v1484 = vpack.c.b16 %v1469, %v1468
  %v1485 = vpack.c.b16 %v1471, %v1470
  %v1486 = vpack.c.b16 %v1473, %v1472
  %v1487 = vpack.c.b16 %v1475, %v1474
  %v1488 = vpack.c.b16 %v1477, %v1476
  %v1489 = vpack.c.b16 %v1479, %v1478
  %v1490 = vpack.c.b16 %v1481, %v1480
  %v1491 = vpack.c.b16 %v1483, %v1482
  %1500 = vmatprep.subr.bf16.mxu0 0
  %1501 = vmatpush1.bf16.msra.mxu0 %v1484
  %1502 = vmatprep.subr.bf16.mxu0 0
  %1503 = vmatpush1.bf16.msra.mxu0 %v1485
  %1504 = vmatprep.subr.bf16.mxu0 0
  %1505 = vmatpush1.bf16.msra.mxu0 %v1486
  %1506 = vmatprep.subr.bf16.mxu0 0
  %1507 = vmatpush1.bf16.msra.mxu0 %v1487
  %1508 = vmatprep.subr.bf16.mxu0 0
  %1509 = vmatpush1.bf16.msra.mxu0 %v1488
  %1510 = vmatprep.subr.bf16.mxu0 0
  %1511 = vmatpush1.bf16.msra.mxu0 %v1489
  %1512 = vmatprep.subr.bf16.mxu0 0
  %1513 = vmatpush1.bf16.msra.mxu0 %v1490
  %1514 = vmatprep.subr.bf16.mxu0 0
  %1515 = vmatpush1.bf16.msra.mxu0 %v1491
  %1516 = vmatprep.subr.bf16.mxu0 0
  %1517 = vmatpush1.bf16.msra.mxu0 0
  %1518 = vmatprep.subr.bf16.mxu0 0
  %1519 = vmatpush1.bf16.msra.mxu0 0
  %1520 = vmatprep.subr.bf16.mxu0 0
  %1521 = vmatpush1.bf16.msra.mxu0 0
  %1522 = vmatprep.subr.bf16.mxu0 0
  %1523 = vmatpush1.bf16.msra.mxu0 0
  %1524 = vmatprep.subr.bf16.mxu0 0
  %1525 = vmatpush1.bf16.msra.mxu0 0
  %1526 = vmatprep.subr.bf16.mxu0 0
  %1527 = vmatpush1.bf16.msra.mxu0 0
  %1528 = vmatprep.subr.bf16.mxu0 0
  %1529 = vmatpush1.bf16.msra.mxu0 0
  %1530 = vmatprep.subr.bf16.mxu0 0
  %1531 = vmatpush1.bf16.msra.mxu0 0
  %1532 = vmatprep.mubr.bf16.mxu0 0
  %1533 = vmatmul.mubr.bf16.gmra.mrb[0].mxu0 %v1428
  %v1534 = vpop.f32.mrb[0].mxu0
  %v1535 = vadd.f32 0.0, %v1534
  %v1536 = vpop.f32.mrb[0].mxu0
  %v1537 = vpop.f32.mrb[0].mxu0
  %v1538 = vadd.f32 0.0, %v1537
  %v1539 = vpop.f32.mrb[0].mxu0
  %1540 = vmatprep.mubr.bf16.mxu0 0
  %1541 = vmatmul.mubr.bf16.gmra.mrb[0].mxu0 %v1429
  %v1542 = vpop.f32.mrb[0].mxu0
  %v1543 = vadd.f32 0.0, %v1542
  %v1544 = vpop.f32.mrb[0].mxu0
  %v1545 = vpop.f32.mrb[0].mxu0
  %v1546 = vadd.f32 0.0, %v1545
  %v1547 = vpop.f32.mrb[0].mxu0
  %1548 = vmatprep.mubr.bf16.mxu0 0
  %1549 = vmatmul.mubr.bf16.gmra.mrb[0].mxu0 %v1430
  %v1550 = vpop.f32.mrb[0].mxu0
  %v1551 = vadd.f32 0.0, %v1550
  %v1552 = vpop.f32.mrb[0].mxu0
  %v1553 = vpop.f32.mrb[0].mxu0
  %v1554 = vadd.f32 0.0, %v1553
  %v1555 = vpop.f32.mrb[0].mxu0
  %1556 = vmatprep.mubr.bf16.mxu0 0
  %1557 = vmatmul.mubr.bf16.gmra.mrb[0].mxu0 %v1431
  %v1558 = vpop.f32.mrb[0].mxu0
  %v1559 = vadd.f32 0.0, %v1558
  %v1560 = vpop.f32.mrb[0].mxu0
  %v1561 = vpop.f32.mrb[0].mxu0
  %v1562 = vadd.f32 0.0, %v1561
  %v1563 = vpop.f32.mrb[0].mxu0
  %1564 = vmatprep.mubr.bf16.mxu0 0
  %1565 = vmatmul.mubr.bf16.gmra.mrb[0].mxu0 %v1432
  %v1566 = vpop.f32.mrb[0].mxu0
  %v1567 = vadd.f32 0.0, %v1566
  %v1568 = vpop.f32.mrb[0].mxu0
  %v1569 = vpop.f32.mrb[0].mxu0
  %v1570 = vadd.f32 0.0, %v1569
  %v1571 = vpop.f32.mrb[0].mxu0
  %1572 = vmatprep.mubr.bf16.mxu0 0
  %1573 = vmatmul.mubr.bf16.gmra.mrb[0].mxu0 %v1433
  %v1574 = vpop.f32.mrb[0].mxu0
  %v1575 = vadd.f32 0.0, %v1574
  %v1576 = vpop.f32.mrb[0].mxu0
  %v1577 = vpop.f32.mrb[0].mxu0
  %v1578 = vadd.f32 0.0, %v1577
  %v1579 = vpop.f32.mrb[0].mxu0
  %1580 = vmatprep.mubr.bf16.mxu0 0
  %1581 = vmatmul.mubr.bf16.gmra.mrb[0].mxu0 %v1434
  %v1582 = vpop.f32.mrb[0].mxu0
  %v1583 = vadd.f32 0.0, %v1582
  %v1584 = vpop.f32.mrb[0].mxu0
  %v1585 = vpop.f32.mrb[0].mxu0
  %v1586 = vpop.f32.mrb[0].mxu0
  %1587 = vdwg.mxu0
  %v1604 = vunpack.c.l.b16 %v1061
  %v1605 = vunpack.c.l.b16 %v1062
  %v1606 = vunpack.c.l.b16 %v1063
  %v1607 = vunpack.c.l.b16 %v1064
  %v1608 = vunpack.c.l.b16 %v1065
  %v1609 = vunpack.c.l.b16 %v1066
  %v1610 = vunpack.c.l.b16 %v1067
  %v1611 = vunpack.c.l.b16 %v1068
  %v1612 = vunpack.c.l.b16 %v1069
  %v1613 = vunpack.c.l.b16 %v1070
  %v1614 = vunpack.c.l.b16 %v1071
  %v1615 = vunpack.c.l.b16 %v1072
  %v1616 = vunpack.c.l.b16 %v1073
  %v1617 = vunpack.c.l.b16 %v1074
  %v1618 = vunpack.c.l.b16 %v1075
  %v1619 = vunpack.c.l.b16 %v1076
  %v1620 = vpack.c.b16 %v1605, %v1604
  %v1621 = vpack.c.b16 %v1607, %v1606
  %v1622 = vpack.c.b16 %v1609, %v1608
  %v1623 = vpack.c.b16 %v1611, %v1610
  %v1624 = vpack.c.b16 %v1613, %v1612
  %v1625 = vpack.c.b16 %v1615, %v1614
  %v1626 = vpack.c.b16 %v1617, %v1616
  %v1627 = vpack.c.b16 %v1619, %v1618
  %1636 = vmatprep.subr.bf16.mxu0 0
  %1637 = vmatpush1.bf16.msra.mxu0 %v1620
  %1638 = vmatprep.subr.bf16.mxu0 0
  %1639 = vmatpush1.bf16.msra.mxu0 %v1621
  %1640 = vmatprep.subr.bf16.mxu0 0
  %1641 = vmatpush1.bf16.msra.mxu0 %v1622
  %1642 = vmatprep.subr.bf16.mxu0 0
  %1643 = vmatpush1.bf16.msra.mxu0 %v1623
  %1644 = vmatprep.subr.bf16.mxu0 0
  %1645 = vmatpush1.bf16.msra.mxu0 %v1624
  %1646 = vmatprep.subr.bf16.mxu0 0
  %1647 = vmatpush1.bf16.msra.mxu0 %v1625
  %1648 = vmatprep.subr.bf16.mxu0 0
  %1649 = vmatpush1.bf16.msra.mxu0 %v1626
  %1650 = vmatprep.subr.bf16.mxu0 0
  %1651 = vmatpush1.bf16.msra.mxu0 %v1627
  %1652 = vmatprep.subr.bf16.mxu0 0
  %1653 = vmatpush1.bf16.msra.mxu0 0
  %1654 = vmatprep.subr.bf16.mxu0 0
  %1655 = vmatpush1.bf16.msra.mxu0 0
  %1656 = vmatprep.subr.bf16.mxu0 0
  %1657 = vmatpush1.bf16.msra.mxu0 0
  %1658 = vmatprep.subr.bf16.mxu0 0
  %1659 = vmatpush1.bf16.msra.mxu0 0
  %1660 = vmatprep.subr.bf16.mxu0 0
  %1661 = vmatpush1.bf16.msra.mxu0 0
  %1662 = vmatprep.subr.bf16.mxu0 0
  %1663 = vmatpush1.bf16.msra.mxu0 0
  %1664 = vmatprep.subr.bf16.mxu0 0
  %1665 = vmatpush1.bf16.msra.mxu0 0
  %1666 = vmatprep.subr.bf16.mxu0 0
  %1667 = vmatpush1.bf16.msra.mxu0 0
  %1668 = vmatprep.mubr.bf16.mxu0 0
  %1669 = vmatmul.mubr.bf16.gmra.mrb[0].mxu0 %v1054
  %v1670 = vpop.f32.mrb[0].mxu0
  %v1671 = vadd.f32 %v1535, %v1670
  %v1672 = vpop.f32.mrb[0].mxu0
  %v1673 = vpop.f32.mrb[0].mxu0
  %v1674 = vadd.f32 %v1538, %v1673
  %v1675 = vpop.f32.mrb[0].mxu0
  %1676 = vmatprep.mubr.bf16.mxu0 0
  %1677 = vmatmul.mubr.bf16.gmra.mrb[0].mxu0 %v1055
  %v1678 = vpop.f32.mrb[0].mxu0
  %v1679 = vadd.f32 %v1543, %v1678
  %v1680 = vpop.f32.mrb[0].mxu0
  %v1681 = vpop.f32.mrb[0].mxu0
  %v1682 = vadd.f32 %v1546, %v1681
  %v1683 = vpop.f32.mrb[0].mxu0
  %1684 = vmatprep.mubr.bf16.mxu0 0
  %1685 = vmatmul.mubr.bf16.gmra.mrb[0].mxu0 %v1056
  %v1686 = vpop.f32.mrb[0].mxu0
  %v1687 = vadd.f32 %v1551, %v1686
  %v1688 = vpop.f32.mrb[0].mxu0
  %v1689 = vpop.f32.mrb[0].mxu0
  %v1690 = vadd.f32 %v1554, %v1689
  %v1691 = vpop.f32.mrb[0].mxu0
  %1692 = vmatprep.mubr.bf16.mxu0 0
  %1693 = vmatmul.mubr.bf16.gmra.mrb[0].mxu0 %v1057
  %v1694 = vpop.f32.mrb[0].mxu0
  %v1695 = vadd.f32 %v1559, %v1694
  %v1696 = vpop.f32.mrb[0].mxu0
  %v1697 = vpop.f32.mrb[0].mxu0
  %v1698 = vadd.f32 %v1562, %v1697
  %v1699 = vpop.f32.mrb[0].mxu0
  %1700 = vmatprep.mubr.bf16.mxu0 0
  %1701 = vmatmul.mubr.bf16.gmra.mrb[0].mxu0 %v1058
  %v1702 = vpop.f32.mrb[0].mxu0
  %v1703 = vadd.f32 %v1567, %v1702
  %v1704 = vpop.f32.mrb[0].mxu0
  %v1705 = vpop.f32.mrb[0].mxu0
  %v1706 = vadd.f32 %v1570, %v1705
  %v1707 = vpop.f32.mrb[0].mxu0
  %1708 = vmatprep.mubr.bf16.mxu0 0
  %1709 = vmatmul.mubr.bf16.gmra.mrb[0].mxu0 %v1059
  %v1710 = vpop.f32.mrb[0].mxu0
  %v1711 = vadd.f32 %v1575, %v1710
  %v1712 = vpop.f32.mrb[0].mxu0
  %v1713 = vpop.f32.mrb[0].mxu0
  %v1714 = vadd.f32 %v1578, %v1713
  %v1715 = vpop.f32.mrb[0].mxu0
  %1716 = vmatprep.mubr.bf16.mxu0 0
  %1717 = vmatmul.mubr.bf16.gmra.mrb[0].mxu0 %v1060
  %v1718 = vpop.f32.mrb[0].mxu0
  %v1719 = vadd.f32 %v1583, %v1718
  %v1720 = vpop.f32.mrb[0].mxu0
  %v1721 = vpop.f32.mrb[0].mxu0
  %v1722 = vpop.f32.mrb[0].mxu0
  %1723 = vdwg.mxu0
  %s1724 = scalar_lea.vmem %s2, 416
  %v1725 = vld [vmem:[%s1724] sm:$0xff]
  %v1726 = vld [vmem:[%s1724 + $0x8] sm:$0xff]
  %v1727 = vld [vmem:[%s1724 + $0x10] sm:$0xff]
  %v1728 = vld [vmem:[%s1724 + $0x18] sm:$0xff]
  %v1729 = vld [vmem:[%s1724 + $0x20] sm:$0xff]
  %v1730 = vld [vmem:[%s1724 + $0x28] sm:$0xff]
  %v1731 = vld [vmem:[%s1724 + $0x30] sm:$0xff]
  %v1732 = vld [vmem:[%s1724 + $0x38] sm:$0xff]
  %v1733 = vld [vmem:[%s1724 + $0x40] sm:$0xff]
  %v1734 = vld [vmem:[%s1724 + $0x48] sm:$0xff]
  %v1735 = vld [vmem:[%s1724 + $0x50] sm:$0xff]
  %v1736 = vld [vmem:[%s1724 + $0x58] sm:$0xff]
  %v1737 = vld [vmem:[%s1724 + $0x60] sm:$0xff]
  %v1738 = vld [vmem:[%s1724 + $0x68] sm:$0xff]
  %v1739 = vld [vmem:[%s1724 + $0x70] sm:$0xff]
  %v1740 = vld [vmem:[%s1724 + $0x78] sm:$0xff]
  %v1741 = vld [vmem:[%s1724 + $0x80] sm:$0xff]
  %v1742 = vld [vmem:[%s1724 + $0x88] sm:$0xff]
  %v1743 = vld [vmem:[%s1724 + $0x90] sm:$0xff]
  %v1744 = vld [vmem:[%s1724 + $0x98] sm:$0xff]
  %v1745 = vld [vmem:[%s1724 + $0xa0] sm:$0xff]
  %v1746 = vld [vmem:[%s1724 + $0xa8] sm:$0xff]
  %v1747 = vld [vmem:[%s1724 + $0xb0] sm:$0xff]
  %v1748 = vld [vmem:[%s1724 + $0xb8] sm:$0xff]
  %v1749 = vld [vmem:[%s1724 + $0xc0] sm:$0x11]
  %v1750 = vld [vmem:[%s1724 + $0xc8] sm:$0x11]
  %v1777 = vunpack.c.l.b16 %v1725
  %v1778 = vunpack.c.h.b16 %v1725
  %v1779 = vunpack.c.l.b16 %v1726
  %v1780 = vunpack.c.h.b16 %v1726
  %v1781 = vunpack.c.l.b16 %v1727
  %v1782 = vunpack.c.h.b16 %v1727
  %v1783 = vunpack.c.l.b16 %v1728
  %v1784 = vunpack.c.h.b16 %v1728
  %v1785 = vunpack.c.l.b16 %v1729
  %v1786 = vunpack.c.h.b16 %v1729
  %v1787 = vunpack.c.l.b16 %v1730
  %v1788 = vunpack.c.h.b16 %v1730
  %v1789 = vunpack.c.l.b16 %v1731
  %v1790 = vunpack.c.h.b16 %v1731
  %v1791 = vunpack.c.l.b16 %v1732
  %v1792 = vunpack.c.h.b16 %v1732
  %v1793 = vunpack.c.l.b16 %v1733
  %v1794 = vunpack.c.h.b16 %v1733
  %v1795 = vunpack.c.l.b16 %v1734
  %v1796 = vunpack.c.h.b16 %v1734
  %v1797 = vunpack.c.l.b16 %v1735
  %v1798 = vunpack.c.h.b16 %v1735
  %v1799 = vunpack.c.l.b16 %v1736
  %v1800 = vunpack.c.h.b16 %v1736
  %v1801 = vunpack.c.l.b16 %v1737
  %v1802 = vunpack.c.h.b16 %v1737
  %v1803 = vunpack.c.l.b16 %v1738
  %v1804 = vunpack.c.h.b16 %v1738
  %v1805 = vunpack.c.l.b16 %v1739
  %v1806 = vunpack.c.h.b16 %v1739
  %v1807 = vunpack.c.l.b16 %v1740
  %v1808 = vunpack.c.h.b16 %v1740
  %v1809 = vunpack.c.l.b16 %v1741
  %v1810 = vunpack.c.h.b16 %v1741
  %v1811 = vunpack.c.l.b16 %v1742
  %v1812 = vunpack.c.h.b16 %v1742
  %v1813 = vunpack.c.l.b16 %v1743
  %v1814 = vunpack.c.h.b16 %v1743
  %v1815 = vunpack.c.l.b16 %v1744
  %v1816 = vunpack.c.h.b16 %v1744
  %v1817 = vunpack.c.l.b16 %v1745
  %v1818 = vunpack.c.h.b16 %v1745
  %v1819 = vunpack.c.l.b16 %v1746
  %v1820 = vunpack.c.h.b16 %v1746
  %v1821 = vunpack.c.l.b16 %v1747
  %v1822 = vunpack.c.h.b16 %v1747
  %v1823 = vunpack.c.l.b16 %v1748
  %v1824 = vunpack.c.h.b16 %v1748
  %v1825 = vunpack.c.l.b16 %v1749
  %v1826 = vunpack.c.h.b16 %v1749
  %v1827 = vunpack.c.l.b16 %v1750
  %v1828 = vunpack.c.h.b16 %v1750
  %v1829 = vpack.c.b16 %v1781, %v1777
  %v1830 = vpack.c.b16 %v1782, %v1778
  %v1831 = vpack.c.b16 %v1783, %v1779
  %v1832 = vpack.c.b16 %v1784, %v1780
  %v1833 = vpack.c.b16 %v1789, %v1785
  %v1834 = vpack.c.b16 %v1790, %v1786
  %v1835 = vpack.c.b16 %v1791, %v1787
  %v1836 = vpack.c.b16 %v1792, %v1788
  %v1837 = vpack.c.b16 %v1797, %v1793
  %v1838 = vpack.c.b16 %v1798, %v1794
  %v1839 = vpack.c.b16 %v1799, %v1795
  %v1840 = vpack.c.b16 %v1800, %v1796
  %v1841 = vpack.c.b16 %v1805, %v1801
  %v1842 = vpack.c.b16 %v1806, %v1802
  %v1843 = vpack.c.b16 %v1807, %v1803
  %v1844 = vpack.c.b16 %v1808, %v1804
  %v1845 = vpack.c.b16 %v1813, %v1809
  %v1846 = vpack.c.b16 %v1814, %v1810
  %v1847 = vpack.c.b16 %v1815, %v1811
  %v1848 = vpack.c.b16 %v1816, %v1812
  %v1849 = vpack.c.b16 %v1821, %v1817
  %v1850 = vpack.c.b16 %v1822, %v1818
  %v1851 = vpack.c.b16 %v1823, %v1819
  %v1852 = vpack.c.b16 %v1824, %v1820
  %v1853 = vpack.c.b16 %v1825, %v1825
  %v1854 = vpack.c.b16 %v1826, %v1826
  %v1855 = vpack.c.b16 %v1827, %v1827
  %v1856 = vpack.c.b16 %v1828, %v1828
  %v1879 = vsel %vm852, %v1832, 0
  %v1882 = vsel %vm852, %v1836, 0
  %v1885 = vsel %vm852, %v1840, 0
  %v1888 = vsel %vm852, %v1844, 0
  %v1891 = vsel %vm852, %v1848, 0
  %v1894 = vsel %vm852, %v1852, 0
  %v1897 = vsel %vm852, %v1856, 0
  %1899 = vmatprep.subr.bf16.mxu0 0
  %1900 = vmatpush1.bf16.msra.mxu0 %v674
  %1901 = vmatprep.subr.bf16.mxu0 0
  %1902 = vmatpush1.bf16.msra.mxu0 %v675
  %1903 = vmatprep.subr.bf16.mxu0 0
  %1904 = vmatpush1.bf16.msra.mxu0 %v676
  %1905 = vmatprep.subr.bf16.mxu0 0
  %1906 = vmatpush1.bf16.msra.mxu0 %v677
  %1907 = vmatprep.subr.bf16.mxu0 0
  %1908 = vmatpush1.bf16.msra.mxu0 %v678
  %1909 = vmatprep.subr.bf16.mxu0 0
  %1910 = vmatpush1.bf16.msra.mxu0 %v679
  %1911 = vmatprep.subr.bf16.mxu0 0
  %1912 = vmatpush1.bf16.msra.mxu0 %v680
  %1913 = vmatprep.subr.bf16.mxu0 0
  %1914 = vmatpush1.bf16.msra.mxu0 %v681
  %1915 = vmatprep.subr.bf16.mxu0 0
  %1916 = vmatpush1.bf16.msra.mxu0 %v682
  %1917 = vmatprep.subr.bf16.mxu0 0
  %1918 = vmatpush1.bf16.msra.mxu0 %v683
  %1919 = vmatprep.subr.bf16.mxu0 0
  %1920 = vmatpush1.bf16.msra.mxu0 %v684
  %1921 = vmatprep.subr.bf16.mxu0 0
  %1922 = vmatpush1.bf16.msra.mxu0 %v685
  %1923 = vmatprep.subr.bf16.mxu0 0
  %1924 = vmatpush1.bf16.msra.mxu0 %v686
  %1925 = vmatprep.subr.bf16.mxu0 0
  %1926 = vmatpush1.bf16.msra.mxu0 %v687
  %1927 = vmatprep.subr.bf16.mxu0 0
  %1928 = vmatpush1.bf16.msra.mxu0 %v688
  %1929 = vmatprep.subr.bf16.mxu0 0
  %1930 = vmatpush1.bf16.msra.mxu0 %v689
  %1931 = vmatprep.mubr.bf16.mxu0 %v1830
  %1932 = vmatmul.mubr.bf16.gmra.mrb[0].mxu0 %v1829
  %v1933 = vpop.f32.mrb[0].mxu0
  %v1934 = vadd.f32 0.0, %v1933
  %v1935 = vpop.f32.mrb[0].mxu0
  %v1936 = vpop.f32.mrb[0].mxu0
  %v1937 = vadd.f32 0.0, %v1936
  %v1938 = vpop.f32.mrb[0].mxu0
  %1939 = vmatprep.mubr.bf16.mxu0 %v1834
  %1940 = vmatmul.mubr.bf16.gmra.mrb[0].mxu0 %v1833
  %v1941 = vpop.f32.mrb[0].mxu0
  %v1942 = vadd.f32 0.0, %v1941
  %v1943 = vpop.f32.mrb[0].mxu0
  %v1944 = vpop.f32.mrb[0].mxu0
  %v1945 = vadd.f32 0.0, %v1944
  %v1946 = vpop.f32.mrb[0].mxu0
  %1947 = vmatprep.mubr.bf16.mxu0 %v1838
  %1948 = vmatmul.mubr.bf16.gmra.mrb[0].mxu0 %v1837
  %v1949 = vpop.f32.mrb[0].mxu0
  %v1950 = vadd.f32 0.0, %v1949
  %v1951 = vpop.f32.mrb[0].mxu0
  %v1952 = vpop.f32.mrb[0].mxu0
  %v1953 = vadd.f32 0.0, %v1952
  %v1954 = vpop.f32.mrb[0].mxu0
  %1955 = vmatprep.mubr.bf16.mxu0 %v1842
  %1956 = vmatmul.mubr.bf16.gmra.mrb[0].mxu0 %v1841
  %v1957 = vpop.f32.mrb[0].mxu0
  %v1958 = vadd.f32 0.0, %v1957
  %v1959 = vpop.f32.mrb[0].mxu0
  %v1960 = vpop.f32.mrb[0].mxu0
  %v1961 = vadd.f32 0.0, %v1960
  %v1962 = vpop.f32.mrb[0].mxu0
  %1963 = vmatprep.mubr.bf16.mxu0 %v1846
  %1964 = vmatmul.mubr.bf16.gmra.mrb[0].mxu0 %v1845
  %v1965 = vpop.f32.mrb[0].mxu0
  %v1966 = vadd.f32 0.0, %v1965
  %v1967 = vpop.f32.mrb[0].mxu0
  %v1968 = vpop.f32.mrb[0].mxu0
  %v1969 = vadd.f32 0.0, %v1968
  %v1970 = vpop.f32.mrb[0].mxu0
  %1971 = vmatprep.mubr.bf16.mxu0 %v1850
  %1972 = vmatmul.mubr.bf16.gmra.mrb[0].mxu0 %v1849
  %v1973 = vpop.f32.mrb[0].mxu0
  %v1974 = vadd.f32 0.0, %v1973
  %v1975 = vpop.f32.mrb[0].mxu0
  %v1976 = vpop.f32.mrb[0].mxu0
  %v1977 = vadd.f32 0.0, %v1976
  %v1978 = vpop.f32.mrb[0].mxu0
  %1979 = vmatprep.mubr.bf16.mxu0 %v1854
  %1980 = vmatmul.mubr.bf16.gmra.mrb[0].mxu0 %v1853
  %v1981 = vpop.f32.mrb[0].mxu0
  %v1982 = vadd.f32 0.0, %v1981
  %v1983 = vpop.f32.mrb[0].mxu0
  %v1984 = vpop.f32.mrb[0].mxu0
  %v1985 = vpop.f32.mrb[0].mxu0
  %1986 = vdwg.mxu0
  %1987 = vmatprep.subr.bf16.mxu0 0
  %1988 = vmatpush1.bf16.msra.mxu0 %v690
  %1989 = vmatprep.subr.bf16.mxu0 0
  %1990 = vmatpush1.bf16.msra.mxu0 %v691
  %1991 = vmatprep.subr.bf16.mxu0 0
  %1992 = vmatpush1.bf16.msra.mxu0 %v692
  %1993 = vmatprep.subr.bf16.mxu0 0
  %1994 = vmatpush1.bf16.msra.mxu0 %v693
  %1995 = vmatprep.subr.bf16.mxu0 0
  %1996 = vmatpush1.bf16.msra.mxu0 %v694
  %1997 = vmatprep.subr.bf16.mxu0 0
  %1998 = vmatpush1.bf16.msra.mxu0 %v695
  %1999 = vmatprep.subr.bf16.mxu0 0
  %2000 = vmatpush1.bf16.msra.mxu0 %v696
  %2001 = vmatprep.subr.bf16.mxu0 0
  %2002 = vmatpush1.bf16.msra.mxu0 %v697
  %2003 = vmatprep.subr.bf16.mxu0 0
  %2004 = vmatpush1.bf16.msra.mxu0 %v876
  %2005 = vmatprep.subr.bf16.mxu0 0
  %2006 = vmatpush1.bf16.msra.mxu0 0
  %2007 = vmatprep.subr.bf16.mxu0 0
  %2008 = vmatpush1.bf16.msra.mxu0 0
  %2009 = vmatprep.subr.bf16.mxu0 0
  %2010 = vmatpush1.bf16.msra.mxu0 0
  %2011 = vmatprep.subr.bf16.mxu0 0
  %2012 = vmatpush1.bf16.msra.mxu0 0
  %2013 = vmatprep.subr.bf16.mxu0 0
  %2014 = vmatpush1.bf16.msra.mxu0 0
  %2015 = vmatprep.subr.bf16.mxu0 0
  %2016 = vmatpush1.bf16.msra.mxu0 0
  %2017 = vmatprep.subr.bf16.mxu0 0
  %2018 = vmatpush1.bf16.msra.mxu0 0
  %2019 = vmatprep.mubr.bf16.mxu0 %v1879
  %2020 = vmatmul.mubr.bf16.gmra.mrb[0].mxu0 %v1831
  %v2021 = vpop.f32.mrb[0].mxu0
  %v2022 = vadd.f32 %v1934, %v2021
  %v2023 = vpop.f32.mrb[0].mxu0
  %v2024 = vpop.f32.mrb[0].mxu0
  %v2025 = vadd.f32 %v1937, %v2024
  %v2026 = vpop.f32.mrb[0].mxu0
  %2027 = vmatprep.mubr.bf16.mxu0 %v1882
  %2028 = vmatmul.mubr.bf16.gmra.mrb[0].mxu0 %v1835
  %v2029 = vpop.f32.mrb[0].mxu0
  %v2030 = vadd.f32 %v1942, %v2029
  %v2031 = vpop.f32.mrb[0].mxu0
  %v2032 = vpop.f32.mrb[0].mxu0
  %v2033 = vadd.f32 %v1945, %v2032
  %v2034 = vpop.f32.mrb[0].mxu0
  %2035 = vmatprep.mubr.bf16.mxu0 %v1885
  %2036 = vmatmul.mubr.bf16.gmra.mrb[0].mxu0 %v1839
  %v2037 = vpop.f32.mrb[0].mxu0
  %v2038 = vadd.f32 %v1950, %v2037
  %v2039 = vpop.f32.mrb[0].mxu0
  %v2040 = vpop.f32.mrb[0].mxu0
  %v2041 = vadd.f32 %v1953, %v2040
  %v2042 = vpop.f32.mrb[0].mxu0
  %2043 = vmatprep.mubr.bf16.mxu0 %v1888
  %2044 = vmatmul.mubr.bf16.gmra.mrb[0].mxu0 %v1843
  %v2045 = vpop.f32.mrb[0].mxu0
  %v2046 = vadd.f32 %v1958, %v2045
  %v2047 = vpop.f32.mrb[0].mxu0
  %v2048 = vpop.f32.mrb[0].mxu0
  %v2049 = vadd.f32 %v1961, %v2048
  %v2050 = vpop.f32.mrb[0].mxu0
  %2051 = vmatprep.mubr.bf16.mxu0 %v1891
  %2052 = vmatmul.mubr.bf16.gmra.mrb[0].mxu0 %v1847
  %v2053 = vpop.f32.mrb[0].mxu0
  %v2054 = vadd.f32 %v1966, %v2053
  %v2055 = vpop.f32.mrb[0].mxu0
  %v2056 = vpop.f32.mrb[0].mxu0
  %v2057 = vadd.f32 %v1969, %v2056
  %v2058 = vpop.f32.mrb[0].mxu0
  %2059 = vmatprep.mubr.bf16.mxu0 %v1894
  %2060 = vmatmul.mubr.bf16.gmra.mrb[0].mxu0 %v1851
  %v2061 = vpop.f32.mrb[0].mxu0
  %v2062 = vadd.f32 %v1974, %v2061
  %v2063 = vpop.f32.mrb[0].mxu0
  %v2064 = vpop.f32.mrb[0].mxu0
  %v2065 = vadd.f32 %v1977, %v2064
  %v2066 = vpop.f32.mrb[0].mxu0
  %2067 = vmatprep.mubr.bf16.mxu0 %v1897
  %2068 = vmatmul.mubr.bf16.gmra.mrb[0].mxu0 %v1855
  %v2069 = vpop.f32.mrb[0].mxu0
  %v2070 = vadd.f32 %v1982, %v2069
  %v2071 = vpop.f32.mrb[0].mxu0
  %v2072 = vpop.f32.mrb[0].mxu0
  %v2073 = vpop.f32.mrb[0].mxu0
  %2074 = vdwg.mxu0
  %v2075 = vpack.c.bf16 %v2025, %v2022
  %v2076 = vpack.c.bf16 %v2033, %v2030
  %v2077 = vpack.c.bf16 %v2041, %v2038
  %v2078 = vpack.c.bf16 %v2049, %v2046
  %v2079 = vpack.c.bf16 %v2057, %v2054
  %v2080 = vpack.c.bf16 %v2065, %v2062
  %v2081 = vpack.c.bf16 %v2070, %v2070
  %s2082 = scalar_lea.vmem %s3, 128
  %v2083 = vld [vmem:[%s2082] sm:$0xf]
  %v2084 = vld [vmem:[%s2082 + $0x4] sm:$0xf]
  %v2085 = vld [vmem:[%s2082 + $0x8] sm:$0xf]
  %v2086 = vld [vmem:[%s2082 + $0xc] sm:$0xf]
  %v2087 = vld [vmem:[%s2082 + $0x10] sm:$0xf]
  %v2088 = vld [vmem:[%s2082 + $0x14] sm:$0xf]
  %v2089 = vld [vmem:[%s2082 + $0x18] sm:$0xf]
  %v2090 = vld [vmem:[%s2082 + $0x1c] sm:$0xf]
  %v2091 = vld [vmem:[%s2082 + $0x20] sm:$0xf]
  %v2092 = vld [vmem:[%s2082 + $0x24] sm:$0xf]
  %v2093 = vld [vmem:[%s2082 + $0x28] sm:$0xf]
  %v2094 = vld [vmem:[%s2082 + $0x2c] sm:$0xf]
  %v2095 = vld [vmem:[%s2082 + $0x30] sm:$0xf]
  %v2096 = vld [vmem:[%s2082 + $0x34] sm:$0xf]
  %v2097 = vld [vmem:[%s2082 + $0x38] sm:$0xf]
  %v2098 = vld [vmem:[%s2082 + $0x3c] sm:$0xf]
  %v2115 = vunpack.c.l.b16 %v2083
  %v2116 = vunpack.c.l.b16 %v2084
  %v2117 = vunpack.c.l.b16 %v2085
  %v2118 = vunpack.c.l.b16 %v2086
  %v2119 = vunpack.c.l.b16 %v2087
  %v2120 = vunpack.c.l.b16 %v2088
  %v2121 = vunpack.c.l.b16 %v2089
  %v2122 = vunpack.c.l.b16 %v2090
  %v2123 = vunpack.c.l.b16 %v2091
  %v2124 = vunpack.c.l.b16 %v2092
  %v2125 = vunpack.c.l.b16 %v2093
  %v2126 = vunpack.c.l.b16 %v2094
  %v2127 = vunpack.c.l.b16 %v2095
  %v2128 = vunpack.c.l.b16 %v2096
  %v2129 = vunpack.c.l.b16 %v2097
  %v2130 = vunpack.c.l.b16 %v2098
  %v2131 = vpack.c.b16 %v2116, %v2115
  %v2132 = vpack.c.b16 %v2118, %v2117
  %v2133 = vpack.c.b16 %v2120, %v2119
  %v2134 = vpack.c.b16 %v2122, %v2121
  %v2135 = vpack.c.b16 %v2124, %v2123
  %v2136 = vpack.c.b16 %v2126, %v2125
  %v2137 = vpack.c.b16 %v2128, %v2127
  %v2138 = vpack.c.b16 %v2130, %v2129
  %2147 = vmatprep.subr.bf16.mxu0 0
  %2148 = vmatpush1.bf16.msra.mxu0 %v2131
  %2149 = vmatprep.subr.bf16.mxu0 0
  %2150 = vmatpush1.bf16.msra.mxu0 %v2132
  %2151 = vmatprep.subr.bf16.mxu0 0
  %2152 = vmatpush1.bf16.msra.mxu0 %v2133
  %2153 = vmatprep.subr.bf16.mxu0 0
  %2154 = vmatpush1.bf16.msra.mxu0 %v2134
  %2155 = vmatprep.subr.bf16.mxu0 0
  %2156 = vmatpush1.bf16.msra.mxu0 %v2135
  %2157 = vmatprep.subr.bf16.mxu0 0
  %2158 = vmatpush1.bf16.msra.mxu0 %v2136
  %2159 = vmatprep.subr.bf16.mxu0 0
  %2160 = vmatpush1.bf16.msra.mxu0 %v2137
  %2161 = vmatprep.subr.bf16.mxu0 0
  %2162 = vmatpush1.bf16.msra.mxu0 %v2138
  %2163 = vmatprep.subr.bf16.mxu0 0
  %2164 = vmatpush1.bf16.msra.mxu0 0
  %2165 = vmatprep.subr.bf16.mxu0 0
  %2166 = vmatpush1.bf16.msra.mxu0 0
  %2167 = vmatprep.subr.bf16.mxu0 0
  %2168 = vmatpush1.bf16.msra.mxu0 0
  %2169 = vmatprep.subr.bf16.mxu0 0
  %2170 = vmatpush1.bf16.msra.mxu0 0
  %2171 = vmatprep.subr.bf16.mxu0 0
  %2172 = vmatpush1.bf16.msra.mxu0 0
  %2173 = vmatprep.subr.bf16.mxu0 0
  %2174 = vmatpush1.bf16.msra.mxu0 0
  %2175 = vmatprep.subr.bf16.mxu0 0
  %2176 = vmatpush1.bf16.msra.mxu0 0
  %2177 = vmatprep.subr.bf16.mxu0 0
  %2178 = vmatpush1.bf16.msra.mxu0 0
  %2179 = vmatprep.mubr.bf16.mxu0 0
  %2180 = vmatmul.mubr.bf16.gmra.mrb[0].mxu0 %v2075
  %v2181 = vpop.f32.mrb[0].mxu0
  %v2182 = vadd.f32 0.0, %v2181
  %v2183 = vpop.f32.mrb[0].mxu0
  %v2184 = vpop.f32.mrb[0].mxu0
  %v2185 = vadd.f32 0.0, %v2184
  %v2186 = vpop.f32.mrb[0].mxu0
  %2187 = vmatprep.mubr.bf16.mxu0 0
  %2188 = vmatmul.mubr.bf16.gmra.mrb[0].mxu0 %v2076
  %v2189 = vpop.f32.mrb[0].mxu0
  %v2190 = vadd.f32 0.0, %v2189
  %v2191 = vpop.f32.mrb[0].mxu0
  %v2192 = vpop.f32.mrb[0].mxu0
  %v2193 = vadd.f32 0.0, %v2192
  %v2194 = vpop.f32.mrb[0].mxu0
  %2195 = vmatprep.mubr.bf16.mxu0 0
  %2196 = vmatmul.mubr.bf16.gmra.mrb[0].mxu0 %v2077
  %v2197 = vpop.f32.mrb[0].mxu0
  %v2198 = vadd.f32 0.0, %v2197
  %v2199 = vpop.f32.mrb[0].mxu0
  %v2200 = vpop.f32.mrb[0].mxu0
  %v2201 = vadd.f32 0.0, %v2200
  %v2202 = vpop.f32.mrb[0].mxu0
  %2203 = vmatprep.mubr.bf16.mxu0 0
  %2204 = vmatmul.mubr.bf16.gmra.mrb[0].mxu0 %v2078
  %v2205 = vpop.f32.mrb[0].mxu0
  %v2206 = vadd.f32 0.0, %v2205
  %v2207 = vpop.f32.mrb[0].mxu0
  %v2208 = vpop.f32.mrb[0].mxu0
  %v2209 = vadd.f32 0.0, %v2208
  %v2210 = vpop.f32.mrb[0].mxu0
  %2211 = vmatprep.mubr.bf16.mxu0 0
  %2212 = vmatmul.mubr.bf16.gmra.mrb[0].mxu0 %v2079
  %v2213 = vpop.f32.mrb[0].mxu0
  %v2214 = vadd.f32 0.0, %v2213
  %v2215 = vpop.f32.mrb[0].mxu0
  %v2216 = vpop.f32.mrb[0].mxu0
  %v2217 = vadd.f32 0.0, %v2216
  %v2218 = vpop.f32.mrb[0].mxu0
  %2219 = vmatprep.mubr.bf16.mxu0 0
  %2220 = vmatmul.mubr.bf16.gmra.mrb[0].mxu0 %v2080
  %v2221 = vpop.f32.mrb[0].mxu0
  %v2222 = vadd.f32 0.0, %v2221
  %v2223 = vpop.f32.mrb[0].mxu0
  %v2224 = vpop.f32.mrb[0].mxu0
  %v2225 = vadd.f32 0.0, %v2224
  %v2226 = vpop.f32.mrb[0].mxu0
  %2227 = vmatprep.mubr.bf16.mxu0 0
  %2228 = vmatmul.mubr.bf16.gmra.mrb[0].mxu0 %v2081
  %v2229 = vpop.f32.mrb[0].mxu0
  %v2230 = vadd.f32 0.0, %v2229
  %v2231 = vpop.f32.mrb[0].mxu0
  %v2232 = vpop.f32.mrb[0].mxu0
  %v2233 = vpop.f32.mrb[0].mxu0
  %2234 = vdwg.mxu0
  %v2235 = vadd.f32 %v1671, %v2182
  %v2236 = vadd.f32 %v1674, %v2185
  %v2237 = vadd.f32 %v1679, %v2190
  %v2238 = vadd.f32 %v1682, %v2193
  %v2239 = vadd.f32 %v1687, %v2198
  %v2240 = vadd.f32 %v1690, %v2201
  %v2241 = vadd.f32 %v1695, %v2206
  %v2242 = vadd.f32 %v1698, %v2209
  %v2243 = vadd.f32 %v1703, %v2214
  %v2244 = vadd.f32 %v1706, %v2217
  %v2245 = vadd.f32 %v1711, %v2222
  %v2246 = vadd.f32 %v1714, %v2225
  %v2247 = vadd.f32 %v1719, %v2230
  %s2248 = scalar_lea.vmem %s2, 624
  %v2249 = vld [vmem:[%s2248] sm:$0xff]
  %v2250 = vld [vmem:[%s2248 + $0x8] sm:$0xff]
  %v2251 = vld [vmem:[%s2248 + $0x10] sm:$0xff]
  %v2252 = vld [vmem:[%s2248 + $0x18] sm:$0xff]
  %v2253 = vld [vmem:[%s2248 + $0x20] sm:$0xff]
  %v2254 = vld [vmem:[%s2248 + $0x28] sm:$0xff]
  %v2255 = vld [vmem:[%s2248 + $0x30] sm:$0xff]
  %v2256 = vld [vmem:[%s2248 + $0x38] sm:$0xff]
  %v2257 = vld [vmem:[%s2248 + $0x40] sm:$0xff]
  %v2258 = vld [vmem:[%s2248 + $0x48] sm:$0xff]
  %v2259 = vld [vmem:[%s2248 + $0x50] sm:$0xff]
  %v2260 = vld [vmem:[%s2248 + $0x58] sm:$0xff]
  %v2261 = vld [vmem:[%s2248 + $0x60] sm:$0xff]
  %v2262 = vld [vmem:[%s2248 + $0x68] sm:$0xff]
  %v2263 = vld [vmem:[%s2248 + $0x70] sm:$0xff]
  %v2264 = vld [vmem:[%s2248 + $0x78] sm:$0xff]
  %v2265 = vld [vmem:[%s2248 + $0x80] sm:$0xff]
  %v2266 = vld [vmem:[%s2248 + $0x88] sm:$0xff]
  %v2267 = vld [vmem:[%s2248 + $0x90] sm:$0xff]
  %v2268 = vld [vmem:[%s2248 + $0x98] sm:$0xff]
  %v2269 = vld [vmem:[%s2248 + $0xa0] sm:$0xff]
  %v2270 = vld [vmem:[%s2248 + $0xa8] sm:$0xff]
  %v2271 = vld [vmem:[%s2248 + $0xb0] sm:$0xff]
  %v2272 = vld [vmem:[%s2248 + $0xb8] sm:$0xff]
  %v2273 = vld [vmem:[%s2248 + $0xc0] sm:$0x11]
  %v2274 = vld [vmem:[%s2248 + $0xc8] sm:$0x11]
  %v2301 = vunpack.c.l.b16 %v2249
  %v2302 = vunpack.c.h.b16 %v2249
  %v2303 = vunpack.c.l.b16 %v2250
  %v2304 = vunpack.c.h.b16 %v2250
  %v2305 = vunpack.c.l.b16 %v2251
  %v2306 = vunpack.c.h.b16 %v2251
  %v2307 = vunpack.c.l.b16 %v2252
  %v2308 = vunpack.c.h.b16 %v2252
  %v2309 = vunpack.c.l.b16 %v2253
  %v2310 = vunpack.c.h.b16 %v2253
  %v2311 = vunpack.c.l.b16 %v2254
  %v2312 = vunpack.c.h.b16 %v2254
  %v2313 = vunpack.c.l.b16 %v2255
  %v2314 = vunpack.c.h.b16 %v2255
  %v2315 = vunpack.c.l.b16 %v2256
  %v2316 = vunpack.c.h.b16 %v2256
  %v2317 = vunpack.c.l.b16 %v2257
  %v2318 = vunpack.c.h.b16 %v2257
  %v2319 = vunpack.c.l.b16 %v2258
  %v2320 = vunpack.c.h.b16 %v2258
  %v2321 = vunpack.c.l.b16 %v2259
  %v2322 = vunpack.c.h.b16 %v2259
  %v2323 = vunpack.c.l.b16 %v2260
  %v2324 = vunpack.c.h.b16 %v2260
  %v2325 = vunpack.c.l.b16 %v2261
  %v2326 = vunpack.c.h.b16 %v2261
  %v2327 = vunpack.c.l.b16 %v2262
  %v2328 = vunpack.c.h.b16 %v2262
  %v2329 = vunpack.c.l.b16 %v2263
  %v2330 = vunpack.c.h.b16 %v2263
  %v2331 = vunpack.c.l.b16 %v2264
  %v2332 = vunpack.c.h.b16 %v2264
  %v2333 = vunpack.c.l.b16 %v2265
  %v2334 = vunpack.c.h.b16 %v2265
  %v2335 = vunpack.c.l.b16 %v2266
  %v2336 = vunpack.c.h.b16 %v2266
  %v2337 = vunpack.c.l.b16 %v2267
  %v2338 = vunpack.c.h.b16 %v2267
  %v2339 = vunpack.c.l.b16 %v2268
  %v2340 = vunpack.c.h.b16 %v2268
  %v2341 = vunpack.c.l.b16 %v2269
  %v2342 = vunpack.c.h.b16 %v2269
  %v2343 = vunpack.c.l.b16 %v2270
  %v2344 = vunpack.c.h.b16 %v2270
  %v2345 = vunpack.c.l.b16 %v2271
  %v2346 = vunpack.c.h.b16 %v2271
  %v2347 = vunpack.c.l.b16 %v2272
  %v2348 = vunpack.c.h.b16 %v2272
  %v2349 = vunpack.c.l.b16 %v2273
  %v2350 = vunpack.c.h.b16 %v2273
  %v2351 = vunpack.c.l.b16 %v2274
  %v2352 = vunpack.c.h.b16 %v2274
  %v2353 = vpack.c.b16 %v2305, %v2301
  %v2354 = vpack.c.b16 %v2306, %v2302
  %v2355 = vpack.c.b16 %v2307, %v2303
  %v2356 = vpack.c.b16 %v2308, %v2304
  %v2357 = vpack.c.b16 %v2313, %v2309
  %v2358 = vpack.c.b16 %v2314, %v2310
  %v2359 = vpack.c.b16 %v2315, %v2311
  %v2360 = vpack.c.b16 %v2316, %v2312
  %v2361 = vpack.c.b16 %v2321, %v2317
  %v2362 = vpack.c.b16 %v2322, %v2318
  %v2363 = vpack.c.b16 %v2323, %v2319
  %v2364 = vpack.c.b16 %v2324, %v2320
  %v2365 = vpack.c.b16 %v2329, %v2325
  %v2366 = vpack.c.b16 %v2330, %v2326
  %v2367 = vpack.c.b16 %v2331, %v2327
  %v2368 = vpack.c.b16 %v2332, %v2328
  %v2369 = vpack.c.b16 %v2337, %v2333
  %v2370 = vpack.c.b16 %v2338, %v2334
  %v2371 = vpack.c.b16 %v2339, %v2335
  %v2372 = vpack.c.b16 %v2340, %v2336
  %v2373 = vpack.c.b16 %v2345, %v2341
  %v2374 = vpack.c.b16 %v2346, %v2342
  %v2375 = vpack.c.b16 %v2347, %v2343
  %v2376 = vpack.c.b16 %v2348, %v2344
  %v2377 = vpack.c.b16 %v2349, %v2349
  %v2378 = vpack.c.b16 %v2350, %v2350
  %v2379 = vpack.c.b16 %v2351, %v2351
  %v2380 = vpack.c.b16 %v2352, %v2352
  %v2403 = vsel %vm852, %v2356, 0
  %v2406 = vsel %vm852, %v2360, 0
  %v2409 = vsel %vm852, %v2364, 0
  %v2412 = vsel %vm852, %v2368, 0
  %v2415 = vsel %vm852, %v2372, 0
  %v2418 = vsel %vm852, %v2376, 0
  %v2421 = vsel %vm852, %v2380, 0
  %2423 = vmatprep.subr.bf16.mxu0 0
  %2424 = vmatpush1.bf16.msra.mxu0 %v674
  %2425 = vmatprep.subr.bf16.mxu0 0
  %2426 = vmatpush1.bf16.msra.mxu0 %v675
  %2427 = vmatprep.subr.bf16.mxu0 0
  %2428 = vmatpush1.bf16.msra.mxu0 %v676
  %2429 = vmatprep.subr.bf16.mxu0 0
  %2430 = vmatpush1.bf16.msra.mxu0 %v677
  %2431 = vmatprep.subr.bf16.mxu0 0
  %2432 = vmatpush1.bf16.msra.mxu0 %v678
  %2433 = vmatprep.subr.bf16.mxu0 0
  %2434 = vmatpush1.bf16.msra.mxu0 %v679
  %2435 = vmatprep.subr.bf16.mxu0 0
  %2436 = vmatpush1.bf16.msra.mxu0 %v680
  %2437 = vmatprep.subr.bf16.mxu0 0
  %2438 = vmatpush1.bf16.msra.mxu0 %v681
  %2439 = vmatprep.subr.bf16.mxu0 0
  %2440 = vmatpush1.bf16.msra.mxu0 %v682
  %2441 = vmatprep.subr.bf16.mxu0 0
  %2442 = vmatpush1.bf16.msra.mxu0 %v683
  %2443 = vmatprep.subr.bf16.mxu0 0
  %2444 = vmatpush1.bf16.msra.mxu0 %v684
  %2445 = vmatprep.subr.bf16.mxu0 0
  %2446 = vmatpush1.bf16.msra.mxu0 %v685
  %2447 = vmatprep.subr.bf16.mxu0 0
  %2448 = vmatpush1.bf16.msra.mxu0 %v686
  %2449 = vmatprep.subr.bf16.mxu0 0
  %2450 = vmatpush1.bf16.msra.mxu0 %v687
  %2451 = vmatprep.subr.bf16.mxu0 0
  %2452 = vmatpush1.bf16.msra.mxu0 %v688
  %2453 = vmatprep.subr.bf16.mxu0 0
  %2454 = vmatpush1.bf16.msra.mxu0 %v689
  %2455 = vmatprep.mubr.bf16.mxu0 %v2354
  %2456 = vmatmul.mubr.bf16.gmra.mrb[0].mxu0 %v2353
  %v2457 = vpop.f32.mrb[0].mxu0
  %v2458 = vadd.f32 0.0, %v2457
  %v2459 = vpop.f32.mrb[0].mxu0
  %v2460 = vpop.f32.mrb[0].mxu0
  %v2461 = vadd.f32 0.0, %v2460
  %v2462 = vpop.f32.mrb[0].mxu0
  %2463 = vmatprep.mubr.bf16.mxu0 %v2358
  %2464 = vmatmul.mubr.bf16.gmra.mrb[0].mxu0 %v2357
  %v2465 = vpop.f32.mrb[0].mxu0
  %v2466 = vadd.f32 0.0, %v2465
  %v2467 = vpop.f32.mrb[0].mxu0
  %v2468 = vpop.f32.mrb[0].mxu0
  %v2469 = vadd.f32 0.0, %v2468
  %v2470 = vpop.f32.mrb[0].mxu0
  %2471 = vmatprep.mubr.bf16.mxu0 %v2362
  %2472 = vmatmul.mubr.bf16.gmra.mrb[0].mxu0 %v2361
  %v2473 = vpop.f32.mrb[0].mxu0
  %v2474 = vadd.f32 0.0, %v2473
  %v2475 = vpop.f32.mrb[0].mxu0
  %v2476 = vpop.f32.mrb[0].mxu0
  %v2477 = vadd.f32 0.0, %v2476
  %v2478 = vpop.f32.mrb[0].mxu0
  %2479 = vmatprep.mubr.bf16.mxu0 %v2366
  %2480 = vmatmul.mubr.bf16.gmra.mrb[0].mxu0 %v2365
  %v2481 = vpop.f32.mrb[0].mxu0
  %v2482 = vadd.f32 0.0, %v2481
  %v2483 = vpop.f32.mrb[0].mxu0
  %v2484 = vpop.f32.mrb[0].mxu0
  %v2485 = vadd.f32 0.0, %v2484
  %v2486 = vpop.f32.mrb[0].mxu0
  %2487 = vmatprep.mubr.bf16.mxu0 %v2370
  %2488 = vmatmul.mubr.bf16.gmra.mrb[0].mxu0 %v2369
  %v2489 = vpop.f32.mrb[0].mxu0
  %v2490 = vadd.f32 0.0, %v2489
  %v2491 = vpop.f32.mrb[0].mxu0
  %v2492 = vpop.f32.mrb[0].mxu0
  %v2493 = vadd.f32 0.0, %v2492
  %v2494 = vpop.f32.mrb[0].mxu0
  %2495 = vmatprep.mubr.bf16.mxu0 %v2374
  %2496 = vmatmul.mubr.bf16.gmra.mrb[0].mxu0 %v2373
  %v2497 = vpop.f32.mrb[0].mxu0
  %v2498 = vadd.f32 0.0, %v2497
  %v2499 = vpop.f32.mrb[0].mxu0
  %v2500 = vpop.f32.mrb[0].mxu0
  %v2501 = vadd.f32 0.0, %v2500
  %v2502 = vpop.f32.mrb[0].mxu0
  %2503 = vmatprep.mubr.bf16.mxu0 %v2378
  %2504 = vmatmul.mubr.bf16.gmra.mrb[0].mxu0 %v2377
  %v2505 = vpop.f32.mrb[0].mxu0
  %v2506 = vadd.f32 0.0, %v2505
  %v2507 = vpop.f32.mrb[0].mxu0
  %v2508 = vpop.f32.mrb[0].mxu0
  %v2509 = vpop.f32.mrb[0].mxu0
  %2510 = vdwg.mxu0
  %2511 = vmatprep.subr.bf16.mxu0 0
  %2512 = vmatpush1.bf16.msra.mxu0 %v690
  %2513 = vmatprep.subr.bf16.mxu0 0
  %2514 = vmatpush1.bf16.msra.mxu0 %v691
  %2515 = vmatprep.subr.bf16.mxu0 0
  %2516 = vmatpush1.bf16.msra.mxu0 %v692
  %2517 = vmatprep.subr.bf16.mxu0 0
  %2518 = vmatpush1.bf16.msra.mxu0 %v693
  %2519 = vmatprep.subr.bf16.mxu0 0
  %2520 = vmatpush1.bf16.msra.mxu0 %v694
  %2521 = vmatprep.subr.bf16.mxu0 0
  %2522 = vmatpush1.bf16.msra.mxu0 %v695
  %2523 = vmatprep.subr.bf16.mxu0 0
  %2524 = vmatpush1.bf16.msra.mxu0 %v696
  %2525 = vmatprep.subr.bf16.mxu0 0
  %2526 = vmatpush1.bf16.msra.mxu0 %v697
  %2527 = vmatprep.subr.bf16.mxu0 0
  %2528 = vmatpush1.bf16.msra.mxu0 %v876
  %2529 = vmatprep.subr.bf16.mxu0 0
  %2530 = vmatpush1.bf16.msra.mxu0 0
  %2531 = vmatprep.subr.bf16.mxu0 0
  %2532 = vmatpush1.bf16.msra.mxu0 0
  %2533 = vmatprep.subr.bf16.mxu0 0
  %2534 = vmatpush1.bf16.msra.mxu0 0
  %2535 = vmatprep.subr.bf16.mxu0 0
  %2536 = vmatpush1.bf16.msra.mxu0 0
  %2537 = vmatprep.subr.bf16.mxu0 0
  %2538 = vmatpush1.bf16.msra.mxu0 0
  %2539 = vmatprep.subr.bf16.mxu0 0
  %2540 = vmatpush1.bf16.msra.mxu0 0
  %2541 = vmatprep.subr.bf16.mxu0 0
  %2542 = vmatpush1.bf16.msra.mxu0 0
  %2543 = vmatprep.mubr.bf16.mxu0 %v2403
  %2544 = vmatmul.mubr.bf16.gmra.mrb[0].mxu0 %v2355
  %v2545 = vpop.f32.mrb[0].mxu0
  %v2546 = vadd.f32 %v2458, %v2545
  %v2547 = vpop.f32.mrb[0].mxu0
  %v2548 = vpop.f32.mrb[0].mxu0
  %v2549 = vadd.f32 %v2461, %v2548
  %v2550 = vpop.f32.mrb[0].mxu0
  %2551 = vmatprep.mubr.bf16.mxu0 %v2406
  %2552 = vmatmul.mubr.bf16.gmra.mrb[0].mxu0 %v2359
  %v2553 = vpop.f32.mrb[0].mxu0
  %v2554 = vadd.f32 %v2466, %v2553
  %v2555 = vpop.f32.mrb[0].mxu0
  %v2556 = vpop.f32.mrb[0].mxu0
  %v2557 = vadd.f32 %v2469, %v2556
  %v2558 = vpop.f32.mrb[0].mxu0
  %2559 = vmatprep.mubr.bf16.mxu0 %v2409
  %2560 = vmatmul.mubr.bf16.gmra.mrb[0].mxu0 %v2363
  %v2561 = vpop.f32.mrb[0].mxu0
  %v2562 = vadd.f32 %v2474, %v2561
  %v2563 = vpop.f32.mrb[0].mxu0
  %v2564 = vpop.f32.mrb[0].mxu0
  %v2565 = vadd.f32 %v2477, %v2564
  %v2566 = vpop.f32.mrb[0].mxu0
  %2567 = vmatprep.mubr.bf16.mxu0 %v2412
  %2568 = vmatmul.mubr.bf16.gmra.mrb[0].mxu0 %v2367
  %v2569 = vpop.f32.mrb[0].mxu0
  %v2570 = vadd.f32 %v2482, %v2569
  %v2571 = vpop.f32.mrb[0].mxu0
  %v2572 = vpop.f32.mrb[0].mxu0
  %v2573 = vadd.f32 %v2485, %v2572
  %v2574 = vpop.f32.mrb[0].mxu0
  %2575 = vmatprep.mubr.bf16.mxu0 %v2415
  %2576 = vmatmul.mubr.bf16.gmra.mrb[0].mxu0 %v2371
  %v2577 = vpop.f32.mrb[0].mxu0
  %v2578 = vadd.f32 %v2490, %v2577
  %v2579 = vpop.f32.mrb[0].mxu0
  %v2580 = vpop.f32.mrb[0].mxu0
  %v2581 = vadd.f32 %v2493, %v2580
  %v2582 = vpop.f32.mrb[0].mxu0
  %2583 = vmatprep.mubr.bf16.mxu0 %v2418
  %2584 = vmatmul.mubr.bf16.gmra.mrb[0].mxu0 %v2375
  %v2585 = vpop.f32.mrb[0].mxu0
  %v2586 = vadd.f32 %v2498, %v2585
  %v2587 = vpop.f32.mrb[0].mxu0
  %v2588 = vpop.f32.mrb[0].mxu0
  %v2589 = vadd.f32 %v2501, %v2588
  %v2590 = vpop.f32.mrb[0].mxu0
  %2591 = vmatprep.mubr.bf16.mxu0 %v2421
  %2592 = vmatmul.mubr.bf16.gmra.mrb[0].mxu0 %v2379
  %v2593 = vpop.f32.mrb[0].mxu0
  %v2594 = vadd.f32 %v2506, %v2593
  %v2595 = vpop.f32.mrb[0].mxu0
  %v2596 = vpop.f32.mrb[0].mxu0
  %v2597 = vpop.f32.mrb[0].mxu0
  %2598 = vdwg.mxu0
  %v2599 = vpack.c.bf16 %v2549, %v2546
  %v2600 = vpack.c.bf16 %v2557, %v2554
  %v2601 = vpack.c.bf16 %v2565, %v2562
  %v2602 = vpack.c.bf16 %v2573, %v2570
  %v2603 = vpack.c.bf16 %v2581, %v2578
  %v2604 = vpack.c.bf16 %v2589, %v2586
  %v2605 = vpack.c.bf16 %v2594, %v2594
  %s2606 = scalar_lea.vmem %s3, 192
  %v2607 = vld [vmem:[%s2606] sm:$0xf]
  %v2608 = vld [vmem:[%s2606 + $0x4] sm:$0xf]
  %v2609 = vld [vmem:[%s2606 + $0x8] sm:$0xf]
  %v2610 = vld [vmem:[%s2606 + $0xc] sm:$0xf]
  %v2611 = vld [vmem:[%s2606 + $0x10] sm:$0xf]
  %v2612 = vld [vmem:[%s2606 + $0x14] sm:$0xf]
  %v2613 = vld [vmem:[%s2606 + $0x18] sm:$0xf]
  %v2614 = vld [vmem:[%s2606 + $0x1c] sm:$0xf]
  %v2615 = vld [vmem:[%s2606 + $0x20] sm:$0xf]
  %v2616 = vld [vmem:[%s2606 + $0x24] sm:$0xf]
  %v2617 = vld [vmem:[%s2606 + $0x28] sm:$0xf]
  %v2618 = vld [vmem:[%s2606 + $0x2c] sm:$0xf]
  %v2619 = vld [vmem:[%s2606 + $0x30] sm:$0xf]
  %v2620 = vld [vmem:[%s2606 + $0x34] sm:$0xf]
  %v2621 = vld [vmem:[%s2606 + $0x38] sm:$0xf]
  %v2622 = vld [vmem:[%s2606 + $0x3c] sm:$0xf]
  %v2639 = vunpack.c.l.b16 %v2607
  %v2640 = vunpack.c.l.b16 %v2608
  %v2641 = vunpack.c.l.b16 %v2609
  %v2642 = vunpack.c.l.b16 %v2610
  %v2643 = vunpack.c.l.b16 %v2611
  %v2644 = vunpack.c.l.b16 %v2612
  %v2645 = vunpack.c.l.b16 %v2613
  %v2646 = vunpack.c.l.b16 %v2614
  %v2647 = vunpack.c.l.b16 %v2615
  %v2648 = vunpack.c.l.b16 %v2616
  %v2649 = vunpack.c.l.b16 %v2617
  %v2650 = vunpack.c.l.b16 %v2618
  %v2651 = vunpack.c.l.b16 %v2619
  %v2652 = vunpack.c.l.b16 %v2620
  %v2653 = vunpack.c.l.b16 %v2621
  %v2654 = vunpack.c.l.b16 %v2622
  %v2655 = vpack.c.b16 %v2640, %v2639
  %v2656 = vpack.c.b16 %v2642, %v2641
  %v2657 = vpack.c.b16 %v2644, %v2643
  %v2658 = vpack.c.b16 %v2646, %v2645
  %v2659 = vpack.c.b16 %v2648, %v2647
  %v2660 = vpack.c.b16 %v2650, %v2649
  %v2661 = vpack.c.b16 %v2652, %v2651
  %v2662 = vpack.c.b16 %v2654, %v2653
  %2671 = vmatprep.subr.bf16.mxu0 0
  %2672 = vmatpush1.bf16.msra.mxu0 %v2655
  %2673 = vmatprep.subr.bf16.mxu0 0
  %2674 = vmatpush1.bf16.msra.mxu0 %v2656
  %2675 = vmatprep.subr.bf16.mxu0 0
  %2676 = vmatpush1.bf16.msra.mxu0 %v2657
  %2677 = vmatprep.subr.bf16.mxu0 0
  %2678 = vmatpush1.bf16.msra.mxu0 %v2658
  %2679 = vmatprep.subr.bf16.mxu0 0
  %2680 = vmatpush1.bf16.msra.mxu0 %v2659
  %2681 = vmatprep.subr.bf16.mxu0 0
  %2682 = vmatpush1.bf16.msra.mxu0 %v2660
  %2683 = vmatprep.subr.bf16.mxu0 0
  %2684 = vmatpush1.bf16.msra.mxu0 %v2661
  %2685 = vmatprep.subr.bf16.mxu0 0
  %2686 = vmatpush1.bf16.msra.mxu0 %v2662
  %2687 = vmatprep.subr.bf16.mxu0 0
  %2688 = vmatpush1.bf16.msra.mxu0 0
  %2689 = vmatprep.subr.bf16.mxu0 0
  %2690 = vmatpush1.bf16.msra.mxu0 0
  %2691 = vmatprep.subr.bf16.mxu0 0
  %2692 = vmatpush1.bf16.msra.mxu0 0
  %2693 = vmatprep.subr.bf16.mxu0 0
  %2694 = vmatpush1.bf16.msra.mxu0 0
  %2695 = vmatprep.subr.bf16.mxu0 0
  %2696 = vmatpush1.bf16.msra.mxu0 0
  %2697 = vmatprep.subr.bf16.mxu0 0
  %2698 = vmatpush1.bf16.msra.mxu0 0
  %2699 = vmatprep.subr.bf16.mxu0 0
  %2700 = vmatpush1.bf16.msra.mxu0 0
  %2701 = vmatprep.subr.bf16.mxu0 0
  %2702 = vmatpush1.bf16.msra.mxu0 0
  %2703 = vmatprep.mubr.bf16.mxu0 0
  %2704 = vmatmul.mubr.bf16.gmra.mrb[0].mxu0 %v2599
  %v2705 = vpop.f32.mrb[0].mxu0
  %v2706 = vadd.f32 0.0, %v2705
  %v2707 = vpop.f32.mrb[0].mxu0
  %v2708 = vpop.f32.mrb[0].mxu0
  %v2709 = vadd.f32 0.0, %v2708
  %v2710 = vpop.f32.mrb[0].mxu0
  %2711 = vmatprep.mubr.bf16.mxu0 0
  %2712 = vmatmul.mubr.bf16.gmra.mrb[0].mxu0 %v2600
  %v2713 = vpop.f32.mrb[0].mxu0
  %v2714 = vadd.f32 0.0, %v2713
  %v2715 = vpop.f32.mrb[0].mxu0
  %v2716 = vpop.f32.mrb[0].mxu0
  %v2717 = vadd.f32 0.0, %v2716
  %v2718 = vpop.f32.mrb[0].mxu0
  %2719 = vmatprep.mubr.bf16.mxu0 0
  %2720 = vmatmul.mubr.bf16.gmra.mrb[0].mxu0 %v2601
  %v2721 = vpop.f32.mrb[0].mxu0
  %v2722 = vadd.f32 0.0, %v2721
  %v2723 = vpop.f32.mrb[0].mxu0
  %v2724 = vpop.f32.mrb[0].mxu0
  %v2725 = vadd.f32 0.0, %v2724
  %v2726 = vpop.f32.mrb[0].mxu0
  %2727 = vmatprep.mubr.bf16.mxu0 0
  %2728 = vmatmul.mubr.bf16.gmra.mrb[0].mxu0 %v2602
  %v2729 = vpop.f32.mrb[0].mxu0
  %v2730 = vadd.f32 0.0, %v2729
  %v2731 = vpop.f32.mrb[0].mxu0
  %v2732 = vpop.f32.mrb[0].mxu0
  %v2733 = vadd.f32 0.0, %v2732
  %v2734 = vpop.f32.mrb[0].mxu0
  %2735 = vmatprep.mubr.bf16.mxu0 0
  %2736 = vmatmul.mubr.bf16.gmra.mrb[0].mxu0 %v2603
  %v2737 = vpop.f32.mrb[0].mxu0
  %v2738 = vadd.f32 0.0, %v2737
  %v2739 = vpop.f32.mrb[0].mxu0
  %v2740 = vpop.f32.mrb[0].mxu0
  %v2741 = vadd.f32 0.0, %v2740
  %v2742 = vpop.f32.mrb[0].mxu0
  %2743 = vmatprep.mubr.bf16.mxu0 0
  %2744 = vmatmul.mubr.bf16.gmra.mrb[0].mxu0 %v2604
  %v2745 = vpop.f32.mrb[0].mxu0
  %v2746 = vadd.f32 0.0, %v2745
  %v2747 = vpop.f32.mrb[0].mxu0
  %v2748 = vpop.f32.mrb[0].mxu0
  %v2749 = vadd.f32 0.0, %v2748
  %v2750 = vpop.f32.mrb[0].mxu0
  %2751 = vmatprep.mubr.bf16.mxu0 0
  %2752 = vmatmul.mubr.bf16.gmra.mrb[0].mxu0 %v2605
  %v2753 = vpop.f32.mrb[0].mxu0
  %v2754 = vadd.f32 0.0, %v2753
  %v2755 = vpop.f32.mrb[0].mxu0
  %v2756 = vpop.f32.mrb[0].mxu0
  %v2757 = vpop.f32.mrb[0].mxu0
  %2758 = vdwg.mxu0
  %v2759 = vadd.f32 %v2235, %v2706
  %v2760 = vadd.f32 %v2236, %v2709
  %v2761 = vadd.f32 %v2237, %v2714
  %v2762 = vadd.f32 %v2238, %v2717
  %v2763 = vadd.f32 %v2239, %v2722
  %v2764 = vadd.f32 %v2240, %v2725
  %v2765 = vadd.f32 %v2241, %v2730
  %v2766 = vadd.f32 %v2242, %v2733
  %v2767 = vadd.f32 %v2243, %v2738
  %v2768 = vadd.f32 %v2244, %v2741
  %v2769 = vadd.f32 %v2245, %v2746
  %v2770 = vadd.f32 %v2246, %v2749
  %v2771 = vadd.f32 %v2247, %v2754
  %s2772 = scalar_lea.vmem %s2, 832
  %v2773 = vld [vmem:[%s2772] sm:$0xff]
  %v2774 = vld [vmem:[%s2772 + $0x8] sm:$0xff]
  %v2775 = vld [vmem:[%s2772 + $0x10] sm:$0xff]
  %v2776 = vld [vmem:[%s2772 + $0x18] sm:$0xff]
  %v2777 = vld [vmem:[%s2772 + $0x20] sm:$0xff]
  %v2778 = vld [vmem:[%s2772 + $0x28] sm:$0xff]
  %v2779 = vld [vmem:[%s2772 + $0x30] sm:$0xff]
  %v2780 = vld [vmem:[%s2772 + $0x38] sm:$0xff]
  %v2781 = vld [vmem:[%s2772 + $0x40] sm:$0xff]
  %v2782 = vld [vmem:[%s2772 + $0x48] sm:$0xff]
  %v2783 = vld [vmem:[%s2772 + $0x50] sm:$0xff]
  %v2784 = vld [vmem:[%s2772 + $0x58] sm:$0xff]
  %v2785 = vld [vmem:[%s2772 + $0x60] sm:$0xff]
  %v2786 = vld [vmem:[%s2772 + $0x68] sm:$0xff]
  %v2787 = vld [vmem:[%s2772 + $0x70] sm:$0xff]
  %v2788 = vld [vmem:[%s2772 + $0x78] sm:$0xff]
  %v2789 = vld [vmem:[%s2772 + $0x80] sm:$0xff]
  %v2790 = vld [vmem:[%s2772 + $0x88] sm:$0xff]
  %v2791 = vld [vmem:[%s2772 + $0x90] sm:$0xff]
  %v2792 = vld [vmem:[%s2772 + $0x98] sm:$0xff]
  %v2793 = vld [vmem:[%s2772 + $0xa0] sm:$0xff]
  %v2794 = vld [vmem:[%s2772 + $0xa8] sm:$0xff]
  %v2795 = vld [vmem:[%s2772 + $0xb0] sm:$0xff]
  %v2796 = vld [vmem:[%s2772 + $0xb8] sm:$0xff]
  %v2797 = vld [vmem:[%s2772 + $0xc0] sm:$0x11]
  %v2798 = vld [vmem:[%s2772 + $0xc8] sm:$0x11]
  %v2825 = vunpack.c.l.b16 %v2773
  %v2826 = vunpack.c.h.b16 %v2773
  %v2827 = vunpack.c.l.b16 %v2774
  %v2828 = vunpack.c.h.b16 %v2774
  %v2829 = vunpack.c.l.b16 %v2775
  %v2830 = vunpack.c.h.b16 %v2775
  %v2831 = vunpack.c.l.b16 %v2776
  %v2832 = vunpack.c.h.b16 %v2776
  %v2833 = vunpack.c.l.b16 %v2777
  %v2834 = vunpack.c.h.b16 %v2777
  %v2835 = vunpack.c.l.b16 %v2778
  %v2836 = vunpack.c.h.b16 %v2778
  %v2837 = vunpack.c.l.b16 %v2779
  %v2838 = vunpack.c.h.b16 %v2779
  %v2839 = vunpack.c.l.b16 %v2780
  %v2840 = vunpack.c.h.b16 %v2780
  %v2841 = vunpack.c.l.b16 %v2781
  %v2842 = vunpack.c.h.b16 %v2781
  %v2843 = vunpack.c.l.b16 %v2782
  %v2844 = vunpack.c.h.b16 %v2782
  %v2845 = vunpack.c.l.b16 %v2783
  %v2846 = vunpack.c.h.b16 %v2783
  %v2847 = vunpack.c.l.b16 %v2784
  %v2848 = vunpack.c.h.b16 %v2784
  %v2849 = vunpack.c.l.b16 %v2785
  %v2850 = vunpack.c.h.b16 %v2785
  %v2851 = vunpack.c.l.b16 %v2786
  %v2852 = vunpack.c.h.b16 %v2786
  %v2853 = vunpack.c.l.b16 %v2787
  %v2854 = vunpack.c.h.b16 %v2787
  %v2855 = vunpack.c.l.b16 %v2788
  %v2856 = vunpack.c.h.b16 %v2788
  %v2857 = vunpack.c.l.b16 %v2789
  %v2858 = vunpack.c.h.b16 %v2789
  %v2859 = vunpack.c.l.b16 %v2790
  %v2860 = vunpack.c.h.b16 %v2790
  %v2861 = vunpack.c.l.b16 %v2791
  %v2862 = vunpack.c.h.b16 %v2791
  %v2863 = vunpack.c.l.b16 %v2792
  %v2864 = vunpack.c.h.b16 %v2792
  %v2865 = vunpack.c.l.b16 %v2793
  %v2866 = vunpack.c.h.b16 %v2793
  %v2867 = vunpack.c.l.b16 %v2794
  %v2868 = vunpack.c.h.b16 %v2794
  %v2869 = vunpack.c.l.b16 %v2795
  %v2870 = vunpack.c.h.b16 %v2795
  %v2871 = vunpack.c.l.b16 %v2796
  %v2872 = vunpack.c.h.b16 %v2796
  %v2873 = vunpack.c.l.b16 %v2797
  %v2874 = vunpack.c.h.b16 %v2797
  %v2875 = vunpack.c.l.b16 %v2798
  %v2876 = vunpack.c.h.b16 %v2798
  %v2877 = vpack.c.b16 %v2829, %v2825
  %v2878 = vpack.c.b16 %v2830, %v2826
  %v2879 = vpack.c.b16 %v2831, %v2827
  %v2880 = vpack.c.b16 %v2832, %v2828
  %v2881 = vpack.c.b16 %v2837, %v2833
  %v2882 = vpack.c.b16 %v2838, %v2834
  %v2883 = vpack.c.b16 %v2839, %v2835
  %v2884 = vpack.c.b16 %v2840, %v2836
  %v2885 = vpack.c.b16 %v2845, %v2841
  %v2886 = vpack.c.b16 %v2846, %v2842
  %v2887 = vpack.c.b16 %v2847, %v2843
  %v2888 = vpack.c.b16 %v2848, %v2844
  %v2889 = vpack.c.b16 %v2853, %v2849
  %v2890 = vpack.c.b16 %v2854, %v2850
  %v2891 = vpack.c.b16 %v2855, %v2851
  %v2892 = vpack.c.b16 %v2856, %v2852
  %v2893 = vpack.c.b16 %v2861, %v2857
  %v2894 = vpack.c.b16 %v2862, %v2858
  %v2895 = vpack.c.b16 %v2863, %v2859
  %v2896 = vpack.c.b16 %v2864, %v2860
  %v2897 = vpack.c.b16 %v2869, %v2865
  %v2898 = vpack.c.b16 %v2870, %v2866
  %v2899 = vpack.c.b16 %v2871, %v2867
  %v2900 = vpack.c.b16 %v2872, %v2868
  %v2901 = vpack.c.b16 %v2873, %v2873
  %v2902 = vpack.c.b16 %v2874, %v2874
  %v2903 = vpack.c.b16 %v2875, %v2875
  %v2904 = vpack.c.b16 %v2876, %v2876
  %v2927 = vsel %vm852, %v2880, 0
  %v2930 = vsel %vm852, %v2884, 0
  %v2933 = vsel %vm852, %v2888, 0
  %v2936 = vsel %vm852, %v2892, 0
  %v2939 = vsel %vm852, %v2896, 0
  %v2942 = vsel %vm852, %v2900, 0
  %v2945 = vsel %vm852, %v2904, 0
  %2947 = vmatprep.subr.bf16.mxu0 0
  %2948 = vmatpush1.bf16.msra.mxu0 %v674
  %2949 = vmatprep.subr.bf16.mxu0 0
  %2950 = vmatpush1.bf16.msra.mxu0 %v675
  %2951 = vmatprep.subr.bf16.mxu0 0
  %2952 = vmatpush1.bf16.msra.mxu0 %v676
  %2953 = vmatprep.subr.bf16.mxu0 0
  %2954 = vmatpush1.bf16.msra.mxu0 %v677
  %2955 = vmatprep.subr.bf16.mxu0 0
  %2956 = vmatpush1.bf16.msra.mxu0 %v678
  %2957 = vmatprep.subr.bf16.mxu0 0
  %2958 = vmatpush1.bf16.msra.mxu0 %v679
  %2959 = vmatprep.subr.bf16.mxu0 0
  %2960 = vmatpush1.bf16.msra.mxu0 %v680
  %2961 = vmatprep.subr.bf16.mxu0 0
  %2962 = vmatpush1.bf16.msra.mxu0 %v681
  %2963 = vmatprep.subr.bf16.mxu0 0
  %2964 = vmatpush1.bf16.msra.mxu0 %v682
  %2965 = vmatprep.subr.bf16.mxu0 0
  %2966 = vmatpush1.bf16.msra.mxu0 %v683
  %2967 = vmatprep.subr.bf16.mxu0 0
  %2968 = vmatpush1.bf16.msra.mxu0 %v684
  %2969 = vmatprep.subr.bf16.mxu0 0
  %2970 = vmatpush1.bf16.msra.mxu0 %v685
  %2971 = vmatprep.subr.bf16.mxu0 0
  %2972 = vmatpush1.bf16.msra.mxu0 %v686
  %2973 = vmatprep.subr.bf16.mxu0 0
  %2974 = vmatpush1.bf16.msra.mxu0 %v687
  %2975 = vmatprep.subr.bf16.mxu0 0
  %2976 = vmatpush1.bf16.msra.mxu0 %v688
  %2977 = vmatprep.subr.bf16.mxu0 0
  %2978 = vmatpush1.bf16.msra.mxu0 %v689
  %2979 = vmatprep.mubr.bf16.mxu0 %v2878
  %2980 = vmatmul.mubr.bf16.gmra.mrb[0].mxu0 %v2877
  %v2981 = vpop.f32.mrb[0].mxu0
  %v2982 = vadd.f32 0.0, %v2981
  %v2983 = vpop.f32.mrb[0].mxu0
  %v2984 = vpop.f32.mrb[0].mxu0
  %v2985 = vadd.f32 0.0, %v2984
  %v2986 = vpop.f32.mrb[0].mxu0
  %2987 = vmatprep.mubr.bf16.mxu0 %v2882
  %2988 = vmatmul.mubr.bf16.gmra.mrb[0].mxu0 %v2881
  %v2989 = vpop.f32.mrb[0].mxu0
  %v2990 = vadd.f32 0.0, %v2989
  %v2991 = vpop.f32.mrb[0].mxu0
  %v2992 = vpop.f32.mrb[0].mxu0
  %v2993 = vadd.f32 0.0, %v2992
  %v2994 = vpop.f32.mrb[0].mxu0
  %2995 = vmatprep.mubr.bf16.mxu0 %v2886
  %2996 = vmatmul.mubr.bf16.gmra.mrb[0].mxu0 %v2885
  %v2997 = vpop.f32.mrb[0].mxu0
  %v2998 = vadd.f32 0.0, %v2997
  %v2999 = vpop.f32.mrb[0].mxu0
  %v3000 = vpop.f32.mrb[0].mxu0
  %v3001 = vadd.f32 0.0, %v3000
  %v3002 = vpop.f32.mrb[0].mxu0
  %3003 = vmatprep.mubr.bf16.mxu0 %v2890
  %3004 = vmatmul.mubr.bf16.gmra.mrb[0].mxu0 %v2889
  %v3005 = vpop.f32.mrb[0].mxu0
  %v3006 = vadd.f32 0.0, %v3005
  %v3007 = vpop.f32.mrb[0].mxu0
  %v3008 = vpop.f32.mrb[0].mxu0
  %v3009 = vadd.f32 0.0, %v3008
  %v3010 = vpop.f32.mrb[0].mxu0
  %3011 = vmatprep.mubr.bf16.mxu0 %v2894
  %3012 = vmatmul.mubr.bf16.gmra.mrb[0].mxu0 %v2893
  %v3013 = vpop.f32.mrb[0].mxu0
  %v3014 = vadd.f32 0.0, %v3013
  %v3015 = vpop.f32.mrb[0].mxu0
  %v3016 = vpop.f32.mrb[0].mxu0
  %v3017 = vadd.f32 0.0, %v3016
  %v3018 = vpop.f32.mrb[0].mxu0
  %3019 = vmatprep.mubr.bf16.mxu0 %v2898
  %3020 = vmatmul.mubr.bf16.gmra.mrb[0].mxu0 %v2897
  %v3021 = vpop.f32.mrb[0].mxu0
  %v3022 = vadd.f32 0.0, %v3021
  %v3023 = vpop.f32.mrb[0].mxu0
  %v3024 = vpop.f32.mrb[0].mxu0
  %v3025 = vadd.f32 0.0, %v3024
  %v3026 = vpop.f32.mrb[0].mxu0
  %3027 = vmatprep.mubr.bf16.mxu0 %v2902
  %3028 = vmatmul.mubr.bf16.gmra.mrb[0].mxu0 %v2901
  %v3029 = vpop.f32.mrb[0].mxu0
  %v3030 = vadd.f32 0.0, %v3029
  %v3031 = vpop.f32.mrb[0].mxu0
  %v3032 = vpop.f32.mrb[0].mxu0
  %v3033 = vpop.f32.mrb[0].mxu0
  %3034 = vdwg.mxu0
  %3035 = vmatprep.subr.bf16.mxu0 0
  %3036 = vmatpush1.bf16.msra.mxu0 %v690
  %3037 = vmatprep.subr.bf16.mxu0 0
  %3038 = vmatpush1.bf16.msra.mxu0 %v691
  %3039 = vmatprep.subr.bf16.mxu0 0
  %3040 = vmatpush1.bf16.msra.mxu0 %v692
  %3041 = vmatprep.subr.bf16.mxu0 0
  %3042 = vmatpush1.bf16.msra.mxu0 %v693
  %3043 = vmatprep.subr.bf16.mxu0 0
  %3044 = vmatpush1.bf16.msra.mxu0 %v694
  %3045 = vmatprep.subr.bf16.mxu0 0
  %3046 = vmatpush1.bf16.msra.mxu0 %v695
  %3047 = vmatprep.subr.bf16.mxu0 0
  %3048 = vmatpush1.bf16.msra.mxu0 %v696
  %3049 = vmatprep.subr.bf16.mxu0 0
  %3050 = vmatpush1.bf16.msra.mxu0 %v697
  %3051 = vmatprep.subr.bf16.mxu0 0
  %3052 = vmatpush1.bf16.msra.mxu0 %v876
  %3053 = vmatprep.subr.bf16.mxu0 0
  %3054 = vmatpush1.bf16.msra.mxu0 0
  %3055 = vmatprep.subr.bf16.mxu0 0
  %3056 = vmatpush1.bf16.msra.mxu0 0
  %3057 = vmatprep.subr.bf16.mxu0 0
  %3058 = vmatpush1.bf16.msra.mxu0 0
  %3059 = vmatprep.subr.bf16.mxu0 0
  %3060 = vmatpush1.bf16.msra.mxu0 0
  %3061 = vmatprep.subr.bf16.mxu0 0
  %3062 = vmatpush1.bf16.msra.mxu0 0
  %3063 = vmatprep.subr.bf16.mxu0 0
  %3064 = vmatpush1.bf16.msra.mxu0 0
  %3065 = vmatprep.subr.bf16.mxu0 0
  %3066 = vmatpush1.bf16.msra.mxu0 0
  %3067 = vmatprep.mubr.bf16.mxu0 %v2927
  %3068 = vmatmul.mubr.bf16.gmra.mrb[0].mxu0 %v2879
  %v3069 = vpop.f32.mrb[0].mxu0
  %v3070 = vadd.f32 %v2982, %v3069
  %v3071 = vpop.f32.mrb[0].mxu0
  %v3072 = vpop.f32.mrb[0].mxu0
  %v3073 = vadd.f32 %v2985, %v3072
  %v3074 = vpop.f32.mrb[0].mxu0
  %3075 = vmatprep.mubr.bf16.mxu0 %v2930
  %3076 = vmatmul.mubr.bf16.gmra.mrb[0].mxu0 %v2883
  %v3077 = vpop.f32.mrb[0].mxu0
  %v3078 = vadd.f32 %v2990, %v3077
  %v3079 = vpop.f32.mrb[0].mxu0
  %v3080 = vpop.f32.mrb[0].mxu0
  %v3081 = vadd.f32 %v2993, %v3080
  %v3082 = vpop.f32.mrb[0].mxu0
  %3083 = vmatprep.mubr.bf16.mxu0 %v2933
  %3084 = vmatmul.mubr.bf16.gmra.mrb[0].mxu0 %v2887
  %v3085 = vpop.f32.mrb[0].mxu0
  %v3086 = vadd.f32 %v2998, %v3085
  %v3087 = vpop.f32.mrb[0].mxu0
  %v3088 = vpop.f32.mrb[0].mxu0
  %v3089 = vadd.f32 %v3001, %v3088
  %v3090 = vpop.f32.mrb[0].mxu0
  %3091 = vmatprep.mubr.bf16.mxu0 %v2936
  %3092 = vmatmul.mubr.bf16.gmra.mrb[0].mxu0 %v2891
  %v3093 = vpop.f32.mrb[0].mxu0
  %v3094 = vadd.f32 %v3006, %v3093
  %v3095 = vpop.f32.mrb[0].mxu0
  %v3096 = vpop.f32.mrb[0].mxu0
  %v3097 = vadd.f32 %v3009, %v3096
  %v3098 = vpop.f32.mrb[0].mxu0
  %3099 = vmatprep.mubr.bf16.mxu0 %v2939
  %3100 = vmatmul.mubr.bf16.gmra.mrb[0].mxu0 %v2895
  %v3101 = vpop.f32.mrb[0].mxu0
  %v3102 = vadd.f32 %v3014, %v3101
  %v3103 = vpop.f32.mrb[0].mxu0
  %v3104 = vpop.f32.mrb[0].mxu0
  %v3105 = vadd.f32 %v3017, %v3104
  %v3106 = vpop.f32.mrb[0].mxu0
  %3107 = vmatprep.mubr.bf16.mxu0 %v2942
  %3108 = vmatmul.mubr.bf16.gmra.mrb[0].mxu0 %v2899
  %v3109 = vpop.f32.mrb[0].mxu0
  %v3110 = vadd.f32 %v3022, %v3109
  %v3111 = vpop.f32.mrb[0].mxu0
  %v3112 = vpop.f32.mrb[0].mxu0
  %v3113 = vadd.f32 %v3025, %v3112
  %v3114 = vpop.f32.mrb[0].mxu0
  %3115 = vmatprep.mubr.bf16.mxu0 %v2945
  %3116 = vmatmul.mubr.bf16.gmra.mrb[0].mxu0 %v2903
  %v3117 = vpop.f32.mrb[0].mxu0
  %v3118 = vadd.f32 %v3030, %v3117
  %v3119 = vpop.f32.mrb[0].mxu0
  %v3120 = vpop.f32.mrb[0].mxu0
  %v3121 = vpop.f32.mrb[0].mxu0
  %3122 = vdwg.mxu0
  %v3123 = vpack.c.bf16 %v3073, %v3070
  %v3124 = vpack.c.bf16 %v3081, %v3078
  %v3125 = vpack.c.bf16 %v3089, %v3086
  %v3126 = vpack.c.bf16 %v3097, %v3094
  %v3127 = vpack.c.bf16 %v3105, %v3102
  %v3128 = vpack.c.bf16 %v3113, %v3110
  %v3129 = vpack.c.bf16 %v3118, %v3118
  %s3130 = scalar_lea.vmem %s3, 256
  %v3131 = vld [vmem:[%s3130] sm:$0xf]
  %v3132 = vld [vmem:[%s3130 + $0x4] sm:$0xf]
  %v3133 = vld [vmem:[%s3130 + $0x8] sm:$0xf]
  %v3134 = vld [vmem:[%s3130 + $0xc] sm:$0xf]
  %v3135 = vld [vmem:[%s3130 + $0x10] sm:$0xf]
  %v3136 = vld [vmem:[%s3130 + $0x14] sm:$0xf]
  %v3137 = vld [vmem:[%s3130 + $0x18] sm:$0xf]
  %v3138 = vld [vmem:[%s3130 + $0x1c] sm:$0xf]
  %v3139 = vld [vmem:[%s3130 + $0x20] sm:$0xf]
  %v3140 = vld [vmem:[%s3130 + $0x24] sm:$0xf]
  %v3141 = vld [vmem:[%s3130 + $0x28] sm:$0xf]
  %v3142 = vld [vmem:[%s3130 + $0x2c] sm:$0xf]
  %v3143 = vld [vmem:[%s3130 + $0x30] sm:$0xf]
  %v3144 = vld [vmem:[%s3130 + $0x34] sm:$0xf]
  %v3145 = vld [vmem:[%s3130 + $0x38] sm:$0xf]
  %v3146 = vld [vmem:[%s3130 + $0x3c] sm:$0xf]
  %v3163 = vunpack.c.l.b16 %v3131
  %v3164 = vunpack.c.l.b16 %v3132
  %v3165 = vunpack.c.l.b16 %v3133
  %v3166 = vunpack.c.l.b16 %v3134
  %v3167 = vunpack.c.l.b16 %v3135
  %v3168 = vunpack.c.l.b16 %v3136
  %v3169 = vunpack.c.l.b16 %v3137
  %v3170 = vunpack.c.l.b16 %v3138
  %v3171 = vunpack.c.l.b16 %v3139
  %v3172 = vunpack.c.l.b16 %v3140
  %v3173 = vunpack.c.l.b16 %v3141
  %v3174 = vunpack.c.l.b16 %v3142
  %v3175 = vunpack.c.l.b16 %v3143
  %v3176 = vunpack.c.l.b16 %v3144
  %v3177 = vunpack.c.l.b16 %v3145
  %v3178 = vunpack.c.l.b16 %v3146
  %v3179 = vpack.c.b16 %v3164, %v3163
  %v3180 = vpack.c.b16 %v3166, %v3165
  %v3181 = vpack.c.b16 %v3168, %v3167
  %v3182 = vpack.c.b16 %v3170, %v3169
  %v3183 = vpack.c.b16 %v3172, %v3171
  %v3184 = vpack.c.b16 %v3174, %v3173
  %v3185 = vpack.c.b16 %v3176, %v3175
  %v3186 = vpack.c.b16 %v3178, %v3177
  %3195 = vmatprep.subr.bf16.mxu0 0
  %3196 = vmatpush1.bf16.msra.mxu0 %v3179
  %3197 = vmatprep.subr.bf16.mxu0 0
  %3198 = vmatpush1.bf16.msra.mxu0 %v3180
  %3199 = vmatprep.subr.bf16.mxu0 0
  %3200 = vmatpush1.bf16.msra.mxu0 %v3181
  %3201 = vmatprep.subr.bf16.mxu0 0
  %3202 = vmatpush1.bf16.msra.mxu0 %v3182
  %3203 = vmatprep.subr.bf16.mxu0 0
  %3204 = vmatpush1.bf16.msra.mxu0 %v3183
  %3205 = vmatprep.subr.bf16.mxu0 0
  %3206 = vmatpush1.bf16.msra.mxu0 %v3184
  %3207 = vmatprep.subr.bf16.mxu0 0
  %3208 = vmatpush1.bf16.msra.mxu0 %v3185
  %3209 = vmatprep.subr.bf16.mxu0 0
  %3210 = vmatpush1.bf16.msra.mxu0 %v3186
  %3211 = vmatprep.subr.bf16.mxu0 0
  %3212 = vmatpush1.bf16.msra.mxu0 0
  %3213 = vmatprep.subr.bf16.mxu0 0
  %3214 = vmatpush1.bf16.msra.mxu0 0
  %3215 = vmatprep.subr.bf16.mxu0 0
  %3216 = vmatpush1.bf16.msra.mxu0 0
  %3217 = vmatprep.subr.bf16.mxu0 0
  %3218 = vmatpush1.bf16.msra.mxu0 0
  %3219 = vmatprep.subr.bf16.mxu0 0
  %3220 = vmatpush1.bf16.msra.mxu0 0
  %3221 = vmatprep.subr.bf16.mxu0 0
  %3222 = vmatpush1.bf16.msra.mxu0 0
  %3223 = vmatprep.subr.bf16.mxu0 0
  %3224 = vmatpush1.bf16.msra.mxu0 0
  %3225 = vmatprep.subr.bf16.mxu0 0
  %3226 = vmatpush1.bf16.msra.mxu0 0
  %3227 = vmatprep.mubr.bf16.mxu0 0
  %3228 = vmatmul.mubr.bf16.gmra.mrb[0].mxu0 %v3123
  %v3229 = vpop.f32.mrb[0].mxu0
  %v3230 = vadd.f32 0.0, %v3229
  %v3231 = vpop.f32.mrb[0].mxu0
  %v3232 = vpop.f32.mrb[0].mxu0
  %v3233 = vadd.f32 0.0, %v3232
  %v3234 = vpop.f32.mrb[0].mxu0
  %3235 = vmatprep.mubr.bf16.mxu0 0
  %3236 = vmatmul.mubr.bf16.gmra.mrb[0].mxu0 %v3124
  %v3237 = vpop.f32.mrb[0].mxu0
  %v3238 = vadd.f32 0.0, %v3237
  %v3239 = vpop.f32.mrb[0].mxu0
  %v3240 = vpop.f32.mrb[0].mxu0
  %v3241 = vadd.f32 0.0, %v3240
  %v3242 = vpop.f32.mrb[0].mxu0
  %3243 = vmatprep.mubr.bf16.mxu0 0
  %3244 = vmatmul.mubr.bf16.gmra.mrb[0].mxu0 %v3125
  %v3245 = vpop.f32.mrb[0].mxu0
  %v3246 = vadd.f32 0.0, %v3245
  %v3247 = vpop.f32.mrb[0].mxu0
  %v3248 = vpop.f32.mrb[0].mxu0
  %v3249 = vadd.f32 0.0, %v3248
  %v3250 = vpop.f32.mrb[0].mxu0
  %3251 = vmatprep.mubr.bf16.mxu0 0
  %3252 = vmatmul.mubr.bf16.gmra.mrb[0].mxu0 %v3126
  %v3253 = vpop.f32.mrb[0].mxu0
  %v3254 = vadd.f32 0.0, %v3253
  %v3255 = vpop.f32.mrb[0].mxu0
  %v3256 = vpop.f32.mrb[0].mxu0
  %v3257 = vadd.f32 0.0, %v3256
  %v3258 = vpop.f32.mrb[0].mxu0
  %3259 = vmatprep.mubr.bf16.mxu0 0
  %3260 = vmatmul.mubr.bf16.gmra.mrb[0].mxu0 %v3127
  %v3261 = vpop.f32.mrb[0].mxu0
  %v3262 = vadd.f32 0.0, %v3261
  %v3263 = vpop.f32.mrb[0].mxu0
  %v3264 = vpop.f32.mrb[0].mxu0
  %v3265 = vadd.f32 0.0, %v3264
  %v3266 = vpop.f32.mrb[0].mxu0
  %3267 = vmatprep.mubr.bf16.mxu0 0
  %3268 = vmatmul.mubr.bf16.gmra.mrb[0].mxu0 %v3128
  %v3269 = vpop.f32.mrb[0].mxu0
  %v3270 = vadd.f32 0.0, %v3269
  %v3271 = vpop.f32.mrb[0].mxu0
  %v3272 = vpop.f32.mrb[0].mxu0
  %v3273 = vadd.f32 0.0, %v3272
  %v3274 = vpop.f32.mrb[0].mxu0
  %3275 = vmatprep.mubr.bf16.mxu0 0
  %3276 = vmatmul.mubr.bf16.gmra.mrb[0].mxu0 %v3129
  %v3277 = vpop.f32.mrb[0].mxu0
  %v3278 = vadd.f32 0.0, %v3277
  %v3279 = vpop.f32.mrb[0].mxu0
  %v3280 = vpop.f32.mrb[0].mxu0
  %v3281 = vpop.f32.mrb[0].mxu0
  %3282 = vdwg.mxu0
  %v3283 = vadd.f32 %v2759, %v3230
  %v3284 = vadd.f32 %v2760, %v3233
  %v3285 = vadd.f32 %v2761, %v3238
  %v3286 = vadd.f32 %v2762, %v3241
  %v3287 = vadd.f32 %v2763, %v3246
  %v3288 = vadd.f32 %v2764, %v3249
  %v3289 = vadd.f32 %v2765, %v3254
  %v3290 = vadd.f32 %v2766, %v3257
  %v3291 = vadd.f32 %v2767, %v3262
  %v3292 = vadd.f32 %v2768, %v3265
  %v3293 = vadd.f32 %v2769, %v3270
  %v3294 = vadd.f32 %v2770, %v3273
  %v3295 = vadd.f32 %v2771, %v3278
  %s3296 = scalar_lea.vmem %s2, 1040
  %v3297 = vld [vmem:[%s3296] sm:$0xff]
  %v3298 = vld [vmem:[%s3296 + $0x8] sm:$0xff]
  %v3299 = vld [vmem:[%s3296 + $0x10] sm:$0xff]
  %v3300 = vld [vmem:[%s3296 + $0x18] sm:$0xff]
  %v3301 = vld [vmem:[%s3296 + $0x20] sm:$0xff]
  %v3302 = vld [vmem:[%s3296 + $0x28] sm:$0xff]
  %v3303 = vld [vmem:[%s3296 + $0x30] sm:$0xff]
  %v3304 = vld [vmem:[%s3296 + $0x38] sm:$0xff]
  %v3305 = vld [vmem:[%s3296 + $0x40] sm:$0xff]
  %v3306 = vld [vmem:[%s3296 + $0x48] sm:$0xff]
  %v3307 = vld [vmem:[%s3296 + $0x50] sm:$0xff]
  %v3308 = vld [vmem:[%s3296 + $0x58] sm:$0xff]
  %v3309 = vld [vmem:[%s3296 + $0x60] sm:$0xff]
  %v3310 = vld [vmem:[%s3296 + $0x68] sm:$0xff]
  %v3311 = vld [vmem:[%s3296 + $0x70] sm:$0xff]
  %v3312 = vld [vmem:[%s3296 + $0x78] sm:$0xff]
  %v3313 = vld [vmem:[%s3296 + $0x80] sm:$0xff]
  %v3314 = vld [vmem:[%s3296 + $0x88] sm:$0xff]
  %v3315 = vld [vmem:[%s3296 + $0x90] sm:$0xff]
  %v3316 = vld [vmem:[%s3296 + $0x98] sm:$0xff]
  %v3317 = vld [vmem:[%s3296 + $0xa0] sm:$0xff]
  %v3318 = vld [vmem:[%s3296 + $0xa8] sm:$0xff]
  %v3319 = vld [vmem:[%s3296 + $0xb0] sm:$0xff]
  %v3320 = vld [vmem:[%s3296 + $0xb8] sm:$0xff]
  %v3321 = vld [vmem:[%s3296 + $0xc0] sm:$0x11]
  %v3322 = vld [vmem:[%s3296 + $0xc8] sm:$0x11]
  %v3349 = vunpack.c.l.b16 %v3297
  %v3350 = vunpack.c.h.b16 %v3297
  %v3351 = vunpack.c.l.b16 %v3298
  %v3352 = vunpack.c.h.b16 %v3298
  %v3353 = vunpack.c.l.b16 %v3299
  %v3354 = vunpack.c.h.b16 %v3299
  %v3355 = vunpack.c.l.b16 %v3300
  %v3356 = vunpack.c.h.b16 %v3300
  %v3357 = vunpack.c.l.b16 %v3301
  %v3358 = vunpack.c.h.b16 %v3301
  %v3359 = vunpack.c.l.b16 %v3302
  %v3360 = vunpack.c.h.b16 %v3302
  %v3361 = vunpack.c.l.b16 %v3303
  %v3362 = vunpack.c.h.b16 %v3303
  %v3363 = vunpack.c.l.b16 %v3304
  %v3364 = vunpack.c.h.b16 %v3304
  %v3365 = vunpack.c.l.b16 %v3305
  %v3366 = vunpack.c.h.b16 %v3305
  %v3367 = vunpack.c.l.b16 %v3306
  %v3368 = vunpack.c.h.b16 %v3306
  %v3369 = vunpack.c.l.b16 %v3307
  %v3370 = vunpack.c.h.b16 %v3307
  %v3371 = vunpack.c.l.b16 %v3308
  %v3372 = vunpack.c.h.b16 %v3308
  %v3373 = vunpack.c.l.b16 %v3309
  %v3374 = vunpack.c.h.b16 %v3309
  %v3375 = vunpack.c.l.b16 %v3310
  %v3376 = vunpack.c.h.b16 %v3310
  %v3377 = vunpack.c.l.b16 %v3311
  %v3378 = vunpack.c.h.b16 %v3311
  %v3379 = vunpack.c.l.b16 %v3312
  %v3380 = vunpack.c.h.b16 %v3312
  %v3381 = vunpack.c.l.b16 %v3313
  %v3382 = vunpack.c.h.b16 %v3313
  %v3383 = vunpack.c.l.b16 %v3314
  %v3384 = vunpack.c.h.b16 %v3314
  %v3385 = vunpack.c.l.b16 %v3315
  %v3386 = vunpack.c.h.b16 %v3315
  %v3387 = vunpack.c.l.b16 %v3316
  %v3388 = vunpack.c.h.b16 %v3316
  %v3389 = vunpack.c.l.b16 %v3317
  %v3390 = vunpack.c.h.b16 %v3317
  %v3391 = vunpack.c.l.b16 %v3318
  %v3392 = vunpack.c.h.b16 %v3318
  %v3393 = vunpack.c.l.b16 %v3319
  %v3394 = vunpack.c.h.b16 %v3319
  %v3395 = vunpack.c.l.b16 %v3320
  %v3396 = vunpack.c.h.b16 %v3320
  %v3397 = vunpack.c.l.b16 %v3321
  %v3398 = vunpack.c.h.b16 %v3321
  %v3399 = vunpack.c.l.b16 %v3322
  %v3400 = vunpack.c.h.b16 %v3322
  %v3401 = vpack.c.b16 %v3353, %v3349
  %v3402 = vpack.c.b16 %v3354, %v3350
  %v3403 = vpack.c.b16 %v3355, %v3351
  %v3404 = vpack.c.b16 %v3356, %v3352
  %v3405 = vpack.c.b16 %v3361, %v3357
  %v3406 = vpack.c.b16 %v3362, %v3358
  %v3407 = vpack.c.b16 %v3363, %v3359
  %v3408 = vpack.c.b16 %v3364, %v3360
  %v3409 = vpack.c.b16 %v3369, %v3365
  %v3410 = vpack.c.b16 %v3370, %v3366
  %v3411 = vpack.c.b16 %v3371, %v3367
  %v3412 = vpack.c.b16 %v3372, %v3368
  %v3413 = vpack.c.b16 %v3377, %v3373
  %v3414 = vpack.c.b16 %v3378, %v3374
  %v3415 = vpack.c.b16 %v3379, %v3375
  %v3416 = vpack.c.b16 %v3380, %v3376
  %v3417 = vpack.c.b16 %v3385, %v3381
  %v3418 = vpack.c.b16 %v3386, %v3382
  %v3419 = vpack.c.b16 %v3387, %v3383
  %v3420 = vpack.c.b16 %v3388, %v3384
  %v3421 = vpack.c.b16 %v3393, %v3389
  %v3422 = vpack.c.b16 %v3394, %v3390
  %v3423 = vpack.c.b16 %v3395, %v3391
  %v3424 = vpack.c.b16 %v3396, %v3392
  %v3425 = vpack.c.b16 %v3397, %v3397
  %v3426 = vpack.c.b16 %v3398, %v3398
  %v3427 = vpack.c.b16 %v3399, %v3399
  %v3428 = vpack.c.b16 %v3400, %v3400
  %v3451 = vsel %vm852, %v3404, 0
  %v3454 = vsel %vm852, %v3408, 0
  %v3457 = vsel %vm852, %v3412, 0
  %v3460 = vsel %vm852, %v3416, 0
  %v3463 = vsel %vm852, %v3420, 0
  %v3466 = vsel %vm852, %v3424, 0
  %v3469 = vsel %vm852, %v3428, 0
  %3471 = vmatprep.subr.bf16.mxu0 0
  %3472 = vmatpush1.bf16.msra.mxu0 %v674
  %3473 = vmatprep.subr.bf16.mxu0 0
  %3474 = vmatpush1.bf16.msra.mxu0 %v675
  %3475 = vmatprep.subr.bf16.mxu0 0
  %3476 = vmatpush1.bf16.msra.mxu0 %v676
  %3477 = vmatprep.subr.bf16.mxu0 0
  %3478 = vmatpush1.bf16.msra.mxu0 %v677
  %3479 = vmatprep.subr.bf16.mxu0 0
  %3480 = vmatpush1.bf16.msra.mxu0 %v678
  %3481 = vmatprep.subr.bf16.mxu0 0
  %3482 = vmatpush1.bf16.msra.mxu0 %v679
  %3483 = vmatprep.subr.bf16.mxu0 0
  %3484 = vmatpush1.bf16.msra.mxu0 %v680
  %3485 = vmatprep.subr.bf16.mxu0 0
  %3486 = vmatpush1.bf16.msra.mxu0 %v681
  %3487 = vmatprep.subr.bf16.mxu0 0
  %3488 = vmatpush1.bf16.msra.mxu0 %v682
  %3489 = vmatprep.subr.bf16.mxu0 0
  %3490 = vmatpush1.bf16.msra.mxu0 %v683
  %3491 = vmatprep.subr.bf16.mxu0 0
  %3492 = vmatpush1.bf16.msra.mxu0 %v684
  %3493 = vmatprep.subr.bf16.mxu0 0
  %3494 = vmatpush1.bf16.msra.mxu0 %v685
  %3495 = vmatprep.subr.bf16.mxu0 0
  %3496 = vmatpush1.bf16.msra.mxu0 %v686
  %3497 = vmatprep.subr.bf16.mxu0 0
  %3498 = vmatpush1.bf16.msra.mxu0 %v687
  %3499 = vmatprep.subr.bf16.mxu0 0
  %3500 = vmatpush1.bf16.msra.mxu0 %v688
  %3501 = vmatprep.subr.bf16.mxu0 0
  %3502 = vmatpush1.bf16.msra.mxu0 %v689
  %3503 = vmatprep.mubr.bf16.mxu0 %v3402
  %3504 = vmatmul.mubr.bf16.gmra.mrb[0].mxu0 %v3401
  %v3505 = vpop.f32.mrb[0].mxu0
  %v3506 = vadd.f32 0.0, %v3505
  %v3507 = vpop.f32.mrb[0].mxu0
  %v3508 = vpop.f32.mrb[0].mxu0
  %v3509 = vadd.f32 0.0, %v3508
  %v3510 = vpop.f32.mrb[0].mxu0
  %3511 = vmatprep.mubr.bf16.mxu0 %v3406
  %3512 = vmatmul.mubr.bf16.gmra.mrb[0].mxu0 %v3405
  %v3513 = vpop.f32.mrb[0].mxu0
  %v3514 = vadd.f32 0.0, %v3513
  %v3515 = vpop.f32.mrb[0].mxu0
  %v3516 = vpop.f32.mrb[0].mxu0
  %v3517 = vadd.f32 0.0, %v3516
  %v3518 = vpop.f32.mrb[0].mxu0
  %3519 = vmatprep.mubr.bf16.mxu0 %v3410
  %3520 = vmatmul.mubr.bf16.gmra.mrb[0].mxu0 %v3409
  %v3521 = vpop.f32.mrb[0].mxu0
  %v3522 = vadd.f32 0.0, %v3521
  %v3523 = vpop.f32.mrb[0].mxu0
  %v3524 = vpop.f32.mrb[0].mxu0
  %v3525 = vadd.f32 0.0, %v3524
  %v3526 = vpop.f32.mrb[0].mxu0
  %3527 = vmatprep.mubr.bf16.mxu0 %v3414
  %3528 = vmatmul.mubr.bf16.gmra.mrb[0].mxu0 %v3413
  %v3529 = vpop.f32.mrb[0].mxu0
  %v3530 = vadd.f32 0.0, %v3529
  %v3531 = vpop.f32.mrb[0].mxu0
  %v3532 = vpop.f32.mrb[0].mxu0
  %v3533 = vadd.f32 0.0, %v3532
  %v3534 = vpop.f32.mrb[0].mxu0
  %3535 = vmatprep.mubr.bf16.mxu0 %v3418
  %3536 = vmatmul.mubr.bf16.gmra.mrb[0].mxu0 %v3417
  %v3537 = vpop.f32.mrb[0].mxu0
  %v3538 = vadd.f32 0.0, %v3537
  %v3539 = vpop.f32.mrb[0].mxu0
  %v3540 = vpop.f32.mrb[0].mxu0
  %v3541 = vadd.f32 0.0, %v3540
  %v3542 = vpop.f32.mrb[0].mxu0
  %3543 = vmatprep.mubr.bf16.mxu0 %v3422
  %3544 = vmatmul.mubr.bf16.gmra.mrb[0].mxu0 %v3421
  %v3545 = vpop.f32.mrb[0].mxu0
  %v3546 = vadd.f32 0.0, %v3545
  %v3547 = vpop.f32.mrb[0].mxu0
  %v3548 = vpop.f32.mrb[0].mxu0
  %v3549 = vadd.f32 0.0, %v3548
  %v3550 = vpop.f32.mrb[0].mxu0
  %3551 = vmatprep.mubr.bf16.mxu0 %v3426
  %3552 = vmatmul.mubr.bf16.gmra.mrb[0].mxu0 %v3425
  %v3553 = vpop.f32.mrb[0].mxu0
  %v3554 = vadd.f32 0.0, %v3553
  %v3555 = vpop.f32.mrb[0].mxu0
  %v3556 = vpop.f32.mrb[0].mxu0
  %v3557 = vpop.f32.mrb[0].mxu0
  %3558 = vdwg.mxu0
  %3559 = vmatprep.subr.bf16.mxu0 0
  %3560 = vmatpush1.bf16.msra.mxu0 %v690
  %3561 = vmatprep.subr.bf16.mxu0 0
  %3562 = vmatpush1.bf16.msra.mxu0 %v691
  %3563 = vmatprep.subr.bf16.mxu0 0
  %3564 = vmatpush1.bf16.msra.mxu0 %v692
  %3565 = vmatprep.subr.bf16.mxu0 0
  %3566 = vmatpush1.bf16.msra.mxu0 %v693
  %3567 = vmatprep.subr.bf16.mxu0 0
  %3568 = vmatpush1.bf16.msra.mxu0 %v694
  %3569 = vmatprep.subr.bf16.mxu0 0
  %3570 = vmatpush1.bf16.msra.mxu0 %v695
  %3571 = vmatprep.subr.bf16.mxu0 0
  %3572 = vmatpush1.bf16.msra.mxu0 %v696
  %3573 = vmatprep.subr.bf16.mxu0 0
  %3574 = vmatpush1.bf16.msra.mxu0 %v697
  %3575 = vmatprep.subr.bf16.mxu0 0
  %3576 = vmatpush1.bf16.msra.mxu0 %v876
  %3577 = vmatprep.subr.bf16.mxu0 0
  %3578 = vmatpush1.bf16.msra.mxu0 0
  %3579 = vmatprep.subr.bf16.mxu0 0
  %3580 = vmatpush1.bf16.msra.mxu0 0
  %3581 = vmatprep.subr.bf16.mxu0 0
  %3582 = vmatpush1.bf16.msra.mxu0 0
  %3583 = vmatprep.subr.bf16.mxu0 0
  %3584 = vmatpush1.bf16.msra.mxu0 0
  %3585 = vmatprep.subr.bf16.mxu0 0
  %3586 = vmatpush1.bf16.msra.mxu0 0
  %3587 = vmatprep.subr.bf16.mxu0 0
  %3588 = vmatpush1.bf16.msra.mxu0 0
  %3589 = vmatprep.subr.bf16.mxu0 0
  %3590 = vmatpush1.bf16.msra.mxu0 0
  %3591 = vmatprep.mubr.bf16.mxu0 %v3451
  %3592 = vmatmul.mubr.bf16.gmra.mrb[0].mxu0 %v3403
  %v3593 = vpop.f32.mrb[0].mxu0
  %v3594 = vadd.f32 %v3506, %v3593
  %v3595 = vpop.f32.mrb[0].mxu0
  %v3596 = vpop.f32.mrb[0].mxu0
  %v3597 = vadd.f32 %v3509, %v3596
  %v3598 = vpop.f32.mrb[0].mxu0
  %3599 = vmatprep.mubr.bf16.mxu0 %v3454
  %3600 = vmatmul.mubr.bf16.gmra.mrb[0].mxu0 %v3407
  %v3601 = vpop.f32.mrb[0].mxu0
  %v3602 = vadd.f32 %v3514, %v3601
  %v3603 = vpop.f32.mrb[0].mxu0
  %v3604 = vpop.f32.mrb[0].mxu0
  %v3605 = vadd.f32 %v3517, %v3604
  %v3606 = vpop.f32.mrb[0].mxu0
  %3607 = vmatprep.mubr.bf16.mxu0 %v3457
  %3608 = vmatmul.mubr.bf16.gmra.mrb[0].mxu0 %v3411
  %v3609 = vpop.f32.mrb[0].mxu0
  %v3610 = vadd.f32 %v3522, %v3609
  %v3611 = vpop.f32.mrb[0].mxu0
  %v3612 = vpop.f32.mrb[0].mxu0
  %v3613 = vadd.f32 %v3525, %v3612
  %v3614 = vpop.f32.mrb[0].mxu0
  %3615 = vmatprep.mubr.bf16.mxu0 %v3460
  %3616 = vmatmul.mubr.bf16.gmra.mrb[0].mxu0 %v3415
  %v3617 = vpop.f32.mrb[0].mxu0
  %v3618 = vadd.f32 %v3530, %v3617
  %v3619 = vpop.f32.mrb[0].mxu0
  %v3620 = vpop.f32.mrb[0].mxu0
  %v3621 = vadd.f32 %v3533, %v3620
  %v3622 = vpop.f32.mrb[0].mxu0
  %3623 = vmatprep.mubr.bf16.mxu0 %v3463
  %3624 = vmatmul.mubr.bf16.gmra.mrb[0].mxu0 %v3419
  %v3625 = vpop.f32.mrb[0].mxu0
  %v3626 = vadd.f32 %v3538, %v3625
  %v3627 = vpop.f32.mrb[0].mxu0
  %v3628 = vpop.f32.mrb[0].mxu0
  %v3629 = vadd.f32 %v3541, %v3628
  %v3630 = vpop.f32.mrb[0].mxu0
  %3631 = vmatprep.mubr.bf16.mxu0 %v3466
  %3632 = vmatmul.mubr.bf16.gmra.mrb[0].mxu0 %v3423
  %v3633 = vpop.f32.mrb[0].mxu0
  %v3634 = vadd.f32 %v3546, %v3633
  %v3635 = vpop.f32.mrb[0].mxu0
  %v3636 = vpop.f32.mrb[0].mxu0
  %v3637 = vadd.f32 %v3549, %v3636
  %v3638 = vpop.f32.mrb[0].mxu0
  %3639 = vmatprep.mubr.bf16.mxu0 %v3469
  %3640 = vmatmul.mubr.bf16.gmra.mrb[0].mxu0 %v3427
  %v3641 = vpop.f32.mrb[0].mxu0
  %v3642 = vadd.f32 %v3554, %v3641
  %v3643 = vpop.f32.mrb[0].mxu0
  %v3644 = vpop.f32.mrb[0].mxu0
  %v3645 = vpop.f32.mrb[0].mxu0
  %3646 = vdwg.mxu0
  %v3647 = vpack.c.bf16 %v3597, %v3594
  %v3648 = vpack.c.bf16 %v3605, %v3602
  %v3649 = vpack.c.bf16 %v3613, %v3610
  %v3650 = vpack.c.bf16 %v3621, %v3618
  %v3651 = vpack.c.bf16 %v3629, %v3626
  %v3652 = vpack.c.bf16 %v3637, %v3634
  %v3653 = vpack.c.bf16 %v3642, %v3642
  %s3654 = scalar_lea.vmem %s3, 320
  %v3655 = vld [vmem:[%s3654] sm:$0xf]
  %v3656 = vld [vmem:[%s3654 + $0x4] sm:$0xf]
  %v3657 = vld [vmem:[%s3654 + $0x8] sm:$0xf]
  %v3658 = vld [vmem:[%s3654 + $0xc] sm:$0xf]
  %v3659 = vld [vmem:[%s3654 + $0x10] sm:$0xf]
  %v3660 = vld [vmem:[%s3654 + $0x14] sm:$0xf]
  %v3661 = vld [vmem:[%s3654 + $0x18] sm:$0xf]
  %v3662 = vld [vmem:[%s3654 + $0x1c] sm:$0xf]
  %v3663 = vld [vmem:[%s3654 + $0x20] sm:$0xf]
  %v3664 = vld [vmem:[%s3654 + $0x24] sm:$0xf]
  %v3665 = vld [vmem:[%s3654 + $0x28] sm:$0xf]
  %v3666 = vld [vmem:[%s3654 + $0x2c] sm:$0xf]
  %v3667 = vld [vmem:[%s3654 + $0x30] sm:$0xf]
  %v3668 = vld [vmem:[%s3654 + $0x34] sm:$0xf]
  %v3669 = vld [vmem:[%s3654 + $0x38] sm:$0xf]
  %v3670 = vld [vmem:[%s3654 + $0x3c] sm:$0xf]
  %v3687 = vunpack.c.l.b16 %v3655
  %v3688 = vunpack.c.l.b16 %v3656
  %v3689 = vunpack.c.l.b16 %v3657
  %v3690 = vunpack.c.l.b16 %v3658
  %v3691 = vunpack.c.l.b16 %v3659
  %v3692 = vunpack.c.l.b16 %v3660
  %v3693 = vunpack.c.l.b16 %v3661
  %v3694 = vunpack.c.l.b16 %v3662
  %v3695 = vunpack.c.l.b16 %v3663
  %v3696 = vunpack.c.l.b16 %v3664
  %v3697 = vunpack.c.l.b16 %v3665
  %v3698 = vunpack.c.l.b16 %v3666
  %v3699 = vunpack.c.l.b16 %v3667
  %v3700 = vunpack.c.l.b16 %v3668
  %v3701 = vunpack.c.l.b16 %v3669
  %v3702 = vunpack.c.l.b16 %v3670
  %v3703 = vpack.c.b16 %v3688, %v3687
  %v3704 = vpack.c.b16 %v3690, %v3689
  %v3705 = vpack.c.b16 %v3692, %v3691
  %v3706 = vpack.c.b16 %v3694, %v3693
  %v3707 = vpack.c.b16 %v3696, %v3695
  %v3708 = vpack.c.b16 %v3698, %v3697
  %v3709 = vpack.c.b16 %v3700, %v3699
  %v3710 = vpack.c.b16 %v3702, %v3701
  %3719 = vmatprep.subr.bf16.mxu0 0
  %3720 = vmatpush1.bf16.msra.mxu0 %v3703
  %3721 = vmatprep.subr.bf16.mxu0 0
  %3722 = vmatpush1.bf16.msra.mxu0 %v3704
  %3723 = vmatprep.subr.bf16.mxu0 0
  %3724 = vmatpush1.bf16.msra.mxu0 %v3705
  %3725 = vmatprep.subr.bf16.mxu0 0
  %3726 = vmatpush1.bf16.msra.mxu0 %v3706
  %3727 = vmatprep.subr.bf16.mxu0 0
  %3728 = vmatpush1.bf16.msra.mxu0 %v3707
  %3729 = vmatprep.subr.bf16.mxu0 0
  %3730 = vmatpush1.bf16.msra.mxu0 %v3708
  %3731 = vmatprep.subr.bf16.mxu0 0
  %3732 = vmatpush1.bf16.msra.mxu0 %v3709
  %3733 = vmatprep.subr.bf16.mxu0 0
  %3734 = vmatpush1.bf16.msra.mxu0 %v3710
  %3735 = vmatprep.subr.bf16.mxu0 0
  %3736 = vmatpush1.bf16.msra.mxu0 0
  %3737 = vmatprep.subr.bf16.mxu0 0
  %3738 = vmatpush1.bf16.msra.mxu0 0
  %3739 = vmatprep.subr.bf16.mxu0 0
  %3740 = vmatpush1.bf16.msra.mxu0 0
  %3741 = vmatprep.subr.bf16.mxu0 0
  %3742 = vmatpush1.bf16.msra.mxu0 0
  %3743 = vmatprep.subr.bf16.mxu0 0
  %3744 = vmatpush1.bf16.msra.mxu0 0
  %3745 = vmatprep.subr.bf16.mxu0 0
  %3746 = vmatpush1.bf16.msra.mxu0 0
  %3747 = vmatprep.subr.bf16.mxu0 0
  %3748 = vmatpush1.bf16.msra.mxu0 0
  %3749 = vmatprep.subr.bf16.mxu0 0
  %3750 = vmatpush1.bf16.msra.mxu0 0
  %3751 = vmatprep.mubr.bf16.mxu0 0
  %3752 = vmatmul.mubr.bf16.gmra.mrb[0].mxu0 %v3647
  %v3753 = vpop.f32.mrb[0].mxu0
  %v3754 = vadd.f32 0.0, %v3753
  %v3755 = vpop.f32.mrb[0].mxu0
  %v3756 = vpop.f32.mrb[0].mxu0
  %v3757 = vadd.f32 0.0, %v3756
  %v3758 = vpop.f32.mrb[0].mxu0
  %3759 = vmatprep.mubr.bf16.mxu0 0
  %3760 = vmatmul.mubr.bf16.gmra.mrb[0].mxu0 %v3648
  %v3761 = vpop.f32.mrb[0].mxu0
  %v3762 = vadd.f32 0.0, %v3761
  %v3763 = vpop.f32.mrb[0].mxu0
  %v3764 = vpop.f32.mrb[0].mxu0
  %v3765 = vadd.f32 0.0, %v3764
  %v3766 = vpop.f32.mrb[0].mxu0
  %3767 = vmatprep.mubr.bf16.mxu0 0
  %3768 = vmatmul.mubr.bf16.gmra.mrb[0].mxu0 %v3649
  %v3769 = vpop.f32.mrb[0].mxu0
  %v3770 = vadd.f32 0.0, %v3769
  %v3771 = vpop.f32.mrb[0].mxu0
  %v3772 = vpop.f32.mrb[0].mxu0
  %v3773 = vadd.f32 0.0, %v3772
  %v3774 = vpop.f32.mrb[0].mxu0
  %3775 = vmatprep.mubr.bf16.mxu0 0
  %3776 = vmatmul.mubr.bf16.gmra.mrb[0].mxu0 %v3650
  %v3777 = vpop.f32.mrb[0].mxu0
  %v3778 = vadd.f32 0.0, %v3777
  %v3779 = vpop.f32.mrb[0].mxu0
  %v3780 = vpop.f32.mrb[0].mxu0
  %v3781 = vadd.f32 0.0, %v3780
  %v3782 = vpop.f32.mrb[0].mxu0
  %3783 = vmatprep.mubr.bf16.mxu0 0
  %3784 = vmatmul.mubr.bf16.gmra.mrb[0].mxu0 %v3651
  %v3785 = vpop.f32.mrb[0].mxu0
  %v3786 = vadd.f32 0.0, %v3785
  %v3787 = vpop.f32.mrb[0].mxu0
  %v3788 = vpop.f32.mrb[0].mxu0
  %v3789 = vadd.f32 0.0, %v3788
  %v3790 = vpop.f32.mrb[0].mxu0
  %3791 = vmatprep.mubr.bf16.mxu0 0
  %3792 = vmatmul.mubr.bf16.gmra.mrb[0].mxu0 %v3652
  %v3793 = vpop.f32.mrb[0].mxu0
  %v3794 = vadd.f32 0.0, %v3793
  %v3795 = vpop.f32.mrb[0].mxu0
  %v3796 = vpop.f32.mrb[0].mxu0
  %v3797 = vadd.f32 0.0, %v3796
  %v3798 = vpop.f32.mrb[0].mxu0
  %3799 = vmatprep.mubr.bf16.mxu0 0
  %3800 = vmatmul.mubr.bf16.gmra.mrb[0].mxu0 %v3653
  %v3801 = vpop.f32.mrb[0].mxu0
  %v3802 = vadd.f32 0.0, %v3801
  %v3803 = vpop.f32.mrb[0].mxu0
  %v3804 = vpop.f32.mrb[0].mxu0
  %v3805 = vpop.f32.mrb[0].mxu0
  %3806 = vdwg.mxu0
  %v3807 = vadd.f32 %v3283, %v3754
  %v3808 = vadd.f32 %v3284, %v3757
  %v3809 = vadd.f32 %v3285, %v3762
  %v3810 = vadd.f32 %v3286, %v3765
  %v3811 = vadd.f32 %v3287, %v3770
  %v3812 = vadd.f32 %v3288, %v3773
  %v3813 = vadd.f32 %v3289, %v3778
  %v3814 = vadd.f32 %v3290, %v3781
  %v3815 = vadd.f32 %v3291, %v3786
  %v3816 = vadd.f32 %v3292, %v3789
  %v3817 = vadd.f32 %v3293, %v3794
  %v3818 = vadd.f32 %v3294, %v3797
  %v3819 = vadd.f32 %v3295, %v3802
  %s3820 = scalar_lea.vmem %s2, 1248
  %v3821 = vld [vmem:[%s3820] sm:$0xff]
  %v3822 = vld [vmem:[%s3820 + $0x8] sm:$0xff]
  %v3823 = vld [vmem:[%s3820 + $0x10] sm:$0xff]
  %v3824 = vld [vmem:[%s3820 + $0x18] sm:$0xff]
  %v3825 = vld [vmem:[%s3820 + $0x20] sm:$0xff]
  %v3826 = vld [vmem:[%s3820 + $0x28] sm:$0xff]
  %v3827 = vld [vmem:[%s3820 + $0x30] sm:$0xff]
  %v3828 = vld [vmem:[%s3820 + $0x38] sm:$0xff]
  %v3829 = vld [vmem:[%s3820 + $0x40] sm:$0xff]
  %v3830 = vld [vmem:[%s3820 + $0x48] sm:$0xff]
  %v3831 = vld [vmem:[%s3820 + $0x50] sm:$0xff]
  %v3832 = vld [vmem:[%s3820 + $0x58] sm:$0xff]
  %v3833 = vld [vmem:[%s3820 + $0x60] sm:$0xff]
  %v3834 = vld [vmem:[%s3820 + $0x68] sm:$0xff]
  %v3835 = vld [vmem:[%s3820 + $0x70] sm:$0xff]
  %v3836 = vld [vmem:[%s3820 + $0x78] sm:$0xff]
  %v3837 = vld [vmem:[%s3820 + $0x80] sm:$0xff]
  %v3838 = vld [vmem:[%s3820 + $0x88] sm:$0xff]
  %v3839 = vld [vmem:[%s3820 + $0x90] sm:$0xff]
  %v3840 = vld [vmem:[%s3820 + $0x98] sm:$0xff]
  %v3841 = vld [vmem:[%s3820 + $0xa0] sm:$0xff]
  %v3842 = vld [vmem:[%s3820 + $0xa8] sm:$0xff]
  %v3843 = vld [vmem:[%s3820 + $0xb0] sm:$0xff]
  %v3844 = vld [vmem:[%s3820 + $0xb8] sm:$0xff]
  %v3845 = vld [vmem:[%s3820 + $0xc0] sm:$0x11]
  %v3846 = vld [vmem:[%s3820 + $0xc8] sm:$0x11]
  %v3873 = vunpack.c.l.b16 %v3821
  %v3874 = vunpack.c.h.b16 %v3821
  %v3875 = vunpack.c.l.b16 %v3822
  %v3876 = vunpack.c.h.b16 %v3822
  %v3877 = vunpack.c.l.b16 %v3823
  %v3878 = vunpack.c.h.b16 %v3823
  %v3879 = vunpack.c.l.b16 %v3824
  %v3880 = vunpack.c.h.b16 %v3824
  %v3881 = vunpack.c.l.b16 %v3825
  %v3882 = vunpack.c.h.b16 %v3825
  %v3883 = vunpack.c.l.b16 %v3826
  %v3884 = vunpack.c.h.b16 %v3826
  %v3885 = vunpack.c.l.b16 %v3827
  %v3886 = vunpack.c.h.b16 %v3827
  %v3887 = vunpack.c.l.b16 %v3828
  %v3888 = vunpack.c.h.b16 %v3828
  %v3889 = vunpack.c.l.b16 %v3829
  %v3890 = vunpack.c.h.b16 %v3829
  %v3891 = vunpack.c.l.b16 %v3830
  %v3892 = vunpack.c.h.b16 %v3830
  %v3893 = vunpack.c.l.b16 %v3831
  %v3894 = vunpack.c.h.b16 %v3831
  %v3895 = vunpack.c.l.b16 %v3832
  %v3896 = vunpack.c.h.b16 %v3832
  %v3897 = vunpack.c.l.b16 %v3833
  %v3898 = vunpack.c.h.b16 %v3833
  %v3899 = vunpack.c.l.b16 %v3834
  %v3900 = vunpack.c.h.b16 %v3834
  %v3901 = vunpack.c.l.b16 %v3835
  %v3902 = vunpack.c.h.b16 %v3835
  %v3903 = vunpack.c.l.b16 %v3836
  %v3904 = vunpack.c.h.b16 %v3836
  %v3905 = vunpack.c.l.b16 %v3837
  %v3906 = vunpack.c.h.b16 %v3837
  %v3907 = vunpack.c.l.b16 %v3838
  %v3908 = vunpack.c.h.b16 %v3838
  %v3909 = vunpack.c.l.b16 %v3839
  %v3910 = vunpack.c.h.b16 %v3839
  %v3911 = vunpack.c.l.b16 %v3840
  %v3912 = vunpack.c.h.b16 %v3840
  %v3913 = vunpack.c.l.b16 %v3841
  %v3914 = vunpack.c.h.b16 %v3841
  %v3915 = vunpack.c.l.b16 %v3842
  %v3916 = vunpack.c.h.b16 %v3842
  %v3917 = vunpack.c.l.b16 %v3843
  %v3918 = vunpack.c.h.b16 %v3843
  %v3919 = vunpack.c.l.b16 %v3844
  %v3920 = vunpack.c.h.b16 %v3844
  %v3921 = vunpack.c.l.b16 %v3845
  %v3922 = vunpack.c.h.b16 %v3845
  %v3923 = vunpack.c.l.b16 %v3846
  %v3924 = vunpack.c.h.b16 %v3846
  %v3925 = vpack.c.b16 %v3877, %v3873
  %v3926 = vpack.c.b16 %v3878, %v3874
  %v3927 = vpack.c.b16 %v3879, %v3875
  %v3928 = vpack.c.b16 %v3880, %v3876
  %v3929 = vpack.c.b16 %v3885, %v3881
  %v3930 = vpack.c.b16 %v3886, %v3882
  %v3931 = vpack.c.b16 %v3887, %v3883
  %v3932 = vpack.c.b16 %v3888, %v3884
  %v3933 = vpack.c.b16 %v3893, %v3889
  %v3934 = vpack.c.b16 %v3894, %v3890
  %v3935 = vpack.c.b16 %v3895, %v3891
  %v3936 = vpack.c.b16 %v3896, %v3892
  %v3937 = vpack.c.b16 %v3901, %v3897
  %v3938 = vpack.c.b16 %v3902, %v3898
  %v3939 = vpack.c.b16 %v3903, %v3899
  %v3940 = vpack.c.b16 %v3904, %v3900
  %v3941 = vpack.c.b16 %v3909, %v3905
  %v3942 = vpack.c.b16 %v3910, %v3906
  %v3943 = vpack.c.b16 %v3911, %v3907
  %v3944 = vpack.c.b16 %v3912, %v3908
  %v3945 = vpack.c.b16 %v3917, %v3913
  %v3946 = vpack.c.b16 %v3918, %v3914
  %v3947 = vpack.c.b16 %v3919, %v3915
  %v3948 = vpack.c.b16 %v3920, %v3916
  %v3949 = vpack.c.b16 %v3921, %v3921
  %v3950 = vpack.c.b16 %v3922, %v3922
  %v3951 = vpack.c.b16 %v3923, %v3923
  %v3952 = vpack.c.b16 %v3924, %v3924
  %v3975 = vsel %vm852, %v3928, 0
  %v3978 = vsel %vm852, %v3932, 0
  %v3981 = vsel %vm852, %v3936, 0
  %v3984 = vsel %vm852, %v3940, 0
  %v3987 = vsel %vm852, %v3944, 0
  %v3990 = vsel %vm852, %v3948, 0
  %v3993 = vsel %vm852, %v3952, 0
  %3995 = vmatprep.subr.bf16.mxu0 0
  %3996 = vmatpush1.bf16.msra.mxu0 %v674
  %3997 = vmatprep.subr.bf16.mxu0 0
  %3998 = vmatpush1.bf16.msra.mxu0 %v675
  %3999 = vmatprep.subr.bf16.mxu0 0
  %4000 = vmatpush1.bf16.msra.mxu0 %v676
  %4001 = vmatprep.subr.bf16.mxu0 0
  %4002 = vmatpush1.bf16.msra.mxu0 %v677
  %4003 = vmatprep.subr.bf16.mxu0 0
  %4004 = vmatpush1.bf16.msra.mxu0 %v678
  %4005 = vmatprep.subr.bf16.mxu0 0
  %4006 = vmatpush1.bf16.msra.mxu0 %v679
  %4007 = vmatprep.subr.bf16.mxu0 0
  %4008 = vmatpush1.bf16.msra.mxu0 %v680
  %4009 = vmatprep.subr.bf16.mxu0 0
  %4010 = vmatpush1.bf16.msra.mxu0 %v681
  %4011 = vmatprep.subr.bf16.mxu0 0
  %4012 = vmatpush1.bf16.msra.mxu0 %v682
  %4013 = vmatprep.subr.bf16.mxu0 0
  %4014 = vmatpush1.bf16.msra.mxu0 %v683
  %4015 = vmatprep.subr.bf16.mxu0 0
  %4016 = vmatpush1.bf16.msra.mxu0 %v684
  %4017 = vmatprep.subr.bf16.mxu0 0
  %4018 = vmatpush1.bf16.msra.mxu0 %v685
  %4019 = vmatprep.subr.bf16.mxu0 0
  %4020 = vmatpush1.bf16.msra.mxu0 %v686
  %4021 = vmatprep.subr.bf16.mxu0 0
  %4022 = vmatpush1.bf16.msra.mxu0 %v687
  %4023 = vmatprep.subr.bf16.mxu0 0
  %4024 = vmatpush1.bf16.msra.mxu0 %v688
  %4025 = vmatprep.subr.bf16.mxu0 0
  %4026 = vmatpush1.bf16.msra.mxu0 %v689
  %4027 = vmatprep.mubr.bf16.mxu0 %v3926
  %4028 = vmatmul.mubr.bf16.gmra.mrb[0].mxu0 %v3925
  %v4029 = vpop.f32.mrb[0].mxu0
  %v4030 = vadd.f32 0.0, %v4029
  %v4031 = vpop.f32.mrb[0].mxu0
  %v4032 = vpop.f32.mrb[0].mxu0
  %v4033 = vadd.f32 0.0, %v4032
  %v4034 = vpop.f32.mrb[0].mxu0
  %4035 = vmatprep.mubr.bf16.mxu0 %v3930
  %4036 = vmatmul.mubr.bf16.gmra.mrb[0].mxu0 %v3929
  %v4037 = vpop.f32.mrb[0].mxu0
  %v4038 = vadd.f32 0.0, %v4037
  %v4039 = vpop.f32.mrb[0].mxu0
  %v4040 = vpop.f32.mrb[0].mxu0
  %v4041 = vadd.f32 0.0, %v4040
  %v4042 = vpop.f32.mrb[0].mxu0
  %4043 = vmatprep.mubr.bf16.mxu0 %v3934
  %4044 = vmatmul.mubr.bf16.gmra.mrb[0].mxu0 %v3933
  %v4045 = vpop.f32.mrb[0].mxu0
  %v4046 = vadd.f32 0.0, %v4045
  %v4047 = vpop.f32.mrb[0].mxu0
  %v4048 = vpop.f32.mrb[0].mxu0
  %v4049 = vadd.f32 0.0, %v4048
  %v4050 = vpop.f32.mrb[0].mxu0
  %4051 = vmatprep.mubr.bf16.mxu0 %v3938
  %4052 = vmatmul.mubr.bf16.gmra.mrb[0].mxu0 %v3937
  %v4053 = vpop.f32.mrb[0].mxu0
  %v4054 = vadd.f32 0.0, %v4053
  %v4055 = vpop.f32.mrb[0].mxu0
  %v4056 = vpop.f32.mrb[0].mxu0
  %v4057 = vadd.f32 0.0, %v4056
  %v4058 = vpop.f32.mrb[0].mxu0
  %4059 = vmatprep.mubr.bf16.mxu0 %v3942
  %4060 = vmatmul.mubr.bf16.gmra.mrb[0].mxu0 %v3941
  %v4061 = vpop.f32.mrb[0].mxu0
  %v4062 = vadd.f32 0.0, %v4061
  %v4063 = vpop.f32.mrb[0].mxu0
  %v4064 = vpop.f32.mrb[0].mxu0
  %v4065 = vadd.f32 0.0, %v4064
  %v4066 = vpop.f32.mrb[0].mxu0
  %4067 = vmatprep.mubr.bf16.mxu0 %v3946
  %4068 = vmatmul.mubr.bf16.gmra.mrb[0].mxu0 %v3945
  %v4069 = vpop.f32.mrb[0].mxu0
  %v4070 = vadd.f32 0.0, %v4069
  %v4071 = vpop.f32.mrb[0].mxu0
  %v4072 = vpop.f32.mrb[0].mxu0
  %v4073 = vadd.f32 0.0, %v4072
  %v4074 = vpop.f32.mrb[0].mxu0
  %4075 = vmatprep.mubr.bf16.mxu0 %v3950
  %4076 = vmatmul.mubr.bf16.gmra.mrb[0].mxu0 %v3949
  %v4077 = vpop.f32.mrb[0].mxu0
  %v4078 = vadd.f32 0.0, %v4077
  %v4079 = vpop.f32.mrb[0].mxu0
  %v4080 = vpop.f32.mrb[0].mxu0
  %v4081 = vpop.f32.mrb[0].mxu0
  %4082 = vdwg.mxu0
  %4083 = vmatprep.subr.bf16.mxu0 0
  %4084 = vmatpush1.bf16.msra.mxu0 %v690
  %4085 = vmatprep.subr.bf16.mxu0 0
  %4086 = vmatpush1.bf16.msra.mxu0 %v691
  %4087 = vmatprep.subr.bf16.mxu0 0
  %4088 = vmatpush1.bf16.msra.mxu0 %v692
  %4089 = vmatprep.subr.bf16.mxu0 0
  %4090 = vmatpush1.bf16.msra.mxu0 %v693
  %4091 = vmatprep.subr.bf16.mxu0 0
  %4092 = vmatpush1.bf16.msra.mxu0 %v694
  %4093 = vmatprep.subr.bf16.mxu0 0
  %4094 = vmatpush1.bf16.msra.mxu0 %v695
  %4095 = vmatprep.subr.bf16.mxu0 0
  %4096 = vmatpush1.bf16.msra.mxu0 %v696
  %4097 = vmatprep.subr.bf16.mxu0 0
  %4098 = vmatpush1.bf16.msra.mxu0 %v697
  %4099 = vmatprep.subr.bf16.mxu0 0
  %4100 = vmatpush1.bf16.msra.mxu0 %v876
  %4101 = vmatprep.subr.bf16.mxu0 0
  %4102 = vmatpush1.bf16.msra.mxu0 0
  %4103 = vmatprep.subr.bf16.mxu0 0
  %4104 = vmatpush1.bf16.msra.mxu0 0
  %4105 = vmatprep.subr.bf16.mxu0 0
  %4106 = vmatpush1.bf16.msra.mxu0 0
  %4107 = vmatprep.subr.bf16.mxu0 0
  %4108 = vmatpush1.bf16.msra.mxu0 0
  %4109 = vmatprep.subr.bf16.mxu0 0
  %4110 = vmatpush1.bf16.msra.mxu0 0
  %4111 = vmatprep.subr.bf16.mxu0 0
  %4112 = vmatpush1.bf16.msra.mxu0 0
  %4113 = vmatprep.subr.bf16.mxu0 0
  %4114 = vmatpush1.bf16.msra.mxu0 0
  %4115 = vmatprep.mubr.bf16.mxu0 %v3975
  %4116 = vmatmul.mubr.bf16.gmra.mrb[0].mxu0 %v3927
  %v4117 = vpop.f32.mrb[0].mxu0
  %v4118 = vadd.f32 %v4030, %v4117
  %v4119 = vpop.f32.mrb[0].mxu0
  %v4120 = vpop.f32.mrb[0].mxu0
  %v4121 = vadd.f32 %v4033, %v4120
  %v4122 = vpop.f32.mrb[0].mxu0
  %4123 = vmatprep.mubr.bf16.mxu0 %v3978
  %4124 = vmatmul.mubr.bf16.gmra.mrb[0].mxu0 %v3931
  %v4125 = vpop.f32.mrb[0].mxu0
  %v4126 = vadd.f32 %v4038, %v4125
  %v4127 = vpop.f32.mrb[0].mxu0
  %v4128 = vpop.f32.mrb[0].mxu0
  %v4129 = vadd.f32 %v4041, %v4128
  %v4130 = vpop.f32.mrb[0].mxu0
  %4131 = vmatprep.mubr.bf16.mxu0 %v3981
  %4132 = vmatmul.mubr.bf16.gmra.mrb[0].mxu0 %v3935
  %v4133 = vpop.f32.mrb[0].mxu0
  %v4134 = vadd.f32 %v4046, %v4133
  %v4135 = vpop.f32.mrb[0].mxu0
  %v4136 = vpop.f32.mrb[0].mxu0
  %v4137 = vadd.f32 %v4049, %v4136
  %v4138 = vpop.f32.mrb[0].mxu0
  %4139 = vmatprep.mubr.bf16.mxu0 %v3984
  %4140 = vmatmul.mubr.bf16.gmra.mrb[0].mxu0 %v3939
  %v4141 = vpop.f32.mrb[0].mxu0
  %v4142 = vadd.f32 %v4054, %v4141
  %v4143 = vpop.f32.mrb[0].mxu0
  %v4144 = vpop.f32.mrb[0].mxu0
  %v4145 = vadd.f32 %v4057, %v4144
  %v4146 = vpop.f32.mrb[0].mxu0
  %4147 = vmatprep.mubr.bf16.mxu0 %v3987
  %4148 = vmatmul.mubr.bf16.gmra.mrb[0].mxu0 %v3943
  %v4149 = vpop.f32.mrb[0].mxu0
  %v4150 = vadd.f32 %v4062, %v4149
  %v4151 = vpop.f32.mrb[0].mxu0
  %v4152 = vpop.f32.mrb[0].mxu0
  %v4153 = vadd.f32 %v4065, %v4152
  %v4154 = vpop.f32.mrb[0].mxu0
  %4155 = vmatprep.mubr.bf16.mxu0 %v3990
  %4156 = vmatmul.mubr.bf16.gmra.mrb[0].mxu0 %v3947
  %v4157 = vpop.f32.mrb[0].mxu0
  %v4158 = vadd.f32 %v4070, %v4157
  %v4159 = vpop.f32.mrb[0].mxu0
  %v4160 = vpop.f32.mrb[0].mxu0
  %v4161 = vadd.f32 %v4073, %v4160
  %v4162 = vpop.f32.mrb[0].mxu0
  %4163 = vmatprep.mubr.bf16.mxu0 %v3993
  %4164 = vmatmul.mubr.bf16.gmra.mrb[0].mxu0 %v3951
  %v4165 = vpop.f32.mrb[0].mxu0
  %v4166 = vadd.f32 %v4078, %v4165
  %v4167 = vpop.f32.mrb[0].mxu0
  %v4168 = vpop.f32.mrb[0].mxu0
  %v4169 = vpop.f32.mrb[0].mxu0
  %4170 = vdwg.mxu0
  %v4171 = vpack.c.bf16 %v4121, %v4118
  %v4172 = vpack.c.bf16 %v4129, %v4126
  %v4173 = vpack.c.bf16 %v4137, %v4134
  %v4174 = vpack.c.bf16 %v4145, %v4142
  %v4175 = vpack.c.bf16 %v4153, %v4150
  %v4176 = vpack.c.bf16 %v4161, %v4158
  %v4177 = vpack.c.bf16 %v4166, %v4166
  %s4178 = scalar_lea.vmem %s3, 384
  %v4179 = vld [vmem:[%s4178] sm:$0xf]
  %v4180 = vld [vmem:[%s4178 + $0x4] sm:$0xf]
  %v4181 = vld [vmem:[%s4178 + $0x8] sm:$0xf]
  %v4182 = vld [vmem:[%s4178 + $0xc] sm:$0xf]
  %v4183 = vld [vmem:[%s4178 + $0x10] sm:$0xf]
  %v4184 = vld [vmem:[%s4178 + $0x14] sm:$0xf]
  %v4185 = vld [vmem:[%s4178 + $0x18] sm:$0xf]
  %v4186 = vld [vmem:[%s4178 + $0x1c] sm:$0xf]
  %v4187 = vld [vmem:[%s4178 + $0x20] sm:$0xf]
  %v4188 = vld [vmem:[%s4178 + $0x24] sm:$0xf]
  %v4189 = vld [vmem:[%s4178 + $0x28] sm:$0xf]
  %v4190 = vld [vmem:[%s4178 + $0x2c] sm:$0xf]
  %v4191 = vld [vmem:[%s4178 + $0x30] sm:$0xf]
  %v4192 = vld [vmem:[%s4178 + $0x34] sm:$0xf]
  %v4193 = vld [vmem:[%s4178 + $0x38] sm:$0xf]
  %v4194 = vld [vmem:[%s4178 + $0x3c] sm:$0xf]
  %v4211 = vunpack.c.l.b16 %v4179
  %v4212 = vunpack.c.l.b16 %v4180
  %v4213 = vunpack.c.l.b16 %v4181
  %v4214 = vunpack.c.l.b16 %v4182
  %v4215 = vunpack.c.l.b16 %v4183
  %v4216 = vunpack.c.l.b16 %v4184
  %v4217 = vunpack.c.l.b16 %v4185
  %v4218 = vunpack.c.l.b16 %v4186
  %v4219 = vunpack.c.l.b16 %v4187
  %v4220 = vunpack.c.l.b16 %v4188
  %v4221 = vunpack.c.l.b16 %v4189
  %v4222 = vunpack.c.l.b16 %v4190
  %v4223 = vunpack.c.l.b16 %v4191
  %v4224 = vunpack.c.l.b16 %v4192
  %v4225 = vunpack.c.l.b16 %v4193
  %v4226 = vunpack.c.l.b16 %v4194
  %v4227 = vpack.c.b16 %v4212, %v4211
  %v4228 = vpack.c.b16 %v4214, %v4213
  %v4229 = vpack.c.b16 %v4216, %v4215
  %v4230 = vpack.c.b16 %v4218, %v4217
  %v4231 = vpack.c.b16 %v4220, %v4219
  %v4232 = vpack.c.b16 %v4222, %v4221
  %v4233 = vpack.c.b16 %v4224, %v4223
  %v4234 = vpack.c.b16 %v4226, %v4225
  %4243 = vmatprep.subr.bf16.mxu0 0
  %4244 = vmatpush1.bf16.msra.mxu0 %v4227
  %4245 = vmatprep.subr.bf16.mxu0 0
  %4246 = vmatpush1.bf16.msra.mxu0 %v4228
  %4247 = vmatprep.subr.bf16.mxu0 0
  %4248 = vmatpush1.bf16.msra.mxu0 %v4229
  %4249 = vmatprep.subr.bf16.mxu0 0
  %4250 = vmatpush1.bf16.msra.mxu0 %v4230
  %4251 = vmatprep.subr.bf16.mxu0 0
  %4252 = vmatpush1.bf16.msra.mxu0 %v4231
  %4253 = vmatprep.subr.bf16.mxu0 0
  %4254 = vmatpush1.bf16.msra.mxu0 %v4232
  %4255 = vmatprep.subr.bf16.mxu0 0
  %4256 = vmatpush1.bf16.msra.mxu0 %v4233
  %4257 = vmatprep.subr.bf16.mxu0 0
  %4258 = vmatpush1.bf16.msra.mxu0 %v4234
  %4259 = vmatprep.subr.bf16.mxu0 0
  %4260 = vmatpush1.bf16.msra.mxu0 0
  %4261 = vmatprep.subr.bf16.mxu0 0
  %4262 = vmatpush1.bf16.msra.mxu0 0
  %4263 = vmatprep.subr.bf16.mxu0 0
  %4264 = vmatpush1.bf16.msra.mxu0 0
  %4265 = vmatprep.subr.bf16.mxu0 0
  %4266 = vmatpush1.bf16.msra.mxu0 0
  %4267 = vmatprep.subr.bf16.mxu0 0
  %4268 = vmatpush1.bf16.msra.mxu0 0
  %4269 = vmatprep.subr.bf16.mxu0 0
  %4270 = vmatpush1.bf16.msra.mxu0 0
  %4271 = vmatprep.subr.bf16.mxu0 0
  %4272 = vmatpush1.bf16.msra.mxu0 0
  %4273 = vmatprep.subr.bf16.mxu0 0
  %4274 = vmatpush1.bf16.msra.mxu0 0
  %4275 = vmatprep.mubr.bf16.mxu0 0
  %4276 = vmatmul.mubr.bf16.gmra.mrb[0].mxu0 %v4171
  %v4277 = vpop.f32.mrb[0].mxu0
  %v4278 = vadd.f32 0.0, %v4277
  %v4279 = vpop.f32.mrb[0].mxu0
  %v4280 = vpop.f32.mrb[0].mxu0
  %v4281 = vadd.f32 0.0, %v4280
  %v4282 = vpop.f32.mrb[0].mxu0
  %4283 = vmatprep.mubr.bf16.mxu0 0
  %4284 = vmatmul.mubr.bf16.gmra.mrb[0].mxu0 %v4172
  %v4285 = vpop.f32.mrb[0].mxu0
  %v4286 = vadd.f32 0.0, %v4285
  %v4287 = vpop.f32.mrb[0].mxu0
  %v4288 = vpop.f32.mrb[0].mxu0
  %v4289 = vadd.f32 0.0, %v4288
  %v4290 = vpop.f32.mrb[0].mxu0
  %4291 = vmatprep.mubr.bf16.mxu0 0
  %4292 = vmatmul.mubr.bf16.gmra.mrb[0].mxu0 %v4173
  %v4293 = vpop.f32.mrb[0].mxu0
  %v4294 = vadd.f32 0.0, %v4293
  %v4295 = vpop.f32.mrb[0].mxu0
  %v4296 = vpop.f32.mrb[0].mxu0
  %v4297 = vadd.f32 0.0, %v4296
  %v4298 = vpop.f32.mrb[0].mxu0
  %4299 = vmatprep.mubr.bf16.mxu0 0
  %4300 = vmatmul.mubr.bf16.gmra.mrb[0].mxu0 %v4174
  %v4301 = vpop.f32.mrb[0].mxu0
  %v4302 = vadd.f32 0.0, %v4301
  %v4303 = vpop.f32.mrb[0].mxu0
  %v4304 = vpop.f32.mrb[0].mxu0
  %v4305 = vadd.f32 0.0, %v4304
  %v4306 = vpop.f32.mrb[0].mxu0
  %4307 = vmatprep.mubr.bf16.mxu0 0
  %4308 = vmatmul.mubr.bf16.gmra.mrb[0].mxu0 %v4175
  %v4309 = vpop.f32.mrb[0].mxu0
  %v4310 = vadd.f32 0.0, %v4309
  %v4311 = vpop.f32.mrb[0].mxu0
  %v4312 = vpop.f32.mrb[0].mxu0
  %v4313 = vadd.f32 0.0, %v4312
  %v4314 = vpop.f32.mrb[0].mxu0
  %4315 = vmatprep.mubr.bf16.mxu0 0
  %4316 = vmatmul.mubr.bf16.gmra.mrb[0].mxu0 %v4176
  %v4317 = vpop.f32.mrb[0].mxu0
  %v4318 = vadd.f32 0.0, %v4317
  %v4319 = vpop.f32.mrb[0].mxu0
  %v4320 = vpop.f32.mrb[0].mxu0
  %v4321 = vadd.f32 0.0, %v4320
  %v4322 = vpop.f32.mrb[0].mxu0
  %4323 = vmatprep.mubr.bf16.mxu0 0
  %4324 = vmatmul.mubr.bf16.gmra.mrb[0].mxu0 %v4177
  %v4325 = vpop.f32.mrb[0].mxu0
  %v4326 = vadd.f32 0.0, %v4325
  %v4327 = vpop.f32.mrb[0].mxu0
  %v4328 = vpop.f32.mrb[0].mxu0
  %v4329 = vpop.f32.mrb[0].mxu0
  %4330 = vdwg.mxu0
  %v4331 = vadd.f32 %v3807, %v4278
  %v4332 = vadd.f32 %v3808, %v4281
  %v4333 = vadd.f32 %v3809, %v4286
  %v4334 = vadd.f32 %v3810, %v4289
  %v4335 = vadd.f32 %v3811, %v4294
  %v4336 = vadd.f32 %v3812, %v4297
  %v4337 = vadd.f32 %v3813, %v4302
  %v4338 = vadd.f32 %v3814, %v4305
  %v4339 = vadd.f32 %v3815, %v4310
  %v4340 = vadd.f32 %v3816, %v4313
  %v4341 = vadd.f32 %v3817, %v4318
  %v4342 = vadd.f32 %v3818, %v4321
  %v4343 = vadd.f32 %v3819, %v4326
  %s4344 = scalar_lea.vmem %s2, 1456
  %v4345 = vld [vmem:[%s4344] sm:$0xff]
  %v4346 = vld [vmem:[%s4344 + $0x8] sm:$0xff]
  %v4347 = vld [vmem:[%s4344 + $0x10] sm:$0xff]
  %v4348 = vld [vmem:[%s4344 + $0x18] sm:$0xff]
  %v4349 = vld [vmem:[%s4344 + $0x20] sm:$0xff]
  %v4350 = vld [vmem:[%s4344 + $0x28] sm:$0xff]
  %v4351 = vld [vmem:[%s4344 + $0x30] sm:$0xff]
  %v4352 = vld [vmem:[%s4344 + $0x38] sm:$0xff]
  %v4353 = vld [vmem:[%s4344 + $0x40] sm:$0xff]
  %v4354 = vld [vmem:[%s4344 + $0x48] sm:$0xff]
  %v4355 = vld [vmem:[%s4344 + $0x50] sm:$0xff]
  %v4356 = vld [vmem:[%s4344 + $0x58] sm:$0xff]
  %v4357 = vld [vmem:[%s4344 + $0x60] sm:$0xff]
  %v4358 = vld [vmem:[%s4344 + $0x68] sm:$0xff]
  %v4359 = vld [vmem:[%s4344 + $0x70] sm:$0xff]
  %v4360 = vld [vmem:[%s4344 + $0x78] sm:$0xff]
  %v4361 = vld [vmem:[%s4344 + $0x80] sm:$0xff]
  %v4362 = vld [vmem:[%s4344 + $0x88] sm:$0xff]
  %v4363 = vld [vmem:[%s4344 + $0x90] sm:$0xff]
  %v4364 = vld [vmem:[%s4344 + $0x98] sm:$0xff]
  %v4365 = vld [vmem:[%s4344 + $0xa0] sm:$0xff]
  %v4366 = vld [vmem:[%s4344 + $0xa8] sm:$0xff]
  %v4367 = vld [vmem:[%s4344 + $0xb0] sm:$0xff]
  %v4368 = vld [vmem:[%s4344 + $0xb8] sm:$0xff]
  %v4369 = vld [vmem:[%s4344 + $0xc0] sm:$0x11]
  %v4370 = vld [vmem:[%s4344 + $0xc8] sm:$0x11]
  %v4397 = vunpack.c.l.b16 %v4345
  %v4398 = vunpack.c.h.b16 %v4345
  %v4399 = vunpack.c.l.b16 %v4346
  %v4400 = vunpack.c.h.b16 %v4346
  %v4401 = vunpack.c.l.b16 %v4347
  %v4402 = vunpack.c.h.b16 %v4347
  %v4403 = vunpack.c.l.b16 %v4348
  %v4404 = vunpack.c.h.b16 %v4348
  %v4405 = vunpack.c.l.b16 %v4349
  %v4406 = vunpack.c.h.b16 %v4349
  %v4407 = vunpack.c.l.b16 %v4350
  %v4408 = vunpack.c.h.b16 %v4350
  %v4409 = vunpack.c.l.b16 %v4351
  %v4410 = vunpack.c.h.b16 %v4351
  %v4411 = vunpack.c.l.b16 %v4352
  %v4412 = vunpack.c.h.b16 %v4352
  %v4413 = vunpack.c.l.b16 %v4353
  %v4414 = vunpack.c.h.b16 %v4353
  %v4415 = vunpack.c.l.b16 %v4354
  %v4416 = vunpack.c.h.b16 %v4354
  %v4417 = vunpack.c.l.b16 %v4355
  %v4418 = vunpack.c.h.b16 %v4355
  %v4419 = vunpack.c.l.b16 %v4356
  %v4420 = vunpack.c.h.b16 %v4356
  %v4421 = vunpack.c.l.b16 %v4357
  %v4422 = vunpack.c.h.b16 %v4357
  %v4423 = vunpack.c.l.b16 %v4358
  %v4424 = vunpack.c.h.b16 %v4358
  %v4425 = vunpack.c.l.b16 %v4359
  %v4426 = vunpack.c.h.b16 %v4359
  %v4427 = vunpack.c.l.b16 %v4360
  %v4428 = vunpack.c.h.b16 %v4360
  %v4429 = vunpack.c.l.b16 %v4361
  %v4430 = vunpack.c.h.b16 %v4361
  %v4431 = vunpack.c.l.b16 %v4362
  %v4432 = vunpack.c.h.b16 %v4362
  %v4433 = vunpack.c.l.b16 %v4363
  %v4434 = vunpack.c.h.b16 %v4363
  %v4435 = vunpack.c.l.b16 %v4364
  %v4436 = vunpack.c.h.b16 %v4364
  %v4437 = vunpack.c.l.b16 %v4365
  %v4438 = vunpack.c.h.b16 %v4365
  %v4439 = vunpack.c.l.b16 %v4366
  %v4440 = vunpack.c.h.b16 %v4366
  %v4441 = vunpack.c.l.b16 %v4367
  %v4442 = vunpack.c.h.b16 %v4367
  %v4443 = vunpack.c.l.b16 %v4368
  %v4444 = vunpack.c.h.b16 %v4368
  %v4445 = vunpack.c.l.b16 %v4369
  %v4446 = vunpack.c.h.b16 %v4369
  %v4447 = vunpack.c.l.b16 %v4370
  %v4448 = vunpack.c.h.b16 %v4370
  %v4449 = vpack.c.b16 %v4401, %v4397
  %v4450 = vpack.c.b16 %v4402, %v4398
  %v4451 = vpack.c.b16 %v4403, %v4399
  %v4452 = vpack.c.b16 %v4404, %v4400
  %v4453 = vpack.c.b16 %v4409, %v4405
  %v4454 = vpack.c.b16 %v4410, %v4406
  %v4455 = vpack.c.b16 %v4411, %v4407
  %v4456 = vpack.c.b16 %v4412, %v4408
  %v4457 = vpack.c.b16 %v4417, %v4413
  %v4458 = vpack.c.b16 %v4418, %v4414
  %v4459 = vpack.c.b16 %v4419, %v4415
  %v4460 = vpack.c.b16 %v4420, %v4416
  %v4461 = vpack.c.b16 %v4425, %v4421
  %v4462 = vpack.c.b16 %v4426, %v4422
  %v4463 = vpack.c.b16 %v4427, %v4423
  %v4464 = vpack.c.b16 %v4428, %v4424
  %v4465 = vpack.c.b16 %v4433, %v4429
  %v4466 = vpack.c.b16 %v4434, %v4430
  %v4467 = vpack.c.b16 %v4435, %v4431
  %v4468 = vpack.c.b16 %v4436, %v4432
  %v4469 = vpack.c.b16 %v4441, %v4437
  %v4470 = vpack.c.b16 %v4442, %v4438
  %v4471 = vpack.c.b16 %v4443, %v4439
  %v4472 = vpack.c.b16 %v4444, %v4440
  %v4473 = vpack.c.b16 %v4445, %v4445
  %v4474 = vpack.c.b16 %v4446, %v4446
  %v4475 = vpack.c.b16 %v4447, %v4447
  %v4476 = vpack.c.b16 %v4448, %v4448
  %v4499 = vsel %vm852, %v4452, 0
  %v4502 = vsel %vm852, %v4456, 0
  %v4505 = vsel %vm852, %v4460, 0
  %v4508 = vsel %vm852, %v4464, 0
  %v4511 = vsel %vm852, %v4468, 0
  %v4514 = vsel %vm852, %v4472, 0
  %v4517 = vsel %vm852, %v4476, 0
  %4519 = vmatprep.subr.bf16.mxu0 0
  %4520 = vmatpush1.bf16.msra.mxu0 %v674
  %4521 = vmatprep.subr.bf16.mxu0 0
  %4522 = vmatpush1.bf16.msra.mxu0 %v675
  %4523 = vmatprep.subr.bf16.mxu0 0
  %4524 = vmatpush1.bf16.msra.mxu0 %v676
  %4525 = vmatprep.subr.bf16.mxu0 0
  %4526 = vmatpush1.bf16.msra.mxu0 %v677
  %4527 = vmatprep.subr.bf16.mxu0 0
  %4528 = vmatpush1.bf16.msra.mxu0 %v678
  %4529 = vmatprep.subr.bf16.mxu0 0
  %4530 = vmatpush1.bf16.msra.mxu0 %v679
  %4531 = vmatprep.subr.bf16.mxu0 0
  %4532 = vmatpush1.bf16.msra.mxu0 %v680
  %4533 = vmatprep.subr.bf16.mxu0 0
  %4534 = vmatpush1.bf16.msra.mxu0 %v681
  %4535 = vmatprep.subr.bf16.mxu0 0
  %4536 = vmatpush1.bf16.msra.mxu0 %v682
  %4537 = vmatprep.subr.bf16.mxu0 0
  %4538 = vmatpush1.bf16.msra.mxu0 %v683
  %4539 = vmatprep.subr.bf16.mxu0 0
  %4540 = vmatpush1.bf16.msra.mxu0 %v684
  %4541 = vmatprep.subr.bf16.mxu0 0
  %4542 = vmatpush1.bf16.msra.mxu0 %v685
  %4543 = vmatprep.subr.bf16.mxu0 0
  %4544 = vmatpush1.bf16.msra.mxu0 %v686
  %4545 = vmatprep.subr.bf16.mxu0 0
  %4546 = vmatpush1.bf16.msra.mxu0 %v687
  %4547 = vmatprep.subr.bf16.mxu0 0
  %4548 = vmatpush1.bf16.msra.mxu0 %v688
  %4549 = vmatprep.subr.bf16.mxu0 0
  %4550 = vmatpush1.bf16.msra.mxu0 %v689
  %4551 = vmatprep.mubr.bf16.mxu0 %v4450
  %4552 = vmatmul.mubr.bf16.gmra.mrb[0].mxu0 %v4449
  %v4553 = vpop.f32.mrb[0].mxu0
  %v4554 = vadd.f32 0.0, %v4553
  %v4555 = vpop.f32.mrb[0].mxu0
  %v4556 = vpop.f32.mrb[0].mxu0
  %v4557 = vadd.f32 0.0, %v4556
  %v4558 = vpop.f32.mrb[0].mxu0
  %4559 = vmatprep.mubr.bf16.mxu0 %v4454
  %4560 = vmatmul.mubr.bf16.gmra.mrb[0].mxu0 %v4453
  %v4561 = vpop.f32.mrb[0].mxu0
  %v4562 = vadd.f32 0.0, %v4561
  %v4563 = vpop.f32.mrb[0].mxu0
  %v4564 = vpop.f32.mrb[0].mxu0
  %v4565 = vadd.f32 0.0, %v4564
  %v4566 = vpop.f32.mrb[0].mxu0
  %4567 = vmatprep.mubr.bf16.mxu0 %v4458
  %4568 = vmatmul.mubr.bf16.gmra.mrb[0].mxu0 %v4457
  %v4569 = vpop.f32.mrb[0].mxu0
  %v4570 = vadd.f32 0.0, %v4569
  %v4571 = vpop.f32.mrb[0].mxu0
  %v4572 = vpop.f32.mrb[0].mxu0
  %v4573 = vadd.f32 0.0, %v4572
  %v4574 = vpop.f32.mrb[0].mxu0
  %4575 = vmatprep.mubr.bf16.mxu0 %v4462
  %4576 = vmatmul.mubr.bf16.gmra.mrb[0].mxu0 %v4461
  %v4577 = vpop.f32.mrb[0].mxu0
  %v4578 = vadd.f32 0.0, %v4577
  %v4579 = vpop.f32.mrb[0].mxu0
  %v4580 = vpop.f32.mrb[0].mxu0
  %v4581 = vadd.f32 0.0, %v4580
  %v4582 = vpop.f32.mrb[0].mxu0
  %4583 = vmatprep.mubr.bf16.mxu0 %v4466
  %4584 = vmatmul.mubr.bf16.gmra.mrb[0].mxu0 %v4465
  %v4585 = vpop.f32.mrb[0].mxu0
  %v4586 = vadd.f32 0.0, %v4585
  %v4587 = vpop.f32.mrb[0].mxu0
  %v4588 = vpop.f32.mrb[0].mxu0
  %v4589 = vadd.f32 0.0, %v4588
  %v4590 = vpop.f32.mrb[0].mxu0
  %4591 = vmatprep.mubr.bf16.mxu0 %v4470
  %4592 = vmatmul.mubr.bf16.gmra.mrb[0].mxu0 %v4469
  %v4593 = vpop.f32.mrb[0].mxu0
  %v4594 = vadd.f32 0.0, %v4593
  %v4595 = vpop.f32.mrb[0].mxu0
  %v4596 = vpop.f32.mrb[0].mxu0
  %v4597 = vadd.f32 0.0, %v4596
  %v4598 = vpop.f32.mrb[0].mxu0
  %4599 = vmatprep.mubr.bf16.mxu0 %v4474
  %4600 = vmatmul.mubr.bf16.gmra.mrb[0].mxu0 %v4473
  %v4601 = vpop.f32.mrb[0].mxu0
  %v4602 = vadd.f32 0.0, %v4601
  %v4603 = vpop.f32.mrb[0].mxu0
  %v4604 = vpop.f32.mrb[0].mxu0
  %v4605 = vpop.f32.mrb[0].mxu0
  %4606 = vdwg.mxu0
  %4607 = vmatprep.subr.bf16.mxu0 0
  %4608 = vmatpush1.bf16.msra.mxu0 %v690
  %4609 = vmatprep.subr.bf16.mxu0 0
  %4610 = vmatpush1.bf16.msra.mxu0 %v691
  %4611 = vmatprep.subr.bf16.mxu0 0
  %4612 = vmatpush1.bf16.msra.mxu0 %v692
  %4613 = vmatprep.subr.bf16.mxu0 0
  %4614 = vmatpush1.bf16.msra.mxu0 %v693
  %4615 = vmatprep.subr.bf16.mxu0 0
  %4616 = vmatpush1.bf16.msra.mxu0 %v694
  %4617 = vmatprep.subr.bf16.mxu0 0
  %4618 = vmatpush1.bf16.msra.mxu0 %v695
  %4619 = vmatprep.subr.bf16.mxu0 0
  %4620 = vmatpush1.bf16.msra.mxu0 %v696
  %4621 = vmatprep.subr.bf16.mxu0 0
  %4622 = vmatpush1.bf16.msra.mxu0 %v697
  %4623 = vmatprep.subr.bf16.mxu0 0
  %4624 = vmatpush1.bf16.msra.mxu0 %v876
  %4625 = vmatprep.subr.bf16.mxu0 0
  %4626 = vmatpush1.bf16.msra.mxu0 0
  %4627 = vmatprep.subr.bf16.mxu0 0
  %4628 = vmatpush1.bf16.msra.mxu0 0
  %4629 = vmatprep.subr.bf16.mxu0 0
  %4630 = vmatpush1.bf16.msra.mxu0 0
  %4631 = vmatprep.subr.bf16.mxu0 0
  %4632 = vmatpush1.bf16.msra.mxu0 0
  %4633 = vmatprep.subr.bf16.mxu0 0
  %4634 = vmatpush1.bf16.msra.mxu0 0
  %4635 = vmatprep.subr.bf16.mxu0 0
  %4636 = vmatpush1.bf16.msra.mxu0 0
  %4637 = vmatprep.subr.bf16.mxu0 0
  %4638 = vmatpush1.bf16.msra.mxu0 0
  %4639 = vmatprep.mubr.bf16.mxu0 %v4499
  %4640 = vmatmul.mubr.bf16.gmra.mrb[0].mxu0 %v4451
  %v4641 = vpop.f32.mrb[0].mxu0
  %v4642 = vadd.f32 %v4554, %v4641
  %v4643 = vpop.f32.mrb[0].mxu0
  %v4644 = vpop.f32.mrb[0].mxu0
  %v4645 = vadd.f32 %v4557, %v4644
  %v4646 = vpop.f32.mrb[0].mxu0
  %4647 = vmatprep.mubr.bf16.mxu0 %v4502
  %4648 = vmatmul.mubr.bf16.gmra.mrb[0].mxu0 %v4455
  %v4649 = vpop.f32.mrb[0].mxu0
  %v4650 = vadd.f32 %v4562, %v4649
  %v4651 = vpop.f32.mrb[0].mxu0
  %v4652 = vpop.f32.mrb[0].mxu0
  %v4653 = vadd.f32 %v4565, %v4652
  %v4654 = vpop.f32.mrb[0].mxu0
  %4655 = vmatprep.mubr.bf16.mxu0 %v4505
  %4656 = vmatmul.mubr.bf16.gmra.mrb[0].mxu0 %v4459
  %v4657 = vpop.f32.mrb[0].mxu0
  %v4658 = vadd.f32 %v4570, %v4657
  %v4659 = vpop.f32.mrb[0].mxu0
  %v4660 = vpop.f32.mrb[0].mxu0
  %v4661 = vadd.f32 %v4573, %v4660
  %v4662 = vpop.f32.mrb[0].mxu0
  %4663 = vmatprep.mubr.bf16.mxu0 %v4508
  %4664 = vmatmul.mubr.bf16.gmra.mrb[0].mxu0 %v4463
  %v4665 = vpop.f32.mrb[0].mxu0
  %v4666 = vadd.f32 %v4578, %v4665
  %v4667 = vpop.f32.mrb[0].mxu0
  %v4668 = vpop.f32.mrb[0].mxu0
  %v4669 = vadd.f32 %v4581, %v4668
  %v4670 = vpop.f32.mrb[0].mxu0
  %4671 = vmatprep.mubr.bf16.mxu0 %v4511
  %4672 = vmatmul.mubr.bf16.gmra.mrb[0].mxu0 %v4467
  %v4673 = vpop.f32.mrb[0].mxu0
  %v4674 = vadd.f32 %v4586, %v4673
  %v4675 = vpop.f32.mrb[0].mxu0
  %v4676 = vpop.f32.mrb[0].mxu0
  %v4677 = vadd.f32 %v4589, %v4676
  %v4678 = vpop.f32.mrb[0].mxu0
  %4679 = vmatprep.mubr.bf16.mxu0 %v4514
  %4680 = vmatmul.mubr.bf16.gmra.mrb[0].mxu0 %v4471
  %v4681 = vpop.f32.mrb[0].mxu0
  %v4682 = vadd.f32 %v4594, %v4681
  %v4683 = vpop.f32.mrb[0].mxu0
  %v4684 = vpop.f32.mrb[0].mxu0
  %v4685 = vadd.f32 %v4597, %v4684
  %v4686 = vpop.f32.mrb[0].mxu0
  %4687 = vmatprep.mubr.bf16.mxu0 %v4517
  %4688 = vmatmul.mubr.bf16.gmra.mrb[0].mxu0 %v4475
  %v4689 = vpop.f32.mrb[0].mxu0
  %v4690 = vadd.f32 %v4602, %v4689
  %v4691 = vpop.f32.mrb[0].mxu0
  %v4692 = vpop.f32.mrb[0].mxu0
  %v4693 = vpop.f32.mrb[0].mxu0
  %4694 = vdwg.mxu0
  %v4695 = vpack.c.bf16 %v4645, %v4642
  %v4696 = vpack.c.bf16 %v4653, %v4650
  %v4697 = vpack.c.bf16 %v4661, %v4658
  %v4698 = vpack.c.bf16 %v4669, %v4666
  %v4699 = vpack.c.bf16 %v4677, %v4674
  %v4700 = vpack.c.bf16 %v4685, %v4682
  %v4701 = vpack.c.bf16 %v4690, %v4690
  %s4702 = scalar_lea.vmem %s3, 448
  %v4703 = vld [vmem:[%s4702] sm:$0xf]
  %v4704 = vld [vmem:[%s4702 + $0x4] sm:$0xf]
  %v4705 = vld [vmem:[%s4702 + $0x8] sm:$0xf]
  %v4706 = vld [vmem:[%s4702 + $0xc] sm:$0xf]
  %v4707 = vld [vmem:[%s4702 + $0x10] sm:$0xf]
  %v4708 = vld [vmem:[%s4702 + $0x14] sm:$0xf]
  %v4709 = vld [vmem:[%s4702 + $0x18] sm:$0xf]
  %v4710 = vld [vmem:[%s4702 + $0x1c] sm:$0xf]
  %v4711 = vld [vmem:[%s4702 + $0x20] sm:$0xf]
  %v4712 = vld [vmem:[%s4702 + $0x24] sm:$0xf]
  %v4713 = vld [vmem:[%s4702 + $0x28] sm:$0xf]
  %v4714 = vld [vmem:[%s4702 + $0x2c] sm:$0xf]
  %v4715 = vld [vmem:[%s4702 + $0x30] sm:$0xf]
  %v4716 = vld [vmem:[%s4702 + $0x34] sm:$0xf]
  %v4717 = vld [vmem:[%s4702 + $0x38] sm:$0xf]
  %v4718 = vld [vmem:[%s4702 + $0x3c] sm:$0xf]
  %v4735 = vunpack.c.l.b16 %v4703
  %v4736 = vunpack.c.l.b16 %v4704
  %v4737 = vunpack.c.l.b16 %v4705
  %v4738 = vunpack.c.l.b16 %v4706
  %v4739 = vunpack.c.l.b16 %v4707
  %v4740 = vunpack.c.l.b16 %v4708
  %v4741 = vunpack.c.l.b16 %v4709
  %v4742 = vunpack.c.l.b16 %v4710
  %v4743 = vunpack.c.l.b16 %v4711
  %v4744 = vunpack.c.l.b16 %v4712
  %v4745 = vunpack.c.l.b16 %v4713
  %v4746 = vunpack.c.l.b16 %v4714
  %v4747 = vunpack.c.l.b16 %v4715
  %v4748 = vunpack.c.l.b16 %v4716
  %v4749 = vunpack.c.l.b16 %v4717
  %v4750 = vunpack.c.l.b16 %v4718
  %v4751 = vpack.c.b16 %v4736, %v4735
  %v4752 = vpack.c.b16 %v4738, %v4737
  %v4753 = vpack.c.b16 %v4740, %v4739
  %v4754 = vpack.c.b16 %v4742, %v4741
  %v4755 = vpack.c.b16 %v4744, %v4743
  %v4756 = vpack.c.b16 %v4746, %v4745
  %v4757 = vpack.c.b16 %v4748, %v4747
  %v4758 = vpack.c.b16 %v4750, %v4749
  %4767 = vmatprep.subr.bf16.mxu0 0
  %4768 = vmatpush1.bf16.msra.mxu0 %v4751
  %4769 = vmatprep.subr.bf16.mxu0 0
  %4770 = vmatpush1.bf16.msra.mxu0 %v4752
  %4771 = vmatprep.subr.bf16.mxu0 0
  %4772 = vmatpush1.bf16.msra.mxu0 %v4753
  %4773 = vmatprep.subr.bf16.mxu0 0
  %4774 = vmatpush1.bf16.msra.mxu0 %v4754
  %4775 = vmatprep.subr.bf16.mxu0 0
  %4776 = vmatpush1.bf16.msra.mxu0 %v4755
  %4777 = vmatprep.subr.bf16.mxu0 0
  %4778 = vmatpush1.bf16.msra.mxu0 %v4756
  %4779 = vmatprep.subr.bf16.mxu0 0
  %4780 = vmatpush1.bf16.msra.mxu0 %v4757
  %4781 = vmatprep.subr.bf16.mxu0 0
  %4782 = vmatpush1.bf16.msra.mxu0 %v4758
  %4783 = vmatprep.subr.bf16.mxu0 0
  %4784 = vmatpush1.bf16.msra.mxu0 0
  %4785 = vmatprep.subr.bf16.mxu0 0
  %4786 = vmatpush1.bf16.msra.mxu0 0
  %4787 = vmatprep.subr.bf16.mxu0 0
  %4788 = vmatpush1.bf16.msra.mxu0 0
  %4789 = vmatprep.subr.bf16.mxu0 0
  %4790 = vmatpush1.bf16.msra.mxu0 0
  %4791 = vmatprep.subr.bf16.mxu0 0
  %4792 = vmatpush1.bf16.msra.mxu0 0
  %4793 = vmatprep.subr.bf16.mxu0 0
  %4794 = vmatpush1.bf16.msra.mxu0 0
  %4795 = vmatprep.subr.bf16.mxu0 0
  %4796 = vmatpush1.bf16.msra.mxu0 0
  %4797 = vmatprep.subr.bf16.mxu0 0
  %4798 = vmatpush1.bf16.msra.mxu0 0
  %4799 = vmatprep.mubr.bf16.mxu0 0
  %4800 = vmatmul.mubr.bf16.gmra.mrb[0].mxu0 %v4695
  %v4801 = vpop.f32.mrb[0].mxu0
  %v4802 = vadd.f32 0.0, %v4801
  %v4803 = vpop.f32.mrb[0].mxu0
  %v4804 = vpop.f32.mrb[0].mxu0
  %v4805 = vadd.f32 0.0, %v4804
  %v4806 = vpop.f32.mrb[0].mxu0
  %4807 = vmatprep.mubr.bf16.mxu0 0
  %4808 = vmatmul.mubr.bf16.gmra.mrb[0].mxu0 %v4696
  %v4809 = vpop.f32.mrb[0].mxu0
  %v4810 = vadd.f32 0.0, %v4809
  %v4811 = vpop.f32.mrb[0].mxu0
  %v4812 = vpop.f32.mrb[0].mxu0
  %v4813 = vadd.f32 0.0, %v4812
  %v4814 = vpop.f32.mrb[0].mxu0
  %4815 = vmatprep.mubr.bf16.mxu0 0
  %4816 = vmatmul.mubr.bf16.gmra.mrb[0].mxu0 %v4697
  %v4817 = vpop.f32.mrb[0].mxu0
  %v4818 = vadd.f32 0.0, %v4817
  %v4819 = vpop.f32.mrb[0].mxu0
  %v4820 = vpop.f32.mrb[0].mxu0
  %v4821 = vadd.f32 0.0, %v4820
  %v4822 = vpop.f32.mrb[0].mxu0
  %4823 = vmatprep.mubr.bf16.mxu0 0
  %4824 = vmatmul.mubr.bf16.gmra.mrb[0].mxu0 %v4698
  %v4825 = vpop.f32.mrb[0].mxu0
  %v4826 = vadd.f32 0.0, %v4825
  %v4827 = vpop.f32.mrb[0].mxu0
  %v4828 = vpop.f32.mrb[0].mxu0
  %v4829 = vadd.f32 0.0, %v4828
  %v4830 = vpop.f32.mrb[0].mxu0
  %4831 = vmatprep.mubr.bf16.mxu0 0
  %4832 = vmatmul.mubr.bf16.gmra.mrb[0].mxu0 %v4699
  %v4833 = vpop.f32.mrb[0].mxu0
  %v4834 = vadd.f32 0.0, %v4833
  %v4835 = vpop.f32.mrb[0].mxu0
  %v4836 = vpop.f32.mrb[0].mxu0
  %v4837 = vadd.f32 0.0, %v4836
  %v4838 = vpop.f32.mrb[0].mxu0
  %4839 = vmatprep.mubr.bf16.mxu0 0
  %4840 = vmatmul.mubr.bf16.gmra.mrb[0].mxu0 %v4700
  %v4841 = vpop.f32.mrb[0].mxu0
  %v4842 = vadd.f32 0.0, %v4841
  %v4843 = vpop.f32.mrb[0].mxu0
  %v4844 = vpop.f32.mrb[0].mxu0
  %v4845 = vadd.f32 0.0, %v4844
  %v4846 = vpop.f32.mrb[0].mxu0
  %4847 = vmatprep.mubr.bf16.mxu0 0
  %4848 = vmatmul.mubr.bf16.gmra.mrb[0].mxu0 %v4701
  %v4849 = vpop.f32.mrb[0].mxu0
  %v4850 = vadd.f32 0.0, %v4849
  %v4851 = vpop.f32.mrb[0].mxu0
  %v4852 = vpop.f32.mrb[0].mxu0
  %v4853 = vpop.f32.mrb[0].mxu0
  %4854 = vdwg.mxu0
  %v4855 = vadd.f32 %v4331, %v4802
  %v4856 = vadd.f32 %v4332, %v4805
  %v4857 = vadd.f32 %v4333, %v4810
  %v4858 = vadd.f32 %v4334, %v4813
  %v4859 = vadd.f32 %v4335, %v4818
  %v4860 = vadd.f32 %v4336, %v4821
  %v4861 = vadd.f32 %v4337, %v4826
  %v4862 = vadd.f32 %v4338, %v4829
  %v4863 = vadd.f32 %v4339, %v4834
  %v4864 = vadd.f32 %v4340, %v4837
  %v4865 = vadd.f32 %v4341, %v4842
  %v4866 = vadd.f32 %v4342, %v4845
  %v4867 = vadd.f32 %v4343, %v4850
  %s4868 = scalar_lea.vmem %s2, 1664
  %v4869 = vld [vmem:[%s4868] sm:$0xff]
  %v4870 = vld [vmem:[%s4868 + $0x8] sm:$0xff]
  %v4871 = vld [vmem:[%s4868 + $0x10] sm:$0xff]
  %v4872 = vld [vmem:[%s4868 + $0x18] sm:$0xff]
  %v4873 = vld [vmem:[%s4868 + $0x20] sm:$0xff]
  %v4874 = vld [vmem:[%s4868 + $0x28] sm:$0xff]
  %v4875 = vld [vmem:[%s4868 + $0x30] sm:$0xff]
  %v4876 = vld [vmem:[%s4868 + $0x38] sm:$0xff]
  %v4877 = vld [vmem:[%s4868 + $0x40] sm:$0xff]
  %v4878 = vld [vmem:[%s4868 + $0x48] sm:$0xff]
  %v4879 = vld [vmem:[%s4868 + $0x50] sm:$0xff]
  %v4880 = vld [vmem:[%s4868 + $0x58] sm:$0xff]
  %v4881 = vld [vmem:[%s4868 + $0x60] sm:$0xff]
  %v4882 = vld [vmem:[%s4868 + $0x68] sm:$0xff]
  %v4883 = vld [vmem:[%s4868 + $0x70] sm:$0xff]
  %v4884 = vld [vmem:[%s4868 + $0x78] sm:$0xff]
  %v4885 = vld [vmem:[%s4868 + $0x80] sm:$0xff]
  %v4886 = vld [vmem:[%s4868 + $0x88] sm:$0xff]
  %v4887 = vld [vmem:[%s4868 + $0x90] sm:$0xff]
  %v4888 = vld [vmem:[%s4868 + $0x98] sm:$0xff]
  %v4889 = vld [vmem:[%s4868 + $0xa0] sm:$0xff]
  %v4890 = vld [vmem:[%s4868 + $0xa8] sm:$0xff]
  %v4891 = vld [vmem:[%s4868 + $0xb0] sm:$0xff]
  %v4892 = vld [vmem:[%s4868 + $0xb8] sm:$0xff]
  %v4893 = vld [vmem:[%s4868 + $0xc0] sm:$0x11]
  %v4894 = vld [vmem:[%s4868 + $0xc8] sm:$0x11]
  %v4921 = vunpack.c.l.b16 %v4869
  %v4922 = vunpack.c.h.b16 %v4869
  %v4923 = vunpack.c.l.b16 %v4870
  %v4924 = vunpack.c.h.b16 %v4870
  %v4925 = vunpack.c.l.b16 %v4871
  %v4926 = vunpack.c.h.b16 %v4871
  %v4927 = vunpack.c.l.b16 %v4872
  %v4928 = vunpack.c.h.b16 %v4872
  %v4929 = vunpack.c.l.b16 %v4873
  %v4930 = vunpack.c.h.b16 %v4873
  %v4931 = vunpack.c.l.b16 %v4874
  %v4932 = vunpack.c.h.b16 %v4874
  %v4933 = vunpack.c.l.b16 %v4875
  %v4934 = vunpack.c.h.b16 %v4875
  %v4935 = vunpack.c.l.b16 %v4876
  %v4936 = vunpack.c.h.b16 %v4876
  %v4937 = vunpack.c.l.b16 %v4877
  %v4938 = vunpack.c.h.b16 %v4877
  %v4939 = vunpack.c.l.b16 %v4878
  %v4940 = vunpack.c.h.b16 %v4878
  %v4941 = vunpack.c.l.b16 %v4879
  %v4942 = vunpack.c.h.b16 %v4879
  %v4943 = vunpack.c.l.b16 %v4880
  %v4944 = vunpack.c.h.b16 %v4880
  %v4945 = vunpack.c.l.b16 %v4881
  %v4946 = vunpack.c.h.b16 %v4881
  %v4947 = vunpack.c.l.b16 %v4882
  %v4948 = vunpack.c.h.b16 %v4882
  %v4949 = vunpack.c.l.b16 %v4883
  %v4950 = vunpack.c.h.b16 %v4883
  %v4951 = vunpack.c.l.b16 %v4884
  %v4952 = vunpack.c.h.b16 %v4884
  %v4953 = vunpack.c.l.b16 %v4885
  %v4954 = vunpack.c.h.b16 %v4885
  %v4955 = vunpack.c.l.b16 %v4886
  %v4956 = vunpack.c.h.b16 %v4886
  %v4957 = vunpack.c.l.b16 %v4887
  %v4958 = vunpack.c.h.b16 %v4887
  %v4959 = vunpack.c.l.b16 %v4888
  %v4960 = vunpack.c.h.b16 %v4888
  %v4961 = vunpack.c.l.b16 %v4889
  %v4962 = vunpack.c.h.b16 %v4889
  %v4963 = vunpack.c.l.b16 %v4890
  %v4964 = vunpack.c.h.b16 %v4890
  %v4965 = vunpack.c.l.b16 %v4891
  %v4966 = vunpack.c.h.b16 %v4891
  %v4967 = vunpack.c.l.b16 %v4892
  %v4968 = vunpack.c.h.b16 %v4892
  %v4969 = vunpack.c.l.b16 %v4893
  %v4970 = vunpack.c.h.b16 %v4893
  %v4971 = vunpack.c.l.b16 %v4894
  %v4972 = vunpack.c.h.b16 %v4894
  %v4973 = vpack.c.b16 %v4925, %v4921
  %v4974 = vpack.c.b16 %v4926, %v4922
  %v4975 = vpack.c.b16 %v4927, %v4923
  %v4976 = vpack.c.b16 %v4928, %v4924
  %v4977 = vpack.c.b16 %v4933, %v4929
  %v4978 = vpack.c.b16 %v4934, %v4930
  %v4979 = vpack.c.b16 %v4935, %v4931
  %v4980 = vpack.c.b16 %v4936, %v4932
  %v4981 = vpack.c.b16 %v4941, %v4937
  %v4982 = vpack.c.b16 %v4942, %v4938
  %v4983 = vpack.c.b16 %v4943, %v4939
  %v4984 = vpack.c.b16 %v4944, %v4940
  %v4985 = vpack.c.b16 %v4949, %v4945
  %v4986 = vpack.c.b16 %v4950, %v4946
  %v4987 = vpack.c.b16 %v4951, %v4947
  %v4988 = vpack.c.b16 %v4952, %v4948
  %v4989 = vpack.c.b16 %v4957, %v4953
  %v4990 = vpack.c.b16 %v4958, %v4954
  %v4991 = vpack.c.b16 %v4959, %v4955
  %v4992 = vpack.c.b16 %v4960, %v4956
  %v4993 = vpack.c.b16 %v4965, %v4961
  %v4994 = vpack.c.b16 %v4966, %v4962
  %v4995 = vpack.c.b16 %v4967, %v4963
  %v4996 = vpack.c.b16 %v4968, %v4964
  %v4997 = vpack.c.b16 %v4969, %v4969
  %v4998 = vpack.c.b16 %v4970, %v4970
  %v4999 = vpack.c.b16 %v4971, %v4971
  %v5000 = vpack.c.b16 %v4972, %v4972
  %v5023 = vsel %vm852, %v4976, 0
  %v5026 = vsel %vm852, %v4980, 0
  %v5029 = vsel %vm852, %v4984, 0
  %v5032 = vsel %vm852, %v4988, 0
  %v5035 = vsel %vm852, %v4992, 0
  %v5038 = vsel %vm852, %v4996, 0
  %v5041 = vsel %vm852, %v5000, 0
  %5043 = vmatprep.subr.bf16.mxu0 0
  %5044 = vmatpush1.bf16.msra.mxu0 %v674
  %5045 = vmatprep.subr.bf16.mxu0 0
  %5046 = vmatpush1.bf16.msra.mxu0 %v675
  %5047 = vmatprep.subr.bf16.mxu0 0
  %5048 = vmatpush1.bf16.msra.mxu0 %v676
  %5049 = vmatprep.subr.bf16.mxu0 0
  %5050 = vmatpush1.bf16.msra.mxu0 %v677
  %5051 = vmatprep.subr.bf16.mxu0 0
  %5052 = vmatpush1.bf16.msra.mxu0 %v678
  %5053 = vmatprep.subr.bf16.mxu0 0
  %5054 = vmatpush1.bf16.msra.mxu0 %v679
  %5055 = vmatprep.subr.bf16.mxu0 0
  %5056 = vmatpush1.bf16.msra.mxu0 %v680
  %5057 = vmatprep.subr.bf16.mxu0 0
  %5058 = vmatpush1.bf16.msra.mxu0 %v681
  %5059 = vmatprep.subr.bf16.mxu0 0
  %5060 = vmatpush1.bf16.msra.mxu0 %v682
  %5061 = vmatprep.subr.bf16.mxu0 0
  %5062 = vmatpush1.bf16.msra.mxu0 %v683
  %5063 = vmatprep.subr.bf16.mxu0 0
  %5064 = vmatpush1.bf16.msra.mxu0 %v684
  %5065 = vmatprep.subr.bf16.mxu0 0
  %5066 = vmatpush1.bf16.msra.mxu0 %v685
  %5067 = vmatprep.subr.bf16.mxu0 0
  %5068 = vmatpush1.bf16.msra.mxu0 %v686
  %5069 = vmatprep.subr.bf16.mxu0 0
  %5070 = vmatpush1.bf16.msra.mxu0 %v687
  %5071 = vmatprep.subr.bf16.mxu0 0
  %5072 = vmatpush1.bf16.msra.mxu0 %v688
  %5073 = vmatprep.subr.bf16.mxu0 0
  %5074 = vmatpush1.bf16.msra.mxu0 %v689
  %5075 = vmatprep.mubr.bf16.mxu0 %v4974
  %5076 = vmatmul.mubr.bf16.gmra.mrb[0].mxu0 %v4973
  %v5077 = vpop.f32.mrb[0].mxu0
  %v5078 = vadd.f32 0.0, %v5077
  %v5079 = vpop.f32.mrb[0].mxu0
  %v5080 = vpop.f32.mrb[0].mxu0
  %v5081 = vadd.f32 0.0, %v5080
  %v5082 = vpop.f32.mrb[0].mxu0
  %5083 = vmatprep.mubr.bf16.mxu0 %v4978
  %5084 = vmatmul.mubr.bf16.gmra.mrb[0].mxu0 %v4977
  %v5085 = vpop.f32.mrb[0].mxu0
  %v5086 = vadd.f32 0.0, %v5085
  %v5087 = vpop.f32.mrb[0].mxu0
  %v5088 = vpop.f32.mrb[0].mxu0
  %v5089 = vadd.f32 0.0, %v5088
  %v5090 = vpop.f32.mrb[0].mxu0
  %5091 = vmatprep.mubr.bf16.mxu0 %v4982
  %5092 = vmatmul.mubr.bf16.gmra.mrb[0].mxu0 %v4981
  %v5093 = vpop.f32.mrb[0].mxu0
  %v5094 = vadd.f32 0.0, %v5093
  %v5095 = vpop.f32.mrb[0].mxu0
  %v5096 = vpop.f32.mrb[0].mxu0
  %v5097 = vadd.f32 0.0, %v5096
  %v5098 = vpop.f32.mrb[0].mxu0
  %5099 = vmatprep.mubr.bf16.mxu0 %v4986
  %5100 = vmatmul.mubr.bf16.gmra.mrb[0].mxu0 %v4985
  %v5101 = vpop.f32.mrb[0].mxu0
  %v5102 = vadd.f32 0.0, %v5101
  %v5103 = vpop.f32.mrb[0].mxu0
  %v5104 = vpop.f32.mrb[0].mxu0
  %v5105 = vadd.f32 0.0, %v5104
  %v5106 = vpop.f32.mrb[0].mxu0
  %5107 = vmatprep.mubr.bf16.mxu0 %v4990
  %5108 = vmatmul.mubr.bf16.gmra.mrb[0].mxu0 %v4989
  %v5109 = vpop.f32.mrb[0].mxu0
  %v5110 = vadd.f32 0.0, %v5109
  %v5111 = vpop.f32.mrb[0].mxu0
  %v5112 = vpop.f32.mrb[0].mxu0
  %v5113 = vadd.f32 0.0, %v5112
  %v5114 = vpop.f32.mrb[0].mxu0
  %5115 = vmatprep.mubr.bf16.mxu0 %v4994
  %5116 = vmatmul.mubr.bf16.gmra.mrb[0].mxu0 %v4993
  %v5117 = vpop.f32.mrb[0].mxu0
  %v5118 = vadd.f32 0.0, %v5117
  %v5119 = vpop.f32.mrb[0].mxu0
  %v5120 = vpop.f32.mrb[0].mxu0
  %v5121 = vadd.f32 0.0, %v5120
  %v5122 = vpop.f32.mrb[0].mxu0
  %5123 = vmatprep.mubr.bf16.mxu0 %v4998
  %5124 = vmatmul.mubr.bf16.gmra.mrb[0].mxu0 %v4997
  %v5125 = vpop.f32.mrb[0].mxu0
  %v5126 = vadd.f32 0.0, %v5125
  %v5127 = vpop.f32.mrb[0].mxu0
  %v5128 = vpop.f32.mrb[0].mxu0
  %v5129 = vpop.f32.mrb[0].mxu0
  %5130 = vdwg.mxu0
  %5131 = vmatprep.subr.bf16.mxu0 0
  %5132 = vmatpush1.bf16.msra.mxu0 %v690
  %5133 = vmatprep.subr.bf16.mxu0 0
  %5134 = vmatpush1.bf16.msra.mxu0 %v691
  %5135 = vmatprep.subr.bf16.mxu0 0
  %5136 = vmatpush1.bf16.msra.mxu0 %v692
  %5137 = vmatprep.subr.bf16.mxu0 0
  %5138 = vmatpush1.bf16.msra.mxu0 %v693
  %5139 = vmatprep.subr.bf16.mxu0 0
  %5140 = vmatpush1.bf16.msra.mxu0 %v694
  %5141 = vmatprep.subr.bf16.mxu0 0
  %5142 = vmatpush1.bf16.msra.mxu0 %v695
  %5143 = vmatprep.subr.bf16.mxu0 0
  %5144 = vmatpush1.bf16.msra.mxu0 %v696
  %5145 = vmatprep.subr.bf16.mxu0 0
  %5146 = vmatpush1.bf16.msra.mxu0 %v697
  %5147 = vmatprep.subr.bf16.mxu0 0
  %5148 = vmatpush1.bf16.msra.mxu0 %v876
  %5149 = vmatprep.subr.bf16.mxu0 0
  %5150 = vmatpush1.bf16.msra.mxu0 0
  %5151 = vmatprep.subr.bf16.mxu0 0
  %5152 = vmatpush1.bf16.msra.mxu0 0
  %5153 = vmatprep.subr.bf16.mxu0 0
  %5154 = vmatpush1.bf16.msra.mxu0 0
  %5155 = vmatprep.subr.bf16.mxu0 0
  %5156 = vmatpush1.bf16.msra.mxu0 0
  %5157 = vmatprep.subr.bf16.mxu0 0
  %5158 = vmatpush1.bf16.msra.mxu0 0
  %5159 = vmatprep.subr.bf16.mxu0 0
  %5160 = vmatpush1.bf16.msra.mxu0 0
  %5161 = vmatprep.subr.bf16.mxu0 0
  %5162 = vmatpush1.bf16.msra.mxu0 0
  %5163 = vmatprep.mubr.bf16.mxu0 %v5023
  %5164 = vmatmul.mubr.bf16.gmra.mrb[0].mxu0 %v4975
  %v5165 = vpop.f32.mrb[0].mxu0
  %v5166 = vadd.f32 %v5078, %v5165
  %v5167 = vpop.f32.mrb[0].mxu0
  %v5168 = vpop.f32.mrb[0].mxu0
  %v5169 = vadd.f32 %v5081, %v5168
  %v5170 = vpop.f32.mrb[0].mxu0
  %5171 = vmatprep.mubr.bf16.mxu0 %v5026
  %5172 = vmatmul.mubr.bf16.gmra.mrb[0].mxu0 %v4979
  %v5173 = vpop.f32.mrb[0].mxu0
  %v5174 = vadd.f32 %v5086, %v5173
  %v5175 = vpop.f32.mrb[0].mxu0
  %v5176 = vpop.f32.mrb[0].mxu0
  %v5177 = vadd.f32 %v5089, %v5176
  %v5178 = vpop.f32.mrb[0].mxu0
  %5179 = vmatprep.mubr.bf16.mxu0 %v5029
  %5180 = vmatmul.mubr.bf16.gmra.mrb[0].mxu0 %v4983
  %v5181 = vpop.f32.mrb[0].mxu0
  %v5182 = vadd.f32 %v5094, %v5181
  %v5183 = vpop.f32.mrb[0].mxu0
  %v5184 = vpop.f32.mrb[0].mxu0
  %v5185 = vadd.f32 %v5097, %v5184
  %v5186 = vpop.f32.mrb[0].mxu0
  %5187 = vmatprep.mubr.bf16.mxu0 %v5032
  %5188 = vmatmul.mubr.bf16.gmra.mrb[0].mxu0 %v4987
  %v5189 = vpop.f32.mrb[0].mxu0
  %v5190 = vadd.f32 %v5102, %v5189
  %v5191 = vpop.f32.mrb[0].mxu0
  %v5192 = vpop.f32.mrb[0].mxu0
  %v5193 = vadd.f32 %v5105, %v5192
  %v5194 = vpop.f32.mrb[0].mxu0
  %5195 = vmatprep.mubr.bf16.mxu0 %v5035
  %5196 = vmatmul.mubr.bf16.gmra.mrb[0].mxu0 %v4991
  %v5197 = vpop.f32.mrb[0].mxu0
  %v5198 = vadd.f32 %v5110, %v5197
  %v5199 = vpop.f32.mrb[0].mxu0
  %v5200 = vpop.f32.mrb[0].mxu0
  %v5201 = vadd.f32 %v5113, %v5200
  %v5202 = vpop.f32.mrb[0].mxu0
  %5203 = vmatprep.mubr.bf16.mxu0 %v5038
  %5204 = vmatmul.mubr.bf16.gmra.mrb[0].mxu0 %v4995
  %v5205 = vpop.f32.mrb[0].mxu0
  %v5206 = vadd.f32 %v5118, %v5205
  %v5207 = vpop.f32.mrb[0].mxu0
  %v5208 = vpop.f32.mrb[0].mxu0
  %v5209 = vadd.f32 %v5121, %v5208
  %v5210 = vpop.f32.mrb[0].mxu0
  %5211 = vmatprep.mubr.bf16.mxu0 %v5041
  %5212 = vmatmul.mubr.bf16.gmra.mrb[0].mxu0 %v4999
  %v5213 = vpop.f32.mrb[0].mxu0
  %v5214 = vadd.f32 %v5126, %v5213
  %v5215 = vpop.f32.mrb[0].mxu0
  %v5216 = vpop.f32.mrb[0].mxu0
  %v5217 = vpop.f32.mrb[0].mxu0
  %5218 = vdwg.mxu0
  %v5219 = vpack.c.bf16 %v5169, %v5166
  %v5220 = vpack.c.bf16 %v5177, %v5174
  %v5221 = vpack.c.bf16 %v5185, %v5182
  %v5222 = vpack.c.bf16 %v5193, %v5190
  %v5223 = vpack.c.bf16 %v5201, %v5198
  %v5224 = vpack.c.bf16 %v5209, %v5206
  %v5225 = vpack.c.bf16 %v5214, %v5214
  %s5226 = scalar_lea.vmem %s3, 512
  %v5227 = vld [vmem:[%s5226] sm:$0xf]
  %v5228 = vld [vmem:[%s5226 + $0x4] sm:$0xf]
  %v5229 = vld [vmem:[%s5226 + $0x8] sm:$0xf]
  %v5230 = vld [vmem:[%s5226 + $0xc] sm:$0xf]
  %v5231 = vld [vmem:[%s5226 + $0x10] sm:$0xf]
  %v5232 = vld [vmem:[%s5226 + $0x14] sm:$0xf]
  %v5233 = vld [vmem:[%s5226 + $0x18] sm:$0xf]
  %v5234 = vld [vmem:[%s5226 + $0x1c] sm:$0xf]
  %v5235 = vld [vmem:[%s5226 + $0x20] sm:$0xf]
  %v5236 = vld [vmem:[%s5226 + $0x24] sm:$0xf]
  %v5237 = vld [vmem:[%s5226 + $0x28] sm:$0xf]
  %v5238 = vld [vmem:[%s5226 + $0x2c] sm:$0xf]
  %v5239 = vld [vmem:[%s5226 + $0x30] sm:$0xf]
  %v5240 = vld [vmem:[%s5226 + $0x34] sm:$0xf]
  %v5241 = vld [vmem:[%s5226 + $0x38] sm:$0xf]
  %v5242 = vld [vmem:[%s5226 + $0x3c] sm:$0xf]
  %v5259 = vunpack.c.l.b16 %v5227
  %v5260 = vunpack.c.l.b16 %v5228
  %v5261 = vunpack.c.l.b16 %v5229
  %v5262 = vunpack.c.l.b16 %v5230
  %v5263 = vunpack.c.l.b16 %v5231
  %v5264 = vunpack.c.l.b16 %v5232
  %v5265 = vunpack.c.l.b16 %v5233
  %v5266 = vunpack.c.l.b16 %v5234
  %v5267 = vunpack.c.l.b16 %v5235
  %v5268 = vunpack.c.l.b16 %v5236
  %v5269 = vunpack.c.l.b16 %v5237
  %v5270 = vunpack.c.l.b16 %v5238
  %v5271 = vunpack.c.l.b16 %v5239
  %v5272 = vunpack.c.l.b16 %v5240
  %v5273 = vunpack.c.l.b16 %v5241
  %v5274 = vunpack.c.l.b16 %v5242
  %v5275 = vpack.c.b16 %v5260, %v5259
  %v5276 = vpack.c.b16 %v5262, %v5261
  %v5277 = vpack.c.b16 %v5264, %v5263
  %v5278 = vpack.c.b16 %v5266, %v5265
  %v5279 = vpack.c.b16 %v5268, %v5267
  %v5280 = vpack.c.b16 %v5270, %v5269
  %v5281 = vpack.c.b16 %v5272, %v5271
  %v5282 = vpack.c.b16 %v5274, %v5273
  %5291 = vmatprep.subr.bf16.mxu0 0
  %5292 = vmatpush1.bf16.msra.mxu0 %v5275
  %5293 = vmatprep.subr.bf16.mxu0 0
  %5294 = vmatpush1.bf16.msra.mxu0 %v5276
  %5295 = vmatprep.subr.bf16.mxu0 0
  %5296 = vmatpush1.bf16.msra.mxu0 %v5277
  %5297 = vmatprep.subr.bf16.mxu0 0
  %5298 = vmatpush1.bf16.msra.mxu0 %v5278
  %5299 = vmatprep.subr.bf16.mxu0 0
  %5300 = vmatpush1.bf16.msra.mxu0 %v5279
  %5301 = vmatprep.subr.bf16.mxu0 0
  %5302 = vmatpush1.bf16.msra.mxu0 %v5280
  %5303 = vmatprep.subr.bf16.mxu0 0
  %5304 = vmatpush1.bf16.msra.mxu0 %v5281
  %5305 = vmatprep.subr.bf16.mxu0 0
  %5306 = vmatpush1.bf16.msra.mxu0 %v5282
  %5307 = vmatprep.subr.bf16.mxu0 0
  %5308 = vmatpush1.bf16.msra.mxu0 0
  %5309 = vmatprep.subr.bf16.mxu0 0
  %5310 = vmatpush1.bf16.msra.mxu0 0
  %5311 = vmatprep.subr.bf16.mxu0 0
  %5312 = vmatpush1.bf16.msra.mxu0 0
  %5313 = vmatprep.subr.bf16.mxu0 0
  %5314 = vmatpush1.bf16.msra.mxu0 0
  %5315 = vmatprep.subr.bf16.mxu0 0
  %5316 = vmatpush1.bf16.msra.mxu0 0
  %5317 = vmatprep.subr.bf16.mxu0 0
  %5318 = vmatpush1.bf16.msra.mxu0 0
  %5319 = vmatprep.subr.bf16.mxu0 0
  %5320 = vmatpush1.bf16.msra.mxu0 0
  %5321 = vmatprep.subr.bf16.mxu0 0
  %5322 = vmatpush1.bf16.msra.mxu0 0
  %5323 = vmatprep.mubr.bf16.mxu0 0
  %5324 = vmatmul.mubr.bf16.gmra.mrb[0].mxu0 %v5219
  %v5325 = vpop.f32.mrb[0].mxu0
  %v5326 = vadd.f32 0.0, %v5325
  %v5327 = vpop.f32.mrb[0].mxu0
  %v5328 = vpop.f32.mrb[0].mxu0
  %v5329 = vadd.f32 0.0, %v5328
  %v5330 = vpop.f32.mrb[0].mxu0
  %5331 = vmatprep.mubr.bf16.mxu0 0
  %5332 = vmatmul.mubr.bf16.gmra.mrb[0].mxu0 %v5220
  %v5333 = vpop.f32.mrb[0].mxu0
  %v5334 = vadd.f32 0.0, %v5333
  %v5335 = vpop.f32.mrb[0].mxu0
  %v5336 = vpop.f32.mrb[0].mxu0
  %v5337 = vadd.f32 0.0, %v5336
  %v5338 = vpop.f32.mrb[0].mxu0
  %5339 = vmatprep.mubr.bf16.mxu0 0
  %5340 = vmatmul.mubr.bf16.gmra.mrb[0].mxu0 %v5221
  %v5341 = vpop.f32.mrb[0].mxu0
  %v5342 = vadd.f32 0.0, %v5341
  %v5343 = vpop.f32.mrb[0].mxu0
  %v5344 = vpop.f32.mrb[0].mxu0
  %v5345 = vadd.f32 0.0, %v5344
  %v5346 = vpop.f32.mrb[0].mxu0
  %5347 = vmatprep.mubr.bf16.mxu0 0
  %5348 = vmatmul.mubr.bf16.gmra.mrb[0].mxu0 %v5222
  %v5349 = vpop.f32.mrb[0].mxu0
  %v5350 = vadd.f32 0.0, %v5349
  %v5351 = vpop.f32.mrb[0].mxu0
  %v5352 = vpop.f32.mrb[0].mxu0
  %v5353 = vadd.f32 0.0, %v5352
  %v5354 = vpop.f32.mrb[0].mxu0
  %5355 = vmatprep.mubr.bf16.mxu0 0
  %5356 = vmatmul.mubr.bf16.gmra.mrb[0].mxu0 %v5223
  %v5357 = vpop.f32.mrb[0].mxu0
  %v5358 = vadd.f32 0.0, %v5357
  %v5359 = vpop.f32.mrb[0].mxu0
  %v5360 = vpop.f32.mrb[0].mxu0
  %v5361 = vadd.f32 0.0, %v5360
  %v5362 = vpop.f32.mrb[0].mxu0
  %5363 = vmatprep.mubr.bf16.mxu0 0
  %5364 = vmatmul.mubr.bf16.gmra.mrb[0].mxu0 %v5224
  %v5365 = vpop.f32.mrb[0].mxu0
  %v5366 = vadd.f32 0.0, %v5365
  %v5367 = vpop.f32.mrb[0].mxu0
  %v5368 = vpop.f32.mrb[0].mxu0
  %v5369 = vadd.f32 0.0, %v5368
  %v5370 = vpop.f32.mrb[0].mxu0
  %5371 = vmatprep.mubr.bf16.mxu0 0
  %5372 = vmatmul.mubr.bf16.gmra.mrb[0].mxu0 %v5225
  %v5373 = vpop.f32.mrb[0].mxu0
  %v5374 = vadd.f32 0.0, %v5373
  %v5375 = vpop.f32.mrb[0].mxu0
  %v5376 = vpop.f32.mrb[0].mxu0
  %v5377 = vpop.f32.mrb[0].mxu0
  %5378 = vdwg.mxu0
  %v5379 = vadd.f32 %v4855, %v5326
  %v5380 = vadd.f32 %v4856, %v5329
  %v5381 = vadd.f32 %v4857, %v5334
  %v5382 = vadd.f32 %v4858, %v5337
  %v5383 = vadd.f32 %v4859, %v5342
  %v5384 = vadd.f32 %v4860, %v5345
  %v5385 = vadd.f32 %v4861, %v5350
  %v5386 = vadd.f32 %v4862, %v5353
  %v5387 = vadd.f32 %v4863, %v5358
  %v5388 = vadd.f32 %v4864, %v5361
  %v5389 = vadd.f32 %v4865, %v5366
  %v5390 = vadd.f32 %v4866, %v5369
  %v5391 = vadd.f32 %v4867, %v5374
  %s5392 = scalar_lea.vmem %s2, 1872
  %v5393 = vld [vmem:[%s5392] sm:$0xff]
  %v5394 = vld [vmem:[%s5392 + $0x8] sm:$0xff]
  %v5395 = vld [vmem:[%s5392 + $0x10] sm:$0xff]
  %v5396 = vld [vmem:[%s5392 + $0x18] sm:$0xff]
  %v5397 = vld [vmem:[%s5392 + $0x20] sm:$0xff]
  %v5398 = vld [vmem:[%s5392 + $0x28] sm:$0xff]
  %v5399 = vld [vmem:[%s5392 + $0x30] sm:$0xff]
  %v5400 = vld [vmem:[%s5392 + $0x38] sm:$0xff]
  %v5401 = vld [vmem:[%s5392 + $0x40] sm:$0xff]
  %v5402 = vld [vmem:[%s5392 + $0x48] sm:$0xff]
  %v5403 = vld [vmem:[%s5392 + $0x50] sm:$0xff]
  %v5404 = vld [vmem:[%s5392 + $0x58] sm:$0xff]
  %v5405 = vld [vmem:[%s5392 + $0x60] sm:$0xff]
  %v5406 = vld [vmem:[%s5392 + $0x68] sm:$0xff]
  %v5407 = vld [vmem:[%s5392 + $0x70] sm:$0xff]
  %v5408 = vld [vmem:[%s5392 + $0x78] sm:$0xff]
  %v5409 = vld [vmem:[%s5392 + $0x80] sm:$0xff]
  %v5410 = vld [vmem:[%s5392 + $0x88] sm:$0xff]
  %v5411 = vld [vmem:[%s5392 + $0x90] sm:$0xff]
  %v5412 = vld [vmem:[%s5392 + $0x98] sm:$0xff]
  %v5413 = vld [vmem:[%s5392 + $0xa0] sm:$0xff]
  %v5414 = vld [vmem:[%s5392 + $0xa8] sm:$0xff]
  %v5415 = vld [vmem:[%s5392 + $0xb0] sm:$0xff]
  %v5416 = vld [vmem:[%s5392 + $0xb8] sm:$0xff]
  %v5417 = vld [vmem:[%s5392 + $0xc0] sm:$0x11]
  %v5418 = vld [vmem:[%s5392 + $0xc8] sm:$0x11]
  %v5445 = vunpack.c.l.b16 %v5393
  %v5446 = vunpack.c.h.b16 %v5393
  %v5447 = vunpack.c.l.b16 %v5394
  %v5448 = vunpack.c.h.b16 %v5394
  %v5449 = vunpack.c.l.b16 %v5395
  %v5450 = vunpack.c.h.b16 %v5395
  %v5451 = vunpack.c.l.b16 %v5396
  %v5452 = vunpack.c.h.b16 %v5396
  %v5453 = vunpack.c.l.b16 %v5397
  %v5454 = vunpack.c.h.b16 %v5397
  %v5455 = vunpack.c.l.b16 %v5398
  %v5456 = vunpack.c.h.b16 %v5398
  %v5457 = vunpack.c.l.b16 %v5399
  %v5458 = vunpack.c.h.b16 %v5399
  %v5459 = vunpack.c.l.b16 %v5400
  %v5460 = vunpack.c.h.b16 %v5400
  %v5461 = vunpack.c.l.b16 %v5401
  %v5462 = vunpack.c.h.b16 %v5401
  %v5463 = vunpack.c.l.b16 %v5402
  %v5464 = vunpack.c.h.b16 %v5402
  %v5465 = vunpack.c.l.b16 %v5403
  %v5466 = vunpack.c.h.b16 %v5403
  %v5467 = vunpack.c.l.b16 %v5404
  %v5468 = vunpack.c.h.b16 %v5404
  %v5469 = vunpack.c.l.b16 %v5405
  %v5470 = vunpack.c.h.b16 %v5405
  %v5471 = vunpack.c.l.b16 %v5406
  %v5472 = vunpack.c.h.b16 %v5406
  %v5473 = vunpack.c.l.b16 %v5407
  %v5474 = vunpack.c.h.b16 %v5407
  %v5475 = vunpack.c.l.b16 %v5408
  %v5476 = vunpack.c.h.b16 %v5408
  %v5477 = vunpack.c.l.b16 %v5409
  %v5478 = vunpack.c.h.b16 %v5409
  %v5479 = vunpack.c.l.b16 %v5410
  %v5480 = vunpack.c.h.b16 %v5410
  %v5481 = vunpack.c.l.b16 %v5411
  %v5482 = vunpack.c.h.b16 %v5411
  %v5483 = vunpack.c.l.b16 %v5412
  %v5484 = vunpack.c.h.b16 %v5412
  %v5485 = vunpack.c.l.b16 %v5413
  %v5486 = vunpack.c.h.b16 %v5413
  %v5487 = vunpack.c.l.b16 %v5414
  %v5488 = vunpack.c.h.b16 %v5414
  %v5489 = vunpack.c.l.b16 %v5415
  %v5490 = vunpack.c.h.b16 %v5415
  %v5491 = vunpack.c.l.b16 %v5416
  %v5492 = vunpack.c.h.b16 %v5416
  %v5493 = vunpack.c.l.b16 %v5417
  %v5494 = vunpack.c.h.b16 %v5417
  %v5495 = vunpack.c.l.b16 %v5418
  %v5496 = vunpack.c.h.b16 %v5418
  %v5497 = vpack.c.b16 %v5449, %v5445
  %v5498 = vpack.c.b16 %v5450, %v5446
  %v5499 = vpack.c.b16 %v5451, %v5447
  %v5500 = vpack.c.b16 %v5452, %v5448
  %v5501 = vpack.c.b16 %v5457, %v5453
  %v5502 = vpack.c.b16 %v5458, %v5454
  %v5503 = vpack.c.b16 %v5459, %v5455
  %v5504 = vpack.c.b16 %v5460, %v5456
  %v5505 = vpack.c.b16 %v5465, %v5461
  %v5506 = vpack.c.b16 %v5466, %v5462
  %v5507 = vpack.c.b16 %v5467, %v5463
  %v5508 = vpack.c.b16 %v5468, %v5464
  %v5509 = vpack.c.b16 %v5473, %v5469
  %v5510 = vpack.c.b16 %v5474, %v5470
  %v5511 = vpack.c.b16 %v5475, %v5471
  %v5512 = vpack.c.b16 %v5476, %v5472
  %v5513 = vpack.c.b16 %v5481, %v5477
  %v5514 = vpack.c.b16 %v5482, %v5478
  %v5515 = vpack.c.b16 %v5483, %v5479
  %v5516 = vpack.c.b16 %v5484, %v5480
  %v5517 = vpack.c.b16 %v5489, %v5485
  %v5518 = vpack.c.b16 %v5490, %v5486
  %v5519 = vpack.c.b16 %v5491, %v5487
  %v5520 = vpack.c.b16 %v5492, %v5488
  %v5521 = vpack.c.b16 %v5493, %v5493
  %v5522 = vpack.c.b16 %v5494, %v5494
  %v5523 = vpack.c.b16 %v5495, %v5495
  %v5524 = vpack.c.b16 %v5496, %v5496
  %v5547 = vsel %vm852, %v5500, 0
  %v5550 = vsel %vm852, %v5504, 0
  %v5553 = vsel %vm852, %v5508, 0
  %v5556 = vsel %vm852, %v5512, 0
  %v5559 = vsel %vm852, %v5516, 0
  %v5562 = vsel %vm852, %v5520, 0
  %v5565 = vsel %vm852, %v5524, 0
  %5567 = vmatprep.subr.bf16.mxu0 0
  %5568 = vmatpush1.bf16.msra.mxu0 %v674
  %5569 = vmatprep.subr.bf16.mxu0 0
  %5570 = vmatpush1.bf16.msra.mxu0 %v675
  %5571 = vmatprep.subr.bf16.mxu0 0
  %5572 = vmatpush1.bf16.msra.mxu0 %v676
  %5573 = vmatprep.subr.bf16.mxu0 0
  %5574 = vmatpush1.bf16.msra.mxu0 %v677
  %5575 = vmatprep.subr.bf16.mxu0 0
  %5576 = vmatpush1.bf16.msra.mxu0 %v678
  %5577 = vmatprep.subr.bf16.mxu0 0
  %5578 = vmatpush1.bf16.msra.mxu0 %v679
  %5579 = vmatprep.subr.bf16.mxu0 0
  %5580 = vmatpush1.bf16.msra.mxu0 %v680
  %5581 = vmatprep.subr.bf16.mxu0 0
  %5582 = vmatpush1.bf16.msra.mxu0 %v681
  %5583 = vmatprep.subr.bf16.mxu0 0
  %5584 = vmatpush1.bf16.msra.mxu0 %v682
  %5585 = vmatprep.subr.bf16.mxu0 0
  %5586 = vmatpush1.bf16.msra.mxu0 %v683
  %5587 = vmatprep.subr.bf16.mxu0 0
  %5588 = vmatpush1.bf16.msra.mxu0 %v684
  %5589 = vmatprep.subr.bf16.mxu0 0
  %5590 = vmatpush1.bf16.msra.mxu0 %v685
  %5591 = vmatprep.subr.bf16.mxu0 0
  %5592 = vmatpush1.bf16.msra.mxu0 %v686
  %5593 = vmatprep.subr.bf16.mxu0 0
  %5594 = vmatpush1.bf16.msra.mxu0 %v687
  %5595 = vmatprep.subr.bf16.mxu0 0
  %5596 = vmatpush1.bf16.msra.mxu0 %v688
  %5597 = vmatprep.subr.bf16.mxu0 0
  %5598 = vmatpush1.bf16.msra.mxu0 %v689
  %5599 = vmatprep.mubr.bf16.mxu0 %v5498
  %5600 = vmatmul.mubr.bf16.gmra.mrb[0].mxu0 %v5497
  %v5601 = vpop.f32.mrb[0].mxu0
  %v5602 = vadd.f32 0.0, %v5601
  %v5603 = vpop.f32.mrb[0].mxu0
  %v5604 = vpop.f32.mrb[0].mxu0
  %v5605 = vadd.f32 0.0, %v5604
  %v5606 = vpop.f32.mrb[0].mxu0
  %5607 = vmatprep.mubr.bf16.mxu0 %v5502
  %5608 = vmatmul.mubr.bf16.gmra.mrb[0].mxu0 %v5501
  %v5609 = vpop.f32.mrb[0].mxu0
  %v5610 = vadd.f32 0.0, %v5609
  %v5611 = vpop.f32.mrb[0].mxu0
  %v5612 = vpop.f32.mrb[0].mxu0
  %v5613 = vadd.f32 0.0, %v5612
  %v5614 = vpop.f32.mrb[0].mxu0
  %5615 = vmatprep.mubr.bf16.mxu0 %v5506
  %5616 = vmatmul.mubr.bf16.gmra.mrb[0].mxu0 %v5505
  %v5617 = vpop.f32.mrb[0].mxu0
  %v5618 = vadd.f32 0.0, %v5617
  %v5619 = vpop.f32.mrb[0].mxu0
  %v5620 = vpop.f32.mrb[0].mxu0
  %v5621 = vadd.f32 0.0, %v5620
  %v5622 = vpop.f32.mrb[0].mxu0
  %5623 = vmatprep.mubr.bf16.mxu0 %v5510
  %5624 = vmatmul.mubr.bf16.gmra.mrb[0].mxu0 %v5509
  %v5625 = vpop.f32.mrb[0].mxu0
  %v5626 = vadd.f32 0.0, %v5625
  %v5627 = vpop.f32.mrb[0].mxu0
  %v5628 = vpop.f32.mrb[0].mxu0
  %v5629 = vadd.f32 0.0, %v5628
  %v5630 = vpop.f32.mrb[0].mxu0
  %5631 = vmatprep.mubr.bf16.mxu0 %v5514
  %5632 = vmatmul.mubr.bf16.gmra.mrb[0].mxu0 %v5513
  %v5633 = vpop.f32.mrb[0].mxu0
  %v5634 = vadd.f32 0.0, %v5633
  %v5635 = vpop.f32.mrb[0].mxu0
  %v5636 = vpop.f32.mrb[0].mxu0
  %v5637 = vadd.f32 0.0, %v5636
  %v5638 = vpop.f32.mrb[0].mxu0
  %5639 = vmatprep.mubr.bf16.mxu0 %v5518
  %5640 = vmatmul.mubr.bf16.gmra.mrb[0].mxu0 %v5517
  %v5641 = vpop.f32.mrb[0].mxu0
  %v5642 = vadd.f32 0.0, %v5641
  %v5643 = vpop.f32.mrb[0].mxu0
  %v5644 = vpop.f32.mrb[0].mxu0
  %v5645 = vadd.f32 0.0, %v5644
  %v5646 = vpop.f32.mrb[0].mxu0
  %5647 = vmatprep.mubr.bf16.mxu0 %v5522
  %5648 = vmatmul.mubr.bf16.gmra.mrb[0].mxu0 %v5521
  %v5649 = vpop.f32.mrb[0].mxu0
  %v5650 = vadd.f32 0.0, %v5649
  %v5651 = vpop.f32.mrb[0].mxu0
  %v5652 = vpop.f32.mrb[0].mxu0
  %v5653 = vpop.f32.mrb[0].mxu0
  %5654 = vdwg.mxu0
  %5655 = vmatprep.subr.bf16.mxu0 0
  %5656 = vmatpush1.bf16.msra.mxu0 %v690
  %5657 = vmatprep.subr.bf16.mxu0 0
  %5658 = vmatpush1.bf16.msra.mxu0 %v691
  %5659 = vmatprep.subr.bf16.mxu0 0
  %5660 = vmatpush1.bf16.msra.mxu0 %v692
  %5661 = vmatprep.subr.bf16.mxu0 0
  %5662 = vmatpush1.bf16.msra.mxu0 %v693
  %5663 = vmatprep.subr.bf16.mxu0 0
  %5664 = vmatpush1.bf16.msra.mxu0 %v694
  %5665 = vmatprep.subr.bf16.mxu0 0
  %5666 = vmatpush1.bf16.msra.mxu0 %v695
  %5667 = vmatprep.subr.bf16.mxu0 0
  %5668 = vmatpush1.bf16.msra.mxu0 %v696
  %5669 = vmatprep.subr.bf16.mxu0 0
  %5670 = vmatpush1.bf16.msra.mxu0 %v697
  %5671 = vmatprep.subr.bf16.mxu0 0
  %5672 = vmatpush1.bf16.msra.mxu0 %v876
  %5673 = vmatprep.subr.bf16.mxu0 0
  %5674 = vmatpush1.bf16.msra.mxu0 0
  %5675 = vmatprep.subr.bf16.mxu0 0
  %5676 = vmatpush1.bf16.msra.mxu0 0
  %5677 = vmatprep.subr.bf16.mxu0 0
  %5678 = vmatpush1.bf16.msra.mxu0 0
  %5679 = vmatprep.subr.bf16.mxu0 0
  %5680 = vmatpush1.bf16.msra.mxu0 0
  %5681 = vmatprep.subr.bf16.mxu0 0
  %5682 = vmatpush1.bf16.msra.mxu0 0
  %5683 = vmatprep.subr.bf16.mxu0 0
  %5684 = vmatpush1.bf16.msra.mxu0 0
  %5685 = vmatprep.subr.bf16.mxu0 0
  %5686 = vmatpush1.bf16.msra.mxu0 0
  %5687 = vmatprep.mubr.bf16.mxu0 %v5547
  %5688 = vmatmul.mubr.bf16.gmra.mrb[0].mxu0 %v5499
  %v5689 = vpop.f32.mrb[0].mxu0
  %v5690 = vadd.f32 %v5602, %v5689
  %v5691 = vpop.f32.mrb[0].mxu0
  %v5692 = vpop.f32.mrb[0].mxu0
  %v5693 = vadd.f32 %v5605, %v5692
  %v5694 = vpop.f32.mrb[0].mxu0
  %5695 = vmatprep.mubr.bf16.mxu0 %v5550
  %5696 = vmatmul.mubr.bf16.gmra.mrb[0].mxu0 %v5503
  %v5697 = vpop.f32.mrb[0].mxu0
  %v5698 = vadd.f32 %v5610, %v5697
  %v5699 = vpop.f32.mrb[0].mxu0
  %v5700 = vpop.f32.mrb[0].mxu0
  %v5701 = vadd.f32 %v5613, %v5700
  %v5702 = vpop.f32.mrb[0].mxu0
  %5703 = vmatprep.mubr.bf16.mxu0 %v5553
  %5704 = vmatmul.mubr.bf16.gmra.mrb[0].mxu0 %v5507
  %v5705 = vpop.f32.mrb[0].mxu0
  %v5706 = vadd.f32 %v5618, %v5705
  %v5707 = vpop.f32.mrb[0].mxu0
  %v5708 = vpop.f32.mrb[0].mxu0
  %v5709 = vadd.f32 %v5621, %v5708
  %v5710 = vpop.f32.mrb[0].mxu0
  %5711 = vmatprep.mubr.bf16.mxu0 %v5556
  %5712 = vmatmul.mubr.bf16.gmra.mrb[0].mxu0 %v5511
  %v5713 = vpop.f32.mrb[0].mxu0
  %v5714 = vadd.f32 %v5626, %v5713
  %v5715 = vpop.f32.mrb[0].mxu0
  %v5716 = vpop.f32.mrb[0].mxu0
  %v5717 = vadd.f32 %v5629, %v5716
  %v5718 = vpop.f32.mrb[0].mxu0
  %5719 = vmatprep.mubr.bf16.mxu0 %v5559
  %5720 = vmatmul.mubr.bf16.gmra.mrb[0].mxu0 %v5515
  %v5721 = vpop.f32.mrb[0].mxu0
  %v5722 = vadd.f32 %v5634, %v5721
  %v5723 = vpop.f32.mrb[0].mxu0
  %v5724 = vpop.f32.mrb[0].mxu0
  %v5725 = vadd.f32 %v5637, %v5724
  %v5726 = vpop.f32.mrb[0].mxu0
  %5727 = vmatprep.mubr.bf16.mxu0 %v5562
  %5728 = vmatmul.mubr.bf16.gmra.mrb[0].mxu0 %v5519
  %v5729 = vpop.f32.mrb[0].mxu0
  %v5730 = vadd.f32 %v5642, %v5729
  %v5731 = vpop.f32.mrb[0].mxu0
  %v5732 = vpop.f32.mrb[0].mxu0
  %v5733 = vadd.f32 %v5645, %v5732
  %v5734 = vpop.f32.mrb[0].mxu0
  %5735 = vmatprep.mubr.bf16.mxu0 %v5565
  %5736 = vmatmul.mubr.bf16.gmra.mrb[0].mxu0 %v5523
  %v5737 = vpop.f32.mrb[0].mxu0
  %v5738 = vadd.f32 %v5650, %v5737
  %v5739 = vpop.f32.mrb[0].mxu0
  %v5740 = vpop.f32.mrb[0].mxu0
  %v5741 = vpop.f32.mrb[0].mxu0
  %5742 = vdwg.mxu0
  %v5743 = vpack.c.bf16 %v5693, %v5690
  %v5744 = vpack.c.bf16 %v5701, %v5698
  %v5745 = vpack.c.bf16 %v5709, %v5706
  %v5746 = vpack.c.bf16 %v5717, %v5714
  %v5747 = vpack.c.bf16 %v5725, %v5722
  %v5748 = vpack.c.bf16 %v5733, %v5730
  %v5749 = vpack.c.bf16 %v5738, %v5738
  %s5750 = scalar_lea.vmem %s3, 576
  %v5751 = vld [vmem:[%s5750] sm:$0xf]
  %v5752 = vld [vmem:[%s5750 + $0x4] sm:$0xf]
  %v5753 = vld [vmem:[%s5750 + $0x8] sm:$0xf]
  %v5754 = vld [vmem:[%s5750 + $0xc] sm:$0xf]
  %v5755 = vld [vmem:[%s5750 + $0x10] sm:$0xf]
  %v5756 = vld [vmem:[%s5750 + $0x14] sm:$0xf]
  %v5757 = vld [vmem:[%s5750 + $0x18] sm:$0xf]
  %v5758 = vld [vmem:[%s5750 + $0x1c] sm:$0xf]
  %v5759 = vld [vmem:[%s5750 + $0x20] sm:$0xf]
  %v5760 = vld [vmem:[%s5750 + $0x24] sm:$0xf]
  %v5761 = vld [vmem:[%s5750 + $0x28] sm:$0xf]
  %v5762 = vld [vmem:[%s5750 + $0x2c] sm:$0xf]
  %v5763 = vld [vmem:[%s5750 + $0x30] sm:$0xf]
  %v5764 = vld [vmem:[%s5750 + $0x34] sm:$0xf]
  %v5765 = vld [vmem:[%s5750 + $0x38] sm:$0xf]
  %v5766 = vld [vmem:[%s5750 + $0x3c] sm:$0xf]
  %v5783 = vunpack.c.l.b16 %v5751
  %v5784 = vunpack.c.l.b16 %v5752
  %v5785 = vunpack.c.l.b16 %v5753
  %v5786 = vunpack.c.l.b16 %v5754
  %v5787 = vunpack.c.l.b16 %v5755
  %v5788 = vunpack.c.l.b16 %v5756
  %v5789 = vunpack.c.l.b16 %v5757
  %v5790 = vunpack.c.l.b16 %v5758
  %v5791 = vunpack.c.l.b16 %v5759
  %v5792 = vunpack.c.l.b16 %v5760
  %v5793 = vunpack.c.l.b16 %v5761
  %v5794 = vunpack.c.l.b16 %v5762
  %v5795 = vunpack.c.l.b16 %v5763
  %v5796 = vunpack.c.l.b16 %v5764
  %v5797 = vunpack.c.l.b16 %v5765
  %v5798 = vunpack.c.l.b16 %v5766
  %v5799 = vpack.c.b16 %v5784, %v5783
  %v5800 = vpack.c.b16 %v5786, %v5785
  %v5801 = vpack.c.b16 %v5788, %v5787
  %v5802 = vpack.c.b16 %v5790, %v5789
  %v5803 = vpack.c.b16 %v5792, %v5791
  %v5804 = vpack.c.b16 %v5794, %v5793
  %v5805 = vpack.c.b16 %v5796, %v5795
  %v5806 = vpack.c.b16 %v5798, %v5797
  %5815 = vmatprep.subr.bf16.mxu0 0
  %5816 = vmatpush1.bf16.msra.mxu0 %v5799
  %5817 = vmatprep.subr.bf16.mxu0 0
  %5818 = vmatpush1.bf16.msra.mxu0 %v5800
  %5819 = vmatprep.subr.bf16.mxu0 0
  %5820 = vmatpush1.bf16.msra.mxu0 %v5801
  %5821 = vmatprep.subr.bf16.mxu0 0
  %5822 = vmatpush1.bf16.msra.mxu0 %v5802
  %5823 = vmatprep.subr.bf16.mxu0 0
  %5824 = vmatpush1.bf16.msra.mxu0 %v5803
  %5825 = vmatprep.subr.bf16.mxu0 0
  %5826 = vmatpush1.bf16.msra.mxu0 %v5804
  %5827 = vmatprep.subr.bf16.mxu0 0
  %5828 = vmatpush1.bf16.msra.mxu0 %v5805
  %5829 = vmatprep.subr.bf16.mxu0 0
  %5830 = vmatpush1.bf16.msra.mxu0 %v5806
  %5831 = vmatprep.subr.bf16.mxu0 0
  %5832 = vmatpush1.bf16.msra.mxu0 0
  %5833 = vmatprep.subr.bf16.mxu0 0
  %5834 = vmatpush1.bf16.msra.mxu0 0
  %5835 = vmatprep.subr.bf16.mxu0 0
  %5836 = vmatpush1.bf16.msra.mxu0 0
  %5837 = vmatprep.subr.bf16.mxu0 0
  %5838 = vmatpush1.bf16.msra.mxu0 0
  %5839 = vmatprep.subr.bf16.mxu0 0
  %5840 = vmatpush1.bf16.msra.mxu0 0
  %5841 = vmatprep.subr.bf16.mxu0 0
  %5842 = vmatpush1.bf16.msra.mxu0 0
  %5843 = vmatprep.subr.bf16.mxu0 0
  %5844 = vmatpush1.bf16.msra.mxu0 0
  %5845 = vmatprep.subr.bf16.mxu0 0
  %5846 = vmatpush1.bf16.msra.mxu0 0
  %5847 = vmatprep.mubr.bf16.mxu0 0
  %5848 = vmatmul.mubr.bf16.gmra.mrb[0].mxu0 %v5743
  %v5849 = vpop.f32.mrb[0].mxu0
  %v5850 = vadd.f32 0.0, %v5849
  %v5851 = vpop.f32.mrb[0].mxu0
  %v5852 = vpop.f32.mrb[0].mxu0
  %v5853 = vadd.f32 0.0, %v5852
  %v5854 = vpop.f32.mrb[0].mxu0
  %5855 = vmatprep.mubr.bf16.mxu0 0
  %5856 = vmatmul.mubr.bf16.gmra.mrb[0].mxu0 %v5744
  %v5857 = vpop.f32.mrb[0].mxu0
  %v5858 = vadd.f32 0.0, %v5857
  %v5859 = vpop.f32.mrb[0].mxu0
  %v5860 = vpop.f32.mrb[0].mxu0
  %v5861 = vadd.f32 0.0, %v5860
  %v5862 = vpop.f32.mrb[0].mxu0
  %5863 = vmatprep.mubr.bf16.mxu0 0
  %5864 = vmatmul.mubr.bf16.gmra.mrb[0].mxu0 %v5745
  %v5865 = vpop.f32.mrb[0].mxu0
  %v5866 = vadd.f32 0.0, %v5865
  %v5867 = vpop.f32.mrb[0].mxu0
  %v5868 = vpop.f32.mrb[0].mxu0
  %v5869 = vadd.f32 0.0, %v5868
  %v5870 = vpop.f32.mrb[0].mxu0
  %5871 = vmatprep.mubr.bf16.mxu0 0
  %5872 = vmatmul.mubr.bf16.gmra.mrb[0].mxu0 %v5746
  %v5873 = vpop.f32.mrb[0].mxu0
  %v5874 = vadd.f32 0.0, %v5873
  %v5875 = vpop.f32.mrb[0].mxu0
  %v5876 = vpop.f32.mrb[0].mxu0
  %v5877 = vadd.f32 0.0, %v5876
  %v5878 = vpop.f32.mrb[0].mxu0
  %5879 = vmatprep.mubr.bf16.mxu0 0
  %5880 = vmatmul.mubr.bf16.gmra.mrb[0].mxu0 %v5747
  %v5881 = vpop.f32.mrb[0].mxu0
  %v5882 = vadd.f32 0.0, %v5881
  %v5883 = vpop.f32.mrb[0].mxu0
  %v5884 = vpop.f32.mrb[0].mxu0
  %v5885 = vadd.f32 0.0, %v5884
  %v5886 = vpop.f32.mrb[0].mxu0
  %5887 = vmatprep.mubr.bf16.mxu0 0
  %5888 = vmatmul.mubr.bf16.gmra.mrb[0].mxu0 %v5748
  %v5889 = vpop.f32.mrb[0].mxu0
  %v5890 = vadd.f32 0.0, %v5889
  %v5891 = vpop.f32.mrb[0].mxu0
  %v5892 = vpop.f32.mrb[0].mxu0
  %v5893 = vadd.f32 0.0, %v5892
  %v5894 = vpop.f32.mrb[0].mxu0
  %5895 = vmatprep.mubr.bf16.mxu0 0
  %5896 = vmatmul.mubr.bf16.gmra.mrb[0].mxu0 %v5749
  %v5897 = vpop.f32.mrb[0].mxu0
  %v5898 = vadd.f32 0.0, %v5897
  %v5899 = vpop.f32.mrb[0].mxu0
  %v5900 = vpop.f32.mrb[0].mxu0
  %v5901 = vpop.f32.mrb[0].mxu0
  %5902 = vdwg.mxu0
  %v5903 = vadd.f32 %v5379, %v5850
  %v5904 = vadd.f32 %v5380, %v5853
  %v5905 = vadd.f32 %v5381, %v5858
  %v5906 = vadd.f32 %v5382, %v5861
  %v5907 = vadd.f32 %v5383, %v5866
  %v5908 = vadd.f32 %v5384, %v5869
  %v5909 = vadd.f32 %v5385, %v5874
  %v5910 = vadd.f32 %v5386, %v5877
  %v5911 = vadd.f32 %v5387, %v5882
  %v5912 = vadd.f32 %v5388, %v5885
  %v5913 = vadd.f32 %v5389, %v5890
  %v5914 = vadd.f32 %v5390, %v5893
  %v5915 = vadd.f32 %v5391, %v5898
  %s5916 = scalar_lea.vmem %s2, 2080
  %v5917 = vld [vmem:[%s5916] sm:$0xff]
  %v5918 = vld [vmem:[%s5916 + $0x8] sm:$0xff]
  %v5919 = vld [vmem:[%s5916 + $0x10] sm:$0xff]
  %v5920 = vld [vmem:[%s5916 + $0x18] sm:$0xff]
  %v5921 = vld [vmem:[%s5916 + $0x20] sm:$0xff]
  %v5922 = vld [vmem:[%s5916 + $0x28] sm:$0xff]
  %v5923 = vld [vmem:[%s5916 + $0x30] sm:$0xff]
  %v5924 = vld [vmem:[%s5916 + $0x38] sm:$0xff]
  %v5925 = vld [vmem:[%s5916 + $0x40] sm:$0xff]
  %v5926 = vld [vmem:[%s5916 + $0x48] sm:$0xff]
  %v5927 = vld [vmem:[%s5916 + $0x50] sm:$0xff]
  %v5928 = vld [vmem:[%s5916 + $0x58] sm:$0xff]
  %v5929 = vld [vmem:[%s5916 + $0x60] sm:$0xff]
  %v5930 = vld [vmem:[%s5916 + $0x68] sm:$0xff]
  %v5931 = vld [vmem:[%s5916 + $0x70] sm:$0xff]
  %v5932 = vld [vmem:[%s5916 + $0x78] sm:$0xff]
  %v5933 = vld [vmem:[%s5916 + $0x80] sm:$0xff]
  %v5934 = vld [vmem:[%s5916 + $0x88] sm:$0xff]
  %v5935 = vld [vmem:[%s5916 + $0x90] sm:$0xff]
  %v5936 = vld [vmem:[%s5916 + $0x98] sm:$0xff]
  %v5937 = vld [vmem:[%s5916 + $0xa0] sm:$0xff]
  %v5938 = vld [vmem:[%s5916 + $0xa8] sm:$0xff]
  %v5939 = vld [vmem:[%s5916 + $0xb0] sm:$0xff]
  %v5940 = vld [vmem:[%s5916 + $0xb8] sm:$0xff]
  %v5941 = vld [vmem:[%s5916 + $0xc0] sm:$0x11]
  %v5942 = vld [vmem:[%s5916 + $0xc8] sm:$0x11]
  %v5969 = vunpack.c.l.b16 %v5917
  %v5970 = vunpack.c.h.b16 %v5917
  %v5971 = vunpack.c.l.b16 %v5918
  %v5972 = vunpack.c.h.b16 %v5918
  %v5973 = vunpack.c.l.b16 %v5919
  %v5974 = vunpack.c.h.b16 %v5919
  %v5975 = vunpack.c.l.b16 %v5920
  %v5976 = vunpack.c.h.b16 %v5920
  %v5977 = vunpack.c.l.b16 %v5921
  %v5978 = vunpack.c.h.b16 %v5921
  %v5979 = vunpack.c.l.b16 %v5922
  %v5980 = vunpack.c.h.b16 %v5922
  %v5981 = vunpack.c.l.b16 %v5923
  %v5982 = vunpack.c.h.b16 %v5923
  %v5983 = vunpack.c.l.b16 %v5924
  %v5984 = vunpack.c.h.b16 %v5924
  %v5985 = vunpack.c.l.b16 %v5925
  %v5986 = vunpack.c.h.b16 %v5925
  %v5987 = vunpack.c.l.b16 %v5926
  %v5988 = vunpack.c.h.b16 %v5926
  %v5989 = vunpack.c.l.b16 %v5927
  %v5990 = vunpack.c.h.b16 %v5927
  %v5991 = vunpack.c.l.b16 %v5928
  %v5992 = vunpack.c.h.b16 %v5928
  %v5993 = vunpack.c.l.b16 %v5929
  %v5994 = vunpack.c.h.b16 %v5929
  %v5995 = vunpack.c.l.b16 %v5930
  %v5996 = vunpack.c.h.b16 %v5930
  %v5997 = vunpack.c.l.b16 %v5931
  %v5998 = vunpack.c.h.b16 %v5931
  %v5999 = vunpack.c.l.b16 %v5932
  %v6000 = vunpack.c.h.b16 %v5932
  %v6001 = vunpack.c.l.b16 %v5933
  %v6002 = vunpack.c.h.b16 %v5933
  %v6003 = vunpack.c.l.b16 %v5934
  %v6004 = vunpack.c.h.b16 %v5934
  %v6005 = vunpack.c.l.b16 %v5935
  %v6006 = vunpack.c.h.b16 %v5935
  %v6007 = vunpack.c.l.b16 %v5936
  %v6008 = vunpack.c.h.b16 %v5936
  %v6009 = vunpack.c.l.b16 %v5937
  %v6010 = vunpack.c.h.b16 %v5937
  %v6011 = vunpack.c.l.b16 %v5938
  %v6012 = vunpack.c.h.b16 %v5938
  %v6013 = vunpack.c.l.b16 %v5939
  %v6014 = vunpack.c.h.b16 %v5939
  %v6015 = vunpack.c.l.b16 %v5940
  %v6016 = vunpack.c.h.b16 %v5940
  %v6017 = vunpack.c.l.b16 %v5941
  %v6018 = vunpack.c.h.b16 %v5941
  %v6019 = vunpack.c.l.b16 %v5942
  %v6020 = vunpack.c.h.b16 %v5942
  %v6021 = vpack.c.b16 %v5973, %v5969
  %v6022 = vpack.c.b16 %v5974, %v5970
  %v6023 = vpack.c.b16 %v5975, %v5971
  %v6024 = vpack.c.b16 %v5976, %v5972
  %v6025 = vpack.c.b16 %v5981, %v5977
  %v6026 = vpack.c.b16 %v5982, %v5978
  %v6027 = vpack.c.b16 %v5983, %v5979
  %v6028 = vpack.c.b16 %v5984, %v5980
  %v6029 = vpack.c.b16 %v5989, %v5985
  %v6030 = vpack.c.b16 %v5990, %v5986
  %v6031 = vpack.c.b16 %v5991, %v5987
  %v6032 = vpack.c.b16 %v5992, %v5988
  %v6033 = vpack.c.b16 %v5997, %v5993
  %v6034 = vpack.c.b16 %v5998, %v5994
  %v6035 = vpack.c.b16 %v5999, %v5995
  %v6036 = vpack.c.b16 %v6000, %v5996
  %v6037 = vpack.c.b16 %v6005, %v6001
  %v6038 = vpack.c.b16 %v6006, %v6002
  %v6039 = vpack.c.b16 %v6007, %v6003
  %v6040 = vpack.c.b16 %v6008, %v6004
  %v6041 = vpack.c.b16 %v6013, %v6009
  %v6042 = vpack.c.b16 %v6014, %v6010
  %v6043 = vpack.c.b16 %v6015, %v6011
  %v6044 = vpack.c.b16 %v6016, %v6012
  %v6045 = vpack.c.b16 %v6017, %v6017
  %v6046 = vpack.c.b16 %v6018, %v6018
  %v6047 = vpack.c.b16 %v6019, %v6019
  %v6048 = vpack.c.b16 %v6020, %v6020
  %v6071 = vsel %vm852, %v6024, 0
  %v6074 = vsel %vm852, %v6028, 0
  %v6077 = vsel %vm852, %v6032, 0
  %v6080 = vsel %vm852, %v6036, 0
  %v6083 = vsel %vm852, %v6040, 0
  %v6086 = vsel %vm852, %v6044, 0
  %v6089 = vsel %vm852, %v6048, 0
  %6091 = vmatprep.subr.bf16.mxu0 0
  %6092 = vmatpush1.bf16.msra.mxu0 %v674
  %6093 = vmatprep.subr.bf16.mxu0 0
  %6094 = vmatpush1.bf16.msra.mxu0 %v675
  %6095 = vmatprep.subr.bf16.mxu0 0
  %6096 = vmatpush1.bf16.msra.mxu0 %v676
  %6097 = vmatprep.subr.bf16.mxu0 0
  %6098 = vmatpush1.bf16.msra.mxu0 %v677
  %6099 = vmatprep.subr.bf16.mxu0 0
  %6100 = vmatpush1.bf16.msra.mxu0 %v678
  %6101 = vmatprep.subr.bf16.mxu0 0
  %6102 = vmatpush1.bf16.msra.mxu0 %v679
  %6103 = vmatprep.subr.bf16.mxu0 0
  %6104 = vmatpush1.bf16.msra.mxu0 %v680
  %6105 = vmatprep.subr.bf16.mxu0 0
  %6106 = vmatpush1.bf16.msra.mxu0 %v681
  %6107 = vmatprep.subr.bf16.mxu0 0
  %6108 = vmatpush1.bf16.msra.mxu0 %v682
  %6109 = vmatprep.subr.bf16.mxu0 0
  %6110 = vmatpush1.bf16.msra.mxu0 %v683
  %6111 = vmatprep.subr.bf16.mxu0 0
  %6112 = vmatpush1.bf16.msra.mxu0 %v684
  %6113 = vmatprep.subr.bf16.mxu0 0
  %6114 = vmatpush1.bf16.msra.mxu0 %v685
  %6115 = vmatprep.subr.bf16.mxu0 0
  %6116 = vmatpush1.bf16.msra.mxu0 %v686
  %6117 = vmatprep.subr.bf16.mxu0 0
  %6118 = vmatpush1.bf16.msra.mxu0 %v687
  %6119 = vmatprep.subr.bf16.mxu0 0
  %6120 = vmatpush1.bf16.msra.mxu0 %v688
  %6121 = vmatprep.subr.bf16.mxu0 0
  %6122 = vmatpush1.bf16.msra.mxu0 %v689
  %6123 = vmatprep.mubr.bf16.mxu0 %v6022
  %6124 = vmatmul.mubr.bf16.gmra.mrb[0].mxu0 %v6021
  %v6125 = vpop.f32.mrb[0].mxu0
  %v6126 = vadd.f32 0.0, %v6125
  %v6127 = vpop.f32.mrb[0].mxu0
  %v6128 = vpop.f32.mrb[0].mxu0
  %v6129 = vadd.f32 0.0, %v6128
  %v6130 = vpop.f32.mrb[0].mxu0
  %6131 = vmatprep.mubr.bf16.mxu0 %v6026
  %6132 = vmatmul.mubr.bf16.gmra.mrb[0].mxu0 %v6025
  %v6133 = vpop.f32.mrb[0].mxu0
  %v6134 = vadd.f32 0.0, %v6133
  %v6135 = vpop.f32.mrb[0].mxu0
  %v6136 = vpop.f32.mrb[0].mxu0
  %v6137 = vadd.f32 0.0, %v6136
  %v6138 = vpop.f32.mrb[0].mxu0
  %6139 = vmatprep.mubr.bf16.mxu0 %v6030
  %6140 = vmatmul.mubr.bf16.gmra.mrb[0].mxu0 %v6029
  %v6141 = vpop.f32.mrb[0].mxu0
  %v6142 = vadd.f32 0.0, %v6141
  %v6143 = vpop.f32.mrb[0].mxu0
  %v6144 = vpop.f32.mrb[0].mxu0
  %v6145 = vadd.f32 0.0, %v6144
  %v6146 = vpop.f32.mrb[0].mxu0
  %6147 = vmatprep.mubr.bf16.mxu0 %v6034
  %6148 = vmatmul.mubr.bf16.gmra.mrb[0].mxu0 %v6033
  %v6149 = vpop.f32.mrb[0].mxu0
  %v6150 = vadd.f32 0.0, %v6149
  %v6151 = vpop.f32.mrb[0].mxu0
  %v6152 = vpop.f32.mrb[0].mxu0
  %v6153 = vadd.f32 0.0, %v6152
  %v6154 = vpop.f32.mrb[0].mxu0
  %6155 = vmatprep.mubr.bf16.mxu0 %v6038
  %6156 = vmatmul.mubr.bf16.gmra.mrb[0].mxu0 %v6037
  %v6157 = vpop.f32.mrb[0].mxu0
  %v6158 = vadd.f32 0.0, %v6157
  %v6159 = vpop.f32.mrb[0].mxu0
  %v6160 = vpop.f32.mrb[0].mxu0
  %v6161 = vadd.f32 0.0, %v6160
  %v6162 = vpop.f32.mrb[0].mxu0
  %6163 = vmatprep.mubr.bf16.mxu0 %v6042
  %6164 = vmatmul.mubr.bf16.gmra.mrb[0].mxu0 %v6041
  %v6165 = vpop.f32.mrb[0].mxu0
  %v6166 = vadd.f32 0.0, %v6165
  %v6167 = vpop.f32.mrb[0].mxu0
  %v6168 = vpop.f32.mrb[0].mxu0
  %v6169 = vadd.f32 0.0, %v6168
  %v6170 = vpop.f32.mrb[0].mxu0
  %6171 = vmatprep.mubr.bf16.mxu0 %v6046
  %6172 = vmatmul.mubr.bf16.gmra.mrb[0].mxu0 %v6045
  %v6173 = vpop.f32.mrb[0].mxu0
  %v6174 = vadd.f32 0.0, %v6173
  %v6175 = vpop.f32.mrb[0].mxu0
  %v6176 = vpop.f32.mrb[0].mxu0
  %v6177 = vpop.f32.mrb[0].mxu0
  %6178 = vdwg.mxu0
  %6179 = vmatprep.subr.bf16.mxu0 0
  %6180 = vmatpush1.bf16.msra.mxu0 %v690
  %6181 = vmatprep.subr.bf16.mxu0 0
  %6182 = vmatpush1.bf16.msra.mxu0 %v691
  %6183 = vmatprep.subr.bf16.mxu0 0
  %6184 = vmatpush1.bf16.msra.mxu0 %v692
  %6185 = vmatprep.subr.bf16.mxu0 0
  %6186 = vmatpush1.bf16.msra.mxu0 %v693
  %6187 = vmatprep.subr.bf16.mxu0 0
  %6188 = vmatpush1.bf16.msra.mxu0 %v694
  %6189 = vmatprep.subr.bf16.mxu0 0
  %6190 = vmatpush1.bf16.msra.mxu0 %v695
  %6191 = vmatprep.subr.bf16.mxu0 0
  %6192 = vmatpush1.bf16.msra.mxu0 %v696
  %6193 = vmatprep.subr.bf16.mxu0 0
  %6194 = vmatpush1.bf16.msra.mxu0 %v697
  %6195 = vmatprep.subr.bf16.mxu0 0
  %6196 = vmatpush1.bf16.msra.mxu0 %v876
  %6197 = vmatprep.subr.bf16.mxu0 0
  %6198 = vmatpush1.bf16.msra.mxu0 0
  %6199 = vmatprep.subr.bf16.mxu0 0
  %6200 = vmatpush1.bf16.msra.mxu0 0
  %6201 = vmatprep.subr.bf16.mxu0 0
  %6202 = vmatpush1.bf16.msra.mxu0 0
  %6203 = vmatprep.subr.bf16.mxu0 0
  %6204 = vmatpush1.bf16.msra.mxu0 0
  %6205 = vmatprep.subr.bf16.mxu0 0
  %6206 = vmatpush1.bf16.msra.mxu0 0
  %6207 = vmatprep.subr.bf16.mxu0 0
  %6208 = vmatpush1.bf16.msra.mxu0 0
  %6209 = vmatprep.subr.bf16.mxu0 0
  %6210 = vmatpush1.bf16.msra.mxu0 0
  %6211 = vmatprep.mubr.bf16.mxu0 %v6071
  %6212 = vmatmul.mubr.bf16.gmra.mrb[0].mxu0 %v6023
  %v6213 = vpop.f32.mrb[0].mxu0
  %v6214 = vadd.f32 %v6126, %v6213
  %v6215 = vpop.f32.mrb[0].mxu0
  %v6216 = vpop.f32.mrb[0].mxu0
  %v6217 = vadd.f32 %v6129, %v6216
  %v6218 = vpop.f32.mrb[0].mxu0
  %6219 = vmatprep.mubr.bf16.mxu0 %v6074
  %6220 = vmatmul.mubr.bf16.gmra.mrb[0].mxu0 %v6027
  %v6221 = vpop.f32.mrb[0].mxu0
  %v6222 = vadd.f32 %v6134, %v6221
  %v6223 = vpop.f32.mrb[0].mxu0
  %v6224 = vpop.f32.mrb[0].mxu0
  %v6225 = vadd.f32 %v6137, %v6224
  %v6226 = vpop.f32.mrb[0].mxu0
  %6227 = vmatprep.mubr.bf16.mxu0 %v6077
  %6228 = vmatmul.mubr.bf16.gmra.mrb[0].mxu0 %v6031
  %v6229 = vpop.f32.mrb[0].mxu0
  %v6230 = vadd.f32 %v6142, %v6229
  %v6231 = vpop.f32.mrb[0].mxu0
  %v6232 = vpop.f32.mrb[0].mxu0
  %v6233 = vadd.f32 %v6145, %v6232
  %v6234 = vpop.f32.mrb[0].mxu0
  %6235 = vmatprep.mubr.bf16.mxu0 %v6080
  %6236 = vmatmul.mubr.bf16.gmra.mrb[0].mxu0 %v6035
  %v6237 = vpop.f32.mrb[0].mxu0
  %v6238 = vadd.f32 %v6150, %v6237
  %v6239 = vpop.f32.mrb[0].mxu0
  %v6240 = vpop.f32.mrb[0].mxu0
  %v6241 = vadd.f32 %v6153, %v6240
  %v6242 = vpop.f32.mrb[0].mxu0
  %6243 = vmatprep.mubr.bf16.mxu0 %v6083
  %6244 = vmatmul.mubr.bf16.gmra.mrb[0].mxu0 %v6039
  %v6245 = vpop.f32.mrb[0].mxu0
  %v6246 = vadd.f32 %v6158, %v6245
  %v6247 = vpop.f32.mrb[0].mxu0
  %v6248 = vpop.f32.mrb[0].mxu0
  %v6249 = vadd.f32 %v6161, %v6248
  %v6250 = vpop.f32.mrb[0].mxu0
  %6251 = vmatprep.mubr.bf16.mxu0 %v6086
  %6252 = vmatmul.mubr.bf16.gmra.mrb[0].mxu0 %v6043
  %v6253 = vpop.f32.mrb[0].mxu0
  %v6254 = vadd.f32 %v6166, %v6253
  %v6255 = vpop.f32.mrb[0].mxu0
  %v6256 = vpop.f32.mrb[0].mxu0
  %v6257 = vadd.f32 %v6169, %v6256
  %v6258 = vpop.f32.mrb[0].mxu0
  %6259 = vmatprep.mubr.bf16.mxu0 %v6089
  %6260 = vmatmul.mubr.bf16.gmra.mrb[0].mxu0 %v6047
  %v6261 = vpop.f32.mrb[0].mxu0
  %v6262 = vadd.f32 %v6174, %v6261
  %v6263 = vpop.f32.mrb[0].mxu0
  %v6264 = vpop.f32.mrb[0].mxu0
  %v6265 = vpop.f32.mrb[0].mxu0
  %6266 = vdwg.mxu0
  %v6267 = vpack.c.bf16 %v6217, %v6214
  %v6268 = vpack.c.bf16 %v6225, %v6222
  %v6269 = vpack.c.bf16 %v6233, %v6230
  %v6270 = vpack.c.bf16 %v6241, %v6238
  %v6271 = vpack.c.bf16 %v6249, %v6246
  %v6272 = vpack.c.bf16 %v6257, %v6254
  %v6273 = vpack.c.bf16 %v6262, %v6262
  %s6274 = scalar_lea.vmem %s3, 640
  %v6275 = vld [vmem:[%s6274] sm:$0xf]
  %v6276 = vld [vmem:[%s6274 + $0x4] sm:$0xf]
  %v6277 = vld [vmem:[%s6274 + $0x8] sm:$0xf]
  %v6278 = vld [vmem:[%s6274 + $0xc] sm:$0xf]
  %v6279 = vld [vmem:[%s6274 + $0x10] sm:$0xf]
  %v6280 = vld [vmem:[%s6274 + $0x14] sm:$0xf]
  %v6281 = vld [vmem:[%s6274 + $0x18] sm:$0xf]
  %v6282 = vld [vmem:[%s6274 + $0x1c] sm:$0xf]
  %v6283 = vld [vmem:[%s6274 + $0x20] sm:$0xf]
  %v6284 = vld [vmem:[%s6274 + $0x24] sm:$0xf]
  %v6285 = vld [vmem:[%s6274 + $0x28] sm:$0xf]
  %v6286 = vld [vmem:[%s6274 + $0x2c] sm:$0xf]
  %v6287 = vld [vmem:[%s6274 + $0x30] sm:$0xf]
  %v6288 = vld [vmem:[%s6274 + $0x34] sm:$0xf]
  %v6289 = vld [vmem:[%s6274 + $0x38] sm:$0xf]
  %v6290 = vld [vmem:[%s6274 + $0x3c] sm:$0xf]
  %v6307 = vunpack.c.l.b16 %v6275
  %v6308 = vunpack.c.l.b16 %v6276
  %v6309 = vunpack.c.l.b16 %v6277
  %v6310 = vunpack.c.l.b16 %v6278
  %v6311 = vunpack.c.l.b16 %v6279
  %v6312 = vunpack.c.l.b16 %v6280
  %v6313 = vunpack.c.l.b16 %v6281
  %v6314 = vunpack.c.l.b16 %v6282
  %v6315 = vunpack.c.l.b16 %v6283
  %v6316 = vunpack.c.l.b16 %v6284
  %v6317 = vunpack.c.l.b16 %v6285
  %v6318 = vunpack.c.l.b16 %v6286
  %v6319 = vunpack.c.l.b16 %v6287
  %v6320 = vunpack.c.l.b16 %v6288
  %v6321 = vunpack.c.l.b16 %v6289
  %v6322 = vunpack.c.l.b16 %v6290
  %v6323 = vpack.c.b16 %v6308, %v6307
  %v6324 = vpack.c.b16 %v6310, %v6309
  %v6325 = vpack.c.b16 %v6312, %v6311
  %v6326 = vpack.c.b16 %v6314, %v6313
  %v6327 = vpack.c.b16 %v6316, %v6315
  %v6328 = vpack.c.b16 %v6318, %v6317
  %v6329 = vpack.c.b16 %v6320, %v6319
  %v6330 = vpack.c.b16 %v6322, %v6321
  %6339 = vmatprep.subr.bf16.mxu0 0
  %6340 = vmatpush1.bf16.msra.mxu0 %v6323
  %6341 = vmatprep.subr.bf16.mxu0 0
  %6342 = vmatpush1.bf16.msra.mxu0 %v6324
  %6343 = vmatprep.subr.bf16.mxu0 0
  %6344 = vmatpush1.bf16.msra.mxu0 %v6325
  %6345 = vmatprep.subr.bf16.mxu0 0
  %6346 = vmatpush1.bf16.msra.mxu0 %v6326
  %6347 = vmatprep.subr.bf16.mxu0 0
  %6348 = vmatpush1.bf16.msra.mxu0 %v6327
  %6349 = vmatprep.subr.bf16.mxu0 0
  %6350 = vmatpush1.bf16.msra.mxu0 %v6328
  %6351 = vmatprep.subr.bf16.mxu0 0
  %6352 = vmatpush1.bf16.msra.mxu0 %v6329
  %6353 = vmatprep.subr.bf16.mxu0 0
  %6354 = vmatpush1.bf16.msra.mxu0 %v6330
  %6355 = vmatprep.subr.bf16.mxu0 0
  %6356 = vmatpush1.bf16.msra.mxu0 0
  %6357 = vmatprep.subr.bf16.mxu0 0
  %6358 = vmatpush1.bf16.msra.mxu0 0
  %6359 = vmatprep.subr.bf16.mxu0 0
  %6360 = vmatpush1.bf16.msra.mxu0 0
  %6361 = vmatprep.subr.bf16.mxu0 0
  %6362 = vmatpush1.bf16.msra.mxu0 0
  %6363 = vmatprep.subr.bf16.mxu0 0
  %6364 = vmatpush1.bf16.msra.mxu0 0
  %6365 = vmatprep.subr.bf16.mxu0 0
  %6366 = vmatpush1.bf16.msra.mxu0 0
  %6367 = vmatprep.subr.bf16.mxu0 0
  %6368 = vmatpush1.bf16.msra.mxu0 0
  %6369 = vmatprep.subr.bf16.mxu0 0
  %6370 = vmatpush1.bf16.msra.mxu0 0
  %6371 = vmatprep.mubr.bf16.mxu0 0
  %6372 = vmatmul.mubr.bf16.gmra.mrb[0].mxu0 %v6267
  %v6373 = vpop.f32.mrb[0].mxu0
  %v6374 = vadd.f32 0.0, %v6373
  %v6375 = vpop.f32.mrb[0].mxu0
  %v6376 = vpop.f32.mrb[0].mxu0
  %v6377 = vadd.f32 0.0, %v6376
  %v6378 = vpop.f32.mrb[0].mxu0
  %6379 = vmatprep.mubr.bf16.mxu0 0
  %6380 = vmatmul.mubr.bf16.gmra.mrb[0].mxu0 %v6268
  %v6381 = vpop.f32.mrb[0].mxu0
  %v6382 = vadd.f32 0.0, %v6381
  %v6383 = vpop.f32.mrb[0].mxu0
  %v6384 = vpop.f32.mrb[0].mxu0
  %v6385 = vadd.f32 0.0, %v6384
  %v6386 = vpop.f32.mrb[0].mxu0
  %6387 = vmatprep.mubr.bf16.mxu0 0
  %6388 = vmatmul.mubr.bf16.gmra.mrb[0].mxu0 %v6269
  %v6389 = vpop.f32.mrb[0].mxu0
  %v6390 = vadd.f32 0.0, %v6389
  %v6391 = vpop.f32.mrb[0].mxu0
  %v6392 = vpop.f32.mrb[0].mxu0
  %v6393 = vadd.f32 0.0, %v6392
  %v6394 = vpop.f32.mrb[0].mxu0
  %6395 = vmatprep.mubr.bf16.mxu0 0
  %6396 = vmatmul.mubr.bf16.gmra.mrb[0].mxu0 %v6270
  %v6397 = vpop.f32.mrb[0].mxu0
  %v6398 = vadd.f32 0.0, %v6397
  %v6399 = vpop.f32.mrb[0].mxu0
  %v6400 = vpop.f32.mrb[0].mxu0
  %v6401 = vadd.f32 0.0, %v6400
  %v6402 = vpop.f32.mrb[0].mxu0
  %6403 = vmatprep.mubr.bf16.mxu0 0
  %6404 = vmatmul.mubr.bf16.gmra.mrb[0].mxu0 %v6271
  %v6405 = vpop.f32.mrb[0].mxu0
  %v6406 = vadd.f32 0.0, %v6405
  %v6407 = vpop.f32.mrb[0].mxu0
  %v6408 = vpop.f32.mrb[0].mxu0
  %v6409 = vadd.f32 0.0, %v6408
  %v6410 = vpop.f32.mrb[0].mxu0
  %6411 = vmatprep.mubr.bf16.mxu0 0
  %6412 = vmatmul.mubr.bf16.gmra.mrb[0].mxu0 %v6272
  %v6413 = vpop.f32.mrb[0].mxu0
  %v6414 = vadd.f32 0.0, %v6413
  %v6415 = vpop.f32.mrb[0].mxu0
  %v6416 = vpop.f32.mrb[0].mxu0
  %v6417 = vadd.f32 0.0, %v6416
  %v6418 = vpop.f32.mrb[0].mxu0
  %6419 = vmatprep.mubr.bf16.mxu0 0
  %6420 = vmatmul.mubr.bf16.gmra.mrb[0].mxu0 %v6273
  %v6421 = vpop.f32.mrb[0].mxu0
  %v6422 = vadd.f32 0.0, %v6421
  %v6423 = vpop.f32.mrb[0].mxu0
  %v6424 = vpop.f32.mrb[0].mxu0
  %v6425 = vpop.f32.mrb[0].mxu0
  %6426 = vdwg.mxu0
  %v6427 = vadd.f32 %v5903, %v6374
  %v6428 = vadd.f32 %v5904, %v6377
  %v6429 = vadd.f32 %v5905, %v6382
  %v6430 = vadd.f32 %v5906, %v6385
  %v6431 = vadd.f32 %v5907, %v6390
  %v6432 = vadd.f32 %v5908, %v6393
  %v6433 = vadd.f32 %v5909, %v6398
  %v6434 = vadd.f32 %v5910, %v6401
  %v6435 = vadd.f32 %v5911, %v6406
  %v6436 = vadd.f32 %v5912, %v6409
  %v6437 = vadd.f32 %v5913, %v6414
  %v6438 = vadd.f32 %v5914, %v6417
  %v6439 = vadd.f32 %v5915, %v6422
  %s6440 = scalar_lea.vmem %s2, 2288
  %v6441 = vld [vmem:[%s6440] sm:$0xff]
  %v6442 = vld [vmem:[%s6440 + $0x8] sm:$0xff]
  %v6443 = vld [vmem:[%s6440 + $0x10] sm:$0xff]
  %v6444 = vld [vmem:[%s6440 + $0x18] sm:$0xff]
  %v6445 = vld [vmem:[%s6440 + $0x20] sm:$0xff]
  %v6446 = vld [vmem:[%s6440 + $0x28] sm:$0xff]
  %v6447 = vld [vmem:[%s6440 + $0x30] sm:$0xff]
  %v6448 = vld [vmem:[%s6440 + $0x38] sm:$0xff]
  %v6449 = vld [vmem:[%s6440 + $0x40] sm:$0xff]
  %v6450 = vld [vmem:[%s6440 + $0x48] sm:$0xff]
  %v6451 = vld [vmem:[%s6440 + $0x50] sm:$0xff]
  %v6452 = vld [vmem:[%s6440 + $0x58] sm:$0xff]
  %v6453 = vld [vmem:[%s6440 + $0x60] sm:$0xff]
  %v6454 = vld [vmem:[%s6440 + $0x68] sm:$0xff]
  %v6455 = vld [vmem:[%s6440 + $0x70] sm:$0xff]
  %v6456 = vld [vmem:[%s6440 + $0x78] sm:$0xff]
  %v6457 = vld [vmem:[%s6440 + $0x80] sm:$0xff]
  %v6458 = vld [vmem:[%s6440 + $0x88] sm:$0xff]
  %v6459 = vld [vmem:[%s6440 + $0x90] sm:$0xff]
  %v6460 = vld [vmem:[%s6440 + $0x98] sm:$0xff]
  %v6461 = vld [vmem:[%s6440 + $0xa0] sm:$0xff]
  %v6462 = vld [vmem:[%s6440 + $0xa8] sm:$0xff]
  %v6463 = vld [vmem:[%s6440 + $0xb0] sm:$0xff]
  %v6464 = vld [vmem:[%s6440 + $0xb8] sm:$0xff]
  %v6465 = vld [vmem:[%s6440 + $0xc0] sm:$0x11]
  %v6466 = vld [vmem:[%s6440 + $0xc8] sm:$0x11]
  %v6493 = vunpack.c.l.b16 %v6441
  %v6494 = vunpack.c.h.b16 %v6441
  %v6495 = vunpack.c.l.b16 %v6442
  %v6496 = vunpack.c.h.b16 %v6442
  %v6497 = vunpack.c.l.b16 %v6443
  %v6498 = vunpack.c.h.b16 %v6443
  %v6499 = vunpack.c.l.b16 %v6444
  %v6500 = vunpack.c.h.b16 %v6444
  %v6501 = vunpack.c.l.b16 %v6445
  %v6502 = vunpack.c.h.b16 %v6445
  %v6503 = vunpack.c.l.b16 %v6446
  %v6504 = vunpack.c.h.b16 %v6446
  %v6505 = vunpack.c.l.b16 %v6447
  %v6506 = vunpack.c.h.b16 %v6447
  %v6507 = vunpack.c.l.b16 %v6448
  %v6508 = vunpack.c.h.b16 %v6448
  %v6509 = vunpack.c.l.b16 %v6449
  %v6510 = vunpack.c.h.b16 %v6449
  %v6511 = vunpack.c.l.b16 %v6450
  %v6512 = vunpack.c.h.b16 %v6450
  %v6513 = vunpack.c.l.b16 %v6451
  %v6514 = vunpack.c.h.b16 %v6451
  %v6515 = vunpack.c.l.b16 %v6452
  %v6516 = vunpack.c.h.b16 %v6452
  %v6517 = vunpack.c.l.b16 %v6453
  %v6518 = vunpack.c.h.b16 %v6453
  %v6519 = vunpack.c.l.b16 %v6454
  %v6520 = vunpack.c.h.b16 %v6454
  %v6521 = vunpack.c.l.b16 %v6455
  %v6522 = vunpack.c.h.b16 %v6455
  %v6523 = vunpack.c.l.b16 %v6456
  %v6524 = vunpack.c.h.b16 %v6456
  %v6525 = vunpack.c.l.b16 %v6457
  %v6526 = vunpack.c.h.b16 %v6457
  %v6527 = vunpack.c.l.b16 %v6458
  %v6528 = vunpack.c.h.b16 %v6458
  %v6529 = vunpack.c.l.b16 %v6459
  %v6530 = vunpack.c.h.b16 %v6459
  %v6531 = vunpack.c.l.b16 %v6460
  %v6532 = vunpack.c.h.b16 %v6460
  %v6533 = vunpack.c.l.b16 %v6461
  %v6534 = vunpack.c.h.b16 %v6461
  %v6535 = vunpack.c.l.b16 %v6462
  %v6536 = vunpack.c.h.b16 %v6462
  %v6537 = vunpack.c.l.b16 %v6463
  %v6538 = vunpack.c.h.b16 %v6463
  %v6539 = vunpack.c.l.b16 %v6464
  %v6540 = vunpack.c.h.b16 %v6464
  %v6541 = vunpack.c.l.b16 %v6465
  %v6542 = vunpack.c.h.b16 %v6465
  %v6543 = vunpack.c.l.b16 %v6466
  %v6544 = vunpack.c.h.b16 %v6466
  %v6545 = vpack.c.b16 %v6497, %v6493
  %v6546 = vpack.c.b16 %v6498, %v6494
  %v6547 = vpack.c.b16 %v6499, %v6495
  %v6548 = vpack.c.b16 %v6500, %v6496
  %v6549 = vpack.c.b16 %v6505, %v6501
  %v6550 = vpack.c.b16 %v6506, %v6502
  %v6551 = vpack.c.b16 %v6507, %v6503
  %v6552 = vpack.c.b16 %v6508, %v6504
  %v6553 = vpack.c.b16 %v6513, %v6509
  %v6554 = vpack.c.b16 %v6514, %v6510
  %v6555 = vpack.c.b16 %v6515, %v6511
  %v6556 = vpack.c.b16 %v6516, %v6512
  %v6557 = vpack.c.b16 %v6521, %v6517
  %v6558 = vpack.c.b16 %v6522, %v6518
  %v6559 = vpack.c.b16 %v6523, %v6519
  %v6560 = vpack.c.b16 %v6524, %v6520
  %v6561 = vpack.c.b16 %v6529, %v6525
  %v6562 = vpack.c.b16 %v6530, %v6526
  %v6563 = vpack.c.b16 %v6531, %v6527
  %v6564 = vpack.c.b16 %v6532, %v6528
  %v6565 = vpack.c.b16 %v6537, %v6533
  %v6566 = vpack.c.b16 %v6538, %v6534
  %v6567 = vpack.c.b16 %v6539, %v6535
  %v6568 = vpack.c.b16 %v6540, %v6536
  %v6569 = vpack.c.b16 %v6541, %v6541
  %v6570 = vpack.c.b16 %v6542, %v6542
  %v6571 = vpack.c.b16 %v6543, %v6543
  %v6572 = vpack.c.b16 %v6544, %v6544
  %v6595 = vsel %vm852, %v6548, 0
  %v6598 = vsel %vm852, %v6552, 0
  %v6601 = vsel %vm852, %v6556, 0
  %v6604 = vsel %vm852, %v6560, 0
  %v6607 = vsel %vm852, %v6564, 0
  %v6610 = vsel %vm852, %v6568, 0
  %v6613 = vsel %vm852, %v6572, 0
  %6615 = vmatprep.subr.bf16.mxu0 0
  %6616 = vmatpush1.bf16.msra.mxu0 %v674
  %6617 = vmatprep.subr.bf16.mxu0 0
  %6618 = vmatpush1.bf16.msra.mxu0 %v675
  %6619 = vmatprep.subr.bf16.mxu0 0
  %6620 = vmatpush1.bf16.msra.mxu0 %v676
  %6621 = vmatprep.subr.bf16.mxu0 0
  %6622 = vmatpush1.bf16.msra.mxu0 %v677
  %6623 = vmatprep.subr.bf16.mxu0 0
  %6624 = vmatpush1.bf16.msra.mxu0 %v678
  %6625 = vmatprep.subr.bf16.mxu0 0
  %6626 = vmatpush1.bf16.msra.mxu0 %v679
  %6627 = vmatprep.subr.bf16.mxu0 0
  %6628 = vmatpush1.bf16.msra.mxu0 %v680
  %6629 = vmatprep.subr.bf16.mxu0 0
  %6630 = vmatpush1.bf16.msra.mxu0 %v681
  %6631 = vmatprep.subr.bf16.mxu0 0
  %6632 = vmatpush1.bf16.msra.mxu0 %v682
  %6633 = vmatprep.subr.bf16.mxu0 0
  %6634 = vmatpush1.bf16.msra.mxu0 %v683
  %6635 = vmatprep.subr.bf16.mxu0 0
  %6636 = vmatpush1.bf16.msra.mxu0 %v684
  %6637 = vmatprep.subr.bf16.mxu0 0
  %6638 = vmatpush1.bf16.msra.mxu0 %v685
  %6639 = vmatprep.subr.bf16.mxu0 0
  %6640 = vmatpush1.bf16.msra.mxu0 %v686
  %6641 = vmatprep.subr.bf16.mxu0 0
  %6642 = vmatpush1.bf16.msra.mxu0 %v687
  %6643 = vmatprep.subr.bf16.mxu0 0
  %6644 = vmatpush1.bf16.msra.mxu0 %v688
  %6645 = vmatprep.subr.bf16.mxu0 0
  %6646 = vmatpush1.bf16.msra.mxu0 %v689
  %6647 = vmatprep.mubr.bf16.mxu0 %v6546
  %6648 = vmatmul.mubr.bf16.gmra.mrb[0].mxu0 %v6545
  %v6649 = vpop.f32.mrb[0].mxu0
  %v6650 = vadd.f32 0.0, %v6649
  %v6651 = vpop.f32.mrb[0].mxu0
  %v6652 = vpop.f32.mrb[0].mxu0
  %v6653 = vadd.f32 0.0, %v6652
  %v6654 = vpop.f32.mrb[0].mxu0
  %6655 = vmatprep.mubr.bf16.mxu0 %v6550
  %6656 = vmatmul.mubr.bf16.gmra.mrb[0].mxu0 %v6549
  %v6657 = vpop.f32.mrb[0].mxu0
  %v6658 = vadd.f32 0.0, %v6657
  %v6659 = vpop.f32.mrb[0].mxu0
  %v6660 = vpop.f32.mrb[0].mxu0
  %v6661 = vadd.f32 0.0, %v6660
  %v6662 = vpop.f32.mrb[0].mxu0
  %6663 = vmatprep.mubr.bf16.mxu0 %v6554
  %6664 = vmatmul.mubr.bf16.gmra.mrb[0].mxu0 %v6553
  %v6665 = vpop.f32.mrb[0].mxu0
  %v6666 = vadd.f32 0.0, %v6665
  %v6667 = vpop.f32.mrb[0].mxu0
  %v6668 = vpop.f32.mrb[0].mxu0
  %v6669 = vadd.f32 0.0, %v6668
  %v6670 = vpop.f32.mrb[0].mxu0
  %6671 = vmatprep.mubr.bf16.mxu0 %v6558
  %6672 = vmatmul.mubr.bf16.gmra.mrb[0].mxu0 %v6557
  %v6673 = vpop.f32.mrb[0].mxu0
  %v6674 = vadd.f32 0.0, %v6673
  %v6675 = vpop.f32.mrb[0].mxu0
  %v6676 = vpop.f32.mrb[0].mxu0
  %v6677 = vadd.f32 0.0, %v6676
  %v6678 = vpop.f32.mrb[0].mxu0
  %6679 = vmatprep.mubr.bf16.mxu0 %v6562
  %6680 = vmatmul.mubr.bf16.gmra.mrb[0].mxu0 %v6561
  %v6681 = vpop.f32.mrb[0].mxu0
  %v6682 = vadd.f32 0.0, %v6681
  %v6683 = vpop.f32.mrb[0].mxu0
  %v6684 = vpop.f32.mrb[0].mxu0
  %v6685 = vadd.f32 0.0, %v6684
  %v6686 = vpop.f32.mrb[0].mxu0
  %6687 = vmatprep.mubr.bf16.mxu0 %v6566
  %6688 = vmatmul.mubr.bf16.gmra.mrb[0].mxu0 %v6565
  %v6689 = vpop.f32.mrb[0].mxu0
  %v6690 = vadd.f32 0.0, %v6689
  %v6691 = vpop.f32.mrb[0].mxu0
  %v6692 = vpop.f32.mrb[0].mxu0
  %v6693 = vadd.f32 0.0, %v6692
  %v6694 = vpop.f32.mrb[0].mxu0
  %6695 = vmatprep.mubr.bf16.mxu0 %v6570
  %6696 = vmatmul.mubr.bf16.gmra.mrb[0].mxu0 %v6569
  %v6697 = vpop.f32.mrb[0].mxu0
  %v6698 = vadd.f32 0.0, %v6697
  %v6699 = vpop.f32.mrb[0].mxu0
  %v6700 = vpop.f32.mrb[0].mxu0
  %v6701 = vpop.f32.mrb[0].mxu0
  %6702 = vdwg.mxu0
  %6703 = vmatprep.subr.bf16.mxu0 0
  %6704 = vmatpush1.bf16.msra.mxu0 %v690
  %6705 = vmatprep.subr.bf16.mxu0 0
  %6706 = vmatpush1.bf16.msra.mxu0 %v691
  %6707 = vmatprep.subr.bf16.mxu0 0
  %6708 = vmatpush1.bf16.msra.mxu0 %v692
  %6709 = vmatprep.subr.bf16.mxu0 0
  %6710 = vmatpush1.bf16.msra.mxu0 %v693
  %6711 = vmatprep.subr.bf16.mxu0 0
  %6712 = vmatpush1.bf16.msra.mxu0 %v694
  %6713 = vmatprep.subr.bf16.mxu0 0
  %6714 = vmatpush1.bf16.msra.mxu0 %v695
  %6715 = vmatprep.subr.bf16.mxu0 0
  %6716 = vmatpush1.bf16.msra.mxu0 %v696
  %6717 = vmatprep.subr.bf16.mxu0 0
  %6718 = vmatpush1.bf16.msra.mxu0 %v697
  %6719 = vmatprep.subr.bf16.mxu0 0
  %6720 = vmatpush1.bf16.msra.mxu0 %v876
  %6721 = vmatprep.subr.bf16.mxu0 0
  %6722 = vmatpush1.bf16.msra.mxu0 0
  %6723 = vmatprep.subr.bf16.mxu0 0
  %6724 = vmatpush1.bf16.msra.mxu0 0
  %6725 = vmatprep.subr.bf16.mxu0 0
  %6726 = vmatpush1.bf16.msra.mxu0 0
  %6727 = vmatprep.subr.bf16.mxu0 0
  %6728 = vmatpush1.bf16.msra.mxu0 0
  %6729 = vmatprep.subr.bf16.mxu0 0
  %6730 = vmatpush1.bf16.msra.mxu0 0
  %6731 = vmatprep.subr.bf16.mxu0 0
  %6732 = vmatpush1.bf16.msra.mxu0 0
  %6733 = vmatprep.subr.bf16.mxu0 0
  %6734 = vmatpush1.bf16.msra.mxu0 0
  %6735 = vmatprep.mubr.bf16.mxu0 %v6595
  %6736 = vmatmul.mubr.bf16.gmra.mrb[0].mxu0 %v6547
  %v6737 = vpop.f32.mrb[0].mxu0
  %v6738 = vadd.f32 %v6650, %v6737
  %v6739 = vpop.f32.mrb[0].mxu0
  %v6740 = vpop.f32.mrb[0].mxu0
  %v6741 = vadd.f32 %v6653, %v6740
  %v6742 = vpop.f32.mrb[0].mxu0
  %6743 = vmatprep.mubr.bf16.mxu0 %v6598
  %6744 = vmatmul.mubr.bf16.gmra.mrb[0].mxu0 %v6551
  %v6745 = vpop.f32.mrb[0].mxu0
  %v6746 = vadd.f32 %v6658, %v6745
  %v6747 = vpop.f32.mrb[0].mxu0
  %v6748 = vpop.f32.mrb[0].mxu0
  %v6749 = vadd.f32 %v6661, %v6748
  %v6750 = vpop.f32.mrb[0].mxu0
  %6751 = vmatprep.mubr.bf16.mxu0 %v6601
  %6752 = vmatmul.mubr.bf16.gmra.mrb[0].mxu0 %v6555
  %v6753 = vpop.f32.mrb[0].mxu0
  %v6754 = vadd.f32 %v6666, %v6753
  %v6755 = vpop.f32.mrb[0].mxu0
  %v6756 = vpop.f32.mrb[0].mxu0
  %v6757 = vadd.f32 %v6669, %v6756
  %v6758 = vpop.f32.mrb[0].mxu0
  %6759 = vmatprep.mubr.bf16.mxu0 %v6604
  %6760 = vmatmul.mubr.bf16.gmra.mrb[0].mxu0 %v6559
  %v6761 = vpop.f32.mrb[0].mxu0
  %v6762 = vadd.f32 %v6674, %v6761
  %v6763 = vpop.f32.mrb[0].mxu0
  %v6764 = vpop.f32.mrb[0].mxu0
  %v6765 = vadd.f32 %v6677, %v6764
  %v6766 = vpop.f32.mrb[0].mxu0
  %6767 = vmatprep.mubr.bf16.mxu0 %v6607
  %6768 = vmatmul.mubr.bf16.gmra.mrb[0].mxu0 %v6563
  %v6769 = vpop.f32.mrb[0].mxu0
  %v6770 = vadd.f32 %v6682, %v6769
  %v6771 = vpop.f32.mrb[0].mxu0
  %v6772 = vpop.f32.mrb[0].mxu0
  %v6773 = vadd.f32 %v6685, %v6772
  %v6774 = vpop.f32.mrb[0].mxu0
  %6775 = vmatprep.mubr.bf16.mxu0 %v6610
  %6776 = vmatmul.mubr.bf16.gmra.mrb[0].mxu0 %v6567
  %v6777 = vpop.f32.mrb[0].mxu0
  %v6778 = vadd.f32 %v6690, %v6777
  %v6779 = vpop.f32.mrb[0].mxu0
  %v6780 = vpop.f32.mrb[0].mxu0
  %v6781 = vadd.f32 %v6693, %v6780
  %v6782 = vpop.f32.mrb[0].mxu0
  %6783 = vmatprep.mubr.bf16.mxu0 %v6613
  %6784 = vmatmul.mubr.bf16.gmra.mrb[0].mxu0 %v6571
  %v6785 = vpop.f32.mrb[0].mxu0
  %v6786 = vadd.f32 %v6698, %v6785
  %v6787 = vpop.f32.mrb[0].mxu0
  %v6788 = vpop.f32.mrb[0].mxu0
  %v6789 = vpop.f32.mrb[0].mxu0
  %6790 = vdwg.mxu0
  %v6791 = vpack.c.bf16 %v6741, %v6738
  %v6792 = vpack.c.bf16 %v6749, %v6746
  %v6793 = vpack.c.bf16 %v6757, %v6754
  %v6794 = vpack.c.bf16 %v6765, %v6762
  %v6795 = vpack.c.bf16 %v6773, %v6770
  %v6796 = vpack.c.bf16 %v6781, %v6778
  %v6797 = vpack.c.bf16 %v6786, %v6786
  %s6798 = scalar_lea.vmem %s3, 704
  %v6799 = vld [vmem:[%s6798] sm:$0xf]
  %v6800 = vld [vmem:[%s6798 + $0x4] sm:$0xf]
  %v6801 = vld [vmem:[%s6798 + $0x8] sm:$0xf]
  %v6802 = vld [vmem:[%s6798 + $0xc] sm:$0xf]
  %v6803 = vld [vmem:[%s6798 + $0x10] sm:$0xf]
  %v6804 = vld [vmem:[%s6798 + $0x14] sm:$0xf]
  %v6805 = vld [vmem:[%s6798 + $0x18] sm:$0xf]
  %v6806 = vld [vmem:[%s6798 + $0x1c] sm:$0xf]
  %v6807 = vld [vmem:[%s6798 + $0x20] sm:$0xf]
  %v6808 = vld [vmem:[%s6798 + $0x24] sm:$0xf]
  %v6809 = vld [vmem:[%s6798 + $0x28] sm:$0xf]
  %v6810 = vld [vmem:[%s6798 + $0x2c] sm:$0xf]
  %v6811 = vld [vmem:[%s6798 + $0x30] sm:$0xf]
  %v6812 = vld [vmem:[%s6798 + $0x34] sm:$0xf]
  %v6813 = vld [vmem:[%s6798 + $0x38] sm:$0xf]
  %v6814 = vld [vmem:[%s6798 + $0x3c] sm:$0xf]
  %v6831 = vunpack.c.l.b16 %v6799
  %v6832 = vunpack.c.l.b16 %v6800
  %v6833 = vunpack.c.l.b16 %v6801
  %v6834 = vunpack.c.l.b16 %v6802
  %v6835 = vunpack.c.l.b16 %v6803
  %v6836 = vunpack.c.l.b16 %v6804
  %v6837 = vunpack.c.l.b16 %v6805
  %v6838 = vunpack.c.l.b16 %v6806
  %v6839 = vunpack.c.l.b16 %v6807
  %v6840 = vunpack.c.l.b16 %v6808
  %v6841 = vunpack.c.l.b16 %v6809
  %v6842 = vunpack.c.l.b16 %v6810
  %v6843 = vunpack.c.l.b16 %v6811
  %v6844 = vunpack.c.l.b16 %v6812
  %v6845 = vunpack.c.l.b16 %v6813
  %v6846 = vunpack.c.l.b16 %v6814
  %v6847 = vpack.c.b16 %v6832, %v6831
  %v6848 = vpack.c.b16 %v6834, %v6833
  %v6849 = vpack.c.b16 %v6836, %v6835
  %v6850 = vpack.c.b16 %v6838, %v6837
  %v6851 = vpack.c.b16 %v6840, %v6839
  %v6852 = vpack.c.b16 %v6842, %v6841
  %v6853 = vpack.c.b16 %v6844, %v6843
  %v6854 = vpack.c.b16 %v6846, %v6845
  %6863 = vmatprep.subr.bf16.mxu0 0
  %6864 = vmatpush1.bf16.msra.mxu0 %v6847
  %6865 = vmatprep.subr.bf16.mxu0 0
  %6866 = vmatpush1.bf16.msra.mxu0 %v6848
  %6867 = vmatprep.subr.bf16.mxu0 0
  %6868 = vmatpush1.bf16.msra.mxu0 %v6849
  %6869 = vmatprep.subr.bf16.mxu0 0
  %6870 = vmatpush1.bf16.msra.mxu0 %v6850
  %6871 = vmatprep.subr.bf16.mxu0 0
  %6872 = vmatpush1.bf16.msra.mxu0 %v6851
  %6873 = vmatprep.subr.bf16.mxu0 0
  %6874 = vmatpush1.bf16.msra.mxu0 %v6852
  %6875 = vmatprep.subr.bf16.mxu0 0
  %6876 = vmatpush1.bf16.msra.mxu0 %v6853
  %6877 = vmatprep.subr.bf16.mxu0 0
  %6878 = vmatpush1.bf16.msra.mxu0 %v6854
  %6879 = vmatprep.subr.bf16.mxu0 0
  %6880 = vmatpush1.bf16.msra.mxu0 0
  %6881 = vmatprep.subr.bf16.mxu0 0
  %6882 = vmatpush1.bf16.msra.mxu0 0
  %6883 = vmatprep.subr.bf16.mxu0 0
  %6884 = vmatpush1.bf16.msra.mxu0 0
  %6885 = vmatprep.subr.bf16.mxu0 0
  %6886 = vmatpush1.bf16.msra.mxu0 0
  %6887 = vmatprep.subr.bf16.mxu0 0
  %6888 = vmatpush1.bf16.msra.mxu0 0
  %6889 = vmatprep.subr.bf16.mxu0 0
  %6890 = vmatpush1.bf16.msra.mxu0 0
  %6891 = vmatprep.subr.bf16.mxu0 0
  %6892 = vmatpush1.bf16.msra.mxu0 0
  %6893 = vmatprep.subr.bf16.mxu0 0
  %6894 = vmatpush1.bf16.msra.mxu0 0
  %6895 = vmatprep.mubr.bf16.mxu0 0
  %6896 = vmatmul.mubr.bf16.gmra.mrb[0].mxu0 %v6791
  %v6897 = vpop.f32.mrb[0].mxu0
  %v6898 = vadd.f32 0.0, %v6897
  %v6899 = vpop.f32.mrb[0].mxu0
  %v6900 = vpop.f32.mrb[0].mxu0
  %v6901 = vadd.f32 0.0, %v6900
  %v6902 = vpop.f32.mrb[0].mxu0
  %6903 = vmatprep.mubr.bf16.mxu0 0
  %6904 = vmatmul.mubr.bf16.gmra.mrb[0].mxu0 %v6792
  %v6905 = vpop.f32.mrb[0].mxu0
  %v6906 = vadd.f32 0.0, %v6905
  %v6907 = vpop.f32.mrb[0].mxu0
  %v6908 = vpop.f32.mrb[0].mxu0
  %v6909 = vadd.f32 0.0, %v6908
  %v6910 = vpop.f32.mrb[0].mxu0
  %6911 = vmatprep.mubr.bf16.mxu0 0
  %6912 = vmatmul.mubr.bf16.gmra.mrb[0].mxu0 %v6793
  %v6913 = vpop.f32.mrb[0].mxu0
  %v6914 = vadd.f32 0.0, %v6913
  %v6915 = vpop.f32.mrb[0].mxu0
  %v6916 = vpop.f32.mrb[0].mxu0
  %v6917 = vadd.f32 0.0, %v6916
  %v6918 = vpop.f32.mrb[0].mxu0
  %6919 = vmatprep.mubr.bf16.mxu0 0
  %6920 = vmatmul.mubr.bf16.gmra.mrb[0].mxu0 %v6794
  %v6921 = vpop.f32.mrb[0].mxu0
  %v6922 = vadd.f32 0.0, %v6921
  %v6923 = vpop.f32.mrb[0].mxu0
  %v6924 = vpop.f32.mrb[0].mxu0
  %v6925 = vadd.f32 0.0, %v6924
  %v6926 = vpop.f32.mrb[0].mxu0
  %6927 = vmatprep.mubr.bf16.mxu0 0
  %6928 = vmatmul.mubr.bf16.gmra.mrb[0].mxu0 %v6795
  %v6929 = vpop.f32.mrb[0].mxu0
  %v6930 = vadd.f32 0.0, %v6929
  %v6931 = vpop.f32.mrb[0].mxu0
  %v6932 = vpop.f32.mrb[0].mxu0
  %v6933 = vadd.f32 0.0, %v6932
  %v6934 = vpop.f32.mrb[0].mxu0
  %6935 = vmatprep.mubr.bf16.mxu0 0
  %6936 = vmatmul.mubr.bf16.gmra.mrb[0].mxu0 %v6796
  %v6937 = vpop.f32.mrb[0].mxu0
  %v6938 = vadd.f32 0.0, %v6937
  %v6939 = vpop.f32.mrb[0].mxu0
  %v6940 = vpop.f32.mrb[0].mxu0
  %v6941 = vadd.f32 0.0, %v6940
  %v6942 = vpop.f32.mrb[0].mxu0
  %6943 = vmatprep.mubr.bf16.mxu0 0
  %6944 = vmatmul.mubr.bf16.gmra.mrb[0].mxu0 %v6797
  %v6945 = vpop.f32.mrb[0].mxu0
  %v6946 = vadd.f32 0.0, %v6945
  %v6947 = vpop.f32.mrb[0].mxu0
  %v6948 = vpop.f32.mrb[0].mxu0
  %v6949 = vpop.f32.mrb[0].mxu0
  %6950 = vdwg.mxu0
  %v6951 = vadd.f32 %v6427, %v6898
  %v6952 = vadd.f32 %v6428, %v6901
  %v6953 = vadd.f32 %v6429, %v6906
  %v6954 = vadd.f32 %v6430, %v6909
  %v6955 = vadd.f32 %v6431, %v6914
  %v6956 = vadd.f32 %v6432, %v6917
  %v6957 = vadd.f32 %v6433, %v6922
  %v6958 = vadd.f32 %v6434, %v6925
  %v6959 = vadd.f32 %v6435, %v6930
  %v6960 = vadd.f32 %v6436, %v6933
  %v6961 = vadd.f32 %v6437, %v6938
  %v6962 = vadd.f32 %v6438, %v6941
  %v6963 = vadd.f32 %v6439, %v6946
  %s6964 = scalar_lea.vmem %s2, 2496
  %v6965 = vld [vmem:[%s6964] sm:$0xff]
  %v6966 = vld [vmem:[%s6964 + $0x8] sm:$0xff]
  %v6967 = vld [vmem:[%s6964 + $0x10] sm:$0xff]
  %v6968 = vld [vmem:[%s6964 + $0x18] sm:$0xff]
  %v6969 = vld [vmem:[%s6964 + $0x20] sm:$0xff]
  %v6970 = vld [vmem:[%s6964 + $0x28] sm:$0xff]
  %v6971 = vld [vmem:[%s6964 + $0x30] sm:$0xff]
  %v6972 = vld [vmem:[%s6964 + $0x38] sm:$0xff]
  %v6973 = vld [vmem:[%s6964 + $0x40] sm:$0xff]
  %v6974 = vld [vmem:[%s6964 + $0x48] sm:$0xff]
  %v6975 = vld [vmem:[%s6964 + $0x50] sm:$0xff]
  %v6976 = vld [vmem:[%s6964 + $0x58] sm:$0xff]
  %v6977 = vld [vmem:[%s6964 + $0x60] sm:$0xff]
  %v6978 = vld [vmem:[%s6964 + $0x68] sm:$0xff]
  %v6979 = vld [vmem:[%s6964 + $0x70] sm:$0xff]
  %v6980 = vld [vmem:[%s6964 + $0x78] sm:$0xff]
  %v6981 = vld [vmem:[%s6964 + $0x80] sm:$0xff]
  %v6982 = vld [vmem:[%s6964 + $0x88] sm:$0xff]
  %v6983 = vld [vmem:[%s6964 + $0x90] sm:$0xff]
  %v6984 = vld [vmem:[%s6964 + $0x98] sm:$0xff]
  %v6985 = vld [vmem:[%s6964 + $0xa0] sm:$0xff]
  %v6986 = vld [vmem:[%s6964 + $0xa8] sm:$0xff]
  %v6987 = vld [vmem:[%s6964 + $0xb0] sm:$0xff]
  %v6988 = vld [vmem:[%s6964 + $0xb8] sm:$0xff]
  %v6989 = vld [vmem:[%s6964 + $0xc0] sm:$0x11]
  %v6990 = vld [vmem:[%s6964 + $0xc8] sm:$0x11]
  %v7017 = vunpack.c.l.b16 %v6965
  %v7018 = vunpack.c.h.b16 %v6965
  %v7019 = vunpack.c.l.b16 %v6966
  %v7020 = vunpack.c.h.b16 %v6966
  %v7021 = vunpack.c.l.b16 %v6967
  %v7022 = vunpack.c.h.b16 %v6967
  %v7023 = vunpack.c.l.b16 %v6968
  %v7024 = vunpack.c.h.b16 %v6968
  %v7025 = vunpack.c.l.b16 %v6969
  %v7026 = vunpack.c.h.b16 %v6969
  %v7027 = vunpack.c.l.b16 %v6970
  %v7028 = vunpack.c.h.b16 %v6970
  %v7029 = vunpack.c.l.b16 %v6971
  %v7030 = vunpack.c.h.b16 %v6971
  %v7031 = vunpack.c.l.b16 %v6972
  %v7032 = vunpack.c.h.b16 %v6972
  %v7033 = vunpack.c.l.b16 %v6973
  %v7034 = vunpack.c.h.b16 %v6973
  %v7035 = vunpack.c.l.b16 %v6974
  %v7036 = vunpack.c.h.b16 %v6974
  %v7037 = vunpack.c.l.b16 %v6975
  %v7038 = vunpack.c.h.b16 %v6975
  %v7039 = vunpack.c.l.b16 %v6976
  %v7040 = vunpack.c.h.b16 %v6976
  %v7041 = vunpack.c.l.b16 %v6977
  %v7042 = vunpack.c.h.b16 %v6977
  %v7043 = vunpack.c.l.b16 %v6978
  %v7044 = vunpack.c.h.b16 %v6978
  %v7045 = vunpack.c.l.b16 %v6979
  %v7046 = vunpack.c.h.b16 %v6979
  %v7047 = vunpack.c.l.b16 %v6980
  %v7048 = vunpack.c.h.b16 %v6980
  %v7049 = vunpack.c.l.b16 %v6981
  %v7050 = vunpack.c.h.b16 %v6981
  %v7051 = vunpack.c.l.b16 %v6982
  %v7052 = vunpack.c.h.b16 %v6982
  %v7053 = vunpack.c.l.b16 %v6983
  %v7054 = vunpack.c.h.b16 %v6983
  %v7055 = vunpack.c.l.b16 %v6984
  %v7056 = vunpack.c.h.b16 %v6984
  %v7057 = vunpack.c.l.b16 %v6985
  %v7058 = vunpack.c.h.b16 %v6985
  %v7059 = vunpack.c.l.b16 %v6986
  %v7060 = vunpack.c.h.b16 %v6986
  %v7061 = vunpack.c.l.b16 %v6987
  %v7062 = vunpack.c.h.b16 %v6987
  %v7063 = vunpack.c.l.b16 %v6988
  %v7064 = vunpack.c.h.b16 %v6988
  %v7065 = vunpack.c.l.b16 %v6989
  %v7066 = vunpack.c.h.b16 %v6989
  %v7067 = vunpack.c.l.b16 %v6990
  %v7068 = vunpack.c.h.b16 %v6990
  %v7069 = vpack.c.b16 %v7021, %v7017
  %v7070 = vpack.c.b16 %v7022, %v7018
  %v7071 = vpack.c.b16 %v7023, %v7019
  %v7072 = vpack.c.b16 %v7024, %v7020
  %v7073 = vpack.c.b16 %v7029, %v7025
  %v7074 = vpack.c.b16 %v7030, %v7026
  %v7075 = vpack.c.b16 %v7031, %v7027
  %v7076 = vpack.c.b16 %v7032, %v7028
  %v7077 = vpack.c.b16 %v7037, %v7033
  %v7078 = vpack.c.b16 %v7038, %v7034
  %v7079 = vpack.c.b16 %v7039, %v7035
  %v7080 = vpack.c.b16 %v7040, %v7036
  %v7081 = vpack.c.b16 %v7045, %v7041
  %v7082 = vpack.c.b16 %v7046, %v7042
  %v7083 = vpack.c.b16 %v7047, %v7043
  %v7084 = vpack.c.b16 %v7048, %v7044
  %v7085 = vpack.c.b16 %v7053, %v7049
  %v7086 = vpack.c.b16 %v7054, %v7050
  %v7087 = vpack.c.b16 %v7055, %v7051
  %v7088 = vpack.c.b16 %v7056, %v7052
  %v7089 = vpack.c.b16 %v7061, %v7057
  %v7090 = vpack.c.b16 %v7062, %v7058
  %v7091 = vpack.c.b16 %v7063, %v7059
  %v7092 = vpack.c.b16 %v7064, %v7060
  %v7093 = vpack.c.b16 %v7065, %v7065
  %v7094 = vpack.c.b16 %v7066, %v7066
  %v7095 = vpack.c.b16 %v7067, %v7067
  %v7096 = vpack.c.b16 %v7068, %v7068
  %v7119 = vsel %vm852, %v7072, 0
  %v7122 = vsel %vm852, %v7076, 0
  %v7125 = vsel %vm852, %v7080, 0
  %v7128 = vsel %vm852, %v7084, 0
  %v7131 = vsel %vm852, %v7088, 0
  %v7134 = vsel %vm852, %v7092, 0
  %v7137 = vsel %vm852, %v7096, 0
  %7139 = vmatprep.subr.bf16.mxu0 0
  %7140 = vmatpush1.bf16.msra.mxu0 %v674
  %7141 = vmatprep.subr.bf16.mxu0 0
  %7142 = vmatpush1.bf16.msra.mxu0 %v675
  %7143 = vmatprep.subr.bf16.mxu0 0
  %7144 = vmatpush1.bf16.msra.mxu0 %v676
  %7145 = vmatprep.subr.bf16.mxu0 0
  %7146 = vmatpush1.bf16.msra.mxu0 %v677
  %7147 = vmatprep.subr.bf16.mxu0 0
  %7148 = vmatpush1.bf16.msra.mxu0 %v678
  %7149 = vmatprep.subr.bf16.mxu0 0
  %7150 = vmatpush1.bf16.msra.mxu0 %v679
  %7151 = vmatprep.subr.bf16.mxu0 0
  %7152 = vmatpush1.bf16.msra.mxu0 %v680
  %7153 = vmatprep.subr.bf16.mxu0 0
  %7154 = vmatpush1.bf16.msra.mxu0 %v681
  %7155 = vmatprep.subr.bf16.mxu0 0
  %7156 = vmatpush1.bf16.msra.mxu0 %v682
  %7157 = vmatprep.subr.bf16.mxu0 0
  %7158 = vmatpush1.bf16.msra.mxu0 %v683
  %7159 = vmatprep.subr.bf16.mxu0 0
  %7160 = vmatpush1.bf16.msra.mxu0 %v684
  %7161 = vmatprep.subr.bf16.mxu0 0
  %7162 = vmatpush1.bf16.msra.mxu0 %v685
  %7163 = vmatprep.subr.bf16.mxu0 0
  %7164 = vmatpush1.bf16.msra.mxu0 %v686
  %7165 = vmatprep.subr.bf16.mxu0 0
  %7166 = vmatpush1.bf16.msra.mxu0 %v687
  %7167 = vmatprep.subr.bf16.mxu0 0
  %7168 = vmatpush1.bf16.msra.mxu0 %v688
  %7169 = vmatprep.subr.bf16.mxu0 0
  %7170 = vmatpush1.bf16.msra.mxu0 %v689
  %7171 = vmatprep.mubr.bf16.mxu0 %v7070
  %7172 = vmatmul.mubr.bf16.gmra.mrb[0].mxu0 %v7069
  %v7173 = vpop.f32.mrb[0].mxu0
  %v7174 = vadd.f32 0.0, %v7173
  %v7175 = vpop.f32.mrb[0].mxu0
  %v7176 = vpop.f32.mrb[0].mxu0
  %v7177 = vadd.f32 0.0, %v7176
  %v7178 = vpop.f32.mrb[0].mxu0
  %7179 = vmatprep.mubr.bf16.mxu0 %v7074
  %7180 = vmatmul.mubr.bf16.gmra.mrb[0].mxu0 %v7073
  %v7181 = vpop.f32.mrb[0].mxu0
  %v7182 = vadd.f32 0.0, %v7181
  %v7183 = vpop.f32.mrb[0].mxu0
  %v7184 = vpop.f32.mrb[0].mxu0
  %v7185 = vadd.f32 0.0, %v7184
  %v7186 = vpop.f32.mrb[0].mxu0
  %7187 = vmatprep.mubr.bf16.mxu0 %v7078
  %7188 = vmatmul.mubr.bf16.gmra.mrb[0].mxu0 %v7077
  %v7189 = vpop.f32.mrb[0].mxu0
  %v7190 = vadd.f32 0.0, %v7189
  %v7191 = vpop.f32.mrb[0].mxu0
  %v7192 = vpop.f32.mrb[0].mxu0
  %v7193 = vadd.f32 0.0, %v7192
  %v7194 = vpop.f32.mrb[0].mxu0
  %7195 = vmatprep.mubr.bf16.mxu0 %v7082
  %7196 = vmatmul.mubr.bf16.gmra.mrb[0].mxu0 %v7081
  %v7197 = vpop.f32.mrb[0].mxu0
  %v7198 = vadd.f32 0.0, %v7197
  %v7199 = vpop.f32.mrb[0].mxu0
  %v7200 = vpop.f32.mrb[0].mxu0
  %v7201 = vadd.f32 0.0, %v7200
  %v7202 = vpop.f32.mrb[0].mxu0
  %7203 = vmatprep.mubr.bf16.mxu0 %v7086
  %7204 = vmatmul.mubr.bf16.gmra.mrb[0].mxu0 %v7085
  %v7205 = vpop.f32.mrb[0].mxu0
  %v7206 = vadd.f32 0.0, %v7205
  %v7207 = vpop.f32.mrb[0].mxu0
  %v7208 = vpop.f32.mrb[0].mxu0
  %v7209 = vadd.f32 0.0, %v7208
  %v7210 = vpop.f32.mrb[0].mxu0
  %7211 = vmatprep.mubr.bf16.mxu0 %v7090
  %7212 = vmatmul.mubr.bf16.gmra.mrb[0].mxu0 %v7089
  %v7213 = vpop.f32.mrb[0].mxu0
  %v7214 = vadd.f32 0.0, %v7213
  %v7215 = vpop.f32.mrb[0].mxu0
  %v7216 = vpop.f32.mrb[0].mxu0
  %v7217 = vadd.f32 0.0, %v7216
  %v7218 = vpop.f32.mrb[0].mxu0
  %7219 = vmatprep.mubr.bf16.mxu0 %v7094
  %7220 = vmatmul.mubr.bf16.gmra.mrb[0].mxu0 %v7093
  %v7221 = vpop.f32.mrb[0].mxu0
  %v7222 = vadd.f32 0.0, %v7221
  %v7223 = vpop.f32.mrb[0].mxu0
  %v7224 = vpop.f32.mrb[0].mxu0
  %v7225 = vpop.f32.mrb[0].mxu0
  %7226 = vdwg.mxu0
  %7227 = vmatprep.subr.bf16.mxu0 0
  %7228 = vmatpush1.bf16.msra.mxu0 %v690
  %7229 = vmatprep.subr.bf16.mxu0 0
  %7230 = vmatpush1.bf16.msra.mxu0 %v691
  %7231 = vmatprep.subr.bf16.mxu0 0
  %7232 = vmatpush1.bf16.msra.mxu0 %v692
  %7233 = vmatprep.subr.bf16.mxu0 0
  %7234 = vmatpush1.bf16.msra.mxu0 %v693
  %7235 = vmatprep.subr.bf16.mxu0 0
  %7236 = vmatpush1.bf16.msra.mxu0 %v694
  %7237 = vmatprep.subr.bf16.mxu0 0
  %7238 = vmatpush1.bf16.msra.mxu0 %v695
  %7239 = vmatprep.subr.bf16.mxu0 0
  %7240 = vmatpush1.bf16.msra.mxu0 %v696
  %7241 = vmatprep.subr.bf16.mxu0 0
  %7242 = vmatpush1.bf16.msra.mxu0 %v697
  %7243 = vmatprep.subr.bf16.mxu0 0
  %7244 = vmatpush1.bf16.msra.mxu0 %v876
  %7245 = vmatprep.subr.bf16.mxu0 0
  %7246 = vmatpush1.bf16.msra.mxu0 0
  %7247 = vmatprep.subr.bf16.mxu0 0
  %7248 = vmatpush1.bf16.msra.mxu0 0
  %7249 = vmatprep.subr.bf16.mxu0 0
  %7250 = vmatpush1.bf16.msra.mxu0 0
  %7251 = vmatprep.subr.bf16.mxu0 0
  %7252 = vmatpush1.bf16.msra.mxu0 0
  %7253 = vmatprep.subr.bf16.mxu0 0
  %7254 = vmatpush1.bf16.msra.mxu0 0
  %7255 = vmatprep.subr.bf16.mxu0 0
  %7256 = vmatpush1.bf16.msra.mxu0 0
  %7257 = vmatprep.subr.bf16.mxu0 0
  %7258 = vmatpush1.bf16.msra.mxu0 0
  %7259 = vmatprep.mubr.bf16.mxu0 %v7119
  %7260 = vmatmul.mubr.bf16.gmra.mrb[0].mxu0 %v7071
  %v7261 = vpop.f32.mrb[0].mxu0
  %v7262 = vadd.f32 %v7174, %v7261
  %v7263 = vpop.f32.mrb[0].mxu0
  %v7264 = vpop.f32.mrb[0].mxu0
  %v7265 = vadd.f32 %v7177, %v7264
  %v7266 = vpop.f32.mrb[0].mxu0
  %7267 = vmatprep.mubr.bf16.mxu0 %v7122
  %7268 = vmatmul.mubr.bf16.gmra.mrb[0].mxu0 %v7075
  %v7269 = vpop.f32.mrb[0].mxu0
  %v7270 = vadd.f32 %v7182, %v7269
  %v7271 = vpop.f32.mrb[0].mxu0
  %v7272 = vpop.f32.mrb[0].mxu0
  %v7273 = vadd.f32 %v7185, %v7272
  %v7274 = vpop.f32.mrb[0].mxu0
  %7275 = vmatprep.mubr.bf16.mxu0 %v7125
  %7276 = vmatmul.mubr.bf16.gmra.mrb[0].mxu0 %v7079
  %v7277 = vpop.f32.mrb[0].mxu0
  %v7278 = vadd.f32 %v7190, %v7277
  %v7279 = vpop.f32.mrb[0].mxu0
  %v7280 = vpop.f32.mrb[0].mxu0
  %v7281 = vadd.f32 %v7193, %v7280
  %v7282 = vpop.f32.mrb[0].mxu0
  %7283 = vmatprep.mubr.bf16.mxu0 %v7128
  %7284 = vmatmul.mubr.bf16.gmra.mrb[0].mxu0 %v7083
  %v7285 = vpop.f32.mrb[0].mxu0
  %v7286 = vadd.f32 %v7198, %v7285
  %v7287 = vpop.f32.mrb[0].mxu0
  %v7288 = vpop.f32.mrb[0].mxu0
  %v7289 = vadd.f32 %v7201, %v7288
  %v7290 = vpop.f32.mrb[0].mxu0
  %7291 = vmatprep.mubr.bf16.mxu0 %v7131
  %7292 = vmatmul.mubr.bf16.gmra.mrb[0].mxu0 %v7087
  %v7293 = vpop.f32.mrb[0].mxu0
  %v7294 = vadd.f32 %v7206, %v7293
  %v7295 = vpop.f32.mrb[0].mxu0
  %v7296 = vpop.f32.mrb[0].mxu0
  %v7297 = vadd.f32 %v7209, %v7296
  %v7298 = vpop.f32.mrb[0].mxu0
  %7299 = vmatprep.mubr.bf16.mxu0 %v7134
  %7300 = vmatmul.mubr.bf16.gmra.mrb[0].mxu0 %v7091
  %v7301 = vpop.f32.mrb[0].mxu0
  %v7302 = vadd.f32 %v7214, %v7301
  %v7303 = vpop.f32.mrb[0].mxu0
  %v7304 = vpop.f32.mrb[0].mxu0
  %v7305 = vadd.f32 %v7217, %v7304
  %v7306 = vpop.f32.mrb[0].mxu0
  %7307 = vmatprep.mubr.bf16.mxu0 %v7137
  %7308 = vmatmul.mubr.bf16.gmra.mrb[0].mxu0 %v7095
  %v7309 = vpop.f32.mrb[0].mxu0
  %v7310 = vadd.f32 %v7222, %v7309
  %v7311 = vpop.f32.mrb[0].mxu0
  %v7312 = vpop.f32.mrb[0].mxu0
  %v7313 = vpop.f32.mrb[0].mxu0
  %7314 = vdwg.mxu0
  %v7315 = vpack.c.bf16 %v7265, %v7262
  %v7316 = vpack.c.bf16 %v7273, %v7270
  %v7317 = vpack.c.bf16 %v7281, %v7278
  %v7318 = vpack.c.bf16 %v7289, %v7286
  %v7319 = vpack.c.bf16 %v7297, %v7294
  %v7320 = vpack.c.bf16 %v7305, %v7302
  %v7321 = vpack.c.bf16 %v7310, %v7310
  %s7322 = scalar_lea.vmem %s3, 768
  %v7323 = vld [vmem:[%s7322] sm:$0xf]
  %v7324 = vld [vmem:[%s7322 + $0x4] sm:$0xf]
  %v7325 = vld [vmem:[%s7322 + $0x8] sm:$0xf]
  %v7326 = vld [vmem:[%s7322 + $0xc] sm:$0xf]
  %v7327 = vld [vmem:[%s7322 + $0x10] sm:$0xf]
  %v7328 = vld [vmem:[%s7322 + $0x14] sm:$0xf]
  %v7329 = vld [vmem:[%s7322 + $0x18] sm:$0xf]
  %v7330 = vld [vmem:[%s7322 + $0x1c] sm:$0xf]
  %v7331 = vld [vmem:[%s7322 + $0x20] sm:$0xf]
  %v7332 = vld [vmem:[%s7322 + $0x24] sm:$0xf]
  %v7333 = vld [vmem:[%s7322 + $0x28] sm:$0xf]
  %v7334 = vld [vmem:[%s7322 + $0x2c] sm:$0xf]
  %v7335 = vld [vmem:[%s7322 + $0x30] sm:$0xf]
  %v7336 = vld [vmem:[%s7322 + $0x34] sm:$0xf]
  %v7337 = vld [vmem:[%s7322 + $0x38] sm:$0xf]
  %v7338 = vld [vmem:[%s7322 + $0x3c] sm:$0xf]
  %v7355 = vunpack.c.l.b16 %v7323
  %v7356 = vunpack.c.l.b16 %v7324
  %v7357 = vunpack.c.l.b16 %v7325
  %v7358 = vunpack.c.l.b16 %v7326
  %v7359 = vunpack.c.l.b16 %v7327
  %v7360 = vunpack.c.l.b16 %v7328
  %v7361 = vunpack.c.l.b16 %v7329
  %v7362 = vunpack.c.l.b16 %v7330
  %v7363 = vunpack.c.l.b16 %v7331
  %v7364 = vunpack.c.l.b16 %v7332
  %v7365 = vunpack.c.l.b16 %v7333
  %v7366 = vunpack.c.l.b16 %v7334
  %v7367 = vunpack.c.l.b16 %v7335
  %v7368 = vunpack.c.l.b16 %v7336
  %v7369 = vunpack.c.l.b16 %v7337
  %v7370 = vunpack.c.l.b16 %v7338
  %v7371 = vpack.c.b16 %v7356, %v7355
  %v7372 = vpack.c.b16 %v7358, %v7357
  %v7373 = vpack.c.b16 %v7360, %v7359
  %v7374 = vpack.c.b16 %v7362, %v7361
  %v7375 = vpack.c.b16 %v7364, %v7363
  %v7376 = vpack.c.b16 %v7366, %v7365
  %v7377 = vpack.c.b16 %v7368, %v7367
  %v7378 = vpack.c.b16 %v7370, %v7369
  %7387 = vmatprep.subr.bf16.mxu0 0
  %7388 = vmatpush1.bf16.msra.mxu0 %v7371
  %7389 = vmatprep.subr.bf16.mxu0 0
  %7390 = vmatpush1.bf16.msra.mxu0 %v7372
  %7391 = vmatprep.subr.bf16.mxu0 0
  %7392 = vmatpush1.bf16.msra.mxu0 %v7373
  %7393 = vmatprep.subr.bf16.mxu0 0
  %7394 = vmatpush1.bf16.msra.mxu0 %v7374
  %7395 = vmatprep.subr.bf16.mxu0 0
  %7396 = vmatpush1.bf16.msra.mxu0 %v7375
  %7397 = vmatprep.subr.bf16.mxu0 0
  %7398 = vmatpush1.bf16.msra.mxu0 %v7376
  %7399 = vmatprep.subr.bf16.mxu0 0
  %7400 = vmatpush1.bf16.msra.mxu0 %v7377
  %7401 = vmatprep.subr.bf16.mxu0 0
  %7402 = vmatpush1.bf16.msra.mxu0 %v7378
  %7403 = vmatprep.subr.bf16.mxu0 0
  %7404 = vmatpush1.bf16.msra.mxu0 0
  %7405 = vmatprep.subr.bf16.mxu0 0
  %7406 = vmatpush1.bf16.msra.mxu0 0
  %7407 = vmatprep.subr.bf16.mxu0 0
  %7408 = vmatpush1.bf16.msra.mxu0 0
  %7409 = vmatprep.subr.bf16.mxu0 0
  %7410 = vmatpush1.bf16.msra.mxu0 0
  %7411 = vmatprep.subr.bf16.mxu0 0
  %7412 = vmatpush1.bf16.msra.mxu0 0
  %7413 = vmatprep.subr.bf16.mxu0 0
  %7414 = vmatpush1.bf16.msra.mxu0 0
  %7415 = vmatprep.subr.bf16.mxu0 0
  %7416 = vmatpush1.bf16.msra.mxu0 0
  %7417 = vmatprep.subr.bf16.mxu0 0
  %7418 = vmatpush1.bf16.msra.mxu0 0
  %7419 = vmatprep.mubr.bf16.mxu0 0
  %7420 = vmatmul.mubr.bf16.gmra.mrb[0].mxu0 %v7315
  %v7421 = vpop.f32.mrb[0].mxu0
  %v7422 = vadd.f32 0.0, %v7421
  %v7423 = vpop.f32.mrb[0].mxu0
  %v7424 = vpop.f32.mrb[0].mxu0
  %v7425 = vadd.f32 0.0, %v7424
  %v7426 = vpop.f32.mrb[0].mxu0
  %7427 = vmatprep.mubr.bf16.mxu0 0
  %7428 = vmatmul.mubr.bf16.gmra.mrb[0].mxu0 %v7316
  %v7429 = vpop.f32.mrb[0].mxu0
  %v7430 = vadd.f32 0.0, %v7429
  %v7431 = vpop.f32.mrb[0].mxu0
  %v7432 = vpop.f32.mrb[0].mxu0
  %v7433 = vadd.f32 0.0, %v7432
  %v7434 = vpop.f32.mrb[0].mxu0
  %7435 = vmatprep.mubr.bf16.mxu0 0
  %7436 = vmatmul.mubr.bf16.gmra.mrb[0].mxu0 %v7317
  %v7437 = vpop.f32.mrb[0].mxu0
  %v7438 = vadd.f32 0.0, %v7437
  %v7439 = vpop.f32.mrb[0].mxu0
  %v7440 = vpop.f32.mrb[0].mxu0
  %v7441 = vadd.f32 0.0, %v7440
  %v7442 = vpop.f32.mrb[0].mxu0
  %7443 = vmatprep.mubr.bf16.mxu0 0
  %7444 = vmatmul.mubr.bf16.gmra.mrb[0].mxu0 %v7318
  %v7445 = vpop.f32.mrb[0].mxu0
  %v7446 = vadd.f32 0.0, %v7445
  %v7447 = vpop.f32.mrb[0].mxu0
  %v7448 = vpop.f32.mrb[0].mxu0
  %v7449 = vadd.f32 0.0, %v7448
  %v7450 = vpop.f32.mrb[0].mxu0
  %7451 = vmatprep.mubr.bf16.mxu0 0
  %7452 = vmatmul.mubr.bf16.gmra.mrb[0].mxu0 %v7319
  %v7453 = vpop.f32.mrb[0].mxu0
  %v7454 = vadd.f32 0.0, %v7453
  %v7455 = vpop.f32.mrb[0].mxu0
  %v7456 = vpop.f32.mrb[0].mxu0
  %v7457 = vadd.f32 0.0, %v7456
  %v7458 = vpop.f32.mrb[0].mxu0
  %7459 = vmatprep.mubr.bf16.mxu0 0
  %7460 = vmatmul.mubr.bf16.gmra.mrb[0].mxu0 %v7320
  %v7461 = vpop.f32.mrb[0].mxu0
  %v7462 = vadd.f32 0.0, %v7461
  %v7463 = vpop.f32.mrb[0].mxu0
  %v7464 = vpop.f32.mrb[0].mxu0
  %v7465 = vadd.f32 0.0, %v7464
  %v7466 = vpop.f32.mrb[0].mxu0
  %7467 = vmatprep.mubr.bf16.mxu0 0
  %7468 = vmatmul.mubr.bf16.gmra.mrb[0].mxu0 %v7321
  %v7469 = vpop.f32.mrb[0].mxu0
  %v7470 = vadd.f32 0.0, %v7469
  %v7471 = vpop.f32.mrb[0].mxu0
  %v7472 = vpop.f32.mrb[0].mxu0
  %v7473 = vpop.f32.mrb[0].mxu0
  %7474 = vdwg.mxu0
  %v7475 = vadd.f32 %v6951, %v7422
  %v7476 = vadd.f32 %v6952, %v7425
  %v7477 = vadd.f32 %v6953, %v7430
  %v7478 = vadd.f32 %v6954, %v7433
  %v7479 = vadd.f32 %v6955, %v7438
  %v7480 = vadd.f32 %v6956, %v7441
  %v7481 = vadd.f32 %v6957, %v7446
  %v7482 = vadd.f32 %v6958, %v7449
  %v7483 = vadd.f32 %v6959, %v7454
  %v7484 = vadd.f32 %v6960, %v7457
  %v7485 = vadd.f32 %v6961, %v7462
  %v7486 = vadd.f32 %v6962, %v7465
  %v7487 = vadd.f32 %v6963, %v7470
  %s7488 = scalar_lea.vmem %s2, 2704
  %v7489 = vld [vmem:[%s7488] sm:$0xff]
  %v7490 = vld [vmem:[%s7488 + $0x8] sm:$0xff]
  %v7491 = vld [vmem:[%s7488 + $0x10] sm:$0xff]
  %v7492 = vld [vmem:[%s7488 + $0x18] sm:$0xff]
  %v7493 = vld [vmem:[%s7488 + $0x20] sm:$0xff]
  %v7494 = vld [vmem:[%s7488 + $0x28] sm:$0xff]
  %v7495 = vld [vmem:[%s7488 + $0x30] sm:$0xff]
  %v7496 = vld [vmem:[%s7488 + $0x38] sm:$0xff]
  %v7497 = vld [vmem:[%s7488 + $0x40] sm:$0xff]
  %v7498 = vld [vmem:[%s7488 + $0x48] sm:$0xff]
  %v7499 = vld [vmem:[%s7488 + $0x50] sm:$0xff]
  %v7500 = vld [vmem:[%s7488 + $0x58] sm:$0xff]
  %v7501 = vld [vmem:[%s7488 + $0x60] sm:$0xff]
  %v7502 = vld [vmem:[%s7488 + $0x68] sm:$0xff]
  %v7503 = vld [vmem:[%s7488 + $0x70] sm:$0xff]
  %v7504 = vld [vmem:[%s7488 + $0x78] sm:$0xff]
  %v7505 = vld [vmem:[%s7488 + $0x80] sm:$0xff]
  %v7506 = vld [vmem:[%s7488 + $0x88] sm:$0xff]
  %v7507 = vld [vmem:[%s7488 + $0x90] sm:$0xff]
  %v7508 = vld [vmem:[%s7488 + $0x98] sm:$0xff]
  %v7509 = vld [vmem:[%s7488 + $0xa0] sm:$0xff]
  %v7510 = vld [vmem:[%s7488 + $0xa8] sm:$0xff]
  %v7511 = vld [vmem:[%s7488 + $0xb0] sm:$0xff]
  %v7512 = vld [vmem:[%s7488 + $0xb8] sm:$0xff]
  %v7513 = vld [vmem:[%s7488 + $0xc0] sm:$0x11]
  %v7514 = vld [vmem:[%s7488 + $0xc8] sm:$0x11]
  %v7541 = vunpack.c.l.b16 %v7489
  %v7542 = vunpack.c.h.b16 %v7489
  %v7543 = vunpack.c.l.b16 %v7490
  %v7544 = vunpack.c.h.b16 %v7490
  %v7545 = vunpack.c.l.b16 %v7491
  %v7546 = vunpack.c.h.b16 %v7491
  %v7547 = vunpack.c.l.b16 %v7492
  %v7548 = vunpack.c.h.b16 %v7492
  %v7549 = vunpack.c.l.b16 %v7493
  %v7550 = vunpack.c.h.b16 %v7493
  %v7551 = vunpack.c.l.b16 %v7494
  %v7552 = vunpack.c.h.b16 %v7494
  %v7553 = vunpack.c.l.b16 %v7495
  %v7554 = vunpack.c.h.b16 %v7495
  %v7555 = vunpack.c.l.b16 %v7496
  %v7556 = vunpack.c.h.b16 %v7496
  %v7557 = vunpack.c.l.b16 %v7497
  %v7558 = vunpack.c.h.b16 %v7497
  %v7559 = vunpack.c.l.b16 %v7498
  %v7560 = vunpack.c.h.b16 %v7498
  %v7561 = vunpack.c.l.b16 %v7499
  %v7562 = vunpack.c.h.b16 %v7499
  %v7563 = vunpack.c.l.b16 %v7500
  %v7564 = vunpack.c.h.b16 %v7500
  %v7565 = vunpack.c.l.b16 %v7501
  %v7566 = vunpack.c.h.b16 %v7501
  %v7567 = vunpack.c.l.b16 %v7502
  %v7568 = vunpack.c.h.b16 %v7502
  %v7569 = vunpack.c.l.b16 %v7503
  %v7570 = vunpack.c.h.b16 %v7503
  %v7571 = vunpack.c.l.b16 %v7504
  %v7572 = vunpack.c.h.b16 %v7504
  %v7573 = vunpack.c.l.b16 %v7505
  %v7574 = vunpack.c.h.b16 %v7505
  %v7575 = vunpack.c.l.b16 %v7506
  %v7576 = vunpack.c.h.b16 %v7506
  %v7577 = vunpack.c.l.b16 %v7507
  %v7578 = vunpack.c.h.b16 %v7507
  %v7579 = vunpack.c.l.b16 %v7508
  %v7580 = vunpack.c.h.b16 %v7508
  %v7581 = vunpack.c.l.b16 %v7509
  %v7582 = vunpack.c.h.b16 %v7509
  %v7583 = vunpack.c.l.b16 %v7510
  %v7584 = vunpack.c.h.b16 %v7510
  %v7585 = vunpack.c.l.b16 %v7511
  %v7586 = vunpack.c.h.b16 %v7511
  %v7587 = vunpack.c.l.b16 %v7512
  %v7588 = vunpack.c.h.b16 %v7512
  %v7589 = vunpack.c.l.b16 %v7513
  %v7590 = vunpack.c.h.b16 %v7513
  %v7591 = vunpack.c.l.b16 %v7514
  %v7592 = vunpack.c.h.b16 %v7514
  %v7593 = vpack.c.b16 %v7545, %v7541
  %v7594 = vpack.c.b16 %v7546, %v7542
  %v7595 = vpack.c.b16 %v7547, %v7543
  %v7596 = vpack.c.b16 %v7548, %v7544
  %v7597 = vpack.c.b16 %v7553, %v7549
  %v7598 = vpack.c.b16 %v7554, %v7550
  %v7599 = vpack.c.b16 %v7555, %v7551
  %v7600 = vpack.c.b16 %v7556, %v7552
  %v7601 = vpack.c.b16 %v7561, %v7557
  %v7602 = vpack.c.b16 %v7562, %v7558
  %v7603 = vpack.c.b16 %v7563, %v7559
  %v7604 = vpack.c.b16 %v7564, %v7560
  %v7605 = vpack.c.b16 %v7569, %v7565
  %v7606 = vpack.c.b16 %v7570, %v7566
  %v7607 = vpack.c.b16 %v7571, %v7567
  %v7608 = vpack.c.b16 %v7572, %v7568
  %v7609 = vpack.c.b16 %v7577, %v7573
  %v7610 = vpack.c.b16 %v7578, %v7574
  %v7611 = vpack.c.b16 %v7579, %v7575
  %v7612 = vpack.c.b16 %v7580, %v7576
  %v7613 = vpack.c.b16 %v7585, %v7581
  %v7614 = vpack.c.b16 %v7586, %v7582
  %v7615 = vpack.c.b16 %v7587, %v7583
  %v7616 = vpack.c.b16 %v7588, %v7584
  %v7617 = vpack.c.b16 %v7589, %v7589
  %v7618 = vpack.c.b16 %v7590, %v7590
  %v7619 = vpack.c.b16 %v7591, %v7591
  %v7620 = vpack.c.b16 %v7592, %v7592
  %v7643 = vsel %vm852, %v7596, 0
  %v7646 = vsel %vm852, %v7600, 0
  %v7649 = vsel %vm852, %v7604, 0
  %v7652 = vsel %vm852, %v7608, 0
  %v7655 = vsel %vm852, %v7612, 0
  %v7658 = vsel %vm852, %v7616, 0
  %v7661 = vsel %vm852, %v7620, 0
  %7663 = vmatprep.subr.bf16.mxu0 0
  %7664 = vmatpush1.bf16.msra.mxu0 %v674
  %7665 = vmatprep.subr.bf16.mxu0 0
  %7666 = vmatpush1.bf16.msra.mxu0 %v675
  %7667 = vmatprep.subr.bf16.mxu0 0
  %7668 = vmatpush1.bf16.msra.mxu0 %v676
  %7669 = vmatprep.subr.bf16.mxu0 0
  %7670 = vmatpush1.bf16.msra.mxu0 %v677
  %7671 = vmatprep.subr.bf16.mxu0 0
  %7672 = vmatpush1.bf16.msra.mxu0 %v678
  %7673 = vmatprep.subr.bf16.mxu0 0
  %7674 = vmatpush1.bf16.msra.mxu0 %v679
  %7675 = vmatprep.subr.bf16.mxu0 0
  %7676 = vmatpush1.bf16.msra.mxu0 %v680
  %7677 = vmatprep.subr.bf16.mxu0 0
  %7678 = vmatpush1.bf16.msra.mxu0 %v681
  %7679 = vmatprep.subr.bf16.mxu0 0
  %7680 = vmatpush1.bf16.msra.mxu0 %v682
  %7681 = vmatprep.subr.bf16.mxu0 0
  %7682 = vmatpush1.bf16.msra.mxu0 %v683
  %7683 = vmatprep.subr.bf16.mxu0 0
  %7684 = vmatpush1.bf16.msra.mxu0 %v684
  %7685 = vmatprep.subr.bf16.mxu0 0
  %7686 = vmatpush1.bf16.msra.mxu0 %v685
  %7687 = vmatprep.subr.bf16.mxu0 0
  %7688 = vmatpush1.bf16.msra.mxu0 %v686
  %7689 = vmatprep.subr.bf16.mxu0 0
  %7690 = vmatpush1.bf16.msra.mxu0 %v687
  %7691 = vmatprep.subr.bf16.mxu0 0
  %7692 = vmatpush1.bf16.msra.mxu0 %v688
  %7693 = vmatprep.subr.bf16.mxu0 0
  %7694 = vmatpush1.bf16.msra.mxu0 %v689
  %7695 = vmatprep.mubr.bf16.mxu0 %v7594
  %7696 = vmatmul.mubr.bf16.gmra.mrb[0].mxu0 %v7593
  %v7697 = vpop.f32.mrb[0].mxu0
  %v7698 = vadd.f32 0.0, %v7697
  %v7699 = vpop.f32.mrb[0].mxu0
  %v7700 = vpop.f32.mrb[0].mxu0
  %v7701 = vadd.f32 0.0, %v7700
  %v7702 = vpop.f32.mrb[0].mxu0
  %7703 = vmatprep.mubr.bf16.mxu0 %v7598
  %7704 = vmatmul.mubr.bf16.gmra.mrb[0].mxu0 %v7597
  %v7705 = vpop.f32.mrb[0].mxu0
  %v7706 = vadd.f32 0.0, %v7705
  %v7707 = vpop.f32.mrb[0].mxu0
  %v7708 = vpop.f32.mrb[0].mxu0
  %v7709 = vadd.f32 0.0, %v7708
  %v7710 = vpop.f32.mrb[0].mxu0
  %7711 = vmatprep.mubr.bf16.mxu0 %v7602
  %7712 = vmatmul.mubr.bf16.gmra.mrb[0].mxu0 %v7601
  %v7713 = vpop.f32.mrb[0].mxu0
  %v7714 = vadd.f32 0.0, %v7713
  %v7715 = vpop.f32.mrb[0].mxu0
  %v7716 = vpop.f32.mrb[0].mxu0
  %v7717 = vadd.f32 0.0, %v7716
  %v7718 = vpop.f32.mrb[0].mxu0
  %7719 = vmatprep.mubr.bf16.mxu0 %v7606
  %7720 = vmatmul.mubr.bf16.gmra.mrb[0].mxu0 %v7605
  %v7721 = vpop.f32.mrb[0].mxu0
  %v7722 = vadd.f32 0.0, %v7721
  %v7723 = vpop.f32.mrb[0].mxu0
  %v7724 = vpop.f32.mrb[0].mxu0
  %v7725 = vadd.f32 0.0, %v7724
  %v7726 = vpop.f32.mrb[0].mxu0
  %7727 = vmatprep.mubr.bf16.mxu0 %v7610
  %7728 = vmatmul.mubr.bf16.gmra.mrb[0].mxu0 %v7609
  %v7729 = vpop.f32.mrb[0].mxu0
  %v7730 = vadd.f32 0.0, %v7729
  %v7731 = vpop.f32.mrb[0].mxu0
  %v7732 = vpop.f32.mrb[0].mxu0
  %v7733 = vadd.f32 0.0, %v7732
  %v7734 = vpop.f32.mrb[0].mxu0
  %7735 = vmatprep.mubr.bf16.mxu0 %v7614
  %7736 = vmatmul.mubr.bf16.gmra.mrb[0].mxu0 %v7613
  %v7737 = vpop.f32.mrb[0].mxu0
  %v7738 = vadd.f32 0.0, %v7737
  %v7739 = vpop.f32.mrb[0].mxu0
  %v7740 = vpop.f32.mrb[0].mxu0
  %v7741 = vadd.f32 0.0, %v7740
  %v7742 = vpop.f32.mrb[0].mxu0
  %7743 = vmatprep.mubr.bf16.mxu0 %v7618
  %7744 = vmatmul.mubr.bf16.gmra.mrb[0].mxu0 %v7617
  %v7745 = vpop.f32.mrb[0].mxu0
  %v7746 = vadd.f32 0.0, %v7745
  %v7747 = vpop.f32.mrb[0].mxu0
  %v7748 = vpop.f32.mrb[0].mxu0
  %v7749 = vpop.f32.mrb[0].mxu0
  %7750 = vdwg.mxu0
  %7751 = vmatprep.subr.bf16.mxu0 0
  %7752 = vmatpush1.bf16.msra.mxu0 %v690
  %7753 = vmatprep.subr.bf16.mxu0 0
  %7754 = vmatpush1.bf16.msra.mxu0 %v691
  %7755 = vmatprep.subr.bf16.mxu0 0
  %7756 = vmatpush1.bf16.msra.mxu0 %v692
  %7757 = vmatprep.subr.bf16.mxu0 0
  %7758 = vmatpush1.bf16.msra.mxu0 %v693
  %7759 = vmatprep.subr.bf16.mxu0 0
  %7760 = vmatpush1.bf16.msra.mxu0 %v694
  %7761 = vmatprep.subr.bf16.mxu0 0
  %7762 = vmatpush1.bf16.msra.mxu0 %v695
  %7763 = vmatprep.subr.bf16.mxu0 0
  %7764 = vmatpush1.bf16.msra.mxu0 %v696
  %7765 = vmatprep.subr.bf16.mxu0 0
  %7766 = vmatpush1.bf16.msra.mxu0 %v697
  %7767 = vmatprep.subr.bf16.mxu0 0
  %7768 = vmatpush1.bf16.msra.mxu0 %v876
  %7769 = vmatprep.subr.bf16.mxu0 0
  %7770 = vmatpush1.bf16.msra.mxu0 0
  %7771 = vmatprep.subr.bf16.mxu0 0
  %7772 = vmatpush1.bf16.msra.mxu0 0
  %7773 = vmatprep.subr.bf16.mxu0 0
  %7774 = vmatpush1.bf16.msra.mxu0 0
  %7775 = vmatprep.subr.bf16.mxu0 0
  %7776 = vmatpush1.bf16.msra.mxu0 0
  %7777 = vmatprep.subr.bf16.mxu0 0
  %7778 = vmatpush1.bf16.msra.mxu0 0
  %7779 = vmatprep.subr.bf16.mxu0 0
  %7780 = vmatpush1.bf16.msra.mxu0 0
  %7781 = vmatprep.subr.bf16.mxu0 0
  %7782 = vmatpush1.bf16.msra.mxu0 0
  %7783 = vmatprep.mubr.bf16.mxu0 %v7643
  %7784 = vmatmul.mubr.bf16.gmra.mrb[0].mxu0 %v7595
  %v7785 = vpop.f32.mrb[0].mxu0
  %v7786 = vadd.f32 %v7698, %v7785
  %v7787 = vpop.f32.mrb[0].mxu0
  %v7788 = vpop.f32.mrb[0].mxu0
  %v7789 = vadd.f32 %v7701, %v7788
  %v7790 = vpop.f32.mrb[0].mxu0
  %7791 = vmatprep.mubr.bf16.mxu0 %v7646
  %7792 = vmatmul.mubr.bf16.gmra.mrb[0].mxu0 %v7599
  %v7793 = vpop.f32.mrb[0].mxu0
  %v7794 = vadd.f32 %v7706, %v7793
  %v7795 = vpop.f32.mrb[0].mxu0
  %v7796 = vpop.f32.mrb[0].mxu0
  %v7797 = vadd.f32 %v7709, %v7796
  %v7798 = vpop.f32.mrb[0].mxu0
  %7799 = vmatprep.mubr.bf16.mxu0 %v7649
  %7800 = vmatmul.mubr.bf16.gmra.mrb[0].mxu0 %v7603
  %v7801 = vpop.f32.mrb[0].mxu0
  %v7802 = vadd.f32 %v7714, %v7801
  %v7803 = vpop.f32.mrb[0].mxu0
  %v7804 = vpop.f32.mrb[0].mxu0
  %v7805 = vadd.f32 %v7717, %v7804
  %v7806 = vpop.f32.mrb[0].mxu0
  %7807 = vmatprep.mubr.bf16.mxu0 %v7652
  %7808 = vmatmul.mubr.bf16.gmra.mrb[0].mxu0 %v7607
  %v7809 = vpop.f32.mrb[0].mxu0
  %v7810 = vadd.f32 %v7722, %v7809
  %v7811 = vpop.f32.mrb[0].mxu0
  %v7812 = vpop.f32.mrb[0].mxu0
  %v7813 = vadd.f32 %v7725, %v7812
  %v7814 = vpop.f32.mrb[0].mxu0
  %7815 = vmatprep.mubr.bf16.mxu0 %v7655
  %7816 = vmatmul.mubr.bf16.gmra.mrb[0].mxu0 %v7611
  %v7817 = vpop.f32.mrb[0].mxu0
  %v7818 = vadd.f32 %v7730, %v7817
  %v7819 = vpop.f32.mrb[0].mxu0
  %v7820 = vpop.f32.mrb[0].mxu0
  %v7821 = vadd.f32 %v7733, %v7820
  %v7822 = vpop.f32.mrb[0].mxu0
  %7823 = vmatprep.mubr.bf16.mxu0 %v7658
  %7824 = vmatmul.mubr.bf16.gmra.mrb[0].mxu0 %v7615
  %v7825 = vpop.f32.mrb[0].mxu0
  %v7826 = vadd.f32 %v7738, %v7825
  %v7827 = vpop.f32.mrb[0].mxu0
  %v7828 = vpop.f32.mrb[0].mxu0
  %v7829 = vadd.f32 %v7741, %v7828
  %v7830 = vpop.f32.mrb[0].mxu0
  %7831 = vmatprep.mubr.bf16.mxu0 %v7661
  %7832 = vmatmul.mubr.bf16.gmra.mrb[0].mxu0 %v7619
  %v7833 = vpop.f32.mrb[0].mxu0
  %v7834 = vadd.f32 %v7746, %v7833
  %v7835 = vpop.f32.mrb[0].mxu0
  %v7836 = vpop.f32.mrb[0].mxu0
  %v7837 = vpop.f32.mrb[0].mxu0
  %7838 = vdwg.mxu0
  %v7839 = vpack.c.bf16 %v7789, %v7786
  %v7840 = vpack.c.bf16 %v7797, %v7794
  %v7841 = vpack.c.bf16 %v7805, %v7802
  %v7842 = vpack.c.bf16 %v7813, %v7810
  %v7843 = vpack.c.bf16 %v7821, %v7818
  %v7844 = vpack.c.bf16 %v7829, %v7826
  %v7845 = vpack.c.bf16 %v7834, %v7834
  %s7846 = scalar_lea.vmem %s3, 832
  %v7847 = vld [vmem:[%s7846] sm:$0xf]
  %v7848 = vld [vmem:[%s7846 + $0x4] sm:$0xf]
  %v7849 = vld [vmem:[%s7846 + $0x8] sm:$0xf]
  %v7850 = vld [vmem:[%s7846 + $0xc] sm:$0xf]
  %v7851 = vld [vmem:[%s7846 + $0x10] sm:$0xf]
  %v7852 = vld [vmem:[%s7846 + $0x14] sm:$0xf]
  %v7853 = vld [vmem:[%s7846 + $0x18] sm:$0xf]
  %v7854 = vld [vmem:[%s7846 + $0x1c] sm:$0xf]
  %v7855 = vld [vmem:[%s7846 + $0x20] sm:$0xf]
  %v7856 = vld [vmem:[%s7846 + $0x24] sm:$0xf]
  %v7857 = vld [vmem:[%s7846 + $0x28] sm:$0xf]
  %v7858 = vld [vmem:[%s7846 + $0x2c] sm:$0xf]
  %v7859 = vld [vmem:[%s7846 + $0x30] sm:$0xf]
  %v7860 = vld [vmem:[%s7846 + $0x34] sm:$0xf]
  %v7861 = vld [vmem:[%s7846 + $0x38] sm:$0xf]
  %v7862 = vld [vmem:[%s7846 + $0x3c] sm:$0xf]
  %v7879 = vunpack.c.l.b16 %v7847
  %v7880 = vunpack.c.l.b16 %v7848
  %v7881 = vunpack.c.l.b16 %v7849
  %v7882 = vunpack.c.l.b16 %v7850
  %v7883 = vunpack.c.l.b16 %v7851
  %v7884 = vunpack.c.l.b16 %v7852
  %v7885 = vunpack.c.l.b16 %v7853
  %v7886 = vunpack.c.l.b16 %v7854
  %v7887 = vunpack.c.l.b16 %v7855
  %v7888 = vunpack.c.l.b16 %v7856
  %v7889 = vunpack.c.l.b16 %v7857
  %v7890 = vunpack.c.l.b16 %v7858
  %v7891 = vunpack.c.l.b16 %v7859
  %v7892 = vunpack.c.l.b16 %v7860
  %v7893 = vunpack.c.l.b16 %v7861
  %v7894 = vunpack.c.l.b16 %v7862
  %v7895 = vpack.c.b16 %v7880, %v7879
  %v7896 = vpack.c.b16 %v7882, %v7881
  %v7897 = vpack.c.b16 %v7884, %v7883
  %v7898 = vpack.c.b16 %v7886, %v7885
  %v7899 = vpack.c.b16 %v7888, %v7887
  %v7900 = vpack.c.b16 %v7890, %v7889
  %v7901 = vpack.c.b16 %v7892, %v7891
  %v7902 = vpack.c.b16 %v7894, %v7893
  %7911 = vmatprep.subr.bf16.mxu0 0
  %7912 = vmatpush1.bf16.msra.mxu0 %v7895
  %7913 = vmatprep.subr.bf16.mxu0 0
  %7914 = vmatpush1.bf16.msra.mxu0 %v7896
  %7915 = vmatprep.subr.bf16.mxu0 0
  %7916 = vmatpush1.bf16.msra.mxu0 %v7897
  %7917 = vmatprep.subr.bf16.mxu0 0
  %7918 = vmatpush1.bf16.msra.mxu0 %v7898
  %7919 = vmatprep.subr.bf16.mxu0 0
  %7920 = vmatpush1.bf16.msra.mxu0 %v7899
  %7921 = vmatprep.subr.bf16.mxu0 0
  %7922 = vmatpush1.bf16.msra.mxu0 %v7900
  %7923 = vmatprep.subr.bf16.mxu0 0
  %7924 = vmatpush1.bf16.msra.mxu0 %v7901
  %7925 = vmatprep.subr.bf16.mxu0 0
  %7926 = vmatpush1.bf16.msra.mxu0 %v7902
  %7927 = vmatprep.subr.bf16.mxu0 0
  %7928 = vmatpush1.bf16.msra.mxu0 0
  %7929 = vmatprep.subr.bf16.mxu0 0
  %7930 = vmatpush1.bf16.msra.mxu0 0
  %7931 = vmatprep.subr.bf16.mxu0 0
  %7932 = vmatpush1.bf16.msra.mxu0 0
  %7933 = vmatprep.subr.bf16.mxu0 0
  %7934 = vmatpush1.bf16.msra.mxu0 0
  %7935 = vmatprep.subr.bf16.mxu0 0
  %7936 = vmatpush1.bf16.msra.mxu0 0
  %7937 = vmatprep.subr.bf16.mxu0 0
  %7938 = vmatpush1.bf16.msra.mxu0 0
  %7939 = vmatprep.subr.bf16.mxu0 0
  %7940 = vmatpush1.bf16.msra.mxu0 0
  %7941 = vmatprep.subr.bf16.mxu0 0
  %7942 = vmatpush1.bf16.msra.mxu0 0
  %7943 = vmatprep.mubr.bf16.mxu0 0
  %7944 = vmatmul.mubr.bf16.gmra.mrb[0].mxu0 %v7839
  %v7945 = vpop.f32.mrb[0].mxu0
  %v7946 = vadd.f32 0.0, %v7945
  %v7947 = vpop.f32.mrb[0].mxu0
  %v7948 = vpop.f32.mrb[0].mxu0
  %v7949 = vadd.f32 0.0, %v7948
  %v7950 = vpop.f32.mrb[0].mxu0
  %7951 = vmatprep.mubr.bf16.mxu0 0
  %7952 = vmatmul.mubr.bf16.gmra.mrb[0].mxu0 %v7840
  %v7953 = vpop.f32.mrb[0].mxu0
  %v7954 = vadd.f32 0.0, %v7953
  %v7955 = vpop.f32.mrb[0].mxu0
  %v7956 = vpop.f32.mrb[0].mxu0
  %v7957 = vadd.f32 0.0, %v7956
  %v7958 = vpop.f32.mrb[0].mxu0
  %7959 = vmatprep.mubr.bf16.mxu0 0
  %7960 = vmatmul.mubr.bf16.gmra.mrb[0].mxu0 %v7841
  %v7961 = vpop.f32.mrb[0].mxu0
  %v7962 = vadd.f32 0.0, %v7961
  %v7963 = vpop.f32.mrb[0].mxu0
  %v7964 = vpop.f32.mrb[0].mxu0
  %v7965 = vadd.f32 0.0, %v7964
  %v7966 = vpop.f32.mrb[0].mxu0
  %7967 = vmatprep.mubr.bf16.mxu0 0
  %7968 = vmatmul.mubr.bf16.gmra.mrb[0].mxu0 %v7842
  %v7969 = vpop.f32.mrb[0].mxu0
  %v7970 = vadd.f32 0.0, %v7969
  %v7971 = vpop.f32.mrb[0].mxu0
  %v7972 = vpop.f32.mrb[0].mxu0
  %v7973 = vadd.f32 0.0, %v7972
  %v7974 = vpop.f32.mrb[0].mxu0
  %7975 = vmatprep.mubr.bf16.mxu0 0
  %7976 = vmatmul.mubr.bf16.gmra.mrb[0].mxu0 %v7843
  %v7977 = vpop.f32.mrb[0].mxu0
  %v7978 = vadd.f32 0.0, %v7977
  %v7979 = vpop.f32.mrb[0].mxu0
  %v7980 = vpop.f32.mrb[0].mxu0
  %v7981 = vadd.f32 0.0, %v7980
  %v7982 = vpop.f32.mrb[0].mxu0
  %7983 = vmatprep.mubr.bf16.mxu0 0
  %7984 = vmatmul.mubr.bf16.gmra.mrb[0].mxu0 %v7844
  %v7985 = vpop.f32.mrb[0].mxu0
  %v7986 = vadd.f32 0.0, %v7985
  %v7987 = vpop.f32.mrb[0].mxu0
  %v7988 = vpop.f32.mrb[0].mxu0
  %v7989 = vadd.f32 0.0, %v7988
  %v7990 = vpop.f32.mrb[0].mxu0
  %7991 = vmatprep.mubr.bf16.mxu0 0
  %7992 = vmatmul.mubr.bf16.gmra.mrb[0].mxu0 %v7845
  %v7993 = vpop.f32.mrb[0].mxu0
  %v7994 = vadd.f32 0.0, %v7993
  %v7995 = vpop.f32.mrb[0].mxu0
  %v7996 = vpop.f32.mrb[0].mxu0
  %v7997 = vpop.f32.mrb[0].mxu0
  %7998 = vdwg.mxu0
  %v7999 = vadd.f32 %v7475, %v7946
  %v8000 = vadd.f32 %v7476, %v7949
  %v8001 = vadd.f32 %v7477, %v7954
  %v8002 = vadd.f32 %v7478, %v7957
  %v8003 = vadd.f32 %v7479, %v7962
  %v8004 = vadd.f32 %v7480, %v7965
  %v8005 = vadd.f32 %v7481, %v7970
  %v8006 = vadd.f32 %v7482, %v7973
  %v8007 = vadd.f32 %v7483, %v7978
  %v8008 = vadd.f32 %v7484, %v7981
  %v8009 = vadd.f32 %v7485, %v7986
  %v8010 = vadd.f32 %v7486, %v7989
  %v8011 = vadd.f32 %v7487, %v7994
  %s8012 = scalar_lea.vmem %s2, 2912
  %v8013 = vld [vmem:[%s8012] sm:$0xff]
  %v8014 = vld [vmem:[%s8012 + $0x8] sm:$0xff]
  %v8015 = vld [vmem:[%s8012 + $0x10] sm:$0xff]
  %v8016 = vld [vmem:[%s8012 + $0x18] sm:$0xff]
  %v8017 = vld [vmem:[%s8012 + $0x20] sm:$0xff]
  %v8018 = vld [vmem:[%s8012 + $0x28] sm:$0xff]
  %v8019 = vld [vmem:[%s8012 + $0x30] sm:$0xff]
  %v8020 = vld [vmem:[%s8012 + $0x38] sm:$0xff]
  %v8021 = vld [vmem:[%s8012 + $0x40] sm:$0xff]
  %v8022 = vld [vmem:[%s8012 + $0x48] sm:$0xff]
  %v8023 = vld [vmem:[%s8012 + $0x50] sm:$0xff]
  %v8024 = vld [vmem:[%s8012 + $0x58] sm:$0xff]
  %v8025 = vld [vmem:[%s8012 + $0x60] sm:$0xff]
  %v8026 = vld [vmem:[%s8012 + $0x68] sm:$0xff]
  %v8027 = vld [vmem:[%s8012 + $0x70] sm:$0xff]
  %v8028 = vld [vmem:[%s8012 + $0x78] sm:$0xff]
  %v8029 = vld [vmem:[%s8012 + $0x80] sm:$0xff]
  %v8030 = vld [vmem:[%s8012 + $0x88] sm:$0xff]
  %v8031 = vld [vmem:[%s8012 + $0x90] sm:$0xff]
  %v8032 = vld [vmem:[%s8012 + $0x98] sm:$0xff]
  %v8033 = vld [vmem:[%s8012 + $0xa0] sm:$0xff]
  %v8034 = vld [vmem:[%s8012 + $0xa8] sm:$0xff]
  %v8035 = vld [vmem:[%s8012 + $0xb0] sm:$0xff]
  %v8036 = vld [vmem:[%s8012 + $0xb8] sm:$0xff]
  %v8037 = vld [vmem:[%s8012 + $0xc0] sm:$0x11]
  %v8038 = vld [vmem:[%s8012 + $0xc8] sm:$0x11]
  %v8065 = vunpack.c.l.b16 %v8013
  %v8066 = vunpack.c.h.b16 %v8013
  %v8067 = vunpack.c.l.b16 %v8014
  %v8068 = vunpack.c.h.b16 %v8014
  %v8069 = vunpack.c.l.b16 %v8015
  %v8070 = vunpack.c.h.b16 %v8015
  %v8071 = vunpack.c.l.b16 %v8016
  %v8072 = vunpack.c.h.b16 %v8016
  %v8073 = vunpack.c.l.b16 %v8017
  %v8074 = vunpack.c.h.b16 %v8017
  %v8075 = vunpack.c.l.b16 %v8018
  %v8076 = vunpack.c.h.b16 %v8018
  %v8077 = vunpack.c.l.b16 %v8019
  %v8078 = vunpack.c.h.b16 %v8019
  %v8079 = vunpack.c.l.b16 %v8020
  %v8080 = vunpack.c.h.b16 %v8020
  %v8081 = vunpack.c.l.b16 %v8021
  %v8082 = vunpack.c.h.b16 %v8021
  %v8083 = vunpack.c.l.b16 %v8022
  %v8084 = vunpack.c.h.b16 %v8022
  %v8085 = vunpack.c.l.b16 %v8023
  %v8086 = vunpack.c.h.b16 %v8023
  %v8087 = vunpack.c.l.b16 %v8024
  %v8088 = vunpack.c.h.b16 %v8024
  %v8089 = vunpack.c.l.b16 %v8025
  %v8090 = vunpack.c.h.b16 %v8025
  %v8091 = vunpack.c.l.b16 %v8026
  %v8092 = vunpack.c.h.b16 %v8026
  %v8093 = vunpack.c.l.b16 %v8027
  %v8094 = vunpack.c.h.b16 %v8027
  %v8095 = vunpack.c.l.b16 %v8028
  %v8096 = vunpack.c.h.b16 %v8028
  %v8097 = vunpack.c.l.b16 %v8029
  %v8098 = vunpack.c.h.b16 %v8029
  %v8099 = vunpack.c.l.b16 %v8030
  %v8100 = vunpack.c.h.b16 %v8030
  %v8101 = vunpack.c.l.b16 %v8031
  %v8102 = vunpack.c.h.b16 %v8031
  %v8103 = vunpack.c.l.b16 %v8032
  %v8104 = vunpack.c.h.b16 %v8032
  %v8105 = vunpack.c.l.b16 %v8033
  %v8106 = vunpack.c.h.b16 %v8033
  %v8107 = vunpack.c.l.b16 %v8034
  %v8108 = vunpack.c.h.b16 %v8034
  %v8109 = vunpack.c.l.b16 %v8035
  %v8110 = vunpack.c.h.b16 %v8035
  %v8111 = vunpack.c.l.b16 %v8036
  %v8112 = vunpack.c.h.b16 %v8036
  %v8113 = vunpack.c.l.b16 %v8037
  %v8114 = vunpack.c.h.b16 %v8037
  %v8115 = vunpack.c.l.b16 %v8038
  %v8116 = vunpack.c.h.b16 %v8038
  %v8117 = vpack.c.b16 %v8069, %v8065
  %v8118 = vpack.c.b16 %v8070, %v8066
  %v8119 = vpack.c.b16 %v8071, %v8067
  %v8120 = vpack.c.b16 %v8072, %v8068
  %v8121 = vpack.c.b16 %v8077, %v8073
  %v8122 = vpack.c.b16 %v8078, %v8074
  %v8123 = vpack.c.b16 %v8079, %v8075
  %v8124 = vpack.c.b16 %v8080, %v8076
  %v8125 = vpack.c.b16 %v8085, %v8081
  %v8126 = vpack.c.b16 %v8086, %v8082
  %v8127 = vpack.c.b16 %v8087, %v8083
  %v8128 = vpack.c.b16 %v8088, %v8084
  %v8129 = vpack.c.b16 %v8093, %v8089
  %v8130 = vpack.c.b16 %v8094, %v8090
  %v8131 = vpack.c.b16 %v8095, %v8091
  %v8132 = vpack.c.b16 %v8096, %v8092
  %v8133 = vpack.c.b16 %v8101, %v8097
  %v8134 = vpack.c.b16 %v8102, %v8098
  %v8135 = vpack.c.b16 %v8103, %v8099
  %v8136 = vpack.c.b16 %v8104, %v8100
  %v8137 = vpack.c.b16 %v8109, %v8105
  %v8138 = vpack.c.b16 %v8110, %v8106
  %v8139 = vpack.c.b16 %v8111, %v8107
  %v8140 = vpack.c.b16 %v8112, %v8108
  %v8141 = vpack.c.b16 %v8113, %v8113
  %v8142 = vpack.c.b16 %v8114, %v8114
  %v8143 = vpack.c.b16 %v8115, %v8115
  %v8144 = vpack.c.b16 %v8116, %v8116
  %v8167 = vsel %vm852, %v8120, 0
  %v8170 = vsel %vm852, %v8124, 0
  %v8173 = vsel %vm852, %v8128, 0
  %v8176 = vsel %vm852, %v8132, 0
  %v8179 = vsel %vm852, %v8136, 0
  %v8182 = vsel %vm852, %v8140, 0
  %v8185 = vsel %vm852, %v8144, 0
  %8187 = vmatprep.subr.bf16.mxu0 0
  %8188 = vmatpush1.bf16.msra.mxu0 %v674
  %8189 = vmatprep.subr.bf16.mxu0 0
  %8190 = vmatpush1.bf16.msra.mxu0 %v675
  %8191 = vmatprep.subr.bf16.mxu0 0
  %8192 = vmatpush1.bf16.msra.mxu0 %v676
  %8193 = vmatprep.subr.bf16.mxu0 0
  %8194 = vmatpush1.bf16.msra.mxu0 %v677
  %8195 = vmatprep.subr.bf16.mxu0 0
  %8196 = vmatpush1.bf16.msra.mxu0 %v678
  %8197 = vmatprep.subr.bf16.mxu0 0
  %8198 = vmatpush1.bf16.msra.mxu0 %v679
  %8199 = vmatprep.subr.bf16.mxu0 0
  %8200 = vmatpush1.bf16.msra.mxu0 %v680
  %8201 = vmatprep.subr.bf16.mxu0 0
  %8202 = vmatpush1.bf16.msra.mxu0 %v681
  %8203 = vmatprep.subr.bf16.mxu0 0
  %8204 = vmatpush1.bf16.msra.mxu0 %v682
  %8205 = vmatprep.subr.bf16.mxu0 0
  %8206 = vmatpush1.bf16.msra.mxu0 %v683
  %8207 = vmatprep.subr.bf16.mxu0 0
  %8208 = vmatpush1.bf16.msra.mxu0 %v684
  %8209 = vmatprep.subr.bf16.mxu0 0
  %8210 = vmatpush1.bf16.msra.mxu0 %v685
  %8211 = vmatprep.subr.bf16.mxu0 0
  %8212 = vmatpush1.bf16.msra.mxu0 %v686
  %8213 = vmatprep.subr.bf16.mxu0 0
  %8214 = vmatpush1.bf16.msra.mxu0 %v687
  %8215 = vmatprep.subr.bf16.mxu0 0
  %8216 = vmatpush1.bf16.msra.mxu0 %v688
  %8217 = vmatprep.subr.bf16.mxu0 0
  %8218 = vmatpush1.bf16.msra.mxu0 %v689
  %8219 = vmatprep.mubr.bf16.mxu0 %v8118
  %8220 = vmatmul.mubr.bf16.gmra.mrb[0].mxu0 %v8117
  %v8221 = vpop.f32.mrb[0].mxu0
  %v8222 = vadd.f32 0.0, %v8221
  %v8223 = vpop.f32.mrb[0].mxu0
  %v8224 = vpop.f32.mrb[0].mxu0
  %v8225 = vadd.f32 0.0, %v8224
  %v8226 = vpop.f32.mrb[0].mxu0
  %8227 = vmatprep.mubr.bf16.mxu0 %v8122
  %8228 = vmatmul.mubr.bf16.gmra.mrb[0].mxu0 %v8121
  %v8229 = vpop.f32.mrb[0].mxu0
  %v8230 = vadd.f32 0.0, %v8229
  %v8231 = vpop.f32.mrb[0].mxu0
  %v8232 = vpop.f32.mrb[0].mxu0
  %v8233 = vadd.f32 0.0, %v8232
  %v8234 = vpop.f32.mrb[0].mxu0
  %8235 = vmatprep.mubr.bf16.mxu0 %v8126
  %8236 = vmatmul.mubr.bf16.gmra.mrb[0].mxu0 %v8125
  %v8237 = vpop.f32.mrb[0].mxu0
  %v8238 = vadd.f32 0.0, %v8237
  %v8239 = vpop.f32.mrb[0].mxu0
  %v8240 = vpop.f32.mrb[0].mxu0
  %v8241 = vadd.f32 0.0, %v8240
  %v8242 = vpop.f32.mrb[0].mxu0
  %8243 = vmatprep.mubr.bf16.mxu0 %v8130
  %8244 = vmatmul.mubr.bf16.gmra.mrb[0].mxu0 %v8129
  %v8245 = vpop.f32.mrb[0].mxu0
  %v8246 = vadd.f32 0.0, %v8245
  %v8247 = vpop.f32.mrb[0].mxu0
  %v8248 = vpop.f32.mrb[0].mxu0
  %v8249 = vadd.f32 0.0, %v8248
  %v8250 = vpop.f32.mrb[0].mxu0
  %8251 = vmatprep.mubr.bf16.mxu0 %v8134
  %8252 = vmatmul.mubr.bf16.gmra.mrb[0].mxu0 %v8133
  %v8253 = vpop.f32.mrb[0].mxu0
  %v8254 = vadd.f32 0.0, %v8253
  %v8255 = vpop.f32.mrb[0].mxu0
  %v8256 = vpop.f32.mrb[0].mxu0
  %v8257 = vadd.f32 0.0, %v8256
  %v8258 = vpop.f32.mrb[0].mxu0
  %8259 = vmatprep.mubr.bf16.mxu0 %v8138
  %8260 = vmatmul.mubr.bf16.gmra.mrb[0].mxu0 %v8137
  %v8261 = vpop.f32.mrb[0].mxu0
  %v8262 = vadd.f32 0.0, %v8261
  %v8263 = vpop.f32.mrb[0].mxu0
  %v8264 = vpop.f32.mrb[0].mxu0
  %v8265 = vadd.f32 0.0, %v8264
  %v8266 = vpop.f32.mrb[0].mxu0
  %8267 = vmatprep.mubr.bf16.mxu0 %v8142
  %8268 = vmatmul.mubr.bf16.gmra.mrb[0].mxu0 %v8141
  %v8269 = vpop.f32.mrb[0].mxu0
  %v8270 = vadd.f32 0.0, %v8269
  %v8271 = vpop.f32.mrb[0].mxu0
  %v8272 = vpop.f32.mrb[0].mxu0
  %v8273 = vpop.f32.mrb[0].mxu0
  %8274 = vdwg.mxu0
  %8275 = vmatprep.subr.bf16.mxu0 0
  %8276 = vmatpush1.bf16.msra.mxu0 %v690
  %8277 = vmatprep.subr.bf16.mxu0 0
  %8278 = vmatpush1.bf16.msra.mxu0 %v691
  %8279 = vmatprep.subr.bf16.mxu0 0
  %8280 = vmatpush1.bf16.msra.mxu0 %v692
  %8281 = vmatprep.subr.bf16.mxu0 0
  %8282 = vmatpush1.bf16.msra.mxu0 %v693
  %8283 = vmatprep.subr.bf16.mxu0 0
  %8284 = vmatpush1.bf16.msra.mxu0 %v694
  %8285 = vmatprep.subr.bf16.mxu0 0
  %8286 = vmatpush1.bf16.msra.mxu0 %v695
  %8287 = vmatprep.subr.bf16.mxu0 0
  %8288 = vmatpush1.bf16.msra.mxu0 %v696
  %8289 = vmatprep.subr.bf16.mxu0 0
  %8290 = vmatpush1.bf16.msra.mxu0 %v697
  %8291 = vmatprep.subr.bf16.mxu0 0
  %8292 = vmatpush1.bf16.msra.mxu0 %v876
  %8293 = vmatprep.subr.bf16.mxu0 0
  %8294 = vmatpush1.bf16.msra.mxu0 0
  %8295 = vmatprep.subr.bf16.mxu0 0
  %8296 = vmatpush1.bf16.msra.mxu0 0
  %8297 = vmatprep.subr.bf16.mxu0 0
  %8298 = vmatpush1.bf16.msra.mxu0 0
  %8299 = vmatprep.subr.bf16.mxu0 0
  %8300 = vmatpush1.bf16.msra.mxu0 0
  %8301 = vmatprep.subr.bf16.mxu0 0
  %8302 = vmatpush1.bf16.msra.mxu0 0
  %8303 = vmatprep.subr.bf16.mxu0 0
  %8304 = vmatpush1.bf16.msra.mxu0 0
  %8305 = vmatprep.subr.bf16.mxu0 0
  %8306 = vmatpush1.bf16.msra.mxu0 0
  %8307 = vmatprep.mubr.bf16.mxu0 %v8167
  %8308 = vmatmul.mubr.bf16.gmra.mrb[0].mxu0 %v8119
  %v8309 = vpop.f32.mrb[0].mxu0
  %v8310 = vadd.f32 %v8222, %v8309
  %v8311 = vpop.f32.mrb[0].mxu0
  %v8312 = vpop.f32.mrb[0].mxu0
  %v8313 = vadd.f32 %v8225, %v8312
  %v8314 = vpop.f32.mrb[0].mxu0
  %8315 = vmatprep.mubr.bf16.mxu0 %v8170
  %8316 = vmatmul.mubr.bf16.gmra.mrb[0].mxu0 %v8123
  %v8317 = vpop.f32.mrb[0].mxu0
  %v8318 = vadd.f32 %v8230, %v8317
  %v8319 = vpop.f32.mrb[0].mxu0
  %v8320 = vpop.f32.mrb[0].mxu0
  %v8321 = vadd.f32 %v8233, %v8320
  %v8322 = vpop.f32.mrb[0].mxu0
  %8323 = vmatprep.mubr.bf16.mxu0 %v8173
  %8324 = vmatmul.mubr.bf16.gmra.mrb[0].mxu0 %v8127
  %v8325 = vpop.f32.mrb[0].mxu0
  %v8326 = vadd.f32 %v8238, %v8325
  %v8327 = vpop.f32.mrb[0].mxu0
  %v8328 = vpop.f32.mrb[0].mxu0
  %v8329 = vadd.f32 %v8241, %v8328
  %v8330 = vpop.f32.mrb[0].mxu0
  %8331 = vmatprep.mubr.bf16.mxu0 %v8176
  %8332 = vmatmul.mubr.bf16.gmra.mrb[0].mxu0 %v8131
  %v8333 = vpop.f32.mrb[0].mxu0
  %v8334 = vadd.f32 %v8246, %v8333
  %v8335 = vpop.f32.mrb[0].mxu0
  %v8336 = vpop.f32.mrb[0].mxu0
  %v8337 = vadd.f32 %v8249, %v8336
  %v8338 = vpop.f32.mrb[0].mxu0
  %8339 = vmatprep.mubr.bf16.mxu0 %v8179
  %8340 = vmatmul.mubr.bf16.gmra.mrb[0].mxu0 %v8135
  %v8341 = vpop.f32.mrb[0].mxu0
  %v8342 = vadd.f32 %v8254, %v8341
  %v8343 = vpop.f32.mrb[0].mxu0
  %v8344 = vpop.f32.mrb[0].mxu0
  %v8345 = vadd.f32 %v8257, %v8344
  %v8346 = vpop.f32.mrb[0].mxu0
  %8347 = vmatprep.mubr.bf16.mxu0 %v8182
  %8348 = vmatmul.mubr.bf16.gmra.mrb[0].mxu0 %v8139
  %v8349 = vpop.f32.mrb[0].mxu0
  %v8350 = vadd.f32 %v8262, %v8349
  %v8351 = vpop.f32.mrb[0].mxu0
  %v8352 = vpop.f32.mrb[0].mxu0
  %v8353 = vadd.f32 %v8265, %v8352
  %v8354 = vpop.f32.mrb[0].mxu0
  %8355 = vmatprep.mubr.bf16.mxu0 %v8185
  %8356 = vmatmul.mubr.bf16.gmra.mrb[0].mxu0 %v8143
  %v8357 = vpop.f32.mrb[0].mxu0
  %v8358 = vadd.f32 %v8270, %v8357
  %v8359 = vpop.f32.mrb[0].mxu0
  %v8360 = vpop.f32.mrb[0].mxu0
  %v8361 = vpop.f32.mrb[0].mxu0
  %8362 = vdwg.mxu0
  %v8363 = vpack.c.bf16 %v8313, %v8310
  %v8364 = vpack.c.bf16 %v8321, %v8318
  %v8365 = vpack.c.bf16 %v8329, %v8326
  %v8366 = vpack.c.bf16 %v8337, %v8334
  %v8367 = vpack.c.bf16 %v8345, %v8342
  %v8368 = vpack.c.bf16 %v8353, %v8350
  %v8369 = vpack.c.bf16 %v8358, %v8358
  %s8370 = scalar_lea.vmem %s3, 896
  %v8371 = vld [vmem:[%s8370] sm:$0xf]
  %v8372 = vld [vmem:[%s8370 + $0x4] sm:$0xf]
  %v8373 = vld [vmem:[%s8370 + $0x8] sm:$0xf]
  %v8374 = vld [vmem:[%s8370 + $0xc] sm:$0xf]
  %v8375 = vld [vmem:[%s8370 + $0x10] sm:$0xf]
  %v8376 = vld [vmem:[%s8370 + $0x14] sm:$0xf]
  %v8377 = vld [vmem:[%s8370 + $0x18] sm:$0xf]
  %v8378 = vld [vmem:[%s8370 + $0x1c] sm:$0xf]
  %v8379 = vld [vmem:[%s8370 + $0x20] sm:$0xf]
  %v8380 = vld [vmem:[%s8370 + $0x24] sm:$0xf]
  %v8381 = vld [vmem:[%s8370 + $0x28] sm:$0xf]
  %v8382 = vld [vmem:[%s8370 + $0x2c] sm:$0xf]
  %v8383 = vld [vmem:[%s8370 + $0x30] sm:$0xf]
  %v8384 = vld [vmem:[%s8370 + $0x34] sm:$0xf]
  %v8385 = vld [vmem:[%s8370 + $0x38] sm:$0xf]
  %v8386 = vld [vmem:[%s8370 + $0x3c] sm:$0xf]
  %v8403 = vunpack.c.l.b16 %v8371
  %v8404 = vunpack.c.l.b16 %v8372
  %v8405 = vunpack.c.l.b16 %v8373
  %v8406 = vunpack.c.l.b16 %v8374
  %v8407 = vunpack.c.l.b16 %v8375
  %v8408 = vunpack.c.l.b16 %v8376
  %v8409 = vunpack.c.l.b16 %v8377
  %v8410 = vunpack.c.l.b16 %v8378
  %v8411 = vunpack.c.l.b16 %v8379
  %v8412 = vunpack.c.l.b16 %v8380
  %v8413 = vunpack.c.l.b16 %v8381
  %v8414 = vunpack.c.l.b16 %v8382
  %v8415 = vunpack.c.l.b16 %v8383
  %v8416 = vunpack.c.l.b16 %v8384
  %v8417 = vunpack.c.l.b16 %v8385
  %v8418 = vunpack.c.l.b16 %v8386
  %v8419 = vpack.c.b16 %v8404, %v8403
  %v8420 = vpack.c.b16 %v8406, %v8405
  %v8421 = vpack.c.b16 %v8408, %v8407
  %v8422 = vpack.c.b16 %v8410, %v8409
  %v8423 = vpack.c.b16 %v8412, %v8411
  %v8424 = vpack.c.b16 %v8414, %v8413
  %v8425 = vpack.c.b16 %v8416, %v8415
  %v8426 = vpack.c.b16 %v8418, %v8417
  %8435 = vmatprep.subr.bf16.mxu0 0
  %8436 = vmatpush1.bf16.msra.mxu0 %v8419
  %8437 = vmatprep.subr.bf16.mxu0 0
  %8438 = vmatpush1.bf16.msra.mxu0 %v8420
  %8439 = vmatprep.subr.bf16.mxu0 0
  %8440 = vmatpush1.bf16.msra.mxu0 %v8421
  %8441 = vmatprep.subr.bf16.mxu0 0
  %8442 = vmatpush1.bf16.msra.mxu0 %v8422
  %8443 = vmatprep.subr.bf16.mxu0 0
  %8444 = vmatpush1.bf16.msra.mxu0 %v8423
  %8445 = vmatprep.subr.bf16.mxu0 0
  %8446 = vmatpush1.bf16.msra.mxu0 %v8424
  %8447 = vmatprep.subr.bf16.mxu0 0
  %8448 = vmatpush1.bf16.msra.mxu0 %v8425
  %8449 = vmatprep.subr.bf16.mxu0 0
  %8450 = vmatpush1.bf16.msra.mxu0 %v8426
  %8451 = vmatprep.subr.bf16.mxu0 0
  %8452 = vmatpush1.bf16.msra.mxu0 0
  %8453 = vmatprep.subr.bf16.mxu0 0
  %8454 = vmatpush1.bf16.msra.mxu0 0
  %8455 = vmatprep.subr.bf16.mxu0 0
  %8456 = vmatpush1.bf16.msra.mxu0 0
  %8457 = vmatprep.subr.bf16.mxu0 0
  %8458 = vmatpush1.bf16.msra.mxu0 0
  %8459 = vmatprep.subr.bf16.mxu0 0
  %8460 = vmatpush1.bf16.msra.mxu0 0
  %8461 = vmatprep.subr.bf16.mxu0 0
  %8462 = vmatpush1.bf16.msra.mxu0 0
  %8463 = vmatprep.subr.bf16.mxu0 0
  %8464 = vmatpush1.bf16.msra.mxu0 0
  %8465 = vmatprep.subr.bf16.mxu0 0
  %8466 = vmatpush1.bf16.msra.mxu0 0
  %8467 = vmatprep.mubr.bf16.mxu0 0
  %8468 = vmatmul.mubr.bf16.gmra.mrb[0].mxu0 %v8363
  %v8469 = vpop.f32.mrb[0].mxu0
  %v8470 = vadd.f32 0.0, %v8469
  %v8471 = vpop.f32.mrb[0].mxu0
  %v8472 = vpop.f32.mrb[0].mxu0
  %v8473 = vadd.f32 0.0, %v8472
  %v8474 = vpop.f32.mrb[0].mxu0
  %8475 = vmatprep.mubr.bf16.mxu0 0
  %8476 = vmatmul.mubr.bf16.gmra.mrb[0].mxu0 %v8364
  %v8477 = vpop.f32.mrb[0].mxu0
  %v8478 = vadd.f32 0.0, %v8477
  %v8479 = vpop.f32.mrb[0].mxu0
  %v8480 = vpop.f32.mrb[0].mxu0
  %v8481 = vadd.f32 0.0, %v8480
  %v8482 = vpop.f32.mrb[0].mxu0
  %8483 = vmatprep.mubr.bf16.mxu0 0
  %8484 = vmatmul.mubr.bf16.gmra.mrb[0].mxu0 %v8365
  %v8485 = vpop.f32.mrb[0].mxu0
  %v8486 = vadd.f32 0.0, %v8485
  %v8487 = vpop.f32.mrb[0].mxu0
  %v8488 = vpop.f32.mrb[0].mxu0
  %v8489 = vadd.f32 0.0, %v8488
  %v8490 = vpop.f32.mrb[0].mxu0
  %8491 = vmatprep.mubr.bf16.mxu0 0
  %8492 = vmatmul.mubr.bf16.gmra.mrb[0].mxu0 %v8366
  %v8493 = vpop.f32.mrb[0].mxu0
  %v8494 = vadd.f32 0.0, %v8493
  %v8495 = vpop.f32.mrb[0].mxu0
  %v8496 = vpop.f32.mrb[0].mxu0
  %v8497 = vadd.f32 0.0, %v8496
  %v8498 = vpop.f32.mrb[0].mxu0
  %8499 = vmatprep.mubr.bf16.mxu0 0
  %8500 = vmatmul.mubr.bf16.gmra.mrb[0].mxu0 %v8367
  %v8501 = vpop.f32.mrb[0].mxu0
  %v8502 = vadd.f32 0.0, %v8501
  %v8503 = vpop.f32.mrb[0].mxu0
  %v8504 = vpop.f32.mrb[0].mxu0
  %v8505 = vadd.f32 0.0, %v8504
  %v8506 = vpop.f32.mrb[0].mxu0
  %8507 = vmatprep.mubr.bf16.mxu0 0
  %8508 = vmatmul.mubr.bf16.gmra.mrb[0].mxu0 %v8368
  %v8509 = vpop.f32.mrb[0].mxu0
  %v8510 = vadd.f32 0.0, %v8509
  %v8511 = vpop.f32.mrb[0].mxu0
  %v8512 = vpop.f32.mrb[0].mxu0
  %v8513 = vadd.f32 0.0, %v8512
  %v8514 = vpop.f32.mrb[0].mxu0
  %8515 = vmatprep.mubr.bf16.mxu0 0
  %8516 = vmatmul.mubr.bf16.gmra.mrb[0].mxu0 %v8369
  %v8517 = vpop.f32.mrb[0].mxu0
  %v8518 = vadd.f32 0.0, %v8517
  %v8519 = vpop.f32.mrb[0].mxu0
  %v8520 = vpop.f32.mrb[0].mxu0
  %v8521 = vpop.f32.mrb[0].mxu0
  %8522 = vdwg.mxu0
  %v8523 = vadd.f32 %v7999, %v8470
  %v8524 = vadd.f32 %v8000, %v8473
  %v8525 = vadd.f32 %v8001, %v8478
  %v8526 = vadd.f32 %v8002, %v8481
  %v8527 = vadd.f32 %v8003, %v8486
  %v8528 = vadd.f32 %v8004, %v8489
  %v8529 = vadd.f32 %v8005, %v8494
  %v8530 = vadd.f32 %v8006, %v8497
  %v8531 = vadd.f32 %v8007, %v8502
  %v8532 = vadd.f32 %v8008, %v8505
  %v8533 = vadd.f32 %v8009, %v8510
  %v8534 = vadd.f32 %v8010, %v8513
  %v8535 = vadd.f32 %v8011, %v8518
  %s8536 = scalar_lea.vmem %s2, 3120
  %v8537 = vld [vmem:[%s8536] sm:$0xff]
  %v8538 = vld [vmem:[%s8536 + $0x8] sm:$0xff]
  %v8539 = vld [vmem:[%s8536 + $0x10] sm:$0xff]
  %v8540 = vld [vmem:[%s8536 + $0x18] sm:$0xff]
  %v8541 = vld [vmem:[%s8536 + $0x20] sm:$0xff]
  %v8542 = vld [vmem:[%s8536 + $0x28] sm:$0xff]
  %v8543 = vld [vmem:[%s8536 + $0x30] sm:$0xff]
  %v8544 = vld [vmem:[%s8536 + $0x38] sm:$0xff]
  %v8545 = vld [vmem:[%s8536 + $0x40] sm:$0xff]
  %v8546 = vld [vmem:[%s8536 + $0x48] sm:$0xff]
  %v8547 = vld [vmem:[%s8536 + $0x50] sm:$0xff]
  %v8548 = vld [vmem:[%s8536 + $0x58] sm:$0xff]
  %v8549 = vld [vmem:[%s8536 + $0x60] sm:$0xff]
  %v8550 = vld [vmem:[%s8536 + $0x68] sm:$0xff]
  %v8551 = vld [vmem:[%s8536 + $0x70] sm:$0xff]
  %v8552 = vld [vmem:[%s8536 + $0x78] sm:$0xff]
  %v8553 = vld [vmem:[%s8536 + $0x80] sm:$0xff]
  %v8554 = vld [vmem:[%s8536 + $0x88] sm:$0xff]
  %v8555 = vld [vmem:[%s8536 + $0x90] sm:$0xff]
  %v8556 = vld [vmem:[%s8536 + $0x98] sm:$0xff]
  %v8557 = vld [vmem:[%s8536 + $0xa0] sm:$0xff]
  %v8558 = vld [vmem:[%s8536 + $0xa8] sm:$0xff]
  %v8559 = vld [vmem:[%s8536 + $0xb0] sm:$0xff]
  %v8560 = vld [vmem:[%s8536 + $0xb8] sm:$0xff]
  %v8561 = vld [vmem:[%s8536 + $0xc0] sm:$0x11]
  %v8562 = vld [vmem:[%s8536 + $0xc8] sm:$0x11]
  %v8589 = vunpack.c.l.b16 %v8537
  %v8590 = vunpack.c.h.b16 %v8537
  %v8591 = vunpack.c.l.b16 %v8538
  %v8592 = vunpack.c.h.b16 %v8538
  %v8593 = vunpack.c.l.b16 %v8539
  %v8594 = vunpack.c.h.b16 %v8539
  %v8595 = vunpack.c.l.b16 %v8540
  %v8596 = vunpack.c.h.b16 %v8540
  %v8597 = vunpack.c.l.b16 %v8541
  %v8598 = vunpack.c.h.b16 %v8541
  %v8599 = vunpack.c.l.b16 %v8542
  %v8600 = vunpack.c.h.b16 %v8542
  %v8601 = vunpack.c.l.b16 %v8543
  %v8602 = vunpack.c.h.b16 %v8543
  %v8603 = vunpack.c.l.b16 %v8544
  %v8604 = vunpack.c.h.b16 %v8544
  %v8605 = vunpack.c.l.b16 %v8545
  %v8606 = vunpack.c.h.b16 %v8545
  %v8607 = vunpack.c.l.b16 %v8546
  %v8608 = vunpack.c.h.b16 %v8546
  %v8609 = vunpack.c.l.b16 %v8547
  %v8610 = vunpack.c.h.b16 %v8547
  %v8611 = vunpack.c.l.b16 %v8548
  %v8612 = vunpack.c.h.b16 %v8548
  %v8613 = vunpack.c.l.b16 %v8549
  %v8614 = vunpack.c.h.b16 %v8549
  %v8615 = vunpack.c.l.b16 %v8550
  %v8616 = vunpack.c.h.b16 %v8550
  %v8617 = vunpack.c.l.b16 %v8551
  %v8618 = vunpack.c.h.b16 %v8551
  %v8619 = vunpack.c.l.b16 %v8552
  %v8620 = vunpack.c.h.b16 %v8552
  %v8621 = vunpack.c.l.b16 %v8553
  %v8622 = vunpack.c.h.b16 %v8553
  %v8623 = vunpack.c.l.b16 %v8554
  %v8624 = vunpack.c.h.b16 %v8554
  %v8625 = vunpack.c.l.b16 %v8555
  %v8626 = vunpack.c.h.b16 %v8555
  %v8627 = vunpack.c.l.b16 %v8556
  %v8628 = vunpack.c.h.b16 %v8556
  %v8629 = vunpack.c.l.b16 %v8557
  %v8630 = vunpack.c.h.b16 %v8557
  %v8631 = vunpack.c.l.b16 %v8558
  %v8632 = vunpack.c.h.b16 %v8558
  %v8633 = vunpack.c.l.b16 %v8559
  %v8634 = vunpack.c.h.b16 %v8559
  %v8635 = vunpack.c.l.b16 %v8560
  %v8636 = vunpack.c.h.b16 %v8560
  %v8637 = vunpack.c.l.b16 %v8561
  %v8638 = vunpack.c.h.b16 %v8561
  %v8639 = vunpack.c.l.b16 %v8562
  %v8640 = vunpack.c.h.b16 %v8562
  %v8641 = vpack.c.b16 %v8593, %v8589
  %v8642 = vpack.c.b16 %v8594, %v8590
  %v8643 = vpack.c.b16 %v8595, %v8591
  %v8644 = vpack.c.b16 %v8596, %v8592
  %v8645 = vpack.c.b16 %v8601, %v8597
  %v8646 = vpack.c.b16 %v8602, %v8598
  %v8647 = vpack.c.b16 %v8603, %v8599
  %v8648 = vpack.c.b16 %v8604, %v8600
  %v8649 = vpack.c.b16 %v8609, %v8605
  %v8650 = vpack.c.b16 %v8610, %v8606
  %v8651 = vpack.c.b16 %v8611, %v8607
  %v8652 = vpack.c.b16 %v8612, %v8608
  %v8653 = vpack.c.b16 %v8617, %v8613
  %v8654 = vpack.c.b16 %v8618, %v8614
  %v8655 = vpack.c.b16 %v8619, %v8615
  %v8656 = vpack.c.b16 %v8620, %v8616
  %v8657 = vpack.c.b16 %v8625, %v8621
  %v8658 = vpack.c.b16 %v8626, %v8622
  %v8659 = vpack.c.b16 %v8627, %v8623
  %v8660 = vpack.c.b16 %v8628, %v8624
  %v8661 = vpack.c.b16 %v8633, %v8629
  %v8662 = vpack.c.b16 %v8634, %v8630
  %v8663 = vpack.c.b16 %v8635, %v8631
  %v8664 = vpack.c.b16 %v8636, %v8632
  %v8665 = vpack.c.b16 %v8637, %v8637
  %v8666 = vpack.c.b16 %v8638, %v8638
  %v8667 = vpack.c.b16 %v8639, %v8639
  %v8668 = vpack.c.b16 %v8640, %v8640
  %v8691 = vsel %vm852, %v8644, 0
  %v8694 = vsel %vm852, %v8648, 0
  %v8697 = vsel %vm852, %v8652, 0
  %v8700 = vsel %vm852, %v8656, 0
  %v8703 = vsel %vm852, %v8660, 0
  %v8706 = vsel %vm852, %v8664, 0
  %v8709 = vsel %vm852, %v8668, 0
  %8711 = vmatprep.subr.bf16.mxu0 0
  %8712 = vmatpush1.bf16.msra.mxu0 %v674
  %8713 = vmatprep.subr.bf16.mxu0 0
  %8714 = vmatpush1.bf16.msra.mxu0 %v675
  %8715 = vmatprep.subr.bf16.mxu0 0
  %8716 = vmatpush1.bf16.msra.mxu0 %v676
  %8717 = vmatprep.subr.bf16.mxu0 0
  %8718 = vmatpush1.bf16.msra.mxu0 %v677
  %8719 = vmatprep.subr.bf16.mxu0 0
  %8720 = vmatpush1.bf16.msra.mxu0 %v678
  %8721 = vmatprep.subr.bf16.mxu0 0
  %8722 = vmatpush1.bf16.msra.mxu0 %v679
  %8723 = vmatprep.subr.bf16.mxu0 0
  %8724 = vmatpush1.bf16.msra.mxu0 %v680
  %8725 = vmatprep.subr.bf16.mxu0 0
  %8726 = vmatpush1.bf16.msra.mxu0 %v681
  %8727 = vmatprep.subr.bf16.mxu0 0
  %8728 = vmatpush1.bf16.msra.mxu0 %v682
  %8729 = vmatprep.subr.bf16.mxu0 0
  %8730 = vmatpush1.bf16.msra.mxu0 %v683
  %8731 = vmatprep.subr.bf16.mxu0 0
  %8732 = vmatpush1.bf16.msra.mxu0 %v684
  %8733 = vmatprep.subr.bf16.mxu0 0
  %8734 = vmatpush1.bf16.msra.mxu0 %v685
  %8735 = vmatprep.subr.bf16.mxu0 0
  %8736 = vmatpush1.bf16.msra.mxu0 %v686
  %8737 = vmatprep.subr.bf16.mxu0 0
  %8738 = vmatpush1.bf16.msra.mxu0 %v687
  %8739 = vmatprep.subr.bf16.mxu0 0
  %8740 = vmatpush1.bf16.msra.mxu0 %v688
  %8741 = vmatprep.subr.bf16.mxu0 0
  %8742 = vmatpush1.bf16.msra.mxu0 %v689
  %8743 = vmatprep.mubr.bf16.mxu0 %v8642
  %8744 = vmatmul.mubr.bf16.gmra.mrb[0].mxu0 %v8641
  %v8745 = vpop.f32.mrb[0].mxu0
  %v8746 = vadd.f32 0.0, %v8745
  %v8747 = vpop.f32.mrb[0].mxu0
  %v8748 = vpop.f32.mrb[0].mxu0
  %v8749 = vadd.f32 0.0, %v8748
  %v8750 = vpop.f32.mrb[0].mxu0
  %8751 = vmatprep.mubr.bf16.mxu0 %v8646
  %8752 = vmatmul.mubr.bf16.gmra.mrb[0].mxu0 %v8645
  %v8753 = vpop.f32.mrb[0].mxu0
  %v8754 = vadd.f32 0.0, %v8753
  %v8755 = vpop.f32.mrb[0].mxu0
  %v8756 = vpop.f32.mrb[0].mxu0
  %v8757 = vadd.f32 0.0, %v8756
  %v8758 = vpop.f32.mrb[0].mxu0
  %8759 = vmatprep.mubr.bf16.mxu0 %v8650
  %8760 = vmatmul.mubr.bf16.gmra.mrb[0].mxu0 %v8649
  %v8761 = vpop.f32.mrb[0].mxu0
  %v8762 = vadd.f32 0.0, %v8761
  %v8763 = vpop.f32.mrb[0].mxu0
  %v8764 = vpop.f32.mrb[0].mxu0
  %v8765 = vadd.f32 0.0, %v8764
  %v8766 = vpop.f32.mrb[0].mxu0
  %8767 = vmatprep.mubr.bf16.mxu0 %v8654
  %8768 = vmatmul.mubr.bf16.gmra.mrb[0].mxu0 %v8653
  %v8769 = vpop.f32.mrb[0].mxu0
  %v8770 = vadd.f32 0.0, %v8769
  %v8771 = vpop.f32.mrb[0].mxu0
  %v8772 = vpop.f32.mrb[0].mxu0
  %v8773 = vadd.f32 0.0, %v8772
  %v8774 = vpop.f32.mrb[0].mxu0
  %8775 = vmatprep.mubr.bf16.mxu0 %v8658
  %8776 = vmatmul.mubr.bf16.gmra.mrb[0].mxu0 %v8657
  %v8777 = vpop.f32.mrb[0].mxu0
  %v8778 = vadd.f32 0.0, %v8777
  %v8779 = vpop.f32.mrb[0].mxu0
  %v8780 = vpop.f32.mrb[0].mxu0
  %v8781 = vadd.f32 0.0, %v8780
  %v8782 = vpop.f32.mrb[0].mxu0
  %8783 = vmatprep.mubr.bf16.mxu0 %v8662
  %8784 = vmatmul.mubr.bf16.gmra.mrb[0].mxu0 %v8661
  %v8785 = vpop.f32.mrb[0].mxu0
  %v8786 = vadd.f32 0.0, %v8785
  %v8787 = vpop.f32.mrb[0].mxu0
  %v8788 = vpop.f32.mrb[0].mxu0
  %v8789 = vadd.f32 0.0, %v8788
  %v8790 = vpop.f32.mrb[0].mxu0
  %8791 = vmatprep.mubr.bf16.mxu0 %v8666
  %8792 = vmatmul.mubr.bf16.gmra.mrb[0].mxu0 %v8665
  %v8793 = vpop.f32.mrb[0].mxu0
  %v8794 = vadd.f32 0.0, %v8793
  %v8795 = vpop.f32.mrb[0].mxu0
  %v8796 = vpop.f32.mrb[0].mxu0
  %v8797 = vpop.f32.mrb[0].mxu0
  %8798 = vdwg.mxu0
  %8799 = vmatprep.subr.bf16.mxu0 0
  %8800 = vmatpush1.bf16.msra.mxu0 %v690
  %8801 = vmatprep.subr.bf16.mxu0 0
  %8802 = vmatpush1.bf16.msra.mxu0 %v691
  %8803 = vmatprep.subr.bf16.mxu0 0
  %8804 = vmatpush1.bf16.msra.mxu0 %v692
  %8805 = vmatprep.subr.bf16.mxu0 0
  %8806 = vmatpush1.bf16.msra.mxu0 %v693
  %8807 = vmatprep.subr.bf16.mxu0 0
  %8808 = vmatpush1.bf16.msra.mxu0 %v694
  %8809 = vmatprep.subr.bf16.mxu0 0
  %8810 = vmatpush1.bf16.msra.mxu0 %v695
  %8811 = vmatprep.subr.bf16.mxu0 0
  %8812 = vmatpush1.bf16.msra.mxu0 %v696
  %8813 = vmatprep.subr.bf16.mxu0 0
  %8814 = vmatpush1.bf16.msra.mxu0 %v697
  %8815 = vmatprep.subr.bf16.mxu0 0
  %8816 = vmatpush1.bf16.msra.mxu0 %v876
  %8817 = vmatprep.subr.bf16.mxu0 0
  %8818 = vmatpush1.bf16.msra.mxu0 0
  %8819 = vmatprep.subr.bf16.mxu0 0
  %8820 = vmatpush1.bf16.msra.mxu0 0
  %8821 = vmatprep.subr.bf16.mxu0 0
  %8822 = vmatpush1.bf16.msra.mxu0 0
  %8823 = vmatprep.subr.bf16.mxu0 0
  %8824 = vmatpush1.bf16.msra.mxu0 0
  %8825 = vmatprep.subr.bf16.mxu0 0
  %8826 = vmatpush1.bf16.msra.mxu0 0
  %8827 = vmatprep.subr.bf16.mxu0 0
  %8828 = vmatpush1.bf16.msra.mxu0 0
  %8829 = vmatprep.subr.bf16.mxu0 0
  %8830 = vmatpush1.bf16.msra.mxu0 0
  %8831 = vmatprep.mubr.bf16.mxu0 %v8691
  %8832 = vmatmul.mubr.bf16.gmra.mrb[0].mxu0 %v8643
  %v8833 = vpop.f32.mrb[0].mxu0
  %v8834 = vadd.f32 %v8746, %v8833
  %v8835 = vpop.f32.mrb[0].mxu0
  %v8836 = vpop.f32.mrb[0].mxu0
  %v8837 = vadd.f32 %v8749, %v8836
  %v8838 = vpop.f32.mrb[0].mxu0
  %8839 = vmatprep.mubr.bf16.mxu0 %v8694
  %8840 = vmatmul.mubr.bf16.gmra.mrb[0].mxu0 %v8647
  %v8841 = vpop.f32.mrb[0].mxu0
  %v8842 = vadd.f32 %v8754, %v8841
  %v8843 = vpop.f32.mrb[0].mxu0
  %v8844 = vpop.f32.mrb[0].mxu0
  %v8845 = vadd.f32 %v8757, %v8844
  %v8846 = vpop.f32.mrb[0].mxu0
  %8847 = vmatprep.mubr.bf16.mxu0 %v8697
  %8848 = vmatmul.mubr.bf16.gmra.mrb[0].mxu0 %v8651
  %v8849 = vpop.f32.mrb[0].mxu0
  %v8850 = vadd.f32 %v8762, %v8849
  %v8851 = vpop.f32.mrb[0].mxu0
  %v8852 = vpop.f32.mrb[0].mxu0
  %v8853 = vadd.f32 %v8765, %v8852
  %v8854 = vpop.f32.mrb[0].mxu0
  %8855 = vmatprep.mubr.bf16.mxu0 %v8700
  %8856 = vmatmul.mubr.bf16.gmra.mrb[0].mxu0 %v8655
  %v8857 = vpop.f32.mrb[0].mxu0
  %v8858 = vadd.f32 %v8770, %v8857
  %v8859 = vpop.f32.mrb[0].mxu0
  %v8860 = vpop.f32.mrb[0].mxu0
  %v8861 = vadd.f32 %v8773, %v8860
  %v8862 = vpop.f32.mrb[0].mxu0
  %8863 = vmatprep.mubr.bf16.mxu0 %v8703
  %8864 = vmatmul.mubr.bf16.gmra.mrb[0].mxu0 %v8659
  %v8865 = vpop.f32.mrb[0].mxu0
  %v8866 = vadd.f32 %v8778, %v8865
  %v8867 = vpop.f32.mrb[0].mxu0
  %v8868 = vpop.f32.mrb[0].mxu0
  %v8869 = vadd.f32 %v8781, %v8868
  %v8870 = vpop.f32.mrb[0].mxu0
  %8871 = vmatprep.mubr.bf16.mxu0 %v8706
  %8872 = vmatmul.mubr.bf16.gmra.mrb[0].mxu0 %v8663
  %v8873 = vpop.f32.mrb[0].mxu0
  %v8874 = vadd.f32 %v8786, %v8873
  %v8875 = vpop.f32.mrb[0].mxu0
  %v8876 = vpop.f32.mrb[0].mxu0
  %v8877 = vadd.f32 %v8789, %v8876
  %v8878 = vpop.f32.mrb[0].mxu0
  %8879 = vmatprep.mubr.bf16.mxu0 %v8709
  %8880 = vmatmul.mubr.bf16.gmra.mrb[0].mxu0 %v8667
  %v8881 = vpop.f32.mrb[0].mxu0
  %v8882 = vadd.f32 %v8794, %v8881
  %v8883 = vpop.f32.mrb[0].mxu0
  %v8884 = vpop.f32.mrb[0].mxu0
  %v8885 = vpop.f32.mrb[0].mxu0
  %8886 = vdwg.mxu0
  %v8887 = vpack.c.bf16 %v8837, %v8834
  %v8888 = vpack.c.bf16 %v8845, %v8842
  %v8889 = vpack.c.bf16 %v8853, %v8850
  %v8890 = vpack.c.bf16 %v8861, %v8858
  %v8891 = vpack.c.bf16 %v8869, %v8866
  %v8892 = vpack.c.bf16 %v8877, %v8874
  %v8893 = vpack.c.bf16 %v8882, %v8882
  %s8894 = scalar_lea.vmem %s3, 960
  %v8895 = vld [vmem:[%s8894] sm:$0xf]
  %v8896 = vld [vmem:[%s8894 + $0x4] sm:$0xf]
  %v8897 = vld [vmem:[%s8894 + $0x8] sm:$0xf]
  %v8898 = vld [vmem:[%s8894 + $0xc] sm:$0xf]
  %v8899 = vld [vmem:[%s8894 + $0x10] sm:$0xf]
  %v8900 = vld [vmem:[%s8894 + $0x14] sm:$0xf]
  %v8901 = vld [vmem:[%s8894 + $0x18] sm:$0xf]
  %v8902 = vld [vmem:[%s8894 + $0x1c] sm:$0xf]
  %v8903 = vld [vmem:[%s8894 + $0x20] sm:$0xf]
  %v8904 = vld [vmem:[%s8894 + $0x24] sm:$0xf]
  %v8905 = vld [vmem:[%s8894 + $0x28] sm:$0xf]
  %v8906 = vld [vmem:[%s8894 + $0x2c] sm:$0xf]
  %v8907 = vld [vmem:[%s8894 + $0x30] sm:$0xf]
  %v8908 = vld [vmem:[%s8894 + $0x34] sm:$0xf]
  %v8909 = vld [vmem:[%s8894 + $0x38] sm:$0xf]
  %v8910 = vld [vmem:[%s8894 + $0x3c] sm:$0xf]
  %v8927 = vunpack.c.l.b16 %v8895
  %v8928 = vunpack.c.l.b16 %v8896
  %v8929 = vunpack.c.l.b16 %v8897
  %v8930 = vunpack.c.l.b16 %v8898
  %v8931 = vunpack.c.l.b16 %v8899
  %v8932 = vunpack.c.l.b16 %v8900
  %v8933 = vunpack.c.l.b16 %v8901
  %v8934 = vunpack.c.l.b16 %v8902
  %v8935 = vunpack.c.l.b16 %v8903
  %v8936 = vunpack.c.l.b16 %v8904
  %v8937 = vunpack.c.l.b16 %v8905
  %v8938 = vunpack.c.l.b16 %v8906
  %v8939 = vunpack.c.l.b16 %v8907
  %v8940 = vunpack.c.l.b16 %v8908
  %v8941 = vunpack.c.l.b16 %v8909
  %v8942 = vunpack.c.l.b16 %v8910
  %v8943 = vpack.c.b16 %v8928, %v8927
  %v8944 = vpack.c.b16 %v8930, %v8929
  %v8945 = vpack.c.b16 %v8932, %v8931
  %v8946 = vpack.c.b16 %v8934, %v8933
  %v8947 = vpack.c.b16 %v8936, %v8935
  %v8948 = vpack.c.b16 %v8938, %v8937
  %v8949 = vpack.c.b16 %v8940, %v8939
  %v8950 = vpack.c.b16 %v8942, %v8941
  %8959 = vmatprep.subr.bf16.mxu0 0
  %8960 = vmatpush1.bf16.msra.mxu0 %v8943
  %8961 = vmatprep.subr.bf16.mxu0 0
  %8962 = vmatpush1.bf16.msra.mxu0 %v8944
  %8963 = vmatprep.subr.bf16.mxu0 0
  %8964 = vmatpush1.bf16.msra.mxu0 %v8945
  %8965 = vmatprep.subr.bf16.mxu0 0
  %8966 = vmatpush1.bf16.msra.mxu0 %v8946
  %8967 = vmatprep.subr.bf16.mxu0 0
  %8968 = vmatpush1.bf16.msra.mxu0 %v8947
  %8969 = vmatprep.subr.bf16.mxu0 0
  %8970 = vmatpush1.bf16.msra.mxu0 %v8948
  %8971 = vmatprep.subr.bf16.mxu0 0
  %8972 = vmatpush1.bf16.msra.mxu0 %v8949
  %8973 = vmatprep.subr.bf16.mxu0 0
  %8974 = vmatpush1.bf16.msra.mxu0 %v8950
  %8975 = vmatprep.subr.bf16.mxu0 0
  %8976 = vmatpush1.bf16.msra.mxu0 0
  %8977 = vmatprep.subr.bf16.mxu0 0
  %8978 = vmatpush1.bf16.msra.mxu0 0
  %8979 = vmatprep.subr.bf16.mxu0 0
  %8980 = vmatpush1.bf16.msra.mxu0 0
  %8981 = vmatprep.subr.bf16.mxu0 0
  %8982 = vmatpush1.bf16.msra.mxu0 0
  %8983 = vmatprep.subr.bf16.mxu0 0
  %8984 = vmatpush1.bf16.msra.mxu0 0
  %8985 = vmatprep.subr.bf16.mxu0 0
  %8986 = vmatpush1.bf16.msra.mxu0 0
  %8987 = vmatprep.subr.bf16.mxu0 0
  %8988 = vmatpush1.bf16.msra.mxu0 0
  %8989 = vmatprep.subr.bf16.mxu0 0
  %8990 = vmatpush1.bf16.msra.mxu0 0
  %8991 = vmatprep.mubr.bf16.mxu0 0
  %8992 = vmatmul.mubr.bf16.gmra.mrb[0].mxu0 %v8887
  %v8993 = vpop.f32.mrb[0].mxu0
  %v8994 = vadd.f32 0.0, %v8993
  %v8995 = vpop.f32.mrb[0].mxu0
  %v8996 = vpop.f32.mrb[0].mxu0
  %v8997 = vadd.f32 0.0, %v8996
  %v8998 = vpop.f32.mrb[0].mxu0
  %8999 = vmatprep.mubr.bf16.mxu0 0
  %9000 = vmatmul.mubr.bf16.gmra.mrb[0].mxu0 %v8888
  %v9001 = vpop.f32.mrb[0].mxu0
  %v9002 = vadd.f32 0.0, %v9001
  %v9003 = vpop.f32.mrb[0].mxu0
  %v9004 = vpop.f32.mrb[0].mxu0
  %v9005 = vadd.f32 0.0, %v9004
  %v9006 = vpop.f32.mrb[0].mxu0
  %9007 = vmatprep.mubr.bf16.mxu0 0
  %9008 = vmatmul.mubr.bf16.gmra.mrb[0].mxu0 %v8889
  %v9009 = vpop.f32.mrb[0].mxu0
  %v9010 = vadd.f32 0.0, %v9009
  %v9011 = vpop.f32.mrb[0].mxu0
  %v9012 = vpop.f32.mrb[0].mxu0
  %v9013 = vadd.f32 0.0, %v9012
  %v9014 = vpop.f32.mrb[0].mxu0
  %9015 = vmatprep.mubr.bf16.mxu0 0
  %9016 = vmatmul.mubr.bf16.gmra.mrb[0].mxu0 %v8890
  %v9017 = vpop.f32.mrb[0].mxu0
  %v9018 = vadd.f32 0.0, %v9017
  %v9019 = vpop.f32.mrb[0].mxu0
  %v9020 = vpop.f32.mrb[0].mxu0
  %v9021 = vadd.f32 0.0, %v9020
  %v9022 = vpop.f32.mrb[0].mxu0
  %9023 = vmatprep.mubr.bf16.mxu0 0
  %9024 = vmatmul.mubr.bf16.gmra.mrb[0].mxu0 %v8891
  %v9025 = vpop.f32.mrb[0].mxu0
  %v9026 = vadd.f32 0.0, %v9025
  %v9027 = vpop.f32.mrb[0].mxu0
  %v9028 = vpop.f32.mrb[0].mxu0
  %v9029 = vadd.f32 0.0, %v9028
  %v9030 = vpop.f32.mrb[0].mxu0
  %9031 = vmatprep.mubr.bf16.mxu0 0
  %9032 = vmatmul.mubr.bf16.gmra.mrb[0].mxu0 %v8892
  %v9033 = vpop.f32.mrb[0].mxu0
  %v9034 = vadd.f32 0.0, %v9033
  %v9035 = vpop.f32.mrb[0].mxu0
  %v9036 = vpop.f32.mrb[0].mxu0
  %v9037 = vadd.f32 0.0, %v9036
  %v9038 = vpop.f32.mrb[0].mxu0
  %9039 = vmatprep.mubr.bf16.mxu0 0
  %9040 = vmatmul.mubr.bf16.gmra.mrb[0].mxu0 %v8893
  %v9041 = vpop.f32.mrb[0].mxu0
  %v9042 = vadd.f32 0.0, %v9041
  %v9043 = vpop.f32.mrb[0].mxu0
  %v9044 = vpop.f32.mrb[0].mxu0
  %v9045 = vpop.f32.mrb[0].mxu0
  %9046 = vdwg.mxu0
  %v9047 = vadd.f32 %v8523, %v8994
  %v9048 = vadd.f32 %v8524, %v8997
  %v9049 = vadd.f32 %v8525, %v9002
  %v9050 = vadd.f32 %v8526, %v9005
  %v9051 = vadd.f32 %v8527, %v9010
  %v9052 = vadd.f32 %v8528, %v9013
  %v9053 = vadd.f32 %v8529, %v9018
  %v9054 = vadd.f32 %v8530, %v9021
  %v9055 = vadd.f32 %v8531, %v9026
  %v9056 = vadd.f32 %v8532, %v9029
  %v9057 = vadd.f32 %v8533, %v9034
  %v9058 = vadd.f32 %v8534, %v9037
  %v9059 = vadd.f32 %v8535, %v9042
  %v9060 = vadd.f32 %v9047, %v9048
  %v9061 = vadd.f32 %v9060, %v9049
  %v9062 = vadd.f32 %v9061, %v9050
  %v9063 = vadd.f32 %v9062, %v9051
  %v9064 = vadd.f32 %v9063, %v9052
  %v9065 = vadd.f32 %v9064, %v9053
  %v9066 = vadd.f32 %v9065, %v9054
  %v9067 = vadd.f32 %v9066, %v9055
  %v9068 = vadd.f32 %v9067, %v9056
  %v9069 = vadd.f32 %v9068, %v9057
  %v9070 = vadd.f32 %v9069, %v9058
  %vm9071 = vcmask 1041408
  %v9072 = vsel %vm9071, %v9059, 0.0
  %v9073 = vadd.f32 %v9070, %v9072
  %v9074 = vrot.slane %v9073, 4
  %v9075 = vadd.f32 %v9073, %v9074
  %v9076 = vrot.slane %v9075, 2
  %v9077 = vadd.f32 %v9075, %v9076
  %v9078 = vrot.slane %v9077, 1
  %v9079 = vadd.f32 %v9077, %v9078
  %v9080 = vrcp.pop 98.0
  %v9081 = vmul.f32 %v9079, %v9080
  %v9082 = vsub.f32 %v9047, %v9081
  %v9083 = vsub.f32 %v9048, %v9081
  %v9084 = vsub.f32 %v9049, %v9081
  %v9085 = vsub.f32 %v9050, %v9081
  %v9086 = vsub.f32 %v9051, %v9081
  %v9087 = vsub.f32 %v9052, %v9081
  %v9088 = vsub.f32 %v9053, %v9081
  %v9089 = vsub.f32 %v9054, %v9081
  %v9090 = vsub.f32 %v9055, %v9081
  %v9091 = vsub.f32 %v9056, %v9081
  %v9092 = vsub.f32 %v9057, %v9081
  %v9093 = vsub.f32 %v9058, %v9081
  %v9094 = vsub.f32 %v9059, %v9081
  %v9095 = vmul.f32 %v9082, %v9082
  %v9096 = vmul.f32 %v9083, %v9083
  %v9097 = vmul.f32 %v9084, %v9084
  %v9098 = vmul.f32 %v9085, %v9085
  %v9099 = vmul.f32 %v9086, %v9086
  %v9100 = vmul.f32 %v9087, %v9087
  %v9101 = vmul.f32 %v9088, %v9088
  %v9102 = vmul.f32 %v9089, %v9089
  %v9103 = vmul.f32 %v9090, %v9090
  %v9104 = vmul.f32 %v9091, %v9091
  %v9105 = vmul.f32 %v9092, %v9092
  %v9106 = vmul.f32 %v9093, %v9093
  %v9107 = vmul.f32 %v9094, %v9094
  %v9108 = vadd.f32 %v9095, %v9096
  %v9109 = vadd.f32 %v9108, %v9097
  %v9110 = vadd.f32 %v9109, %v9098
  %v9111 = vadd.f32 %v9110, %v9099
  %v9112 = vadd.f32 %v9111, %v9100
  %v9113 = vadd.f32 %v9112, %v9101
  %v9114 = vadd.f32 %v9113, %v9102
  %v9115 = vadd.f32 %v9114, %v9103
  %v9116 = vadd.f32 %v9115, %v9104
  %v9117 = vadd.f32 %v9116, %v9105
  %v9118 = vadd.f32 %v9117, %v9106
  %v9119 = vsel %vm9071, %v9107, 0.0
  %v9120 = vadd.f32 %v9118, %v9119
  %v9121 = vrot.slane %v9120, 4
  %v9122 = vadd.f32 %v9120, %v9121
  %v9123 = vrot.slane %v9122, 2
  %v9124 = vadd.f32 %v9122, %v9123
  %v9125 = vrot.slane %v9124, 1
  %v9126 = vadd.f32 %v9124, %v9125
  %v9127 = vmul.f32 %v9126, %v9080
  %v9128 = vadd.f32 %v9127, 1e-05
  %v9129 = vrsqrt.pop %v9128
  %v9130 = vmul.f32 %v9082, %v9129
  %v9131 = vmul.f32 %v9083, %v9129
  %v9132 = vmul.f32 %v9084, %v9129
  %v9133 = vmul.f32 %v9085, %v9129
  %v9134 = vmul.f32 %v9086, %v9129
  %v9135 = vmul.f32 %v9087, %v9129
  %v9136 = vmul.f32 %v9088, %v9129
  %v9137 = vmul.f32 %v9089, %v9129
  %v9138 = vmul.f32 %v9090, %v9129
  %v9139 = vmul.f32 %v9091, %v9129
  %v9140 = vmul.f32 %v9092, %v9129
  %v9141 = vmul.f32 %v9093, %v9129
  %v9142 = vmul.f32 %v9094, %v9129
  %v9143 = vld [vmem:[%s4] sm:$0x1]
  %v9145 = vlaneseq
  %v9146 = vshrl.u32 %v9145, 7
  %v9147 = vsub.s32 0, %v9146
  %v9148 = vrot.slane %v9143, %v9147
  %v9150 = vmul.f32 %v9130, %v9148
  %v9151 = vmul.f32 %v9131, %v9148
  %v9152 = vmul.f32 %v9132, %v9148
  %v9153 = vmul.f32 %v9133, %v9148
  %v9154 = vmul.f32 %v9134, %v9148
  %v9155 = vmul.f32 %v9135, %v9148
  %v9156 = vmul.f32 %v9136, %v9148
  %v9157 = vmul.f32 %v9137, %v9148
  %v9158 = vmul.f32 %v9138, %v9148
  %v9159 = vmul.f32 %v9139, %v9148
  %v9160 = vmul.f32 %v9140, %v9148
  %v9161 = vmul.f32 %v9141, %v9148
  %v9162 = vmul.f32 %v9142, %v9148
  %v9163 = vld [vmem:[%s5] sm:$0x1]
  %v9165 = vlaneseq
  %v9166 = vshrl.u32 %v9165, 7
  %v9167 = vsub.s32 0, %v9166
  %v9168 = vrot.slane %v9163, %v9167
  %v9170 = vadd.f32 %v9150, %v9168
  %v9171 = vadd.f32 %v9151, %v9168
  %v9172 = vadd.f32 %v9152, %v9168
  %v9173 = vadd.f32 %v9153, %v9168
  %v9174 = vadd.f32 %v9154, %v9168
  %v9175 = vadd.f32 %v9155, %v9168
  %v9176 = vadd.f32 %v9156, %v9168
  %v9177 = vadd.f32 %v9157, %v9168
  %v9178 = vadd.f32 %v9158, %v9168
  %v9179 = vadd.f32 %v9159, %v9168
  %v9180 = vadd.f32 %v9160, %v9168
  %v9181 = vadd.f32 %v9161, %v9168
  %v9182 = vadd.f32 %v9162, %v9168
  %vm9183 = vcmp.gt.f32.partialorder %v9170, 0.0
  %vm9184 = vcmp.gt.f32.partialorder %v9171, 0.0
  %vm9185 = vcmp.gt.f32.partialorder %v9172, 0.0
  %vm9186 = vcmp.gt.f32.partialorder %v9173, 0.0
  %vm9187 = vcmp.gt.f32.partialorder %v9174, 0.0
  %vm9188 = vcmp.gt.f32.partialorder %v9175, 0.0
  %vm9189 = vcmp.gt.f32.partialorder %v9176, 0.0
  %vm9190 = vcmp.gt.f32.partialorder %v9177, 0.0
  %vm9191 = vcmp.gt.f32.partialorder %v9178, 0.0
  %vm9192 = vcmp.gt.f32.partialorder %v9179, 0.0
  %vm9193 = vcmp.gt.f32.partialorder %v9180, 0.0
  %vm9194 = vcmp.gt.f32.partialorder %v9181, 0.0
  %vm9195 = vcmp.gt.f32.partialorder %v9182, 0.0
  %v9196 = vmul.f32 %v9170, 0.2
  %v9197 = vmul.f32 %v9171, 0.2
  %v9198 = vmul.f32 %v9172, 0.2
  %v9199 = vmul.f32 %v9173, 0.2
  %v9200 = vmul.f32 %v9174, 0.2
  %v9201 = vmul.f32 %v9175, 0.2
  %v9202 = vmul.f32 %v9176, 0.2
  %v9203 = vmul.f32 %v9177, 0.2
  %v9204 = vmul.f32 %v9178, 0.2
  %v9205 = vmul.f32 %v9179, 0.2
  %v9206 = vmul.f32 %v9180, 0.2
  %v9207 = vmul.f32 %v9181, 0.2
  %v9208 = vmul.f32 %v9182, 0.2
  %v9209 = vsel %vm9183, %v9170, %v9196
  %v9210 = vsel %vm9184, %v9171, %v9197
  %v9211 = vsel %vm9185, %v9172, %v9198
  %v9212 = vsel %vm9186, %v9173, %v9199
  %v9213 = vsel %vm9187, %v9174, %v9200
  %v9214 = vsel %vm9188, %v9175, %v9201
  %v9215 = vsel %vm9189, %v9176, %v9202
  %v9216 = vsel %vm9190, %v9177, %v9203
  %v9217 = vsel %vm9191, %v9178, %v9204
  %v9218 = vsel %vm9192, %v9179, %v9205
  %v9219 = vsel %vm9193, %v9180, %v9206
  %v9220 = vsel %vm9194, %v9181, %v9207
  %v9221 = vsel %vm9195, %v9182, %v9208
  %v9222 = vpack.c.bf16 %v9210, %v9209
  %v9223 = vpack.c.bf16 %v9212, %v9211
  %v9224 = vpack.c.bf16 %v9214, %v9213
  %v9225 = vpack.c.bf16 %v9216, %v9215
  %v9226 = vpack.c.bf16 %v9218, %v9217
  %v9227 = vpack.c.bf16 %v9220, %v9219
  %v9228 = vpack.c.bf16 %v9221, %v9221
  %v9229 = vld [vmem:[%s6] sm:$0xf]
  %v9230 = vld [vmem:[%s6 + $0x4] sm:$0xf]
  %v9231 = vld [vmem:[%s6 + $0x8] sm:$0xf]
  %v9232 = vld [vmem:[%s6 + $0xc] sm:$0xf]
  %v9237 = vunpack.c.l.b16 %v9229
  %v9238 = vunpack.c.l.b16 %v9230
  %v9239 = vunpack.c.l.b16 %v9231
  %v9240 = vunpack.c.l.b16 %v9232
  %v9241 = vpack.c.b16 %v9238, %v9237
  %v9242 = vpack.c.b16 %v9240, %v9239
  %vm9243 = vcmask 801792
  %v9245 = vsel %vm9243, %v9241, 0
  %v9248 = vsel %vm9243, %v9242, 0
  %vm9250 = vcmask 1040384
  %v9252 = vsel %vm9250, %v9228, 0
  %9254 = vmatprep.subr.bf16.mxu0 0
  %9255 = vmatpush1.bf16.msra.mxu0 %v9222
  %9256 = vmatprep.subr.bf16.mxu0 0
  %9257 = vmatpush1.bf16.msra.mxu0 %v9223
  %9258 = vmatprep.subr.bf16.mxu0 0
  %9259 = vmatpush1.bf16.msra.mxu0 %v9224
  %9260 = vmatprep.subr.bf16.mxu0 0
  %9261 = vmatpush1.bf16.msra.mxu0 %v9225
  %9262 = vmatprep.subr.bf16.mxu0 0
  %9263 = vmatpush1.bf16.msra.mxu0 %v9226
  %9264 = vmatprep.subr.bf16.mxu0 0
  %9265 = vmatpush1.bf16.msra.mxu0 %v9227
  %9266 = vmatprep.subr.bf16.mxu0 0
  %9267 = vmatpush1.bf16.msra.mxu0 %v9252
  %9268 = vmatprep.subr.bf16.mxu0 0
  %9269 = vmatpush1.bf16.msra.mxu0 0
  %9270 = vmatprep.subr.bf16.mxu0 0
  %9271 = vmatpush1.bf16.msra.mxu0 0
  %9272 = vmatprep.subr.bf16.mxu0 0
  %9273 = vmatpush1.bf16.msra.mxu0 0
  %9274 = vmatprep.subr.bf16.mxu0 0
  %9275 = vmatpush1.bf16.msra.mxu0 0
  %9276 = vmatprep.subr.bf16.mxu0 0
  %9277 = vmatpush1.bf16.msra.mxu0 0
  %9278 = vmatprep.subr.bf16.mxu0 0
  %9279 = vmatpush1.bf16.msra.mxu0 0
  %9280 = vmatprep.subr.bf16.mxu0 0
  %9281 = vmatpush1.bf16.msra.mxu0 0
  %9282 = vmatprep.subr.bf16.mxu0 0
  %9283 = vmatpush1.bf16.msra.mxu0 0
  %9284 = vmatprep.subr.bf16.mxu0 0
  %9285 = vmatpush1.bf16.msra.mxu0 0
  %9286 = vmatprep.mubr.bf16.mxu0 0
  %9287 = vmatmul.mubr.bf16.gmra.mrb[0].mxu0 %v9245
  %v9288 = vpop.f32.mrb[0].mxu0
  %v9289 = vadd.f32 0.0, %v9288
  %v9290 = vpop.f32.mrb[0].mxu0
  %v9291 = vpop.f32.mrb[0].mxu0
  %v9292 = vadd.f32 0.0, %v9291
  %v9293 = vpop.f32.mrb[0].mxu0
  %9294 = vmatprep.mubr.bf16.mxu0 0
  %9295 = vmatmul.mubr.bf16.gmra.mrb[0].mxu0 %v9248
  %v9296 = vpop.f32.mrb[0].mxu0
  %v9297 = vadd.f32 0.0, %v9296
  %v9298 = vpop.f32.mrb[0].mxu0
  %v9299 = vpop.f32.mrb[0].mxu0
  %v9300 = vadd.f32 0.0, %v9299
  %v9301 = vpop.f32.mrb[0].mxu0
  %9302 = vdwg.mxu0
  %v9303 = vpack.c.bf16 %v9292, %v9289
  %v9304 = vpack.c.bf16 %v9300, %v9297
  %v9305 = vld [vmem:[%s7] sm:$0xf]
  %v9306 = vld [vmem:[%s7 + $0x4] sm:$0xf]
  %v9307 = vld [vmem:[%s7 + $0x8] sm:$0xf]
  %v9308 = vld [vmem:[%s7 + $0xc] sm:$0xf]
  %v9309 = vld [vmem:[%s7 + $0x10] sm:$0xf]
  %v9310 = vld [vmem:[%s7 + $0x14] sm:$0xf]
  %v9311 = vld [vmem:[%s7 + $0x18] sm:$0xf]
  %v9312 = vld [vmem:[%s7 + $0x1c] sm:$0xf]
  %v9313 = vld [vmem:[%s7 + $0x20] sm:$0xf]
  %v9314 = vld [vmem:[%s7 + $0x24] sm:$0xf]
  %v9315 = vld [vmem:[%s7 + $0x28] sm:$0xf]
  %v9316 = vld [vmem:[%s7 + $0x2c] sm:$0xf]
  %v9317 = vld [vmem:[%s7 + $0x30] sm:$0xf]
  %v9318 = vld [vmem:[%s7 + $0x34] sm:$0xf]
  %v9319 = vld [vmem:[%s7 + $0x38] sm:$0xf]
  %v9320 = vld [vmem:[%s7 + $0x3c] sm:$0xf]
  %s9321 = scalar_lea.vmem %s6, 16
  %v9322 = vld [vmem:[%s9321] sm:$0xf]
  %v9323 = vld [vmem:[%s9321 + $0x4] sm:$0xf]
  %v9324 = vld [vmem:[%s9321 + $0x8] sm:$0xf]
  %v9325 = vld [vmem:[%s9321 + $0xc] sm:$0xf]
  %v9330 = vunpack.c.l.b16 %v9322
  %v9331 = vunpack.c.l.b16 %v9323
  %v9332 = vunpack.c.l.b16 %v9324
  %v9333 = vunpack.c.l.b16 %v9325
  %v9334 = vpack.c.b16 %v9331, %v9330
  %v9335 = vpack.c.b16 %v9333, %v9332
  %v9337 = vsel %vm9243, %v9334, 0
  %v9340 = vsel %vm9243, %v9335, 0
  %9342 = vmatprep.subr.bf16.mxu0 0
  %9343 = vmatpush1.bf16.msra.mxu0 %v9222
  %9344 = vmatprep.subr.bf16.mxu0 0
  %9345 = vmatpush1.bf16.msra.mxu0 %v9223
  %9346 = vmatprep.subr.bf16.mxu0 0
  %9347 = vmatpush1.bf16.msra.mxu0 %v9224
  %9348 = vmatprep.subr.bf16.mxu0 0
  %9349 = vmatpush1.bf16.msra.mxu0 %v9225
  %9350 = vmatprep.subr.bf16.mxu0 0
  %9351 = vmatpush1.bf16.msra.mxu0 %v9226
  %9352 = vmatprep.subr.bf16.mxu0 0
  %9353 = vmatpush1.bf16.msra.mxu0 %v9227
  %9354 = vmatprep.subr.bf16.mxu0 0
  %9355 = vmatpush1.bf16.msra.mxu0 %v9252
  %9356 = vmatprep.subr.bf16.mxu0 0
  %9357 = vmatpush1.bf16.msra.mxu0 0
  %9358 = vmatprep.subr.bf16.mxu0 0
  %9359 = vmatpush1.bf16.msra.mxu0 0
  %9360 = vmatprep.subr.bf16.mxu0 0
  %9361 = vmatpush1.bf16.msra.mxu0 0
  %9362 = vmatprep.subr.bf16.mxu0 0
  %9363 = vmatpush1.bf16.msra.mxu0 0
  %9364 = vmatprep.subr.bf16.mxu0 0
  %9365 = vmatpush1.bf16.msra.mxu0 0
  %9366 = vmatprep.subr.bf16.mxu0 0
  %9367 = vmatpush1.bf16.msra.mxu0 0
  %9368 = vmatprep.subr.bf16.mxu0 0
  %9369 = vmatpush1.bf16.msra.mxu0 0
  %9370 = vmatprep.subr.bf16.mxu0 0
  %9371 = vmatpush1.bf16.msra.mxu0 0
  %9372 = vmatprep.subr.bf16.mxu0 0
  %9373 = vmatpush1.bf16.msra.mxu0 0
  %9374 = vmatprep.mubr.bf16.mxu0 0
  %9375 = vmatmul.mubr.bf16.gmra.mrb[0].mxu0 %v9337
  %v9376 = vpop.f32.mrb[0].mxu0
  %v9377 = vadd.f32 0.0, %v9376
  %v9378 = vpop.f32.mrb[0].mxu0
  %v9379 = vpop.f32.mrb[0].mxu0
  %v9380 = vadd.f32 0.0, %v9379
  %v9381 = vpop.f32.mrb[0].mxu0
  %9382 = vmatprep.mubr.bf16.mxu0 0
  %9383 = vmatmul.mubr.bf16.gmra.mrb[0].mxu0 %v9340
  %v9384 = vpop.f32.mrb[0].mxu0
  %v9385 = vadd.f32 0.0, %v9384
  %v9386 = vpop.f32.mrb[0].mxu0
  %v9387 = vpop.f32.mrb[0].mxu0
  %v9388 = vadd.f32 0.0, %v9387
  %v9389 = vpop.f32.mrb[0].mxu0
  %9390 = vdwg.mxu0
  %v9391 = vpack.c.bf16 %v9380, %v9377
  %v9392 = vpack.c.bf16 %v9388, %v9385
  %s9393 = scalar_lea.vmem %s7, 64
  %v9394 = vld [vmem:[%s9393] sm:$0xf]
  %v9395 = vld [vmem:[%s9393 + $0x4] sm:$0xf]
  %v9396 = vld [vmem:[%s9393 + $0x8] sm:$0xf]
  %v9397 = vld [vmem:[%s9393 + $0xc] sm:$0xf]
  %v9398 = vld [vmem:[%s9393 + $0x10] sm:$0xf]
  %v9399 = vld [vmem:[%s9393 + $0x14] sm:$0xf]
  %v9400 = vld [vmem:[%s9393 + $0x18] sm:$0xf]
  %v9401 = vld [vmem:[%s9393 + $0x1c] sm:$0xf]
  %v9402 = vld [vmem:[%s9393 + $0x20] sm:$0xf]
  %v9403 = vld [vmem:[%s9393 + $0x24] sm:$0xf]
  %v9404 = vld [vmem:[%s9393 + $0x28] sm:$0xf]
  %v9405 = vld [vmem:[%s9393 + $0x2c] sm:$0xf]
  %v9406 = vld [vmem:[%s9393 + $0x30] sm:$0xf]
  %v9407 = vld [vmem:[%s9393 + $0x34] sm:$0xf]
  %v9408 = vld [vmem:[%s9393 + $0x38] sm:$0xf]
  %v9409 = vld [vmem:[%s9393 + $0x3c] sm:$0xf]
  %v9426 = vunpack.c.l.b16 %v9394
  %v9427 = vunpack.c.l.b16 %v9395
  %v9428 = vunpack.c.l.b16 %v9396
  %v9429 = vunpack.c.l.b16 %v9397
  %v9430 = vunpack.c.l.b16 %v9398
  %v9431 = vunpack.c.l.b16 %v9399
  %v9432 = vunpack.c.l.b16 %v9400
  %v9433 = vunpack.c.l.b16 %v9401
  %v9434 = vunpack.c.l.b16 %v9402
  %v9435 = vunpack.c.l.b16 %v9403
  %v9436 = vunpack.c.l.b16 %v9404
  %v9437 = vunpack.c.l.b16 %v9405
  %v9438 = vunpack.c.l.b16 %v9406
  %v9439 = vunpack.c.l.b16 %v9407
  %v9440 = vunpack.c.l.b16 %v9408
  %v9441 = vunpack.c.l.b16 %v9409
  %v9442 = vpack.c.b16 %v9427, %v9426
  %v9443 = vpack.c.b16 %v9429, %v9428
  %v9444 = vpack.c.b16 %v9431, %v9430
  %v9445 = vpack.c.b16 %v9433, %v9432
  %v9446 = vpack.c.b16 %v9435, %v9434
  %v9447 = vpack.c.b16 %v9437, %v9436
  %v9448 = vpack.c.b16 %v9439, %v9438
  %v9449 = vpack.c.b16 %v9441, %v9440
  %9458 = vmatprep.subr.bf16.mxu0 0
  %9459 = vmatpush1.bf16.msra.mxu0 %v9442
  %9460 = vmatprep.subr.bf16.mxu0 0
  %9461 = vmatpush1.bf16.msra.mxu0 %v9443
  %9462 = vmatprep.subr.bf16.mxu0 0
  %9463 = vmatpush1.bf16.msra.mxu0 %v9444
  %9464 = vmatprep.subr.bf16.mxu0 0
  %9465 = vmatpush1.bf16.msra.mxu0 %v9445
  %9466 = vmatprep.subr.bf16.mxu0 0
  %9467 = vmatpush1.bf16.msra.mxu0 %v9446
  %9468 = vmatprep.subr.bf16.mxu0 0
  %9469 = vmatpush1.bf16.msra.mxu0 %v9447
  %9470 = vmatprep.subr.bf16.mxu0 0
  %9471 = vmatpush1.bf16.msra.mxu0 %v9448
  %9472 = vmatprep.subr.bf16.mxu0 0
  %9473 = vmatpush1.bf16.msra.mxu0 %v9449
  %9474 = vmatprep.subr.bf16.mxu0 0
  %9475 = vmatpush1.bf16.msra.mxu0 0
  %9476 = vmatprep.subr.bf16.mxu0 0
  %9477 = vmatpush1.bf16.msra.mxu0 0
  %9478 = vmatprep.subr.bf16.mxu0 0
  %9479 = vmatpush1.bf16.msra.mxu0 0
  %9480 = vmatprep.subr.bf16.mxu0 0
  %9481 = vmatpush1.bf16.msra.mxu0 0
  %9482 = vmatprep.subr.bf16.mxu0 0
  %9483 = vmatpush1.bf16.msra.mxu0 0
  %9484 = vmatprep.subr.bf16.mxu0 0
  %9485 = vmatpush1.bf16.msra.mxu0 0
  %9486 = vmatprep.subr.bf16.mxu0 0
  %9487 = vmatpush1.bf16.msra.mxu0 0
  %9488 = vmatprep.subr.bf16.mxu0 0
  %9489 = vmatpush1.bf16.msra.mxu0 0
  %9490 = vmatprep.mubr.bf16.mxu0 0
  %9491 = vmatmul.mubr.bf16.gmra.mrb[0].mxu0 %v9391
  %v9492 = vpop.f32.mrb[0].mxu0
  %v9493 = vadd.f32 0.0, %v9492
  %v9494 = vpop.f32.mrb[0].mxu0
  %v9495 = vpop.f32.mrb[0].mxu0
  %v9496 = vadd.f32 0.0, %v9495
  %v9497 = vpop.f32.mrb[0].mxu0
  %9498 = vmatprep.mubr.bf16.mxu0 0
  %9499 = vmatmul.mubr.bf16.gmra.mrb[0].mxu0 %v9392
  %v9500 = vpop.f32.mrb[0].mxu0
  %v9501 = vadd.f32 0.0, %v9500
  %v9502 = vpop.f32.mrb[0].mxu0
  %v9503 = vpop.f32.mrb[0].mxu0
  %v9504 = vadd.f32 0.0, %v9503
  %v9505 = vpop.f32.mrb[0].mxu0
  %9506 = vdwg.mxu0
  %v9523 = vunpack.c.l.b16 %v9305
  %v9524 = vunpack.c.l.b16 %v9306
  %v9525 = vunpack.c.l.b16 %v9307
  %v9526 = vunpack.c.l.b16 %v9308
  %v9527 = vunpack.c.l.b16 %v9309
  %v9528 = vunpack.c.l.b16 %v9310
  %v9529 = vunpack.c.l.b16 %v9311
  %v9530 = vunpack.c.l.b16 %v9312
  %v9531 = vunpack.c.l.b16 %v9313
  %v9532 = vunpack.c.l.b16 %v9314
  %v9533 = vunpack.c.l.b16 %v9315
  %v9534 = vunpack.c.l.b16 %v9316
  %v9535 = vunpack.c.l.b16 %v9317
  %v9536 = vunpack.c.l.b16 %v9318
  %v9537 = vunpack.c.l.b16 %v9319
  %v9538 = vunpack.c.l.b16 %v9320
  %v9539 = vpack.c.b16 %v9524, %v9523
  %v9540 = vpack.c.b16 %v9526, %v9525
  %v9541 = vpack.c.b16 %v9528, %v9527
  %v9542 = vpack.c.b16 %v9530, %v9529
  %v9543 = vpack.c.b16 %v9532, %v9531
  %v9544 = vpack.c.b16 %v9534, %v9533
  %v9545 = vpack.c.b16 %v9536, %v9535
  %v9546 = vpack.c.b16 %v9538, %v9537
  %9555 = vmatprep.subr.bf16.mxu0 0
  %9556 = vmatpush1.bf16.msra.mxu0 %v9539
  %9557 = vmatprep.subr.bf16.mxu0 0
  %9558 = vmatpush1.bf16.msra.mxu0 %v9540
  %9559 = vmatprep.subr.bf16.mxu0 0
  %9560 = vmatpush1.bf16.msra.mxu0 %v9541
  %9561 = vmatprep.subr.bf16.mxu0 0
  %9562 = vmatpush1.bf16.msra.mxu0 %v9542
  %9563 = vmatprep.subr.bf16.mxu0 0
  %9564 = vmatpush1.bf16.msra.mxu0 %v9543
  %9565 = vmatprep.subr.bf16.mxu0 0
  %9566 = vmatpush1.bf16.msra.mxu0 %v9544
  %9567 = vmatprep.subr.bf16.mxu0 0
  %9568 = vmatpush1.bf16.msra.mxu0 %v9545
  %9569 = vmatprep.subr.bf16.mxu0 0
  %9570 = vmatpush1.bf16.msra.mxu0 %v9546
  %9571 = vmatprep.subr.bf16.mxu0 0
  %9572 = vmatpush1.bf16.msra.mxu0 0
  %9573 = vmatprep.subr.bf16.mxu0 0
  %9574 = vmatpush1.bf16.msra.mxu0 0
  %9575 = vmatprep.subr.bf16.mxu0 0
  %9576 = vmatpush1.bf16.msra.mxu0 0
  %9577 = vmatprep.subr.bf16.mxu0 0
  %9578 = vmatpush1.bf16.msra.mxu0 0
  %9579 = vmatprep.subr.bf16.mxu0 0
  %9580 = vmatpush1.bf16.msra.mxu0 0
  %9581 = vmatprep.subr.bf16.mxu0 0
  %9582 = vmatpush1.bf16.msra.mxu0 0
  %9583 = vmatprep.subr.bf16.mxu0 0
  %9584 = vmatpush1.bf16.msra.mxu0 0
  %9585 = vmatprep.subr.bf16.mxu0 0
  %9586 = vmatpush1.bf16.msra.mxu0 0
  %9587 = vmatprep.mubr.bf16.mxu0 0
  %9588 = vmatmul.mubr.bf16.gmra.mrb[0].mxu0 %v9303
  %v9589 = vpop.f32.mrb[0].mxu0
  %v9590 = vadd.f32 %v9493, %v9589
  %v9591 = vpop.f32.mrb[0].mxu0
  %v9592 = vpop.f32.mrb[0].mxu0
  %v9593 = vadd.f32 %v9496, %v9592
  %v9594 = vpop.f32.mrb[0].mxu0
  %9595 = vmatprep.mubr.bf16.mxu0 0
  %9596 = vmatmul.mubr.bf16.gmra.mrb[0].mxu0 %v9304
  %v9597 = vpop.f32.mrb[0].mxu0
  %v9598 = vadd.f32 %v9501, %v9597
  %v9599 = vpop.f32.mrb[0].mxu0
  %v9600 = vpop.f32.mrb[0].mxu0
  %v9601 = vadd.f32 %v9504, %v9600
  %v9602 = vpop.f32.mrb[0].mxu0
  %9603 = vdwg.mxu0
  %s9604 = scalar_lea.vmem %s6, 32
  %v9605 = vld [vmem:[%s9604] sm:$0xf]
  %v9606 = vld [vmem:[%s9604 + $0x4] sm:$0xf]
  %v9607 = vld [vmem:[%s9604 + $0x8] sm:$0xf]
  %v9608 = vld [vmem:[%s9604 + $0xc] sm:$0xf]
  %v9613 = vunpack.c.l.b16 %v9605
  %v9614 = vunpack.c.l.b16 %v9606
  %v9615 = vunpack.c.l.b16 %v9607
  %v9616 = vunpack.c.l.b16 %v9608
  %v9617 = vpack.c.b16 %v9614, %v9613
  %v9618 = vpack.c.b16 %v9616, %v9615
  %v9620 = vsel %vm9243, %v9617, 0
  %v9623 = vsel %vm9243, %v9618, 0
  %9625 = vmatprep.subr.bf16.mxu0 0
  %9626 = vmatpush1.bf16.msra.mxu0 %v9222
  %9627 = vmatprep.subr.bf16.mxu0 0
  %9628 = vmatpush1.bf16.msra.mxu0 %v9223
  %9629 = vmatprep.subr.bf16.mxu0 0
  %9630 = vmatpush1.bf16.msra.mxu0 %v9224
  %9631 = vmatprep.subr.bf16.mxu0 0
  %9632 = vmatpush1.bf16.msra.mxu0 %v9225
  %9633 = vmatprep.subr.bf16.mxu0 0
  %9634 = vmatpush1.bf16.msra.mxu0 %v9226
  %9635 = vmatprep.subr.bf16.mxu0 0
  %9636 = vmatpush1.bf16.msra.mxu0 %v9227
  %9637 = vmatprep.subr.bf16.mxu0 0
  %9638 = vmatpush1.bf16.msra.mxu0 %v9252
  %9639 = vmatprep.subr.bf16.mxu0 0
  %9640 = vmatpush1.bf16.msra.mxu0 0
  %9641 = vmatprep.subr.bf16.mxu0 0
  %9642 = vmatpush1.bf16.msra.mxu0 0
  %9643 = vmatprep.subr.bf16.mxu0 0
  %9644 = vmatpush1.bf16.msra.mxu0 0
  %9645 = vmatprep.subr.bf16.mxu0 0
  %9646 = vmatpush1.bf16.msra.mxu0 0
  %9647 = vmatprep.subr.bf16.mxu0 0
  %9648 = vmatpush1.bf16.msra.mxu0 0
  %9649 = vmatprep.subr.bf16.mxu0 0
  %9650 = vmatpush1.bf16.msra.mxu0 0
  %9651 = vmatprep.subr.bf16.mxu0 0
  %9652 = vmatpush1.bf16.msra.mxu0 0
  %9653 = vmatprep.subr.bf16.mxu0 0
  %9654 = vmatpush1.bf16.msra.mxu0 0
  %9655 = vmatprep.subr.bf16.mxu0 0
  %9656 = vmatpush1.bf16.msra.mxu0 0
  %9657 = vmatprep.mubr.bf16.mxu0 0
  %9658 = vmatmul.mubr.bf16.gmra.mrb[0].mxu0 %v9620
  %v9659 = vpop.f32.mrb[0].mxu0
  %v9660 = vadd.f32 0.0, %v9659
  %v9661 = vpop.f32.mrb[0].mxu0
  %v9662 = vpop.f32.mrb[0].mxu0
  %v9663 = vadd.f32 0.0, %v9662
  %v9664 = vpop.f32.mrb[0].mxu0
  %9665 = vmatprep.mubr.bf16.mxu0 0
  %9666 = vmatmul.mubr.bf16.gmra.mrb[0].mxu0 %v9623
  %v9667 = vpop.f32.mrb[0].mxu0
  %v9668 = vadd.f32 0.0, %v9667
  %v9669 = vpop.f32.mrb[0].mxu0
  %v9670 = vpop.f32.mrb[0].mxu0
  %v9671 = vadd.f32 0.0, %v9670
  %v9672 = vpop.f32.mrb[0].mxu0
  %9673 = vdwg.mxu0
  %v9674 = vpack.c.bf16 %v9663, %v9660
  %v9675 = vpack.c.bf16 %v9671, %v9668
  %s9676 = scalar_lea.vmem %s7, 128
  %v9677 = vld [vmem:[%s9676] sm:$0xf]
  %v9678 = vld [vmem:[%s9676 + $0x4] sm:$0xf]
  %v9679 = vld [vmem:[%s9676 + $0x8] sm:$0xf]
  %v9680 = vld [vmem:[%s9676 + $0xc] sm:$0xf]
  %v9681 = vld [vmem:[%s9676 + $0x10] sm:$0xf]
  %v9682 = vld [vmem:[%s9676 + $0x14] sm:$0xf]
  %v9683 = vld [vmem:[%s9676 + $0x18] sm:$0xf]
  %v9684 = vld [vmem:[%s9676 + $0x1c] sm:$0xf]
  %v9685 = vld [vmem:[%s9676 + $0x20] sm:$0xf]
  %v9686 = vld [vmem:[%s9676 + $0x24] sm:$0xf]
  %v9687 = vld [vmem:[%s9676 + $0x28] sm:$0xf]
  %v9688 = vld [vmem:[%s9676 + $0x2c] sm:$0xf]
  %v9689 = vld [vmem:[%s9676 + $0x30] sm:$0xf]
  %v9690 = vld [vmem:[%s9676 + $0x34] sm:$0xf]
  %v9691 = vld [vmem:[%s9676 + $0x38] sm:$0xf]
  %v9692 = vld [vmem:[%s9676 + $0x3c] sm:$0xf]
  %v9709 = vunpack.c.l.b16 %v9677
  %v9710 = vunpack.c.l.b16 %v9678
  %v9711 = vunpack.c.l.b16 %v9679
  %v9712 = vunpack.c.l.b16 %v9680
  %v9713 = vunpack.c.l.b16 %v9681
  %v9714 = vunpack.c.l.b16 %v9682
  %v9715 = vunpack.c.l.b16 %v9683
  %v9716 = vunpack.c.l.b16 %v9684
  %v9717 = vunpack.c.l.b16 %v9685
  %v9718 = vunpack.c.l.b16 %v9686
  %v9719 = vunpack.c.l.b16 %v9687
  %v9720 = vunpack.c.l.b16 %v9688
  %v9721 = vunpack.c.l.b16 %v9689
  %v9722 = vunpack.c.l.b16 %v9690
  %v9723 = vunpack.c.l.b16 %v9691
  %v9724 = vunpack.c.l.b16 %v9692
  %v9725 = vpack.c.b16 %v9710, %v9709
  %v9726 = vpack.c.b16 %v9712, %v9711
  %v9727 = vpack.c.b16 %v9714, %v9713
  %v9728 = vpack.c.b16 %v9716, %v9715
  %v9729 = vpack.c.b16 %v9718, %v9717
  %v9730 = vpack.c.b16 %v9720, %v9719
  %v9731 = vpack.c.b16 %v9722, %v9721
  %v9732 = vpack.c.b16 %v9724, %v9723
  %9741 = vmatprep.subr.bf16.mxu0 0
  %9742 = vmatpush1.bf16.msra.mxu0 %v9725
  %9743 = vmatprep.subr.bf16.mxu0 0
  %9744 = vmatpush1.bf16.msra.mxu0 %v9726
  %9745 = vmatprep.subr.bf16.mxu0 0
  %9746 = vmatpush1.bf16.msra.mxu0 %v9727
  %9747 = vmatprep.subr.bf16.mxu0 0
  %9748 = vmatpush1.bf16.msra.mxu0 %v9728
  %9749 = vmatprep.subr.bf16.mxu0 0
  %9750 = vmatpush1.bf16.msra.mxu0 %v9729
  %9751 = vmatprep.subr.bf16.mxu0 0
  %9752 = vmatpush1.bf16.msra.mxu0 %v9730
  %9753 = vmatprep.subr.bf16.mxu0 0
  %9754 = vmatpush1.bf16.msra.mxu0 %v9731
  %9755 = vmatprep.subr.bf16.mxu0 0
  %9756 = vmatpush1.bf16.msra.mxu0 %v9732
  %9757 = vmatprep.subr.bf16.mxu0 0
  %9758 = vmatpush1.bf16.msra.mxu0 0
  %9759 = vmatprep.subr.bf16.mxu0 0
  %9760 = vmatpush1.bf16.msra.mxu0 0
  %9761 = vmatprep.subr.bf16.mxu0 0
  %9762 = vmatpush1.bf16.msra.mxu0 0
  %9763 = vmatprep.subr.bf16.mxu0 0
  %9764 = vmatpush1.bf16.msra.mxu0 0
  %9765 = vmatprep.subr.bf16.mxu0 0
  %9766 = vmatpush1.bf16.msra.mxu0 0
  %9767 = vmatprep.subr.bf16.mxu0 0
  %9768 = vmatpush1.bf16.msra.mxu0 0
  %9769 = vmatprep.subr.bf16.mxu0 0
  %9770 = vmatpush1.bf16.msra.mxu0 0
  %9771 = vmatprep.subr.bf16.mxu0 0
  %9772 = vmatpush1.bf16.msra.mxu0 0
  %9773 = vmatprep.mubr.bf16.mxu0 0
  %9774 = vmatmul.mubr.bf16.gmra.mrb[0].mxu0 %v9674
  %v9775 = vpop.f32.mrb[0].mxu0
  %v9776 = vadd.f32 0.0, %v9775
  %v9777 = vpop.f32.mrb[0].mxu0
  %v9778 = vpop.f32.mrb[0].mxu0
  %v9779 = vadd.f32 0.0, %v9778
  %v9780 = vpop.f32.mrb[0].mxu0
  %9781 = vmatprep.mubr.bf16.mxu0 0
  %9782 = vmatmul.mubr.bf16.gmra.mrb[0].mxu0 %v9675
  %v9783 = vpop.f32.mrb[0].mxu0
  %v9784 = vadd.f32 0.0, %v9783
  %v9785 = vpop.f32.mrb[0].mxu0
  %v9786 = vpop.f32.mrb[0].mxu0
  %v9787 = vadd.f32 0.0, %v9786
  %v9788 = vpop.f32.mrb[0].mxu0
  %9789 = vdwg.mxu0
  %v9790 = vadd.f32 %v9590, %v9776
  %v9791 = vadd.f32 %v9593, %v9779
  %v9792 = vadd.f32 %v9598, %v9784
  %v9793 = vadd.f32 %v9601, %v9787
  %s9794 = scalar_lea.vmem %s6, 48
  %v9795 = vld [vmem:[%s9794] sm:$0xf]
  %v9796 = vld [vmem:[%s9794 + $0x4] sm:$0xf]
  %v9797 = vld [vmem:[%s9794 + $0x8] sm:$0xf]
  %v9798 = vld [vmem:[%s9794 + $0xc] sm:$0xf]
  %v9803 = vunpack.c.l.b16 %v9795
  %v9804 = vunpack.c.l.b16 %v9796
  %v9805 = vunpack.c.l.b16 %v9797
  %v9806 = vunpack.c.l.b16 %v9798
  %v9807 = vpack.c.b16 %v9804, %v9803
  %v9808 = vpack.c.b16 %v9806, %v9805
  %v9810 = vsel %vm9243, %v9807, 0
  %v9813 = vsel %vm9243, %v9808, 0
  %9815 = vmatprep.subr.bf16.mxu0 0
  %9816 = vmatpush1.bf16.msra.mxu0 %v9222
  %9817 = vmatprep.subr.bf16.mxu0 0
  %9818 = vmatpush1.bf16.msra.mxu0 %v9223
  %9819 = vmatprep.subr.bf16.mxu0 0
  %9820 = vmatpush1.bf16.msra.mxu0 %v9224
  %9821 = vmatprep.subr.bf16.mxu0 0
  %9822 = vmatpush1.bf16.msra.mxu0 %v9225
  %9823 = vmatprep.subr.bf16.mxu0 0
  %9824 = vmatpush1.bf16.msra.mxu0 %v9226
  %9825 = vmatprep.subr.bf16.mxu0 0
  %9826 = vmatpush1.bf16.msra.mxu0 %v9227
  %9827 = vmatprep.subr.bf16.mxu0 0
  %9828 = vmatpush1.bf16.msra.mxu0 %v9252
  %9829 = vmatprep.subr.bf16.mxu0 0
  %9830 = vmatpush1.bf16.msra.mxu0 0
  %9831 = vmatprep.subr.bf16.mxu0 0
  %9832 = vmatpush1.bf16.msra.mxu0 0
  %9833 = vmatprep.subr.bf16.mxu0 0
  %9834 = vmatpush1.bf16.msra.mxu0 0
  %9835 = vmatprep.subr.bf16.mxu0 0
  %9836 = vmatpush1.bf16.msra.mxu0 0
  %9837 = vmatprep.subr.bf16.mxu0 0
  %9838 = vmatpush1.bf16.msra.mxu0 0
  %9839 = vmatprep.subr.bf16.mxu0 0
  %9840 = vmatpush1.bf16.msra.mxu0 0
  %9841 = vmatprep.subr.bf16.mxu0 0
  %9842 = vmatpush1.bf16.msra.mxu0 0
  %9843 = vmatprep.subr.bf16.mxu0 0
  %9844 = vmatpush1.bf16.msra.mxu0 0
  %9845 = vmatprep.subr.bf16.mxu0 0
  %9846 = vmatpush1.bf16.msra.mxu0 0
  %9847 = vmatprep.mubr.bf16.mxu0 0
  %9848 = vmatmul.mubr.bf16.gmra.mrb[0].mxu0 %v9810
  %v9849 = vpop.f32.mrb[0].mxu0
  %v9850 = vadd.f32 0.0, %v9849
  %v9851 = vpop.f32.mrb[0].mxu0
  %v9852 = vpop.f32.mrb[0].mxu0
  %v9853 = vadd.f32 0.0, %v9852
  %v9854 = vpop.f32.mrb[0].mxu0
  %9855 = vmatprep.mubr.bf16.mxu0 0
  %9856 = vmatmul.mubr.bf16.gmra.mrb[0].mxu0 %v9813
  %v9857 = vpop.f32.mrb[0].mxu0
  %v9858 = vadd.f32 0.0, %v9857
  %v9859 = vpop.f32.mrb[0].mxu0
  %v9860 = vpop.f32.mrb[0].mxu0
  %v9861 = vadd.f32 0.0, %v9860
  %v9862 = vpop.f32.mrb[0].mxu0
  %9863 = vdwg.mxu0
  %v9864 = vpack.c.bf16 %v9853, %v9850
  %v9865 = vpack.c.bf16 %v9861, %v9858
  %s9866 = scalar_lea.vmem %s7, 192
  %v9867 = vld [vmem:[%s9866] sm:$0xf]
  %v9868 = vld [vmem:[%s9866 + $0x4] sm:$0xf]
  %v9869 = vld [vmem:[%s9866 + $0x8] sm:$0xf]
  %v9870 = vld [vmem:[%s9866 + $0xc] sm:$0xf]
  %v9871 = vld [vmem:[%s9866 + $0x10] sm:$0xf]
  %v9872 = vld [vmem:[%s9866 + $0x14] sm:$0xf]
  %v9873 = vld [vmem:[%s9866 + $0x18] sm:$0xf]
  %v9874 = vld [vmem:[%s9866 + $0x1c] sm:$0xf]
  %v9875 = vld [vmem:[%s9866 + $0x20] sm:$0xf]
  %v9876 = vld [vmem:[%s9866 + $0x24] sm:$0xf]
  %v9877 = vld [vmem:[%s9866 + $0x28] sm:$0xf]
  %v9878 = vld [vmem:[%s9866 + $0x2c] sm:$0xf]
  %v9879 = vld [vmem:[%s9866 + $0x30] sm:$0xf]
  %v9880 = vld [vmem:[%s9866 + $0x34] sm:$0xf]
  %v9881 = vld [vmem:[%s9866 + $0x38] sm:$0xf]
  %v9882 = vld [vmem:[%s9866 + $0x3c] sm:$0xf]
  %v9899 = vunpack.c.l.b16 %v9867
  %v9900 = vunpack.c.l.b16 %v9868
  %v9901 = vunpack.c.l.b16 %v9869
  %v9902 = vunpack.c.l.b16 %v9870
  %v9903 = vunpack.c.l.b16 %v9871
  %v9904 = vunpack.c.l.b16 %v9872
  %v9905 = vunpack.c.l.b16 %v9873
  %v9906 = vunpack.c.l.b16 %v9874
  %v9907 = vunpack.c.l.b16 %v9875
  %v9908 = vunpack.c.l.b16 %v9876
  %v9909 = vunpack.c.l.b16 %v9877
  %v9910 = vunpack.c.l.b16 %v9878
  %v9911 = vunpack.c.l.b16 %v9879
  %v9912 = vunpack.c.l.b16 %v9880
  %v9913 = vunpack.c.l.b16 %v9881
  %v9914 = vunpack.c.l.b16 %v9882
  %v9915 = vpack.c.b16 %v9900, %v9899
  %v9916 = vpack.c.b16 %v9902, %v9901
  %v9917 = vpack.c.b16 %v9904, %v9903
  %v9918 = vpack.c.b16 %v9906, %v9905
  %v9919 = vpack.c.b16 %v9908, %v9907
  %v9920 = vpack.c.b16 %v9910, %v9909
  %v9921 = vpack.c.b16 %v9912, %v9911
  %v9922 = vpack.c.b16 %v9914, %v9913
  %9931 = vmatprep.subr.bf16.mxu0 0
  %9932 = vmatpush1.bf16.msra.mxu0 %v9915
  %9933 = vmatprep.subr.bf16.mxu0 0
  %9934 = vmatpush1.bf16.msra.mxu0 %v9916
  %9935 = vmatprep.subr.bf16.mxu0 0
  %9936 = vmatpush1.bf16.msra.mxu0 %v9917
  %9937 = vmatprep.subr.bf16.mxu0 0
  %9938 = vmatpush1.bf16.msra.mxu0 %v9918
  %9939 = vmatprep.subr.bf16.mxu0 0
  %9940 = vmatpush1.bf16.msra.mxu0 %v9919
  %9941 = vmatprep.subr.bf16.mxu0 0
  %9942 = vmatpush1.bf16.msra.mxu0 %v9920
  %9943 = vmatprep.subr.bf16.mxu0 0
  %9944 = vmatpush1.bf16.msra.mxu0 %v9921
  %9945 = vmatprep.subr.bf16.mxu0 0
  %9946 = vmatpush1.bf16.msra.mxu0 %v9922
  %9947 = vmatprep.subr.bf16.mxu0 0
  %9948 = vmatpush1.bf16.msra.mxu0 0
  %9949 = vmatprep.subr.bf16.mxu0 0
  %9950 = vmatpush1.bf16.msra.mxu0 0
  %9951 = vmatprep.subr.bf16.mxu0 0
  %9952 = vmatpush1.bf16.msra.mxu0 0
  %9953 = vmatprep.subr.bf16.mxu0 0
  %9954 = vmatpush1.bf16.msra.mxu0 0
  %9955 = vmatprep.subr.bf16.mxu0 0
  %9956 = vmatpush1.bf16.msra.mxu0 0
  %9957 = vmatprep.subr.bf16.mxu0 0
  %9958 = vmatpush1.bf16.msra.mxu0 0
  %9959 = vmatprep.subr.bf16.mxu0 0
  %9960 = vmatpush1.bf16.msra.mxu0 0
  %9961 = vmatprep.subr.bf16.mxu0 0
  %9962 = vmatpush1.bf16.msra.mxu0 0
  %9963 = vmatprep.mubr.bf16.mxu0 0
  %9964 = vmatmul.mubr.bf16.gmra.mrb[0].mxu0 %v9864
  %v9965 = vpop.f32.mrb[0].mxu0
  %v9966 = vadd.f32 0.0, %v9965
  %v9967 = vpop.f32.mrb[0].mxu0
  %v9968 = vpop.f32.mrb[0].mxu0
  %v9969 = vadd.f32 0.0, %v9968
  %v9970 = vpop.f32.mrb[0].mxu0
  %9971 = vmatprep.mubr.bf16.mxu0 0
  %9972 = vmatmul.mubr.bf16.gmra.mrb[0].mxu0 %v9865
  %v9973 = vpop.f32.mrb[0].mxu0
  %v9974 = vadd.f32 0.0, %v9973
  %v9975 = vpop.f32.mrb[0].mxu0
  %v9976 = vpop.f32.mrb[0].mxu0
  %v9977 = vadd.f32 0.0, %v9976
  %v9978 = vpop.f32.mrb[0].mxu0
  %9979 = vdwg.mxu0
  %v9980 = vadd.f32 %v9790, %v9966
  %v9981 = vadd.f32 %v9791, %v9969
  %v9982 = vadd.f32 %v9792, %v9974
  %v9983 = vadd.f32 %v9793, %v9977
  %s9984 = scalar_lea.vmem %s6, 64
  %v9985 = vld [vmem:[%s9984] sm:$0xf]
  %v9986 = vld [vmem:[%s9984 + $0x4] sm:$0xf]
  %v9987 = vld [vmem:[%s9984 + $0x8] sm:$0xf]
  %v9988 = vld [vmem:[%s9984 + $0xc] sm:$0xf]
  %v9993 = vunpack.c.l.b16 %v9985
  %v9994 = vunpack.c.l.b16 %v9986
  %v9995 = vunpack.c.l.b16 %v9987
  %v9996 = vunpack.c.l.b16 %v9988
  %v9997 = vpack.c.b16 %v9994, %v9993
  %v9998 = vpack.c.b16 %v9996, %v9995
  %v10000 = vsel %vm9243, %v9997, 0
  %v10003 = vsel %vm9243, %v9998, 0
  %10005 = vmatprep.subr.bf16.mxu0 0
  %10006 = vmatpush1.bf16.msra.mxu0 %v9222
  %10007 = vmatprep.subr.bf16.mxu0 0
  %10008 = vmatpush1.bf16.msra.mxu0 %v9223
  %10009 = vmatprep.subr.bf16.mxu0 0
  %10010 = vmatpush1.bf16.msra.mxu0 %v9224
  %10011 = vmatprep.subr.bf16.mxu0 0
  %10012 = vmatpush1.bf16.msra.mxu0 %v9225
  %10013 = vmatprep.subr.bf16.mxu0 0
  %10014 = vmatpush1.bf16.msra.mxu0 %v9226
  %10015 = vmatprep.subr.bf16.mxu0 0
  %10016 = vmatpush1.bf16.msra.mxu0 %v9227
  %10017 = vmatprep.subr.bf16.mxu0 0
  %10018 = vmatpush1.bf16.msra.mxu0 %v9252
  %10019 = vmatprep.subr.bf16.mxu0 0
  %10020 = vmatpush1.bf16.msra.mxu0 0
  %10021 = vmatprep.subr.bf16.mxu0 0
  %10022 = vmatpush1.bf16.msra.mxu0 0
  %10023 = vmatprep.subr.bf16.mxu0 0
  %10024 = vmatpush1.bf16.msra.mxu0 0
  %10025 = vmatprep.subr.bf16.mxu0 0
  %10026 = vmatpush1.bf16.msra.mxu0 0
  %10027 = vmatprep.subr.bf16.mxu0 0
  %10028 = vmatpush1.bf16.msra.mxu0 0
  %10029 = vmatprep.subr.bf16.mxu0 0
  %10030 = vmatpush1.bf16.msra.mxu0 0
  %10031 = vmatprep.subr.bf16.mxu0 0
  %10032 = vmatpush1.bf16.msra.mxu0 0
  %10033 = vmatprep.subr.bf16.mxu0 0
  %10034 = vmatpush1.bf16.msra.mxu0 0
  %10035 = vmatprep.subr.bf16.mxu0 0
  %10036 = vmatpush1.bf16.msra.mxu0 0
  %10037 = vmatprep.mubr.bf16.mxu0 0
  %10038 = vmatmul.mubr.bf16.gmra.mrb[0].mxu0 %v10000
  %v10039 = vpop.f32.mrb[0].mxu0
  %v10040 = vadd.f32 0.0, %v10039
  %v10041 = vpop.f32.mrb[0].mxu0
  %v10042 = vpop.f32.mrb[0].mxu0
  %v10043 = vadd.f32 0.0, %v10042
  %v10044 = vpop.f32.mrb[0].mxu0
  %10045 = vmatprep.mubr.bf16.mxu0 0
  %10046 = vmatmul.mubr.bf16.gmra.mrb[0].mxu0 %v10003
  %v10047 = vpop.f32.mrb[0].mxu0
  %v10048 = vadd.f32 0.0, %v10047
  %v10049 = vpop.f32.mrb[0].mxu0
  %v10050 = vpop.f32.mrb[0].mxu0
  %v10051 = vadd.f32 0.0, %v10050
  %v10052 = vpop.f32.mrb[0].mxu0
  %10053 = vdwg.mxu0
  %v10054 = vpack.c.bf16 %v10043, %v10040
  %v10055 = vpack.c.bf16 %v10051, %v10048
  %s10056 = scalar_lea.vmem %s7, 256
  %v10057 = vld [vmem:[%s10056] sm:$0xf]
  %v10058 = vld [vmem:[%s10056 + $0x4] sm:$0xf]
  %v10059 = vld [vmem:[%s10056 + $0x8] sm:$0xf]
  %v10060 = vld [vmem:[%s10056 + $0xc] sm:$0xf]
  %v10061 = vld [vmem:[%s10056 + $0x10] sm:$0xf]
  %v10062 = vld [vmem:[%s10056 + $0x14] sm:$0xf]
  %v10063 = vld [vmem:[%s10056 + $0x18] sm:$0xf]
  %v10064 = vld [vmem:[%s10056 + $0x1c] sm:$0xf]
  %v10065 = vld [vmem:[%s10056 + $0x20] sm:$0xf]
  %v10066 = vld [vmem:[%s10056 + $0x24] sm:$0xf]
  %v10067 = vld [vmem:[%s10056 + $0x28] sm:$0xf]
  %v10068 = vld [vmem:[%s10056 + $0x2c] sm:$0xf]
  %v10069 = vld [vmem:[%s10056 + $0x30] sm:$0xf]
  %v10070 = vld [vmem:[%s10056 + $0x34] sm:$0xf]
  %v10071 = vld [vmem:[%s10056 + $0x38] sm:$0xf]
  %v10072 = vld [vmem:[%s10056 + $0x3c] sm:$0xf]
  %v10089 = vunpack.c.l.b16 %v10057
  %v10090 = vunpack.c.l.b16 %v10058
  %v10091 = vunpack.c.l.b16 %v10059
  %v10092 = vunpack.c.l.b16 %v10060
  %v10093 = vunpack.c.l.b16 %v10061
  %v10094 = vunpack.c.l.b16 %v10062
  %v10095 = vunpack.c.l.b16 %v10063
  %v10096 = vunpack.c.l.b16 %v10064
  %v10097 = vunpack.c.l.b16 %v10065
  %v10098 = vunpack.c.l.b16 %v10066
  %v10099 = vunpack.c.l.b16 %v10067
  %v10100 = vunpack.c.l.b16 %v10068
  %v10101 = vunpack.c.l.b16 %v10069
  %v10102 = vunpack.c.l.b16 %v10070
  %v10103 = vunpack.c.l.b16 %v10071
  %v10104 = vunpack.c.l.b16 %v10072
  %v10105 = vpack.c.b16 %v10090, %v10089
  %v10106 = vpack.c.b16 %v10092, %v10091
  %v10107 = vpack.c.b16 %v10094, %v10093
  %v10108 = vpack.c.b16 %v10096, %v10095
  %v10109 = vpack.c.b16 %v10098, %v10097
  %v10110 = vpack.c.b16 %v10100, %v10099
  %v10111 = vpack.c.b16 %v10102, %v10101
  %v10112 = vpack.c.b16 %v10104, %v10103
  %10121 = vmatprep.subr.bf16.mxu0 0
  %10122 = vmatpush1.bf16.msra.mxu0 %v10105
  %10123 = vmatprep.subr.bf16.mxu0 0
  %10124 = vmatpush1.bf16.msra.mxu0 %v10106
  %10125 = vmatprep.subr.bf16.mxu0 0
  %10126 = vmatpush1.bf16.msra.mxu0 %v10107
  %10127 = vmatprep.subr.bf16.mxu0 0
  %10128 = vmatpush1.bf16.msra.mxu0 %v10108
  %10129 = vmatprep.subr.bf16.mxu0 0
  %10130 = vmatpush1.bf16.msra.mxu0 %v10109
  %10131 = vmatprep.subr.bf16.mxu0 0
  %10132 = vmatpush1.bf16.msra.mxu0 %v10110
  %10133 = vmatprep.subr.bf16.mxu0 0
  %10134 = vmatpush1.bf16.msra.mxu0 %v10111
  %10135 = vmatprep.subr.bf16.mxu0 0
  %10136 = vmatpush1.bf16.msra.mxu0 %v10112
  %10137 = vmatprep.subr.bf16.mxu0 0
  %10138 = vmatpush1.bf16.msra.mxu0 0
  %10139 = vmatprep.subr.bf16.mxu0 0
  %10140 = vmatpush1.bf16.msra.mxu0 0
  %10141 = vmatprep.subr.bf16.mxu0 0
  %10142 = vmatpush1.bf16.msra.mxu0 0
  %10143 = vmatprep.subr.bf16.mxu0 0
  %10144 = vmatpush1.bf16.msra.mxu0 0
  %10145 = vmatprep.subr.bf16.mxu0 0
  %10146 = vmatpush1.bf16.msra.mxu0 0
  %10147 = vmatprep.subr.bf16.mxu0 0
  %10148 = vmatpush1.bf16.msra.mxu0 0
  %10149 = vmatprep.subr.bf16.mxu0 0
  %10150 = vmatpush1.bf16.msra.mxu0 0
  %10151 = vmatprep.subr.bf16.mxu0 0
  %10152 = vmatpush1.bf16.msra.mxu0 0
  %10153 = vmatprep.mubr.bf16.mxu0 0
  %10154 = vmatmul.mubr.bf16.gmra.mrb[0].mxu0 %v10054
  %v10155 = vpop.f32.mrb[0].mxu0
  %v10156 = vadd.f32 0.0, %v10155
  %v10157 = vpop.f32.mrb[0].mxu0
  %v10158 = vpop.f32.mrb[0].mxu0
  %v10159 = vadd.f32 0.0, %v10158
  %v10160 = vpop.f32.mrb[0].mxu0
  %10161 = vmatprep.mubr.bf16.mxu0 0
  %10162 = vmatmul.mubr.bf16.gmra.mrb[0].mxu0 %v10055
  %v10163 = vpop.f32.mrb[0].mxu0
  %v10164 = vadd.f32 0.0, %v10163
  %v10165 = vpop.f32.mrb[0].mxu0
  %v10166 = vpop.f32.mrb[0].mxu0
  %v10167 = vadd.f32 0.0, %v10166
  %v10168 = vpop.f32.mrb[0].mxu0
  %10169 = vdwg.mxu0
  %v10170 = vadd.f32 %v9980, %v10156
  %v10171 = vadd.f32 %v9981, %v10159
  %v10172 = vadd.f32 %v9982, %v10164
  %v10173 = vadd.f32 %v9983, %v10167
  %s10174 = scalar_lea.vmem %s6, 80
  %v10175 = vld [vmem:[%s10174] sm:$0xf]
  %v10176 = vld [vmem:[%s10174 + $0x4] sm:$0xf]
  %v10177 = vld [vmem:[%s10174 + $0x8] sm:$0xf]
  %v10178 = vld [vmem:[%s10174 + $0xc] sm:$0xf]
  %v10183 = vunpack.c.l.b16 %v10175
  %v10184 = vunpack.c.l.b16 %v10176
  %v10185 = vunpack.c.l.b16 %v10177
  %v10186 = vunpack.c.l.b16 %v10178
  %v10187 = vpack.c.b16 %v10184, %v10183
  %v10188 = vpack.c.b16 %v10186, %v10185
  %v10190 = vsel %vm9243, %v10187, 0
  %v10193 = vsel %vm9243, %v10188, 0
  %10195 = vmatprep.subr.bf16.mxu0 0
  %10196 = vmatpush1.bf16.msra.mxu0 %v9222
  %10197 = vmatprep.subr.bf16.mxu0 0
  %10198 = vmatpush1.bf16.msra.mxu0 %v9223
  %10199 = vmatprep.subr.bf16.mxu0 0
  %10200 = vmatpush1.bf16.msra.mxu0 %v9224
  %10201 = vmatprep.subr.bf16.mxu0 0
  %10202 = vmatpush1.bf16.msra.mxu0 %v9225
  %10203 = vmatprep.subr.bf16.mxu0 0
  %10204 = vmatpush1.bf16.msra.mxu0 %v9226
  %10205 = vmatprep.subr.bf16.mxu0 0
  %10206 = vmatpush1.bf16.msra.mxu0 %v9227
  %10207 = vmatprep.subr.bf16.mxu0 0
  %10208 = vmatpush1.bf16.msra.mxu0 %v9252
  %10209 = vmatprep.subr.bf16.mxu0 0
  %10210 = vmatpush1.bf16.msra.mxu0 0
  %10211 = vmatprep.subr.bf16.mxu0 0
  %10212 = vmatpush1.bf16.msra.mxu0 0
  %10213 = vmatprep.subr.bf16.mxu0 0
  %10214 = vmatpush1.bf16.msra.mxu0 0
  %10215 = vmatprep.subr.bf16.mxu0 0
  %10216 = vmatpush1.bf16.msra.mxu0 0
  %10217 = vmatprep.subr.bf16.mxu0 0
  %10218 = vmatpush1.bf16.msra.mxu0 0
  %10219 = vmatprep.subr.bf16.mxu0 0
  %10220 = vmatpush1.bf16.msra.mxu0 0
  %10221 = vmatprep.subr.bf16.mxu0 0
  %10222 = vmatpush1.bf16.msra.mxu0 0
  %10223 = vmatprep.subr.bf16.mxu0 0
  %10224 = vmatpush1.bf16.msra.mxu0 0
  %10225 = vmatprep.subr.bf16.mxu0 0
  %10226 = vmatpush1.bf16.msra.mxu0 0
  %10227 = vmatprep.mubr.bf16.mxu0 0
  %10228 = vmatmul.mubr.bf16.gmra.mrb[0].mxu0 %v10190
  %v10229 = vpop.f32.mrb[0].mxu0
  %v10230 = vadd.f32 0.0, %v10229
  %v10231 = vpop.f32.mrb[0].mxu0
  %v10232 = vpop.f32.mrb[0].mxu0
  %v10233 = vadd.f32 0.0, %v10232
  %v10234 = vpop.f32.mrb[0].mxu0
  %10235 = vmatprep.mubr.bf16.mxu0 0
  %10236 = vmatmul.mubr.bf16.gmra.mrb[0].mxu0 %v10193
  %v10237 = vpop.f32.mrb[0].mxu0
  %v10238 = vadd.f32 0.0, %v10237
  %v10239 = vpop.f32.mrb[0].mxu0
  %v10240 = vpop.f32.mrb[0].mxu0
  %v10241 = vadd.f32 0.0, %v10240
  %v10242 = vpop.f32.mrb[0].mxu0
  %10243 = vdwg.mxu0
  %v10244 = vpack.c.bf16 %v10233, %v10230
  %v10245 = vpack.c.bf16 %v10241, %v10238
  %s10246 = scalar_lea.vmem %s7, 320
  %v10247 = vld [vmem:[%s10246] sm:$0xf]
  %v10248 = vld [vmem:[%s10246 + $0x4] sm:$0xf]
  %v10249 = vld [vmem:[%s10246 + $0x8] sm:$0xf]
  %v10250 = vld [vmem:[%s10246 + $0xc] sm:$0xf]
  %v10251 = vld [vmem:[%s10246 + $0x10] sm:$0xf]
  %v10252 = vld [vmem:[%s10246 + $0x14] sm:$0xf]
  %v10253 = vld [vmem:[%s10246 + $0x18] sm:$0xf]
  %v10254 = vld [vmem:[%s10246 + $0x1c] sm:$0xf]
  %v10255 = vld [vmem:[%s10246 + $0x20] sm:$0xf]
  %v10256 = vld [vmem:[%s10246 + $0x24] sm:$0xf]
  %v10257 = vld [vmem:[%s10246 + $0x28] sm:$0xf]
  %v10258 = vld [vmem:[%s10246 + $0x2c] sm:$0xf]
  %v10259 = vld [vmem:[%s10246 + $0x30] sm:$0xf]
  %v10260 = vld [vmem:[%s10246 + $0x34] sm:$0xf]
  %v10261 = vld [vmem:[%s10246 + $0x38] sm:$0xf]
  %v10262 = vld [vmem:[%s10246 + $0x3c] sm:$0xf]
  %v10279 = vunpack.c.l.b16 %v10247
  %v10280 = vunpack.c.l.b16 %v10248
  %v10281 = vunpack.c.l.b16 %v10249
  %v10282 = vunpack.c.l.b16 %v10250
  %v10283 = vunpack.c.l.b16 %v10251
  %v10284 = vunpack.c.l.b16 %v10252
  %v10285 = vunpack.c.l.b16 %v10253
  %v10286 = vunpack.c.l.b16 %v10254
  %v10287 = vunpack.c.l.b16 %v10255
  %v10288 = vunpack.c.l.b16 %v10256
  %v10289 = vunpack.c.l.b16 %v10257
  %v10290 = vunpack.c.l.b16 %v10258
  %v10291 = vunpack.c.l.b16 %v10259
  %v10292 = vunpack.c.l.b16 %v10260
  %v10293 = vunpack.c.l.b16 %v10261
  %v10294 = vunpack.c.l.b16 %v10262
  %v10295 = vpack.c.b16 %v10280, %v10279
  %v10296 = vpack.c.b16 %v10282, %v10281
  %v10297 = vpack.c.b16 %v10284, %v10283
  %v10298 = vpack.c.b16 %v10286, %v10285
  %v10299 = vpack.c.b16 %v10288, %v10287
  %v10300 = vpack.c.b16 %v10290, %v10289
  %v10301 = vpack.c.b16 %v10292, %v10291
  %v10302 = vpack.c.b16 %v10294, %v10293
  %10311 = vmatprep.subr.bf16.mxu0 0
  %10312 = vmatpush1.bf16.msra.mxu0 %v10295
  %10313 = vmatprep.subr.bf16.mxu0 0
  %10314 = vmatpush1.bf16.msra.mxu0 %v10296
  %10315 = vmatprep.subr.bf16.mxu0 0
  %10316 = vmatpush1.bf16.msra.mxu0 %v10297
  %10317 = vmatprep.subr.bf16.mxu0 0
  %10318 = vmatpush1.bf16.msra.mxu0 %v10298
  %10319 = vmatprep.subr.bf16.mxu0 0
  %10320 = vmatpush1.bf16.msra.mxu0 %v10299
  %10321 = vmatprep.subr.bf16.mxu0 0
  %10322 = vmatpush1.bf16.msra.mxu0 %v10300
  %10323 = vmatprep.subr.bf16.mxu0 0
  %10324 = vmatpush1.bf16.msra.mxu0 %v10301
  %10325 = vmatprep.subr.bf16.mxu0 0
  %10326 = vmatpush1.bf16.msra.mxu0 %v10302
  %10327 = vmatprep.subr.bf16.mxu0 0
  %10328 = vmatpush1.bf16.msra.mxu0 0
  %10329 = vmatprep.subr.bf16.mxu0 0
  %10330 = vmatpush1.bf16.msra.mxu0 0
  %10331 = vmatprep.subr.bf16.mxu0 0
  %10332 = vmatpush1.bf16.msra.mxu0 0
  %10333 = vmatprep.subr.bf16.mxu0 0
  %10334 = vmatpush1.bf16.msra.mxu0 0
  %10335 = vmatprep.subr.bf16.mxu0 0
  %10336 = vmatpush1.bf16.msra.mxu0 0
  %10337 = vmatprep.subr.bf16.mxu0 0
  %10338 = vmatpush1.bf16.msra.mxu0 0
  %10339 = vmatprep.subr.bf16.mxu0 0
  %10340 = vmatpush1.bf16.msra.mxu0 0
  %10341 = vmatprep.subr.bf16.mxu0 0
  %10342 = vmatpush1.bf16.msra.mxu0 0
  %10343 = vmatprep.mubr.bf16.mxu0 0
  %10344 = vmatmul.mubr.bf16.gmra.mrb[0].mxu0 %v10244
  %v10345 = vpop.f32.mrb[0].mxu0
  %v10346 = vadd.f32 0.0, %v10345
  %v10347 = vpop.f32.mrb[0].mxu0
  %v10348 = vpop.f32.mrb[0].mxu0
  %v10349 = vadd.f32 0.0, %v10348
  %v10350 = vpop.f32.mrb[0].mxu0
  %10351 = vmatprep.mubr.bf16.mxu0 0
  %10352 = vmatmul.mubr.bf16.gmra.mrb[0].mxu0 %v10245
  %v10353 = vpop.f32.mrb[0].mxu0
  %v10354 = vadd.f32 0.0, %v10353
  %v10355 = vpop.f32.mrb[0].mxu0
  %v10356 = vpop.f32.mrb[0].mxu0
  %v10357 = vadd.f32 0.0, %v10356
  %v10358 = vpop.f32.mrb[0].mxu0
  %10359 = vdwg.mxu0
  %v10360 = vadd.f32 %v10170, %v10346
  %v10361 = vadd.f32 %v10171, %v10349
  %v10362 = vadd.f32 %v10172, %v10354
  %v10363 = vadd.f32 %v10173, %v10357
  %s10364 = scalar_lea.vmem %s6, 96
  %v10365 = vld [vmem:[%s10364] sm:$0xf]
  %v10366 = vld [vmem:[%s10364 + $0x4] sm:$0xf]
  %v10367 = vld [vmem:[%s10364 + $0x8] sm:$0xf]
  %v10368 = vld [vmem:[%s10364 + $0xc] sm:$0xf]
  %v10373 = vunpack.c.l.b16 %v10365
  %v10374 = vunpack.c.l.b16 %v10366
  %v10375 = vunpack.c.l.b16 %v10367
  %v10376 = vunpack.c.l.b16 %v10368
  %v10377 = vpack.c.b16 %v10374, %v10373
  %v10378 = vpack.c.b16 %v10376, %v10375
  %v10380 = vsel %vm9243, %v10377, 0
  %v10383 = vsel %vm9243, %v10378, 0
  %10385 = vmatprep.subr.bf16.mxu0 0
  %10386 = vmatpush1.bf16.msra.mxu0 %v9222
  %10387 = vmatprep.subr.bf16.mxu0 0
  %10388 = vmatpush1.bf16.msra.mxu0 %v9223
  %10389 = vmatprep.subr.bf16.mxu0 0
  %10390 = vmatpush1.bf16.msra.mxu0 %v9224
  %10391 = vmatprep.subr.bf16.mxu0 0
  %10392 = vmatpush1.bf16.msra.mxu0 %v9225
  %10393 = vmatprep.subr.bf16.mxu0 0
  %10394 = vmatpush1.bf16.msra.mxu0 %v9226
  %10395 = vmatprep.subr.bf16.mxu0 0
  %10396 = vmatpush1.bf16.msra.mxu0 %v9227
  %10397 = vmatprep.subr.bf16.mxu0 0
  %10398 = vmatpush1.bf16.msra.mxu0 %v9252
  %10399 = vmatprep.subr.bf16.mxu0 0
  %10400 = vmatpush1.bf16.msra.mxu0 0
  %10401 = vmatprep.subr.bf16.mxu0 0
  %10402 = vmatpush1.bf16.msra.mxu0 0
  %10403 = vmatprep.subr.bf16.mxu0 0
  %10404 = vmatpush1.bf16.msra.mxu0 0
  %10405 = vmatprep.subr.bf16.mxu0 0
  %10406 = vmatpush1.bf16.msra.mxu0 0
  %10407 = vmatprep.subr.bf16.mxu0 0
  %10408 = vmatpush1.bf16.msra.mxu0 0
  %10409 = vmatprep.subr.bf16.mxu0 0
  %10410 = vmatpush1.bf16.msra.mxu0 0
  %10411 = vmatprep.subr.bf16.mxu0 0
  %10412 = vmatpush1.bf16.msra.mxu0 0
  %10413 = vmatprep.subr.bf16.mxu0 0
  %10414 = vmatpush1.bf16.msra.mxu0 0
  %10415 = vmatprep.subr.bf16.mxu0 0
  %10416 = vmatpush1.bf16.msra.mxu0 0
  %10417 = vmatprep.mubr.bf16.mxu0 0
  %10418 = vmatmul.mubr.bf16.gmra.mrb[0].mxu0 %v10380
  %v10419 = vpop.f32.mrb[0].mxu0
  %v10420 = vadd.f32 0.0, %v10419
  %v10421 = vpop.f32.mrb[0].mxu0
  %v10422 = vpop.f32.mrb[0].mxu0
  %v10423 = vadd.f32 0.0, %v10422
  %v10424 = vpop.f32.mrb[0].mxu0
  %10425 = vmatprep.mubr.bf16.mxu0 0
  %10426 = vmatmul.mubr.bf16.gmra.mrb[0].mxu0 %v10383
  %v10427 = vpop.f32.mrb[0].mxu0
  %v10428 = vadd.f32 0.0, %v10427
  %v10429 = vpop.f32.mrb[0].mxu0
  %v10430 = vpop.f32.mrb[0].mxu0
  %v10431 = vadd.f32 0.0, %v10430
  %v10432 = vpop.f32.mrb[0].mxu0
  %10433 = vdwg.mxu0
  %v10434 = vpack.c.bf16 %v10423, %v10420
  %v10435 = vpack.c.bf16 %v10431, %v10428
  %s10436 = scalar_lea.vmem %s7, 384
  %v10437 = vld [vmem:[%s10436] sm:$0xf]
  %v10438 = vld [vmem:[%s10436 + $0x4] sm:$0xf]
  %v10439 = vld [vmem:[%s10436 + $0x8] sm:$0xf]
  %v10440 = vld [vmem:[%s10436 + $0xc] sm:$0xf]
  %v10441 = vld [vmem:[%s10436 + $0x10] sm:$0xf]
  %v10442 = vld [vmem:[%s10436 + $0x14] sm:$0xf]
  %v10443 = vld [vmem:[%s10436 + $0x18] sm:$0xf]
  %v10444 = vld [vmem:[%s10436 + $0x1c] sm:$0xf]
  %v10445 = vld [vmem:[%s10436 + $0x20] sm:$0xf]
  %v10446 = vld [vmem:[%s10436 + $0x24] sm:$0xf]
  %v10447 = vld [vmem:[%s10436 + $0x28] sm:$0xf]
  %v10448 = vld [vmem:[%s10436 + $0x2c] sm:$0xf]
  %v10449 = vld [vmem:[%s10436 + $0x30] sm:$0xf]
  %v10450 = vld [vmem:[%s10436 + $0x34] sm:$0xf]
  %v10451 = vld [vmem:[%s10436 + $0x38] sm:$0xf]
  %v10452 = vld [vmem:[%s10436 + $0x3c] sm:$0xf]
  %v10469 = vunpack.c.l.b16 %v10437
  %v10470 = vunpack.c.l.b16 %v10438
  %v10471 = vunpack.c.l.b16 %v10439
  %v10472 = vunpack.c.l.b16 %v10440
  %v10473 = vunpack.c.l.b16 %v10441
  %v10474 = vunpack.c.l.b16 %v10442
  %v10475 = vunpack.c.l.b16 %v10443
  %v10476 = vunpack.c.l.b16 %v10444
  %v10477 = vunpack.c.l.b16 %v10445
  %v10478 = vunpack.c.l.b16 %v10446
  %v10479 = vunpack.c.l.b16 %v10447
  %v10480 = vunpack.c.l.b16 %v10448
  %v10481 = vunpack.c.l.b16 %v10449
  %v10482 = vunpack.c.l.b16 %v10450
  %v10483 = vunpack.c.l.b16 %v10451
  %v10484 = vunpack.c.l.b16 %v10452
  %v10485 = vpack.c.b16 %v10470, %v10469
  %v10486 = vpack.c.b16 %v10472, %v10471
  %v10487 = vpack.c.b16 %v10474, %v10473
  %v10488 = vpack.c.b16 %v10476, %v10475
  %v10489 = vpack.c.b16 %v10478, %v10477
  %v10490 = vpack.c.b16 %v10480, %v10479
  %v10491 = vpack.c.b16 %v10482, %v10481
  %v10492 = vpack.c.b16 %v10484, %v10483
  %10501 = vmatprep.subr.bf16.mxu0 0
  %10502 = vmatpush1.bf16.msra.mxu0 %v10485
  %10503 = vmatprep.subr.bf16.mxu0 0
  %10504 = vmatpush1.bf16.msra.mxu0 %v10486
  %10505 = vmatprep.subr.bf16.mxu0 0
  %10506 = vmatpush1.bf16.msra.mxu0 %v10487
  %10507 = vmatprep.subr.bf16.mxu0 0
  %10508 = vmatpush1.bf16.msra.mxu0 %v10488
  %10509 = vmatprep.subr.bf16.mxu0 0
  %10510 = vmatpush1.bf16.msra.mxu0 %v10489
  %10511 = vmatprep.subr.bf16.mxu0 0
  %10512 = vmatpush1.bf16.msra.mxu0 %v10490
  %10513 = vmatprep.subr.bf16.mxu0 0
  %10514 = vmatpush1.bf16.msra.mxu0 %v10491
  %10515 = vmatprep.subr.bf16.mxu0 0
  %10516 = vmatpush1.bf16.msra.mxu0 %v10492
  %10517 = vmatprep.subr.bf16.mxu0 0
  %10518 = vmatpush1.bf16.msra.mxu0 0
  %10519 = vmatprep.subr.bf16.mxu0 0
  %10520 = vmatpush1.bf16.msra.mxu0 0
  %10521 = vmatprep.subr.bf16.mxu0 0
  %10522 = vmatpush1.bf16.msra.mxu0 0
  %10523 = vmatprep.subr.bf16.mxu0 0
  %10524 = vmatpush1.bf16.msra.mxu0 0
  %10525 = vmatprep.subr.bf16.mxu0 0
  %10526 = vmatpush1.bf16.msra.mxu0 0
  %10527 = vmatprep.subr.bf16.mxu0 0
  %10528 = vmatpush1.bf16.msra.mxu0 0
  %10529 = vmatprep.subr.bf16.mxu0 0
  %10530 = vmatpush1.bf16.msra.mxu0 0
  %10531 = vmatprep.subr.bf16.mxu0 0
  %10532 = vmatpush1.bf16.msra.mxu0 0
  %10533 = vmatprep.mubr.bf16.mxu0 0
  %10534 = vmatmul.mubr.bf16.gmra.mrb[0].mxu0 %v10434
  %v10535 = vpop.f32.mrb[0].mxu0
  %v10536 = vadd.f32 0.0, %v10535
  %v10537 = vpop.f32.mrb[0].mxu0
  %v10538 = vpop.f32.mrb[0].mxu0
  %v10539 = vadd.f32 0.0, %v10538
  %v10540 = vpop.f32.mrb[0].mxu0
  %10541 = vmatprep.mubr.bf16.mxu0 0
  %10542 = vmatmul.mubr.bf16.gmra.mrb[0].mxu0 %v10435
  %v10543 = vpop.f32.mrb[0].mxu0
  %v10544 = vadd.f32 0.0, %v10543
  %v10545 = vpop.f32.mrb[0].mxu0
  %v10546 = vpop.f32.mrb[0].mxu0
  %v10547 = vadd.f32 0.0, %v10546
  %v10548 = vpop.f32.mrb[0].mxu0
  %10549 = vdwg.mxu0
  %v10550 = vadd.f32 %v10360, %v10536
  %v10551 = vadd.f32 %v10361, %v10539
  %v10552 = vadd.f32 %v10362, %v10544
  %v10553 = vadd.f32 %v10363, %v10547
  %s10554 = scalar_lea.vmem %s6, 112
  %v10555 = vld [vmem:[%s10554] sm:$0xf]
  %v10556 = vld [vmem:[%s10554 + $0x4] sm:$0xf]
  %v10557 = vld [vmem:[%s10554 + $0x8] sm:$0xf]
  %v10558 = vld [vmem:[%s10554 + $0xc] sm:$0xf]
  %v10563 = vunpack.c.l.b16 %v10555
  %v10564 = vunpack.c.l.b16 %v10556
  %v10565 = vunpack.c.l.b16 %v10557
  %v10566 = vunpack.c.l.b16 %v10558
  %v10567 = vpack.c.b16 %v10564, %v10563
  %v10568 = vpack.c.b16 %v10566, %v10565
  %v10570 = vsel %vm9243, %v10567, 0
  %v10573 = vsel %vm9243, %v10568, 0
  %10575 = vmatprep.subr.bf16.mxu0 0
  %10576 = vmatpush1.bf16.msra.mxu0 %v9222
  %10577 = vmatprep.subr.bf16.mxu0 0
  %10578 = vmatpush1.bf16.msra.mxu0 %v9223
  %10579 = vmatprep.subr.bf16.mxu0 0
  %10580 = vmatpush1.bf16.msra.mxu0 %v9224
  %10581 = vmatprep.subr.bf16.mxu0 0
  %10582 = vmatpush1.bf16.msra.mxu0 %v9225
  %10583 = vmatprep.subr.bf16.mxu0 0
  %10584 = vmatpush1.bf16.msra.mxu0 %v9226
  %10585 = vmatprep.subr.bf16.mxu0 0
  %10586 = vmatpush1.bf16.msra.mxu0 %v9227
  %10587 = vmatprep.subr.bf16.mxu0 0
  %10588 = vmatpush1.bf16.msra.mxu0 %v9252
  %10589 = vmatprep.subr.bf16.mxu0 0
  %10590 = vmatpush1.bf16.msra.mxu0 0
  %10591 = vmatprep.subr.bf16.mxu0 0
  %10592 = vmatpush1.bf16.msra.mxu0 0
  %10593 = vmatprep.subr.bf16.mxu0 0
  %10594 = vmatpush1.bf16.msra.mxu0 0
  %10595 = vmatprep.subr.bf16.mxu0 0
  %10596 = vmatpush1.bf16.msra.mxu0 0
  %10597 = vmatprep.subr.bf16.mxu0 0
  %10598 = vmatpush1.bf16.msra.mxu0 0
  %10599 = vmatprep.subr.bf16.mxu0 0
  %10600 = vmatpush1.bf16.msra.mxu0 0
  %10601 = vmatprep.subr.bf16.mxu0 0
  %10602 = vmatpush1.bf16.msra.mxu0 0
  %10603 = vmatprep.subr.bf16.mxu0 0
  %10604 = vmatpush1.bf16.msra.mxu0 0
  %10605 = vmatprep.subr.bf16.mxu0 0
  %10606 = vmatpush1.bf16.msra.mxu0 0
  %10607 = vmatprep.mubr.bf16.mxu0 0
  %10608 = vmatmul.mubr.bf16.gmra.mrb[0].mxu0 %v10570
  %v10609 = vpop.f32.mrb[0].mxu0
  %v10610 = vadd.f32 0.0, %v10609
  %v10611 = vpop.f32.mrb[0].mxu0
  %v10612 = vpop.f32.mrb[0].mxu0
  %v10613 = vadd.f32 0.0, %v10612
  %v10614 = vpop.f32.mrb[0].mxu0
  %10615 = vmatprep.mubr.bf16.mxu0 0
  %10616 = vmatmul.mubr.bf16.gmra.mrb[0].mxu0 %v10573
  %v10617 = vpop.f32.mrb[0].mxu0
  %v10618 = vadd.f32 0.0, %v10617
  %v10619 = vpop.f32.mrb[0].mxu0
  %v10620 = vpop.f32.mrb[0].mxu0
  %v10621 = vadd.f32 0.0, %v10620
  %v10622 = vpop.f32.mrb[0].mxu0
  %10623 = vdwg.mxu0
  %v10624 = vpack.c.bf16 %v10613, %v10610
  %v10625 = vpack.c.bf16 %v10621, %v10618
  %s10626 = scalar_lea.vmem %s7, 448
  %v10627 = vld [vmem:[%s10626] sm:$0xf]
  %v10628 = vld [vmem:[%s10626 + $0x4] sm:$0xf]
  %v10629 = vld [vmem:[%s10626 + $0x8] sm:$0xf]
  %v10630 = vld [vmem:[%s10626 + $0xc] sm:$0xf]
  %v10631 = vld [vmem:[%s10626 + $0x10] sm:$0xf]
  %v10632 = vld [vmem:[%s10626 + $0x14] sm:$0xf]
  %v10633 = vld [vmem:[%s10626 + $0x18] sm:$0xf]
  %v10634 = vld [vmem:[%s10626 + $0x1c] sm:$0xf]
  %v10635 = vld [vmem:[%s10626 + $0x20] sm:$0xf]
  %v10636 = vld [vmem:[%s10626 + $0x24] sm:$0xf]
  %v10637 = vld [vmem:[%s10626 + $0x28] sm:$0xf]
  %v10638 = vld [vmem:[%s10626 + $0x2c] sm:$0xf]
  %v10639 = vld [vmem:[%s10626 + $0x30] sm:$0xf]
  %v10640 = vld [vmem:[%s10626 + $0x34] sm:$0xf]
  %v10641 = vld [vmem:[%s10626 + $0x38] sm:$0xf]
  %v10642 = vld [vmem:[%s10626 + $0x3c] sm:$0xf]
  %v10659 = vunpack.c.l.b16 %v10627
  %v10660 = vunpack.c.l.b16 %v10628
  %v10661 = vunpack.c.l.b16 %v10629
  %v10662 = vunpack.c.l.b16 %v10630
  %v10663 = vunpack.c.l.b16 %v10631
  %v10664 = vunpack.c.l.b16 %v10632
  %v10665 = vunpack.c.l.b16 %v10633
  %v10666 = vunpack.c.l.b16 %v10634
  %v10667 = vunpack.c.l.b16 %v10635
  %v10668 = vunpack.c.l.b16 %v10636
  %v10669 = vunpack.c.l.b16 %v10637
  %v10670 = vunpack.c.l.b16 %v10638
  %v10671 = vunpack.c.l.b16 %v10639
  %v10672 = vunpack.c.l.b16 %v10640
  %v10673 = vunpack.c.l.b16 %v10641
  %v10674 = vunpack.c.l.b16 %v10642
  %v10675 = vpack.c.b16 %v10660, %v10659
  %v10676 = vpack.c.b16 %v10662, %v10661
  %v10677 = vpack.c.b16 %v10664, %v10663
  %v10678 = vpack.c.b16 %v10666, %v10665
  %v10679 = vpack.c.b16 %v10668, %v10667
  %v10680 = vpack.c.b16 %v10670, %v10669
  %v10681 = vpack.c.b16 %v10672, %v10671
  %v10682 = vpack.c.b16 %v10674, %v10673
  %10691 = vmatprep.subr.bf16.mxu0 0
  %10692 = vmatpush1.bf16.msra.mxu0 %v10675
  %10693 = vmatprep.subr.bf16.mxu0 0
  %10694 = vmatpush1.bf16.msra.mxu0 %v10676
  %10695 = vmatprep.subr.bf16.mxu0 0
  %10696 = vmatpush1.bf16.msra.mxu0 %v10677
  %10697 = vmatprep.subr.bf16.mxu0 0
  %10698 = vmatpush1.bf16.msra.mxu0 %v10678
  %10699 = vmatprep.subr.bf16.mxu0 0
  %10700 = vmatpush1.bf16.msra.mxu0 %v10679
  %10701 = vmatprep.subr.bf16.mxu0 0
  %10702 = vmatpush1.bf16.msra.mxu0 %v10680
  %10703 = vmatprep.subr.bf16.mxu0 0
  %10704 = vmatpush1.bf16.msra.mxu0 %v10681
  %10705 = vmatprep.subr.bf16.mxu0 0
  %10706 = vmatpush1.bf16.msra.mxu0 %v10682
  %10707 = vmatprep.subr.bf16.mxu0 0
  %10708 = vmatpush1.bf16.msra.mxu0 0
  %10709 = vmatprep.subr.bf16.mxu0 0
  %10710 = vmatpush1.bf16.msra.mxu0 0
  %10711 = vmatprep.subr.bf16.mxu0 0
  %10712 = vmatpush1.bf16.msra.mxu0 0
  %10713 = vmatprep.subr.bf16.mxu0 0
  %10714 = vmatpush1.bf16.msra.mxu0 0
  %10715 = vmatprep.subr.bf16.mxu0 0
  %10716 = vmatpush1.bf16.msra.mxu0 0
  %10717 = vmatprep.subr.bf16.mxu0 0
  %10718 = vmatpush1.bf16.msra.mxu0 0
  %10719 = vmatprep.subr.bf16.mxu0 0
  %10720 = vmatpush1.bf16.msra.mxu0 0
  %10721 = vmatprep.subr.bf16.mxu0 0
  %10722 = vmatpush1.bf16.msra.mxu0 0
  %10723 = vmatprep.mubr.bf16.mxu0 0
  %10724 = vmatmul.mubr.bf16.gmra.mrb[0].mxu0 %v10624
  %v10725 = vpop.f32.mrb[0].mxu0
  %v10726 = vadd.f32 0.0, %v10725
  %v10727 = vpop.f32.mrb[0].mxu0
  %v10728 = vpop.f32.mrb[0].mxu0
  %v10729 = vadd.f32 0.0, %v10728
  %v10730 = vpop.f32.mrb[0].mxu0
  %10731 = vmatprep.mubr.bf16.mxu0 0
  %10732 = vmatmul.mubr.bf16.gmra.mrb[0].mxu0 %v10625
  %v10733 = vpop.f32.mrb[0].mxu0
  %v10734 = vadd.f32 0.0, %v10733
  %v10735 = vpop.f32.mrb[0].mxu0
  %v10736 = vpop.f32.mrb[0].mxu0
  %v10737 = vadd.f32 0.0, %v10736
  %v10738 = vpop.f32.mrb[0].mxu0
  %10739 = vdwg.mxu0
  %v10740 = vadd.f32 %v10550, %v10726
  %v10741 = vadd.f32 %v10551, %v10729
  %v10742 = vadd.f32 %v10552, %v10734
  %v10743 = vadd.f32 %v10553, %v10737
  %s10744 = scalar_lea.vmem %s6, 128
  %v10745 = vld [vmem:[%s10744] sm:$0xf]
  %v10746 = vld [vmem:[%s10744 + $0x4] sm:$0xf]
  %v10747 = vld [vmem:[%s10744 + $0x8] sm:$0xf]
  %v10748 = vld [vmem:[%s10744 + $0xc] sm:$0xf]
  %v10753 = vunpack.c.l.b16 %v10745
  %v10754 = vunpack.c.l.b16 %v10746
  %v10755 = vunpack.c.l.b16 %v10747
  %v10756 = vunpack.c.l.b16 %v10748
  %v10757 = vpack.c.b16 %v10754, %v10753
  %v10758 = vpack.c.b16 %v10756, %v10755
  %v10760 = vsel %vm9243, %v10757, 0
  %v10763 = vsel %vm9243, %v10758, 0
  %10765 = vmatprep.subr.bf16.mxu0 0
  %10766 = vmatpush1.bf16.msra.mxu0 %v9222
  %10767 = vmatprep.subr.bf16.mxu0 0
  %10768 = vmatpush1.bf16.msra.mxu0 %v9223
  %10769 = vmatprep.subr.bf16.mxu0 0
  %10770 = vmatpush1.bf16.msra.mxu0 %v9224
  %10771 = vmatprep.subr.bf16.mxu0 0
  %10772 = vmatpush1.bf16.msra.mxu0 %v9225
  %10773 = vmatprep.subr.bf16.mxu0 0
  %10774 = vmatpush1.bf16.msra.mxu0 %v9226
  %10775 = vmatprep.subr.bf16.mxu0 0
  %10776 = vmatpush1.bf16.msra.mxu0 %v9227
  %10777 = vmatprep.subr.bf16.mxu0 0
  %10778 = vmatpush1.bf16.msra.mxu0 %v9252
  %10779 = vmatprep.subr.bf16.mxu0 0
  %10780 = vmatpush1.bf16.msra.mxu0 0
  %10781 = vmatprep.subr.bf16.mxu0 0
  %10782 = vmatpush1.bf16.msra.mxu0 0
  %10783 = vmatprep.subr.bf16.mxu0 0
  %10784 = vmatpush1.bf16.msra.mxu0 0
  %10785 = vmatprep.subr.bf16.mxu0 0
  %10786 = vmatpush1.bf16.msra.mxu0 0
  %10787 = vmatprep.subr.bf16.mxu0 0
  %10788 = vmatpush1.bf16.msra.mxu0 0
  %10789 = vmatprep.subr.bf16.mxu0 0
  %10790 = vmatpush1.bf16.msra.mxu0 0
  %10791 = vmatprep.subr.bf16.mxu0 0
  %10792 = vmatpush1.bf16.msra.mxu0 0
  %10793 = vmatprep.subr.bf16.mxu0 0
  %10794 = vmatpush1.bf16.msra.mxu0 0
  %10795 = vmatprep.subr.bf16.mxu0 0
  %10796 = vmatpush1.bf16.msra.mxu0 0
  %10797 = vmatprep.mubr.bf16.mxu0 0
  %10798 = vmatmul.mubr.bf16.gmra.mrb[0].mxu0 %v10760
  %v10799 = vpop.f32.mrb[0].mxu0
  %v10800 = vadd.f32 0.0, %v10799
  %v10801 = vpop.f32.mrb[0].mxu0
  %v10802 = vpop.f32.mrb[0].mxu0
  %v10803 = vadd.f32 0.0, %v10802
  %v10804 = vpop.f32.mrb[0].mxu0
  %10805 = vmatprep.mubr.bf16.mxu0 0
  %10806 = vmatmul.mubr.bf16.gmra.mrb[0].mxu0 %v10763
  %v10807 = vpop.f32.mrb[0].mxu0
  %v10808 = vadd.f32 0.0, %v10807
  %v10809 = vpop.f32.mrb[0].mxu0
  %v10810 = vpop.f32.mrb[0].mxu0
  %v10811 = vadd.f32 0.0, %v10810
  %v10812 = vpop.f32.mrb[0].mxu0
  %10813 = vdwg.mxu0
  %v10814 = vpack.c.bf16 %v10803, %v10800
  %v10815 = vpack.c.bf16 %v10811, %v10808
  %s10816 = scalar_lea.vmem %s7, 512
  %v10817 = vld [vmem:[%s10816] sm:$0xf]
  %v10818 = vld [vmem:[%s10816 + $0x4] sm:$0xf]
  %v10819 = vld [vmem:[%s10816 + $0x8] sm:$0xf]
  %v10820 = vld [vmem:[%s10816 + $0xc] sm:$0xf]
  %v10821 = vld [vmem:[%s10816 + $0x10] sm:$0xf]
  %v10822 = vld [vmem:[%s10816 + $0x14] sm:$0xf]
  %v10823 = vld [vmem:[%s10816 + $0x18] sm:$0xf]
  %v10824 = vld [vmem:[%s10816 + $0x1c] sm:$0xf]
  %v10825 = vld [vmem:[%s10816 + $0x20] sm:$0xf]
  %v10826 = vld [vmem:[%s10816 + $0x24] sm:$0xf]
  %v10827 = vld [vmem:[%s10816 + $0x28] sm:$0xf]
  %v10828 = vld [vmem:[%s10816 + $0x2c] sm:$0xf]
  %v10829 = vld [vmem:[%s10816 + $0x30] sm:$0xf]
  %v10830 = vld [vmem:[%s10816 + $0x34] sm:$0xf]
  %v10831 = vld [vmem:[%s10816 + $0x38] sm:$0xf]
  %v10832 = vld [vmem:[%s10816 + $0x3c] sm:$0xf]
  %v10849 = vunpack.c.l.b16 %v10817
  %v10850 = vunpack.c.l.b16 %v10818
  %v10851 = vunpack.c.l.b16 %v10819
  %v10852 = vunpack.c.l.b16 %v10820
  %v10853 = vunpack.c.l.b16 %v10821
  %v10854 = vunpack.c.l.b16 %v10822
  %v10855 = vunpack.c.l.b16 %v10823
  %v10856 = vunpack.c.l.b16 %v10824
  %v10857 = vunpack.c.l.b16 %v10825
  %v10858 = vunpack.c.l.b16 %v10826
  %v10859 = vunpack.c.l.b16 %v10827
  %v10860 = vunpack.c.l.b16 %v10828
  %v10861 = vunpack.c.l.b16 %v10829
  %v10862 = vunpack.c.l.b16 %v10830
  %v10863 = vunpack.c.l.b16 %v10831
  %v10864 = vunpack.c.l.b16 %v10832
  %v10865 = vpack.c.b16 %v10850, %v10849
  %v10866 = vpack.c.b16 %v10852, %v10851
  %v10867 = vpack.c.b16 %v10854, %v10853
  %v10868 = vpack.c.b16 %v10856, %v10855
  %v10869 = vpack.c.b16 %v10858, %v10857
  %v10870 = vpack.c.b16 %v10860, %v10859
  %v10871 = vpack.c.b16 %v10862, %v10861
  %v10872 = vpack.c.b16 %v10864, %v10863
  %10881 = vmatprep.subr.bf16.mxu0 0
  %10882 = vmatpush1.bf16.msra.mxu0 %v10865
  %10883 = vmatprep.subr.bf16.mxu0 0
  %10884 = vmatpush1.bf16.msra.mxu0 %v10866
  %10885 = vmatprep.subr.bf16.mxu0 0
  %10886 = vmatpush1.bf16.msra.mxu0 %v10867
  %10887 = vmatprep.subr.bf16.mxu0 0
  %10888 = vmatpush1.bf16.msra.mxu0 %v10868
  %10889 = vmatprep.subr.bf16.mxu0 0
  %10890 = vmatpush1.bf16.msra.mxu0 %v10869
  %10891 = vmatprep.subr.bf16.mxu0 0
  %10892 = vmatpush1.bf16.msra.mxu0 %v10870
  %10893 = vmatprep.subr.bf16.mxu0 0
  %10894 = vmatpush1.bf16.msra.mxu0 %v10871
  %10895 = vmatprep.subr.bf16.mxu0 0
  %10896 = vmatpush1.bf16.msra.mxu0 %v10872
  %10897 = vmatprep.subr.bf16.mxu0 0
  %10898 = vmatpush1.bf16.msra.mxu0 0
  %10899 = vmatprep.subr.bf16.mxu0 0
  %10900 = vmatpush1.bf16.msra.mxu0 0
  %10901 = vmatprep.subr.bf16.mxu0 0
  %10902 = vmatpush1.bf16.msra.mxu0 0
  %10903 = vmatprep.subr.bf16.mxu0 0
  %10904 = vmatpush1.bf16.msra.mxu0 0
  %10905 = vmatprep.subr.bf16.mxu0 0
  %10906 = vmatpush1.bf16.msra.mxu0 0
  %10907 = vmatprep.subr.bf16.mxu0 0
  %10908 = vmatpush1.bf16.msra.mxu0 0
  %10909 = vmatprep.subr.bf16.mxu0 0
  %10910 = vmatpush1.bf16.msra.mxu0 0
  %10911 = vmatprep.subr.bf16.mxu0 0
  %10912 = vmatpush1.bf16.msra.mxu0 0
  %10913 = vmatprep.mubr.bf16.mxu0 0
  %10914 = vmatmul.mubr.bf16.gmra.mrb[0].mxu0 %v10814
  %v10915 = vpop.f32.mrb[0].mxu0
  %v10916 = vadd.f32 0.0, %v10915
  %v10917 = vpop.f32.mrb[0].mxu0
  %v10918 = vpop.f32.mrb[0].mxu0
  %v10919 = vadd.f32 0.0, %v10918
  %v10920 = vpop.f32.mrb[0].mxu0
  %10921 = vmatprep.mubr.bf16.mxu0 0
  %10922 = vmatmul.mubr.bf16.gmra.mrb[0].mxu0 %v10815
  %v10923 = vpop.f32.mrb[0].mxu0
  %v10924 = vadd.f32 0.0, %v10923
  %v10925 = vpop.f32.mrb[0].mxu0
  %v10926 = vpop.f32.mrb[0].mxu0
  %v10927 = vadd.f32 0.0, %v10926
  %v10928 = vpop.f32.mrb[0].mxu0
  %10929 = vdwg.mxu0
  %v10930 = vadd.f32 %v10740, %v10916
  %v10931 = vadd.f32 %v10741, %v10919
  %v10932 = vadd.f32 %v10742, %v10924
  %v10933 = vadd.f32 %v10743, %v10927
  %v10934 = vadd.f32 %v10930, %v10931
  %v10935 = vadd.f32 %v10934, %v10932
  %v10936 = vadd.f32 %v10935, %v10933
  %v10937 = vrot.slane %v10936, 4
  %v10938 = vadd.f32 %v10936, %v10937
  %v10939 = vrot.slane %v10938, 2
  %v10940 = vadd.f32 %v10938, %v10939
  %v10941 = vrot.slane %v10940, 1
  %v10942 = vadd.f32 %v10940, %v10941
  %v10943 = vrcp.pop 32.0
  %v10944 = vmul.f32 %v10942, %v10943
  %v10945 = vsub.f32 %v10930, %v10944
  %v10946 = vsub.f32 %v10931, %v10944
  %v10947 = vsub.f32 %v10932, %v10944
  %v10948 = vsub.f32 %v10933, %v10944
  %v10949 = vmul.f32 %v10945, %v10945
  %v10950 = vmul.f32 %v10946, %v10946
  %v10951 = vmul.f32 %v10947, %v10947
  %v10952 = vmul.f32 %v10948, %v10948
  %v10953 = vadd.f32 %v10949, %v10950
  %v10954 = vadd.f32 %v10953, %v10951
  %v10955 = vadd.f32 %v10954, %v10952
  %v10956 = vrot.slane %v10955, 4
  %v10957 = vadd.f32 %v10955, %v10956
  %v10958 = vrot.slane %v10957, 2
  %v10959 = vadd.f32 %v10957, %v10958
  %v10960 = vrot.slane %v10959, 1
  %v10961 = vadd.f32 %v10959, %v10960
  %v10962 = vmul.f32 %v10961, %v10943
  %v10963 = vadd.f32 %v10962, 1e-05
  %v10964 = vrsqrt.pop %v10963
  %v10965 = vmul.f32 %v10945, %v10964
  %v10966 = vmul.f32 %v10946, %v10964
  %v10967 = vmul.f32 %v10947, %v10964
  %v10968 = vmul.f32 %v10948, %v10964
  %v10969 = vld [vmem:[%s8] sm:$0x1]
  %v10971 = vlaneseq
  %v10972 = vshrl.u32 %v10971, 7
  %v10973 = vsub.s32 0, %v10972
  %v10974 = vrot.slane %v10969, %v10973
  %v10976 = vmul.f32 %v10965, %v10974
  %v10977 = vmul.f32 %v10966, %v10974
  %v10978 = vmul.f32 %v10967, %v10974
  %v10979 = vmul.f32 %v10968, %v10974
  %v10980 = vld [vmem:[%s9] sm:$0x1]
  %v10982 = vlaneseq
  %v10983 = vshrl.u32 %v10982, 7
  %v10984 = vsub.s32 0, %v10983
  %v10985 = vrot.slane %v10980, %v10984
  %v10987 = vadd.f32 %v10976, %v10985
  %v10988 = vadd.f32 %v10977, %v10985
  %v10989 = vadd.f32 %v10978, %v10985
  %v10990 = vadd.f32 %v10979, %v10985
  %vm10991 = vcmp.gt.f32.partialorder %v10987, 0.0
  %vm10992 = vcmp.gt.f32.partialorder %v10988, 0.0
  %vm10993 = vcmp.gt.f32.partialorder %v10989, 0.0
  %vm10994 = vcmp.gt.f32.partialorder %v10990, 0.0
  %v10995 = vmul.f32 %v10987, 0.2
  %v10996 = vmul.f32 %v10988, 0.2
  %v10997 = vmul.f32 %v10989, 0.2
  %v10998 = vmul.f32 %v10990, 0.2
  %v10999 = vsel %vm10991, %v10987, %v10995
  %v11000 = vsel %vm10992, %v10988, %v10996
  %v11001 = vsel %vm10993, %v10989, %v10997
  %v11002 = vsel %vm10994, %v10990, %v10998
  %v11003 = vld [vmem:[%s10] sm:$0xff]
  %v11004 = vld [vmem:[%s10 + $0x8] sm:$0xff]
  %v11005 = vmul.f32 %v10999, %v11003
  %v11006 = vmul.f32 %v11000, %v11004
  %v11007 = vmul.f32 %v11001, %v11003
  %v11008 = vmul.f32 %v11002, %v11004
  %11009 = vadd.xlane.f32.xlu0 %v11005
  %v11010 = vpop.xlane.xlu0 %11009
  %11011 = vadd.xlane.f32.xlu0 %v11006
  %v11012 = vpop.xlane.xlu0 %11011
  %11013 = vadd.xlane.f32.xlu0 %v11007
  %v11014 = vpop.xlane.xlu0 %11013
  %11015 = vadd.xlane.f32.xlu0 %v11008
  %v11016 = vpop.xlane.xlu0 %11015
  %v11021 = vlaneseq
  %v11022 = vand.u32 %v11021, 127
  %v11023 = vlaneseq
  %v11024 = vshrl.u32 %v11023, 7
  %v11025 = vsub.s32 %v11022, %v11024
  %v11026 = vrot.slane %v11010, %v11025
  %v11027 = vadd.s32 %v11022, 4294967288
  %v11028 = vlaneseq
  %v11029 = vshrl.u32 %v11028, 7
  %v11030 = vsub.s32 %v11027, %v11029
  %v11031 = vrot.slane %v11012, %v11030
  %vm11032 = vcmask 130112
  %v11033 = vsel %vm11032, %v11031, %v11026
  %v11034 = vlaneseq
  %v11035 = vshrl.u32 %v11034, 7
  %v11036 = vsub.s32 %v11022, %v11035
  %v11037 = vrot.slane %v11014, %v11036
  %v11038 = vlaneseq
  %v11039 = vshrl.u32 %v11038, 7
  %v11040 = vsub.s32 %v11027, %v11039
  %v11041 = vrot.slane %v11016, %v11040
  %v11042 = vsel %vm11032, %v11041, %v11037
  %vm11043 = vcmask 1041409
  %v11044 = vsel %vm11043, %v11042, %v11033
  %vm11046 = vcmask 123904
  %v11047 = vsel %vm11046, %v11044, 0.0
  %11048 = vadd.xlane.f32.xlu0 %v11047
  %v11049 = vpop.xlane.xlu0 %11048
  %v11050 = vxor.u32 %v11049, 2147483648
  %v11051 = vmul.f32 %v11050, 1.442695
  %v11052 = vpow.pop %v11051
  %v11053 = vadd.f32 %v11052, 1.0
  %v11054 = vrcp.pop %v11053
  %v11055 = vmul.f32 1.0, %v11054
  %11056 = vst [vmem:[%s11] sm:$0x3] %v11055
  // Predicated region
  $region46: #{discriminator_forward.1} parent=0 // pred_check
    _
  $region47: #{discriminator_forward.1} parent=0 // pred_check_branch
    %11058 = sbr.rel (0) target = $region49
  $region48: #{discriminator_forward.1} parent=0 // pred_region
    _
  $region49: #{discriminator_forward.1} parent=0 // pred_fallthru
    _
  // Predicated region
  $region50: #{discriminator_forward.1} parent=0 // pred_check
    _
  $region51: #{discriminator_forward.1} parent=0 // pred_check_branch
    %11060 = sbr.rel (0) target = $region53
  $region52: #{discriminator_forward.1} parent=0 // pred_region
    _
  $region53: #{discriminator_forward.1} parent=0 // pred_fallthru
    _

</llo_original>
